<compile_context>
chip_gen: v7x
topology: tpu7x:2x2x1
jax: 0.10.0
libtpu: 0.0.40
codegen_flags: <defaults>
</compile_context>

<pallas_src>
import functools

import jax
import jax.numpy as jnp
from jax.experimental import pallas as pl
from jax.experimental.pallas import tpu as pltpu


# ----------------------------------------------------------------------------
# Layout helpers (plain JAX, outside the kernel)
# TODO(synk): fuse roll / window_partition / window_reverse into the kernel via
# index_maps (grid over (batch, window-row slab)) to cut the extra HBM round
# trips around the attention core.
# ----------------------------------------------------------------------------
def window_partition(x, window_size):
    """(B, H, W, C) -> (B * nW, wh, ww, C), windows varying fastest per batch."""
    B, H, W, C = x.shape
    wh, ww = window_size
    x = x.reshape(B, H // wh, wh, W // ww, ww, C)
    return x.transpose(0, 1, 3, 2, 4, 5).reshape(-1, wh, ww, C)


def window_reverse(windows, window_size, H, W):
    """(B * nW, wh, ww, C) -> (B, H, W, C)."""
    wh, ww = window_size
    B = windows.shape[0] // ((H // wh) * (W // ww))
    x = windows.reshape(B, H // wh, W // ww, wh, ww, -1)
    return x.transpose(0, 1, 3, 2, 4, 5).reshape(B, H, W, -1)


def get_relative_position_index(window_size):
    wh, ww = window_size
    coords = jnp.stack(jnp.meshgrid(jnp.arange(wh), jnp.arange(ww), indexing="ij"))
    coords = coords.reshape(2, -1)                       # (2, N)
    rel = coords[:, :, None] - coords[:, None, :]        # (2, N, N)
    rel = rel.transpose(1, 2, 0)                         # (N, N, 2)
    rel = rel.at[:, :, 0].add(wh - 1)
    rel = rel.at[:, :, 1].add(ww - 1)
    rel = rel.at[:, :, 0].multiply(2 * ww - 1)
    return rel.sum(-1)                                   # (N, N) int32


def relative_position_bias(table, rp_index, num_heads, N):
    bias = table[rp_index.reshape(-1)]                   # (N*N, nH)
    bias = bias.reshape(N, N, num_heads)
    return bias.transpose(2, 0, 1)                       # (nH, N, N)


def calculate_mask(x_size, window_size, shift_size):
    H, W = x_size
    wh, ww = window_size
    img_mask = jnp.zeros((1, H, W, 1), jnp.float32)
    h_slices = (slice(0, -wh), slice(-wh, -shift_size), slice(-shift_size, None))
    w_slices = (slice(0, -ww), slice(-ww, -shift_size), slice(-shift_size, None))
    cnt = 0
    for hs in h_slices:
        for ws in w_slices:
            img_mask = img_mask.at[:, hs, ws, :].set(float(cnt))
            cnt += 1
    mask_windows = window_partition(img_mask, window_size).reshape(-1, wh * ww)
    attn_mask = mask_windows[:, None, :] - mask_windows[:, :, None]
    return jnp.where(attn_mask != 0, -100.0, 0.0).astype(jnp.float32)  # (nW, N, N)


# ----------------------------------------------------------------------------
# Pallas kernel: fused window attention for a group of WB windows
# ----------------------------------------------------------------------------
def _win_attn_kernel(x_ref, wqkv_ref, bqkv_ref, wproj_ref, bproj_ref, bm_ref,
                     o_ref, *, num_heads):
    WB, N, C = x_ref.shape
    hd = C // num_heads
    cdt = x_ref.dtype            # native MXU operand dtype (bf16 if caller uses it)

    # Fused QKV projection over every token in the group (one big MXU matmul).
    # qk scale is pre-folded into the Q columns of wqkv/bqkv by the wrapper.
    x2 = x_ref[...].reshape(WB * N, C)
    qkv = jnp.dot(x2, wqkv_ref[...], preferred_element_type=jnp.float32)
    qkv = (qkv + bqkv_ref[...].astype(jnp.float32)).reshape(WB, N, 3 * C)

    # Head-batched q/k/v: (nH*WB, N, hd), batch index = h*WB + w.
    q = jnp.concatenate(
        [qkv[:, :, h * hd:(h + 1) * hd] for h in range(num_heads)], axis=0)
    k = jnp.concatenate(
        [qkv[:, :, C + h * hd:C + (h + 1) * hd] for h in range(num_heads)], axis=0)
    v = jnp.concatenate(
        [qkv[:, :, 2 * C + h * hd:2 * C + (h + 1) * hd] for h in range(num_heads)],
        axis=0)

    # One batched QK^T stream for all heads/windows in the group.
    s = jnp.einsum("bnd,bmd->bnm", q.astype(cdt), k.astype(cdt),
                   preferred_element_type=jnp.float32)          # (nH*WB, N, N)

    # Relative-position bias (+ shift mask), pre-fused per (head, window) in the
    # wrapper -> a single VPU add here (broadcasts over WB when not shifted).
    s = s.reshape(num_heads, WB, N, N) + bm_ref[...]

    # Softmax in f32; reciprocal goes to the otherwise-idle EUP slot.
    s = s - jnp.max(s, axis=-1, keepdims=True)
    p = jnp.exp(s)
    p = p * pl.reciprocal(jnp.sum(p, axis=-1, keepdims=True), approx=True)
    p = p.reshape(num_heads * WB, N, N)

    o = jnp.einsum("bnm,bmd->bnd", p.astype(cdt), v.astype(cdt),
                   preferred_element_type=jnp.float32)          # (nH*WB, N, hd)
    # Re-assemble heads along the channel axis.
    o = jnp.concatenate(
        [o[h * WB:(h + 1) * WB] for h in range(num_heads)], axis=-1)  # (WB, N, C)

    # Output projection.
    o2 = jnp.dot(o.reshape(WB * N, C).astype(cdt), wproj_ref[...],
                 preferred_element_type=jnp.float32)
    o2 = o2 + bproj_ref[...].astype(jnp.float32)
    # TODO(synk): for C < 128 this store is lane-masked; a lane-dense (WB, N*C)
    # out_spec needs a minor-dim-splitting reshape that is not always lowerable.
    o_ref[...] = o2.reshape(WB, N, C).astype(o_ref.dtype)


# ----------------------------------------------------------------------------
# Generation-aware tiling
# ----------------------------------------------------------------------------
def _vmem_limit_bytes():
    """Scoped VMEM limit derived from the chip (v5e/v6e 128 MiB, v7x 64 MiB)."""
    cap = 128 * 1024 * 1024
    try:
        info = pltpu.get_tpu_info()
        cap = int(getattr(info, "vmem_capacity_bytes", cap) or cap)
    except Exception:
        pass
    return max(32 * 1024 * 1024, min(int(cap * 0.6), 100 * 1024 * 1024))


def _per_step_vmem_bytes(wb, N, C, num_heads, itemsize):
    io = 2 * 2 * wb * N * C * itemsize                     # x + out, double-buffered
    bias = 2 * num_heads * wb * N * N * 4                  # fused bias+mask block
    wts = 2 * (C * 3 * C + 3 * C + C * C + C) * itemsize   # resident weights
    live = 4 * (2 * wb * N * 3 * C                         # qkv + stacked q/k/v
                + 3 * num_heads * wb * N * N               # scores / exp / probs
                + 2 * wb * N * C)                          # merged heads + proj out
    return io + bias + wts + live


def _pick_window_group(nW, total_windows, N, C, num_heads, itemsize, step_budget):
    """Largest divisor of nW that fits the budget; keep >=2 (ideally even) grid
    steps so both v7x TensorCores get work from the 'parallel' grid axis."""
    divisors = [d for d in range(1, nW + 1) if nW % d == 0]
    feasible = [d for d in divisors
                if _per_step_vmem_bytes(d, N, C, num_heads, itemsize) <= step_budget]
    if not feasible:
        feasible = [1]
    best, best_key = feasible[0], None
    for d in feasible:
        groups = total_windows // d
        key = (groups >= 2, groups >= 2 and groups % 2 == 0, d)
        if best_key is None or key > best_key:
            best, best_key = d, key
    return best


# ----------------------------------------------------------------------------
# Pallas attention core (wrapper around pallas_call)
# ----------------------------------------------------------------------------
def _window_attention_pallas(xw, params, bias, mask, *, num_heads, scale, nW):
    B_, N, C = xw.shape
    dt = xw.dtype

    # Fold the qk scale into the Q columns of the QKV projection (trace-time).
    wdt = params["wqkv"].dtype
    qscale = jnp.concatenate([jnp.full((C,), scale, wdt), jnp.ones((2 * C,), wdt)])
    wqkv = (params["wqkv"] * qscale[None, :]).astype(dt)
    bqkv = (params["bqkv"] * qscale).reshape(1, -1).astype(dt)
    wproj = params["wproj"].astype(dt)
    bproj = params["bproj"].reshape(1, -1).astype(dt)

    # Pre-fuse relative-position bias with the shift mask: one add in-kernel and
    # no separate (zero) mask stream when shift_size == 0.
    bias_f32 = bias.astype(jnp.float32)                        # (nH, N, N)
    if mask is not None:
        bm = bias_f32[:, None, :, :] + mask.astype(jnp.float32)[None, :, :, :]
    else:
        bm = bias_f32[:, None, :, :]                           # (nH, 1, N, N)
    n_mask_blocks = bm.shape[1]

    vmem_limit = _vmem_limit_bytes()
    WB = _pick_window_group(nW, B_, N, C, num_heads, jnp.dtype(dt).itemsize,
                            vmem_limit // 2)
    groups = B_ // WB
    gpb = max(nW // WB, 1)                                     # groups per image
    wb_mask = WB if n_mask_blocks > 1 else 1

    if n_mask_blocks > 1:
        bm_index = lambda g: (0, g % gpb, 0, 0)
    else:
        bm_index = lambda g: (0, 0, 0, 0)

    kernel = functools.partial(_win_attn_kernel, num_heads=num_heads)

    return pl.pallas_call(
        kernel,
        out_shape=jax.ShapeDtypeStruct((B_, N, C), dt),
        grid_spec=pltpu.PrefetchScalarGridSpec(
            num_scalar_prefetch=0,
            grid=(groups,),
            in_specs=[
                pl.BlockSpec((WB, N, C), lambda g: (g, 0, 0)),              # x windows
                pl.BlockSpec((C, 3 * C), lambda g: (0, 0)),                 # Wqkv (scaled)
                pl.BlockSpec((1, 3 * C), lambda g: (0, 0)),                 # bqkv (scaled)
                pl.BlockSpec((C, C), lambda g: (0, 0)),                     # Wproj
                pl.BlockSpec((1, C), lambda g: (0, 0)),                     # bproj
                pl.BlockSpec((num_heads, wb_mask, N, N), bm_index),         # bias(+mask)
            ],
            out_specs=pl.BlockSpec((WB, N, C), lambda g: (g, 0, 0)),
        ),
        compiler_params=pltpu.CompilerParams(
            dimension_semantics=("parallel",),
            vmem_limit_bytes=vmem_limit,
        ),
    )(xw, wqkv, bqkv, wproj, bproj, bm)


# ----------------------------------------------------------------------------
# Full wrapper forward (shared layout plumbing, pluggable attention core)
# ----------------------------------------------------------------------------
def _wrapper_forward(x, x_size, params, rp_index, *, window_size, num_heads,
                     shift_size, attn_core):
    H, W = x_size
    B, L, C = x.shape
    wh, ww = window_size
    assert L == H * W and H % wh == 0 and W % ww == 0 and C % num_heads == 0
    N = wh * ww
    nW = (H // wh) * (W // ww)
    scale = (C // num_heads) ** (-0.5)

    xi = x.reshape(B, H, W, C)
    if shift_size > 0:
        xi = jnp.roll(xi, shift=(-shift_size, -shift_size), axis=(1, 2))
    xw = window_partition(xi, window_size).reshape(-1, N, C)        # (B*nW, N, C)

    mask = calculate_mask((H, W), window_size, shift_size) if shift_size > 0 else None
    bias = relative_position_bias(params["rpb_table"], rp_index, num_heads, N)

    out_w = attn_core(xw, params, bias, mask, num_heads=num_heads,
                      scale=scale, nW=nW)                           # (B*nW, N, C)

    xo = window_reverse(out_w.reshape(-1, wh, ww, C), window_size, H, W)
    if shift_size > 0:
        xo = jnp.roll(xo, shift=(shift_size, shift_size), axis=(1, 2))
    return xo.reshape(B, H * W, C)


def window_attention_wrapper_forward(x, x_size, params, rp_index, *,
                                     window_size, num_heads, shift_size):
    return _wrapper_forward(x, x_size, params, rp_index,
                            window_size=window_size, num_heads=num_heads,
                            shift_size=shift_size,
                            attn_core=_window_attention_pallas)


# ----------------------------------------------------------------------------
# Pure-JAX reference (mirrors the PyTorch forward) for correctness checking
# ----------------------------------------------------------------------------
def _attention_core_ref(xw, params, bias, mask, *, num_heads, scale, nW):
    B_, N, C = xw.shape
    hd = C // num_heads
    xf = xw.astype(jnp.float32)
    qkv = xf @ params["wqkv"].astype(jnp.float32) + params["bqkv"].astype(jnp.float32)
    qkv = qkv.reshape(B_, N, 3, num_heads, hd).transpose(2, 0, 3, 1, 4)
    q, k, v = qkv[0] * scale, qkv[1], qkv[2]                        # (B_, nH, N, hd)
    attn = jnp.einsum("bhnd,bhmd->bhnm", q, k)
    attn = attn + bias.astype(jnp.float32)[None]
    if mask is not None:
        attn = attn.reshape(B_ // nW, nW, num_heads, N, N) + mask[None, :, None]
        attn = attn.reshape(B_, num_heads, N, N)
    attn = jax.nn.softmax(attn, axis=-1)
    out = jnp.einsum("bhnm,bhmd->bhnd", attn, v)
    out = out.transpose(0, 2, 1, 3).reshape(B_, N, C)
    out = out @ params["wproj"].astype(jnp.float32) + params["bproj"].astype(jnp.float32)
    return out.astype(xw.dtype)


def reference_forward(x, x_size, params, rp_index, *, window_size, num_heads,
                      shift_size):
    return _wrapper_forward(x, x_size, params, rp_index,
                            window_size=window_size, num_heads=num_heads,
                            shift_size=shift_size,
                            attn_core=_attention_core_ref)


# ----------------------------------------------------------------------------
if __name__ == "__main__":
    # Small shapes consistent with the module.
    B, H, W = 2, 16, 16
    C = 32
    window_size = (8, 8)
    num_heads = 4
    shift_size = 4          # shifted-window path (exercises roll + mask)

    key = jax.random.PRNGKey(0)
    k_x, k_qw, k_qb, k_pw, k_pb, k_t = jax.random.split(key, 6)
    x = jax.random.normal(k_x, (B, H * W, C), jnp.float32)
    params = {
        "wqkv": jax.random.normal(k_qw, (C, 3 * C), jnp.float32) * (C ** -0.5),
        "bqkv": jax.random.normal(k_qb, (3 * C,), jnp.float32) * 0.02,
        "wproj": jax.random.normal(k_pw, (C, C), jnp.float32) * (C ** -0.5),
        "bproj": jax.random.normal(k_pb, (C,), jnp.float32) * 0.02,
        "rpb_table": jax.random.normal(
            k_t, ((2 * window_size[0] - 1) * (2 * window_size[1] - 1), num_heads),
            jnp.float32) * 0.02,
    }
    rp_index = get_relative_position_index(window_size)

    # Shifted-window path.
    out = window_attention_wrapper_forward(
        x, (H, W), params, rp_index,
        window_size=window_size, num_heads=num_heads, shift_size=shift_size)
    out = jax.block_until_ready(out)
    ref = reference_forward(
        x, (H, W), params, rp_index,
        window_size=window_size, num_heads=num_heads, shift_size=shift_size)
    assert out.shape == (B, H * W, C), out.shape
    assert bool(jnp.allclose(out, ref, atol=2e-2, rtol=2e-2)), \
        float(jnp.max(jnp.abs(out - ref)))

    # Non-shifted path (mask dropped entirely -> no mask DMA).
    out0 = window_attention_wrapper_forward(
        x, (H, W), params, rp_index,
        window_size=window_size, num_heads=num_heads, shift_size=0)
    out0 = jax.block_until_ready(out0)
    ref0 = reference_forward(
        x, (H, W), params, rp_index,
        window_size=window_size, num_heads=num_heads, shift_size=0)
    assert bool(jnp.allclose(out0, ref0, atol=2e-2, rtol=2e-2)), \
        float(jnp.max(jnp.abs(out0 - ref0)))

    # bf16 smoke run: native MXU operand dtype path (f32 accumulation in-kernel).
    xb = x.astype(jnp.bfloat16)
    params_b = {k_: v.astype(jnp.bfloat16) for k_, v in params.items()}
    outb = window_attention_wrapper_forward(
        xb, (H, W), params_b, rp_index,
        window_size=window_size, num_heads=num_heads, shift_size=shift_size)
    outb = jax.block_until_ready(outb)
    assert outb.shape == (B, H * W, C), outb.shape
    assert bool(jnp.all(jnp.isfinite(outb.astype(jnp.float32))))

    print("KERNEL_OK")
</pallas_src>

<mosaic_0001>
module attributes {stable_mosaic.version = 11 : i64} {
  func.func @_win_attn_kernel(%arg0: i32, %arg1: memref<4x64x32xf32, #tpu.memory_space<vmem>>, %arg2: memref<32x96xf32, #tpu.memory_space<vmem>>, %arg3: memref<1x96xf32, #tpu.memory_space<vmem>>, %arg4: memref<32x32xf32, #tpu.memory_space<vmem>>, %arg5: memref<1x32xf32, #tpu.memory_space<vmem>>, %arg6: memref<4x4x64x64xf32, #tpu.memory_space<vmem>>, %arg7: memref<4x64x32xf32, #tpu.memory_space<vmem>>) attributes {dimension_semantics = [#tpu.dimension_semantics<parallel>], iteration_bounds = array<i64: 2>, scalar_prefetch = 0 : i64, scratch_operands = 0 : i64, tpu.core_type = #tpu.core_type<tc>, window_params = [{transform_indices = @transform_0, window_bounds = array<i64: 4, 64, 32>}, {pipeline_mode = #tpu.pipeline_mode<synchronous>, transform_indices = @transform_1, window_bounds = array<i64: 32, 96>}, {pipeline_mode = #tpu.pipeline_mode<synchronous>, transform_indices = @transform_2, window_bounds = array<i64: 1, 96>}, {pipeline_mode = #tpu.pipeline_mode<synchronous>, transform_indices = @transform_3, window_bounds = array<i64: 32, 32>}, {pipeline_mode = #tpu.pipeline_mode<synchronous>, transform_indices = @transform_4, window_bounds = array<i64: 1, 32>}, {transform_indices = @transform_5, window_bounds = array<i64: 4, 4, 64, 64>}, {transform_indices = @transform_6, window_bounds = array<i64: 4, 64, 32>}]} {
    %c0 = arith.constant 0 : index
    %c0_0 = arith.constant 0 : index
    %c0_1 = arith.constant 0 : index
    %0 = vector.load %arg1[%c0, %c0_0, %c0_1] : memref<4x64x32xf32, #tpu.memory_space<vmem>>, vector<4x64x32xf32>
    %1 = vector.shape_cast %0 : vector<4x64x32xf32> to vector<256x32xf32>
    %c0_2 = arith.constant 0 : index
    %c0_3 = arith.constant 0 : index
    %2 = vector.load %arg2[%c0_2, %c0_3] : memref<32x96xf32, #tpu.memory_space<vmem>>, vector<32x96xf32>
    %cst = arith.constant dense<0.000000e+00> : vector<256x96xf32>
    %3 = tpu.matmul %1, %2, %cst {dimension_numbers = #tpu.dot_dimension_numbers<[1], [0], [0], [1], [0, 0, 1, 1], [], []>} : vector<256x32xf32>, vector<32x96xf32>, vector<256x96xf32> -> vector<256x96xf32>
    %c0_4 = arith.constant 0 : index
    %c0_5 = arith.constant 0 : index
    %4 = vector.load %arg3[%c0_4, %c0_5] : memref<1x96xf32, #tpu.memory_space<vmem>>, vector<1x96xf32>
    %5 = vector.broadcast %4 : vector<1x96xf32> to vector<256x96xf32>
    %6 = arith.addf %3, %5 : vector<256x96xf32>
    %7 = vector.shape_cast %6 : vector<256x96xf32> to vector<4x64x96xf32>
    %8 = vector.extract_strided_slice %7 {offsets = [0, 0, 0], sizes = [4, 64, 8], strides = [1, 1, 1]} : vector<4x64x96xf32> to vector<4x64x8xf32>
    %9 = vector.extract_strided_slice %7 {offsets = [0, 0, 8], sizes = [4, 64, 8], strides = [1, 1, 1]} : vector<4x64x96xf32> to vector<4x64x8xf32>
    %10 = vector.extract_strided_slice %7 {offsets = [0, 0, 16], sizes = [4, 64, 8], strides = [1, 1, 1]} : vector<4x64x96xf32> to vector<4x64x8xf32>
    %11 = vector.extract_strided_slice %7 {offsets = [0, 0, 24], sizes = [4, 64, 8], strides = [1, 1, 1]} : vector<4x64x96xf32> to vector<4x64x8xf32>
    %12 = tpu.concatenate %8, %9, %10, %11 in 0 : vector<4x64x8xf32>, vector<4x64x8xf32>, vector<4x64x8xf32>, vector<4x64x8xf32> -> vector<16x64x8xf32>
    %13 = vector.extract_strided_slice %7 {offsets = [0, 0, 32], sizes = [4, 64, 8], strides = [1, 1, 1]} : vector<4x64x96xf32> to vector<4x64x8xf32>
    %14 = vector.extract_strided_slice %7 {offsets = [0, 0, 40], sizes = [4, 64, 8], strides = [1, 1, 1]} : vector<4x64x96xf32> to vector<4x64x8xf32>
    %15 = vector.extract_strided_slice %7 {offsets = [0, 0, 48], sizes = [4, 64, 8], strides = [1, 1, 1]} : vector<4x64x96xf32> to vector<4x64x8xf32>
    %16 = vector.extract_strided_slice %7 {offsets = [0, 0, 56], sizes = [4, 64, 8], strides = [1, 1, 1]} : vector<4x64x96xf32> to vector<4x64x8xf32>
    %17 = tpu.concatenate %13, %14, %15, %16 in 0 : vector<4x64x8xf32>, vector<4x64x8xf32>, vector<4x64x8xf32>, vector<4x64x8xf32> -> vector<16x64x8xf32>
    %18 = vector.extract_strided_slice %7 {offsets = [0, 0, 64], sizes = [4, 64, 8], strides = [1, 1, 1]} : vector<4x64x96xf32> to vector<4x64x8xf32>
    %19 = vector.extract_strided_slice %7 {offsets = [0, 0, 72], sizes = [4, 64, 8], strides = [1, 1, 1]} : vector<4x64x96xf32> to vector<4x64x8xf32>
    %20 = vector.extract_strided_slice %7 {offsets = [0, 0, 80], sizes = [4, 64, 8], strides = [1, 1, 1]} : vector<4x64x96xf32> to vector<4x64x8xf32>
    %21 = vector.extract_strided_slice %7 {offsets = [0, 0, 88], sizes = [4, 64, 8], strides = [1, 1, 1]} : vector<4x64x96xf32> to vector<4x64x8xf32>
    %22 = tpu.concatenate %18, %19, %20, %21 in 0 : vector<4x64x8xf32>, vector<4x64x8xf32>, vector<4x64x8xf32>, vector<4x64x8xf32> -> vector<16x64x8xf32>
    "tpu.trace_start"() <{level = 10 : i32, message = "bnd,bmd->bnm"}> : () -> ()
    %cst_6 = arith.constant dense<0.000000e+00> : vector<16x64x64xf32>
    %23 = tpu.matmul %12, %17, %cst_6 {dimension_numbers = #tpu.dot_dimension_numbers<[2], [2], [1], [1], [0, 0, 0, 1, 1, 1], [0], [0]>} : vector<16x64x8xf32>, vector<16x64x8xf32>, vector<16x64x64xf32> -> vector<16x64x64xf32>
    "tpu.trace_stop"() : () -> ()
    %24 = vector.shape_cast %23 : vector<16x64x64xf32> to vector<4x4x64x64xf32>
    %c0_7 = arith.constant 0 : index
    %c0_8 = arith.constant 0 : index
    %c0_9 = arith.constant 0 : index
    %c0_10 = arith.constant 0 : index
    %25 = vector.load %arg6[%c0_7, %c0_8, %c0_9, %c0_10] : memref<4x4x64x64xf32, #tpu.memory_space<vmem>>, vector<4x4x64x64xf32>
    %26 = arith.addf %24, %25 : vector<4x4x64x64xf32>
    %cst_11 = arith.constant dense<0xFF800000> : vector<4x4x64xf32>
    %27 = vector.multi_reduction <maximumf>, %26, %cst_11 [3] : vector<4x4x64x64xf32> to vector<4x4x64xf32>
    %28 = vector.shape_cast %27 : vector<4x4x64xf32> to vector<4x4x64x1xf32>
    %29 = vector.broadcast %28 : vector<4x4x64x1xf32> to vector<4x4x64x64xf32>
    %30 = arith.subf %26, %29 : vector<4x4x64x64xf32>
    %31 = math.exp %30 : vector<4x4x64x64xf32>
    %cst_12 = arith.constant dense<0.000000e+00> : vector<4x4x64xf32>
    %32 = vector.multi_reduction <add>, %31, %cst_12 [3] : vector<4x4x64x64xf32> to vector<4x4x64xf32>
    %33 = vector.shape_cast %32 : vector<4x4x64xf32> to vector<4x4x64x1xf32>
    %34 = tpu.reciprocal %33 {approx = true} : vector<4x4x64x1xf32> -> vector<4x4x64x1xf32>
    %35 = vector.broadcast %34 : vector<4x4x64x1xf32> to vector<4x4x64x64xf32>
    %36 = arith.mulf %31, %35 : vector<4x4x64x64xf32>
    %37 = vector.shape_cast %36 : vector<4x4x64x64xf32> to vector<16x64x64xf32>
    "tpu.trace_start"() <{level = 10 : i32, message = "bnm,bmd->bnd"}> : () -> ()
    %cst_13 = arith.constant dense<0.000000e+00> : vector<16x64x8xf32>
    %38 = tpu.matmul %37, %22, %cst_13 {dimension_numbers = #tpu.dot_dimension_numbers<[2], [1], [1], [2], [0, 0, 0, 1, 1, 2], [0], [0]>} : vector<16x64x64xf32>, vector<16x64x8xf32>, vector<16x64x8xf32> -> vector<16x64x8xf32>
    "tpu.trace_stop"() : () -> ()
    %39 = vector.extract_strided_slice %38 {offsets = [0, 0, 0], sizes = [4, 64, 8], strides = [1, 1, 1]} : vector<16x64x8xf32> to vector<4x64x8xf32>
    %40 = vector.extract_strided_slice %38 {offsets = [4, 0, 0], sizes = [4, 64, 8], strides = [1, 1, 1]} : vector<16x64x8xf32> to vector<4x64x8xf32>
    %41 = vector.extract_strided_slice %38 {offsets = [8, 0, 0], sizes = [4, 64, 8], strides = [1, 1, 1]} : vector<16x64x8xf32> to vector<4x64x8xf32>
    %42 = vector.extract_strided_slice %38 {offsets = [12, 0, 0], sizes = [4, 64, 8], strides = [1, 1, 1]} : vector<16x64x8xf32> to vector<4x64x8xf32>
    %43 = tpu.concatenate %39, %40, %41, %42 in 2 : vector<4x64x8xf32>, vector<4x64x8xf32>, vector<4x64x8xf32>, vector<4x64x8xf32> -> vector<4x64x32xf32>
    %44 = vector.shape_cast %43 : vector<4x64x32xf32> to vector<256x32xf32>
    %c0_14 = arith.constant 0 : index
    %c0_15 = arith.constant 0 : index
    %45 = vector.load %arg4[%c0_14, %c0_15] : memref<32x32xf32, #tpu.memory_space<vmem>>, vector<32x32xf32>
    %cst_16 = arith.constant dense<0.000000e+00> : vector<256x32xf32>
    %46 = tpu.matmul %44, %45, %cst_16 {dimension_numbers = #tpu.dot_dimension_numbers<[1], [0], [0], [1], [0, 0, 1, 1], [], []>} : vector<256x32xf32>, vector<32x32xf32>, vector<256x32xf32> -> vector<256x32xf32>
    %c0_17 = arith.constant 0 : index
    %c0_18 = arith.constant 0 : index
    %47 = vector.load %arg5[%c0_17, %c0_18] : memref<1x32xf32, #tpu.memory_space<vmem>>, vector<1x32xf32>
    %48 = vector.broadcast %47 : vector<1x32xf32> to vector<256x32xf32>
    %49 = arith.addf %46, %48 : vector<256x32xf32>
    %50 = vector.shape_cast %49 : vector<256x32xf32> to vector<4x64x32xf32>
    %c0_19 = arith.constant 0 : index
    %c0_20 = arith.constant 0 : index
    %c0_21 = arith.constant 0 : index
    %51 = vector.load %arg7[%c0_19, %c0_20, %c0_21] : memref<4x64x32xf32, #tpu.memory_space<vmem>>, vector<4x64x32xf32>
    tpu.vector_store %arg7[%c0_19, %c0_20, %c0_21], %50 {strides = array<i32>} : memref<4x64x32xf32, #tpu.memory_space<vmem>>, vector<4x64x32xf32>,
    return
  }
  func.func @transform_0(%arg0: i32) -> (i32, i32, i32) {
    %c0_i32 = arith.constant 0 : i32
    %c0_i32_0 = arith.constant 0 : i32
    %c0_i32_1 = arith.constant 0 : i32
    return %arg0, %c0_i32, %c0_i32_0 : i32, i32, i32
  }
  func.func @transform_1(%arg0: i32) -> (i32, i32) {
    %c0_i32 = arith.constant 0 : i32
    %c0_i32_0 = arith.constant 0 : i32
    %c0_i32_1 = arith.constant 0 : i32
    return %c0_i32, %c0_i32_0 : i32, i32
  }
  func.func @transform_2(%arg0: i32) -> (i32, i32) {
    %c0_i32 = arith.constant 0 : i32
    %c0_i32_0 = arith.constant 0 : i32
    %c0_i32_1 = arith.constant 0 : i32
    return %c0_i32, %c0_i32_0 : i32, i32
  }
  func.func @transform_3(%arg0: i32) -> (i32, i32) {
    %c0_i32 = arith.constant 0 : i32
    %c0_i32_0 = arith.constant 0 : i32
    %c0_i32_1 = arith.constant 0 : i32
    return %c0_i32, %c0_i32_0 : i32, i32
  }
  func.func @transform_4(%arg0: i32) -> (i32, i32) {
    %c0_i32 = arith.constant 0 : i32
    %c0_i32_0 = arith.constant 0 : i32
    %c0_i32_1 = arith.constant 0 : i32
    return %c0_i32, %c0_i32_0 : i32, i32
  }
  func.func @transform_5(%arg0: i32) -> (i32, i32, i32, i32) {
    %c1_i32 = arith.constant 1 : i32
    %c0_i32 = arith.constant 0 : i32
    %0 = arith.cmpi eq, %c1_i32, %c0_i32 : i32
    %c1_i32_0 = arith.constant 1 : i32
    %1 = arith.select %0, %c1_i32_0, %c1_i32 : i32
    %2 = arith.remsi %arg0, %1 : i32
    %c0_i32_1 = arith.constant 0 : i32
    %3 = arith.cmpi ne, %2, %c0_i32_1 : i32
    %c0_i32_2 = arith.constant 0 : i32
    %4 = arith.cmpi slt, %2, %c0_i32_2 : i32
    %c0_i32_3 = arith.constant 0 : i32
    %5 = arith.cmpi slt, %1, %c0_i32_3 : i32
    %6 = arith.xori %4, %5 : i1
    %7 = arith.andi %6, %3 : i1
    %8 = arith.addi %2, %1 : i32
    %9 = arith.select %7, %8, %2 : i32
    %c0_i32_4 = arith.constant 0 : i32
    %c0_i32_5 = arith.constant 0 : i32
    %c0_i32_6 = arith.constant 0 : i32
    %c0_i32_7 = arith.constant 0 : i32
    return %c0_i32_4, %9, %c0_i32_5, %c0_i32_6 : i32, i32, i32, i32
  }
  func.func @transform_6(%arg0: i32) -> (i32, i32, i32) {
    %c0_i32 = arith.constant 0 : i32
    %c0_i32_0 = arith.constant 0 : i32
    %c0_i32_1 = arith.constant 0 : i32
    return %arg0, %c0_i32, %c0_i32_0 : i32, i32, i32
  }
}

</mosaic_0001>

<llo_original>
// kernel: tpu_custom_call.1
$region0: #{tpu_custom_call.1}
  #allocation0 [shape = 'u32[]', space=smem, size = 0x4, offset = 0x4, fixed_abs, tag = 'smem constant byte address 0x4 - core index']
  #allocation1 [shape = 'u32[144,128]{1,0:T(1,128)}', space=vmem, size = 0x12000, scoped, tag = 'internal scratch']
  %s0 = inlined_call_operand.hbm [shape: f32[8,64,32], index: 0, kind: input, shape index: {}]
  %s1 = inlined_call_operand.hbm [shape: f32[32,96], index: 1, kind: input, shape index: {}]
  %s2 = inlined_call_operand.hbm [shape: f32[1,96], index: 2, kind: input, shape index: {}]
  %s3 = inlined_call_operand.hbm [shape: f32[32,32], index: 3, kind: input, shape index: {}]
  %s4 = inlined_call_operand.hbm [shape: f32[1,32], index: 4, kind: input, shape index: {}]
  %s5 = inlined_call_operand.hbm [shape: f32[4,4,64,64], index: 5, kind: input, shape index: {}]
  %s6 = inlined_call_operand.hbm [shape: f32[8,64,32], index: 6, kind: output, shape index: {}]
  %s7 = sld [smem:[#allocation0]]
  $region81: #{tpu_custom_call.1} parent=0
    _
  %s9 = ssub.s32 1, %s7
  %s10 = scalar_select 0, %s9, %s7
  $region1: #{tpu_custom_call.1} parent=0
    #allocation2 [shape = 'u8[262144]{0}', space=vmem, size = 0x40000, scoped, tag = 'input window, operand 0']
    #allocation3 [shape = 's32[2]{0}', space=sflag, size = 0x8, scoped, tag = 'scoped memory for tpu_custom_call.1']
    #allocation4 [shape = 's32[2]{0}', space=sflag, size = 0x8, scoped, tag = 'scoped memory for tpu_custom_call.1']
    #allocation5 [shape = 'u8[16384]{0}', space=vmem, size = 0x4000, scoped, tag = 'input window, operand 1, single buffered']
    #allocation6 [shape = 's32[1]{0}', space=sflag, size = 0x4, scoped, tag = 'scoped memory for tpu_custom_call.1']
    #allocation7 [shape = 'u8[512]{0}', space=vmem, size = 0x400, scoped, tag = 'input window, operand 2, single buffered']
    #allocation8 [shape = 'u8[16384]{0}', space=vmem, size = 0x4000, scoped, tag = 'input window, operand 3, single buffered']
    #allocation9 [shape = 's32[1]{0}', space=sflag, size = 0x4, scoped, tag = 'scoped memory for tpu_custom_call.1']
    #allocation10 [shape = 'u8[512]{0}', space=vmem, size = 0x400, scoped, tag = 'input window, operand 4, single buffered']
    #allocation11 [shape = 'u8[524288]{0}', space=vmem, size = 0x80000, scoped, tag = 'input window, operand 5, single buffered']
    #allocation12 [shape = 's32[1]{0}', space=sflag, size = 0x4, scoped, tag = 'scoped memory for tpu_custom_call.1']
    #allocation13 [shape = 'u8[262144]{0}', space=vmem, size = 0x40000, scoped, tag = 'output window, operand 0']
    %11 = vsyncpa [#allocation3], 0
    %s12 = scalar_lea.sflag [#allocation3], 1
    %13 = vsyncpa %s12, 0
    %14 = vsyncpa [#allocation6], 0
    %15 = vsyncpa [#allocation9], 0
    %16 = vsyncpa [#allocation12], 0
    %17 = vsyncpa [#allocation4], 0
    %s18 = scalar_lea.sflag [#allocation4], 1
    %19 = vsyncpa %s18, 0
    loop: start=0, step=1, limit=4
    $region2: #{tpu_custom_call.1} parent=1 // loop_pre_header
      _
    $region3: #{tpu_custom_call.1} parent=1 // loop_header
      %s21 = sphi 0, %s25
      %p22 = scmp.ge.s32.totalorder %s21, 4
      %s31 = sphi 0, %s33
      %s34 = sphi 0, %s31
      %s35 = sphi 0, %s34
      %s51 = sphi 0, %s35
      %s55 = sphi 0, %s55
      %s57 = sphi 0, %s55
      %s58 = sphi 0, %s57
      %s72 = sphi 0, %s58
      %s76 = sphi 0, %s76
      %s78 = sphi 0, %s76
      %s79 = sphi 0, %s78
      %s93 = sphi 0, %s79
      %s97 = sphi 0, %s97
      %s99 = sphi 0, %s97
      %s100 = sphi 0, %s99
      %s114 = sphi 0, %s100
      %s118 = sphi 0, %s118
      %s120 = sphi 0, %s118
      %s121 = sphi 0, %s120
      %s135 = sphi 0, %s121
      %s139 = sphi 0, %s139
      %s141 = sphi 0, %s139
      %s142 = sphi 0, %s141
      %s156 = sphi 0, %s142
      %s162 = sphi 0, %s164
      %s165 = sphi 0, %s162
      %s166 = sphi 0, %s165
      %s182 = sphi 0, %s166
    $region4: #{tpu_custom_call.1} parent=1 // loop_header_branch
      %24 = sbr.rel (%p22) target = $region8
    $region5: #{tpu_custom_call.1} parent=1 // loop_body
      %s26 = ssub.s32 %s21, 1
      %s27 = ssub.s32 %s21, 2
      %s28 = sadd.s32 %s21, 1
      %s29 = ssub.s32 %s21, %s28
      %p30 = scmp.eq.s32.totalorder %s29, 0
      %s32 = sadd.s32 %s31, 1
      %s33 = scalar_select %p30, %s31, %s32
      %p36 = pneg %p30
      %p37 = scmp.eq.s32.totalorder %s21, 1
      %p38 = por %p36, %p37
      %p39 = scmp.ne.s32.totalorder %s31, %s34
      %p40 = scmp.eq.s32.totalorder %s21, 0
      %p41 = por %p39, %p40
      %p42 = scmp.ne.s32.totalorder %s31, %s34
      %p43 = scmp.eq.s32.totalorder %s26, 1
      %p44 = por %p42, %p43
      %p45 = scmp.ne.s32.totalorder %s34, %s35
      %p46 = scmp.eq.s32.totalorder %s26, 0
      %p47 = por %p45, %p46
      %p48 = scmp.ne.s32.totalorder %s34, %s35
      %p49 = scmp.eq.s32.totalorder %s27, 1
      %p50 = por %p48, %p49
      %p52 = scmp.ne.s32.totalorder %s35, %s51
      %p53 = scmp.eq.s32.totalorder %s27, 0
      %p54 = por %p52, %p53
      %s56 = sadd.s32 %s55, 1
      %p59 = scmp.eq.s32.totalorder %s21, 1
      %p60 = scmp.ne.s32.totalorder %s55, %s57
      %p61 = scmp.eq.s32.totalorder %s21, 0
      %p62 = por %p60, %p61
      %p63 = scmp.ne.s32.totalorder %s55, %s57
      %p64 = scmp.eq.s32.totalorder %s26, 1
      %p65 = por %p63, %p64
      %p66 = scmp.ne.s32.totalorder %s57, %s58
      %p67 = scmp.eq.s32.totalorder %s26, 0
      %p68 = por %p66, %p67
      %p69 = scmp.ne.s32.totalorder %s57, %s58
      %p70 = scmp.eq.s32.totalorder %s27, 1
      %p71 = por %p69, %p70
      %p73 = scmp.ne.s32.totalorder %s58, %s72
      %p74 = scmp.eq.s32.totalorder %s27, 0
      %p75 = por %p73, %p74
      %s77 = sadd.s32 %s76, 1
      %p80 = scmp.eq.s32.totalorder %s21, 1
      %p81 = scmp.ne.s32.totalorder %s76, %s78
      %p82 = scmp.eq.s32.totalorder %s21, 0
      %p83 = por %p81, %p82
      %p84 = scmp.ne.s32.totalorder %s76, %s78
      %p85 = scmp.eq.s32.totalorder %s26, 1
      %p86 = por %p84, %p85
      %p87 = scmp.ne.s32.totalorder %s78, %s79
      %p88 = scmp.eq.s32.totalorder %s26, 0
      %p89 = por %p87, %p88
      %p90 = scmp.ne.s32.totalorder %s78, %s79
      %p91 = scmp.eq.s32.totalorder %s27, 1
      %p92 = por %p90, %p91
      %p94 = scmp.ne.s32.totalorder %s79, %s93
      %p95 = scmp.eq.s32.totalorder %s27, 0
      %p96 = por %p94, %p95
      %s98 = sadd.s32 %s97, 1
      %p101 = scmp.eq.s32.totalorder %s21, 1
      %p102 = scmp.ne.s32.totalorder %s97, %s99
      %p103 = scmp.eq.s32.totalorder %s21, 0
      %p104 = por %p102, %p103
      %p105 = scmp.ne.s32.totalorder %s97, %s99
      %p106 = scmp.eq.s32.totalorder %s26, 1
      %p107 = por %p105, %p106
      %p108 = scmp.ne.s32.totalorder %s99, %s100
      %p109 = scmp.eq.s32.totalorder %s26, 0
      %p110 = por %p108, %p109
      %p111 = scmp.ne.s32.totalorder %s99, %s100
      %p112 = scmp.eq.s32.totalorder %s27, 1
      %p113 = por %p111, %p112
      %p115 = scmp.ne.s32.totalorder %s100, %s114
      %p116 = scmp.eq.s32.totalorder %s27, 0
      %p117 = por %p115, %p116
      %s119 = sadd.s32 %s118, 1
      %p122 = scmp.eq.s32.totalorder %s21, 1
      %p123 = scmp.ne.s32.totalorder %s118, %s120
      %p124 = scmp.eq.s32.totalorder %s21, 0
      %p125 = por %p123, %p124
      %p126 = scmp.ne.s32.totalorder %s118, %s120
      %p127 = scmp.eq.s32.totalorder %s26, 1
      %p128 = por %p126, %p127
      %p129 = scmp.ne.s32.totalorder %s120, %s121
      %p130 = scmp.eq.s32.totalorder %s26, 0
      %p131 = por %p129, %p130
      %p132 = scmp.ne.s32.totalorder %s120, %s121
      %p133 = scmp.eq.s32.totalorder %s27, 1
      %p134 = por %p132, %p133
      %p136 = scmp.ne.s32.totalorder %s121, %s135
      %p137 = scmp.eq.s32.totalorder %s27, 0
      %p138 = por %p136, %p137
      %s140 = sadd.s32 %s139, 1
      %p143 = scmp.eq.s32.totalorder %s21, 1
      %p144 = scmp.ne.s32.totalorder %s139, %s141
      %p145 = scmp.eq.s32.totalorder %s21, 0
      %p146 = por %p144, %p145
      %p147 = scmp.ne.s32.totalorder %s139, %s141
      %p148 = scmp.eq.s32.totalorder %s26, 1
      %p149 = por %p147, %p148
      %p150 = scmp.ne.s32.totalorder %s141, %s142
      %p151 = scmp.eq.s32.totalorder %s26, 0
      %p152 = por %p150, %p151
      %p153 = scmp.ne.s32.totalorder %s141, %s142
      %p154 = scmp.eq.s32.totalorder %s27, 1
      %p155 = por %p153, %p154
      %p157 = scmp.ne.s32.totalorder %s142, %s156
      %p158 = scmp.eq.s32.totalorder %s27, 0
      %p159 = por %p157, %p158
      %s160 = ssub.s32 %s21, %s28
      %p161 = scmp.eq.s32.totalorder %s160, 0
      %s163 = sadd.s32 %s162, 1
      %s164 = scalar_select %p161, %s162, %s163
      %p167 = pneg %p161
      %p168 = scmp.eq.s32.totalorder %s21, 1
      %p169 = por %p167, %p168
      %p170 = scmp.ne.s32.totalorder %s162, %s165
      %p171 = scmp.eq.s32.totalorder %s21, 0
      %p172 = por %p170, %p171
      %p173 = scmp.ne.s32.totalorder %s162, %s165
      %p174 = scmp.eq.s32.totalorder %s26, 1
      %p175 = por %p173, %p174
      %p176 = scmp.ne.s32.totalorder %s165, %s166
      %p177 = scmp.eq.s32.totalorder %s26, 0
      %p178 = por %p176, %p177
      %p179 = scmp.ne.s32.totalorder %s165, %s166
      %p180 = scmp.eq.s32.totalorder %s27, 1
      %p181 = por %p179, %p180
      %p183 = scmp.ne.s32.totalorder %s166, %s182
      %p184 = scmp.eq.s32.totalorder %s27, 0
      %p185 = por %p183, %p184
      %p186 = scmp.le.s32.totalorder 1, %s21
      %p187 = scmp.lt.s32.totalorder %s21, 3
      %p188 = pnand %p186, %p187
      %p189 = pneg %p188
      // Predicated region
      $region9: #{tpu_custom_call.1} parent=5 // pred_check
        _
      $region10: #{tpu_custom_call.1} parent=5 // pred_check_branch
        %191 = sbr.rel (%p188) target = $region12
      $region11: #{tpu_custom_call.1} parent=5 // pred_region
        %s192 = ssub.s32 %s21, 1
        // Predicated region
        $region13: #{tpu_custom_call.1} parent=11 // pred_check
          %p193 = pneg %p68
        $region14: #{tpu_custom_call.1} parent=11 // pred_check_branch
          %195 = sbr.rel (%p193) target = $region16
        $region15: #{tpu_custom_call.1} parent=11 // pred_region
          %s197 = ssub.s32 512, 512
          %198 = vsyncadd [#allocation6], %s197
          %s199 = sshll.u32 [#allocation5], 4
          %s200 = int_to_ptr.vmem [resolvable:$true] %s199
          %205 = dma.hbm_to_vmem [thread:$0]  %s1, 512, %s200, [#allocation6], 128, 128, 8
        $region16: #{tpu_custom_call.1} parent=11 // pred_fallthru
          _
        // Predicated region
        $region17: #{tpu_custom_call.1} parent=11 // pred_check
          %p206 = pneg %p89
        $region18: #{tpu_custom_call.1} parent=11 // pred_check_branch
          %208 = sbr.rel (%p206) target = $region20
        $region19: #{tpu_custom_call.1} parent=11 // pred_region
          %s210 = ssub.s32 16, 16
          %211 = vsyncadd [#allocation6], %s210
          %s213 = sshll.u32 [#allocation7], 4
          %s214 = int_to_ptr.vmem [resolvable:$true] %s213
          %216 = dma.hbm_to_vmem [thread:$0]  %s2, 16, %s214, [#allocation6]
        $region20: #{tpu_custom_call.1} parent=11 // pred_fallthru
          _
        // Predicated region
        $region21: #{tpu_custom_call.1} parent=11 // pred_check
          %p217 = pneg %p110
        $region22: #{tpu_custom_call.1} parent=11 // pred_check_branch
          %219 = sbr.rel (%p217) target = $region24
        $region23: #{tpu_custom_call.1} parent=11 // pred_region
          %s221 = ssub.s32 512, 512
          %222 = vsyncadd [#allocation9], %s221
          %s223 = sshll.u32 [#allocation8], 4
          %s224 = int_to_ptr.vmem [resolvable:$true] %s223
          %229 = dma.hbm_to_vmem [thread:$0]  %s3, 512, %s224, [#allocation9], 128, 128, 8
        $region24: #{tpu_custom_call.1} parent=11 // pred_fallthru
          _
        // Predicated region
        $region25: #{tpu_custom_call.1} parent=11 // pred_check
          %p230 = pneg %p131
        $region26: #{tpu_custom_call.1} parent=11 // pred_check_branch
          %232 = sbr.rel (%p230) target = $region28
        $region27: #{tpu_custom_call.1} parent=11 // pred_region
          %s234 = ssub.s32 16, 16
          %235 = vsyncadd [#allocation9], %s234
          %s237 = sshll.u32 [#allocation10], 4
          %s238 = int_to_ptr.vmem [resolvable:$true] %s237
          %240 = dma.hbm_to_vmem [thread:$0]  %s4, 16, %s238, [#allocation9]
        $region28: #{tpu_custom_call.1} parent=11 // pred_fallthru
          _
        // Predicated region
        $region29: #{tpu_custom_call.1} parent=11 // pred_check
          %p241 = pneg %p152
        $region30: #{tpu_custom_call.1} parent=11 // pred_check_branch
          %243 = sbr.rel (%p241) target = $region32
        $region31: #{tpu_custom_call.1} parent=11 // pred_region
          %s245 = ssub.s32 16384, 16384
          %246 = vsyncadd [#allocation12], %s245
          %s247 = sshll.u32 [#allocation11], 4
          %s248 = int_to_ptr.vmem [resolvable:$true] %s247
          %253 = dma.hbm_to_vmem [thread:$0]  %s5, 16384, %s248, [#allocation12], 128, 128, 8
        $region32: #{tpu_custom_call.1} parent=11 // pred_fallthru
          _
      $region12: #{tpu_custom_call.1} parent=5 // pred_fallthru
        _
      %p254 = scmp.lt.s32.totalorder %s21, 2
      // Predicated region
      $region33: #{tpu_custom_call.1} parent=5 // pred_check
        %p255 = pneg %p254
      $region34: #{tpu_custom_call.1} parent=5 // pred_check_branch
        %257 = sbr.rel (%p255) target = $region36
      $region35: #{tpu_custom_call.1} parent=5 // pred_region
        // Predicated region
        $region37: #{tpu_custom_call.1} parent=35 // pred_check
          %p258 = pneg %p41
        $region38: #{tpu_custom_call.1} parent=35 // pred_check_branch
          %260 = sbr.rel (%p258) target = $region40
        $region39: #{tpu_custom_call.1} parent=35 // pred_region
          %s261 = sand.u32 %s31, 1
          %s262 = scalar_lea.sflag [#allocation3], %s261
          %s263 = sand.u32 %s31, 1
          %s264 = smul.addr %s263, 256
          %s265 = scalar_lea.vmem [#allocation2], %s264
          %s266 = smul.u32 4, %s21
          %s268 = ssub.s32 4096, 4096
          %269 = vsyncadd %s262, %s268
          %s270 = smul.addr %s266, 8
          %s271 = smul.addr %s270, 128
          %s272 = scalar_lea.hbm %s0, %s271
          %s273 = sshll.u32 %s265, 4
          %s274 = int_to_ptr.vmem [resolvable:$true] %s273
          %279 = dma.hbm_to_vmem [thread:$0]  %s272, 4096, %s274, %s262, 128, 128, 8
        $region40: #{tpu_custom_call.1} parent=35 // pred_fallthru
          _
      $region36: #{tpu_custom_call.1} parent=5 // pred_fallthru
        _
      %p280 = scmp.le.s32.totalorder 1, %s21
      %p281 = scmp.lt.s32.totalorder %s21, 3
      %p282 = pnand %p280, %p281
      %p283 = pneg %p282
      // Predicated region
      $region41: #{tpu_custom_call.1} parent=5 // pred_check
        _
      $region42: #{tpu_custom_call.1} parent=5 // pred_check_branch
        %285 = sbr.rel (%p282) target = $region44
      $region43: #{tpu_custom_call.1} parent=5 // pred_region
        %s286 = ssub.s32 %s21, 1
        %s287 = sand.u32 %s34, 1
        %s288 = scalar_lea.sflag [#allocation3], %s287
        %s289 = sand.u32 %s34, 1
        %s290 = smul.addr %s289, 256
        %s291 = scalar_lea.vmem [#allocation2], %s290
        // Predicated region
        $region45: #{tpu_custom_call.1} parent=43 // pred_check
          %p292 = pneg %p47
        $region46: #{tpu_custom_call.1} parent=43 // pred_check_branch
          %294 = sbr.rel (%p292) target = $region48
        $region47: #{tpu_custom_call.1} parent=43 // pred_region
          %295 = dma.done %s288, 4096
        $region48: #{tpu_custom_call.1} parent=43 // pred_fallthru
          _
        // Predicated region
        $region49: #{tpu_custom_call.1} parent=43 // pred_check
          %p296 = pneg %p68
        $region50: #{tpu_custom_call.1} parent=43 // pred_check_branch
          %298 = sbr.rel (%p296) target = $region52
        $region51: #{tpu_custom_call.1} parent=43 // pred_region
          %299 = dma.done [#allocation6], 512
        $region52: #{tpu_custom_call.1} parent=43 // pred_fallthru
          _
        // Predicated region
        $region53: #{tpu_custom_call.1} parent=43 // pred_check
          %p300 = pneg %p89
        $region54: #{tpu_custom_call.1} parent=43 // pred_check_branch
          %302 = sbr.rel (%p300) target = $region56
        $region55: #{tpu_custom_call.1} parent=43 // pred_region
          %303 = dma.done [#allocation6], 16
        $region56: #{tpu_custom_call.1} parent=43 // pred_fallthru
          _
        // Predicated region
        $region57: #{tpu_custom_call.1} parent=43 // pred_check
          %p304 = pneg %p110
        $region58: #{tpu_custom_call.1} parent=43 // pred_check_branch
          %306 = sbr.rel (%p304) target = $region60
        $region59: #{tpu_custom_call.1} parent=43 // pred_region
          %307 = dma.done [#allocation9], 512
        $region60: #{tpu_custom_call.1} parent=43 // pred_fallthru
          _
        // Predicated region
        $region61: #{tpu_custom_call.1} parent=43 // pred_check
          %p308 = pneg %p131
        $region62: #{tpu_custom_call.1} parent=43 // pred_check_branch
          %310 = sbr.rel (%p308) target = $region64
        $region63: #{tpu_custom_call.1} parent=43 // pred_region
          %311 = dma.done [#allocation9], 16
        $region64: #{tpu_custom_call.1} parent=43 // pred_fallthru
          _
        // Predicated region
        $region65: #{tpu_custom_call.1} parent=43 // pred_check
          %p312 = pneg %p152
        $region66: #{tpu_custom_call.1} parent=43 // pred_check_branch
          %314 = sbr.rel (%p312) target = $region68
        $region67: #{tpu_custom_call.1} parent=43 // pred_region
          %315 = dma.done [#allocation12], 16384
        $region68: #{tpu_custom_call.1} parent=43 // pred_fallthru
          _
        %s316 = sand.u32 %s34, 1
        %s317 = scalar_lea.sflag [#allocation3], %s316
        %s318 = sand.u32 %s34, 1
        %s319 = smul.addr %s318, 256
        %s320 = scalar_lea.vmem [#allocation2], %s319
        %p321 = pneg %p47
        %p322 = pneg %p44
        %p323 = pneg %p68
        %p324 = pneg %p65
        %p325 = pneg %p89
        %p326 = pneg %p86
        %p327 = pneg %p110
        %p328 = pneg %p107
        %p329 = pneg %p131
        %p330 = pneg %p128
        %p331 = pneg %p152
        %p332 = pneg %p149
        %p333 = pneg %p178
        %p334 = pneg %p175
        %s335 = sand.u32 %s165, 1
        %s336 = scalar_lea.sflag [#allocation4], %s335
        %s337 = sand.u32 %s165, 1
        %s338 = smul.addr %s337, 256
        %s339 = scalar_lea.vmem [#allocation13], %s338
        %s340 = smul.u32 4, %s26
        %s341 = smul.u32 4, %s26
        %v342 = vld [vmem:[%s291] sm:$0xff]
        %v343 = vld [vmem:[%s291 + $0x8] sm:$0xff]
        %v344 = vld [vmem:[%s291 + $0x10] sm:$0xff]
        %v345 = vld [vmem:[%s291 + $0x18] sm:$0xff]
        %v346 = vld [vmem:[%s291 + $0x20] sm:$0xff]
        %v347 = vld [vmem:[%s291 + $0x28] sm:$0xff]
        %v348 = vld [vmem:[%s291 + $0x30] sm:$0xff]
        %v349 = vld [vmem:[%s291 + $0x38] sm:$0xff]
        %v350 = vld [vmem:[%s291 + $0x40] sm:$0xff]
        %v351 = vld [vmem:[%s291 + $0x48] sm:$0xff]
        %v352 = vld [vmem:[%s291 + $0x50] sm:$0xff]
        %v353 = vld [vmem:[%s291 + $0x58] sm:$0xff]
        %v354 = vld [vmem:[%s291 + $0x60] sm:$0xff]
        %v355 = vld [vmem:[%s291 + $0x68] sm:$0xff]
        %v356 = vld [vmem:[%s291 + $0x70] sm:$0xff]
        %v357 = vld [vmem:[%s291 + $0x78] sm:$0xff]
        %v358 = vld [vmem:[%s291 + $0x80] sm:$0xff]
        %v359 = vld [vmem:[%s291 + $0x88] sm:$0xff]
        %v360 = vld [vmem:[%s291 + $0x90] sm:$0xff]
        %v361 = vld [vmem:[%s291 + $0x98] sm:$0xff]
        %v362 = vld [vmem:[%s291 + $0xa0] sm:$0xff]
        %v363 = vld [vmem:[%s291 + $0xa8] sm:$0xff]
        %v364 = vld [vmem:[%s291 + $0xb0] sm:$0xff]
        %v365 = vld [vmem:[%s291 + $0xb8] sm:$0xff]
        %v366 = vld [vmem:[%s291 + $0xc0] sm:$0xff]
        %v367 = vld [vmem:[%s291 + $0xc8] sm:$0xff]
        %v368 = vld [vmem:[%s291 + $0xd0] sm:$0xff]
        %v369 = vld [vmem:[%s291 + $0xd8] sm:$0xff]
        %v370 = vld [vmem:[%s291 + $0xe0] sm:$0xff]
        %v371 = vld [vmem:[%s291 + $0xe8] sm:$0xff]
        %v372 = vld [vmem:[%s291 + $0xf0] sm:$0xff]
        %v373 = vld [vmem:[%s291 + $0xf8] sm:$0xff]
        %v374 = vld [vmem:[#allocation5] sm:$0xff]
        %v375 = vld [vmem:[#allocation5 + $0x8] sm:$0xff]
        %v376 = vld [vmem:[#allocation5 + $0x10] sm:$0xff]
        %v377 = vld [vmem:[#allocation5 + $0x18] sm:$0xff]
        %v378 = vld [vmem:[#allocation7] sm:$0x1]
        %v380 = vlaneseq
        %v381 = vshrl.u32 %v380, 7
        %v382 = vsub.s32 0, %v381
        %v383 = vrot.slane %v378, %v382
        %vm385 = vcmask 261120
        %v387 = vsel %vm385, %v342, 0
        %v390 = vsel %vm385, %v343, 0
        %v393 = vsel %vm385, %v344, 0
        %v396 = vsel %vm385, %v345, 0
        %v399 = vsel %vm385, %v346, 0
        %v402 = vsel %vm385, %v347, 0
        %v405 = vsel %vm385, %v348, 0
        %v408 = vsel %vm385, %v349, 0
        %v411 = vsel %vm385, %v350, 0
        %v414 = vsel %vm385, %v351, 0
        %v417 = vsel %vm385, %v352, 0
        %v420 = vsel %vm385, %v353, 0
        %v423 = vsel %vm385, %v354, 0
        %v426 = vsel %vm385, %v355, 0
        %v429 = vsel %vm385, %v356, 0
        %v432 = vsel %vm385, %v357, 0
        %v435 = vsel %vm385, %v358, 0
        %v438 = vsel %vm385, %v359, 0
        %v441 = vsel %vm385, %v360, 0
        %v444 = vsel %vm385, %v361, 0
        %v447 = vsel %vm385, %v362, 0
        %v450 = vsel %vm385, %v363, 0
        %v453 = vsel %vm385, %v364, 0
        %v456 = vsel %vm385, %v365, 0
        %v459 = vsel %vm385, %v366, 0
        %v462 = vsel %vm385, %v367, 0
        %v465 = vsel %vm385, %v368, 0
        %v468 = vsel %vm385, %v369, 0
        %v471 = vsel %vm385, %v370, 0
        %v474 = vsel %vm385, %v371, 0
        %v477 = vsel %vm385, %v372, 0
        %v480 = vsel %vm385, %v373, 0
        %482 = vmatprep.subr.mxu0 0.0
        %483 = vmatpush1.msra.mxu0 %v374
        %484 = vmatprep.subr.mxu0 0.0
        %485 = vmatpush1.msra.mxu0 %v375
        %486 = vmatprep.subr.mxu0 0.0
        %487 = vmatpush1.msra.mxu0 %v376
        %488 = vmatprep.subr.mxu0 0.0
        %489 = vmatpush1.msra.mxu0 %v377
        %490 = vmatprep.subr.mxu0 0.0
        %491 = vmatpush1.msra.mxu0 0.0
        %492 = vmatprep.subr.mxu0 0.0
        %493 = vmatpush1.msra.mxu0 0.0
        %494 = vmatprep.subr.mxu0 0.0
        %495 = vmatpush1.msra.mxu0 0.0
        %496 = vmatprep.subr.mxu0 0.0
        %497 = vmatpush1.msra.mxu0 0.0
        %498 = vmatprep.subr.mxu0 0.0
        %499 = vmatpush1.msra.mxu0 0.0
        %500 = vmatprep.subr.mxu0 0.0
        %501 = vmatpush1.msra.mxu0 0.0
        %502 = vmatprep.subr.mxu0 0.0
        %503 = vmatpush1.msra.mxu0 0.0
        %504 = vmatprep.subr.mxu0 0.0
        %505 = vmatpush1.msra.mxu0 0.0
        %506 = vmatprep.subr.mxu0 0.0
        %507 = vmatpush1.msra.mxu0 0.0
        %508 = vmatprep.subr.mxu0 0.0
        %509 = vmatpush1.msra.mxu0 0.0
        %510 = vmatprep.subr.mxu0 0.0
        %511 = vmatpush1.msra.mxu0 0.0
        %512 = vmatprep.subr.mxu0 0.0
        %513 = vmatpush1.msra.mxu0 0.0
        %514 = vmatprep.subr.mxu0 0.0
        %515 = vmatpush1.msra.mxu0 0.0
        %516 = vmatprep.subr.mxu0 0.0
        %517 = vmatpush1.msra.mxu0 0.0
        %518 = vmatprep.subr.mxu0 0.0
        %519 = vmatpush1.msra.mxu0 0.0
        %520 = vmatprep.subr.mxu0 0.0
        %521 = vmatpush1.msra.mxu0 0.0
        %522 = vmatprep.subr.mxu0 0.0
        %523 = vmatpush1.msra.mxu0 0.0
        %524 = vmatprep.subr.mxu0 0.0
        %525 = vmatpush1.msra.mxu0 0.0
        %526 = vmatprep.subr.mxu0 0.0
        %527 = vmatpush1.msra.mxu0 0.0
        %528 = vmatprep.subr.mxu0 0.0
        %529 = vmatpush1.msra.mxu0 0.0
        %530 = vmatprep.subr.mxu0 0.0
        %531 = vmatpush1.msra.mxu0 0.0
        %532 = vmatprep.subr.mxu0 0.0
        %533 = vmatpush1.msra.mxu0 0.0
        %534 = vmatprep.subr.mxu0 0.0
        %535 = vmatpush1.msra.mxu0 0.0
        %536 = vmatprep.subr.mxu0 0.0
        %537 = vmatpush1.msra.mxu0 0.0
        %538 = vmatprep.subr.mxu0 0.0
        %539 = vmatpush1.msra.mxu0 0.0
        %540 = vmatprep.subr.mxu0 0.0
        %541 = vmatpush1.msra.mxu0 0.0
        %542 = vmatprep.subr.mxu0 0.0
        %543 = vmatpush1.msra.mxu0 0.0
        %544 = vmatprep.subr.mxu0 0.0
        %545 = vmatpush1.msra.mxu0 0.0
        %546 = vmatprep.mubr.f32.mxu0 0.0
        %547 = vmatmul.mubr.f32.gmra.mrb[0].mxu0 %v387
        %v548 = vpop.f32.mrb[0].mxu0
        %v549 = vadd.f32 %v383, %v548
        %v550 = vpop.f32.mrb[0].mxu0
        %551 = vmatprep.mubr.f32.mxu0 0.0
        %552 = vmatmul.mubr.f32.gmra.mrb[0].mxu0 %v390
        %v553 = vpop.f32.mrb[0].mxu0
        %v554 = vadd.f32 %v383, %v553
        %v555 = vpop.f32.mrb[0].mxu0
        %556 = vmatprep.mubr.f32.mxu0 0.0
        %557 = vmatmul.mubr.f32.gmra.mrb[0].mxu0 %v393
        %v558 = vpop.f32.mrb[0].mxu0
        %v559 = vadd.f32 %v383, %v558
        %v560 = vpop.f32.mrb[0].mxu0
        %561 = vmatprep.mubr.f32.mxu0 0.0
        %562 = vmatmul.mubr.f32.gmra.mrb[0].mxu0 %v396
        %v563 = vpop.f32.mrb[0].mxu0
        %v564 = vadd.f32 %v383, %v563
        %v565 = vpop.f32.mrb[0].mxu0
        %566 = vmatprep.mubr.f32.mxu0 0.0
        %567 = vmatmul.mubr.f32.gmra.mrb[0].mxu0 %v399
        %v568 = vpop.f32.mrb[0].mxu0
        %v569 = vadd.f32 %v383, %v568
        %v570 = vpop.f32.mrb[0].mxu0
        %571 = vmatprep.mubr.f32.mxu0 0.0
        %572 = vmatmul.mubr.f32.gmra.mrb[0].mxu0 %v402
        %v573 = vpop.f32.mrb[0].mxu0
        %v574 = vadd.f32 %v383, %v573
        %v575 = vpop.f32.mrb[0].mxu0
        %576 = vmatprep.mubr.f32.mxu0 0.0
        %577 = vmatmul.mubr.f32.gmra.mrb[0].mxu0 %v405
        %v578 = vpop.f32.mrb[0].mxu0
        %v579 = vadd.f32 %v383, %v578
        %v580 = vpop.f32.mrb[0].mxu0
        %581 = vmatprep.mubr.f32.mxu0 0.0
        %582 = vmatmul.mubr.f32.gmra.mrb[0].mxu0 %v408
        %v583 = vpop.f32.mrb[0].mxu0
        %v584 = vadd.f32 %v383, %v583
        %v585 = vpop.f32.mrb[0].mxu0
        %586 = vmatprep.mubr.f32.mxu0 0.0
        %587 = vmatmul.mubr.f32.gmra.mrb[0].mxu0 %v411
        %v588 = vpop.f32.mrb[0].mxu0
        %v589 = vadd.f32 %v383, %v588
        %v590 = vpop.f32.mrb[0].mxu0
        %591 = vmatprep.mubr.f32.mxu0 0.0
        %592 = vmatmul.mubr.f32.gmra.mrb[0].mxu0 %v414
        %v593 = vpop.f32.mrb[0].mxu0
        %v594 = vadd.f32 %v383, %v593
        %v595 = vpop.f32.mrb[0].mxu0
        %596 = vmatprep.mubr.f32.mxu0 0.0
        %597 = vmatmul.mubr.f32.gmra.mrb[0].mxu0 %v417
        %v598 = vpop.f32.mrb[0].mxu0
        %v599 = vadd.f32 %v383, %v598
        %v600 = vpop.f32.mrb[0].mxu0
        %601 = vmatprep.mubr.f32.mxu0 0.0
        %602 = vmatmul.mubr.f32.gmra.mrb[0].mxu0 %v420
        %v603 = vpop.f32.mrb[0].mxu0
        %v604 = vadd.f32 %v383, %v603
        %v605 = vpop.f32.mrb[0].mxu0
        %606 = vmatprep.mubr.f32.mxu0 0.0
        %607 = vmatmul.mubr.f32.gmra.mrb[0].mxu0 %v423
        %v608 = vpop.f32.mrb[0].mxu0
        %v609 = vadd.f32 %v383, %v608
        %v610 = vpop.f32.mrb[0].mxu0
        %611 = vmatprep.mubr.f32.mxu0 0.0
        %612 = vmatmul.mubr.f32.gmra.mrb[0].mxu0 %v426
        %v613 = vpop.f32.mrb[0].mxu0
        %v614 = vadd.f32 %v383, %v613
        %v615 = vpop.f32.mrb[0].mxu0
        %616 = vmatprep.mubr.f32.mxu0 0.0
        %617 = vmatmul.mubr.f32.gmra.mrb[0].mxu0 %v429
        %v618 = vpop.f32.mrb[0].mxu0
        %v619 = vadd.f32 %v383, %v618
        %v620 = vpop.f32.mrb[0].mxu0
        %621 = vmatprep.mubr.f32.mxu0 0.0
        %622 = vmatmul.mubr.f32.gmra.mrb[0].mxu0 %v432
        %v623 = vpop.f32.mrb[0].mxu0
        %v624 = vadd.f32 %v383, %v623
        %v625 = vpop.f32.mrb[0].mxu0
        %626 = vmatprep.mubr.f32.mxu0 0.0
        %627 = vmatmul.mubr.f32.gmra.mrb[0].mxu0 %v435
        %v628 = vpop.f32.mrb[0].mxu0
        %v629 = vadd.f32 %v383, %v628
        %v630 = vpop.f32.mrb[0].mxu0
        %631 = vmatprep.mubr.f32.mxu0 0.0
        %632 = vmatmul.mubr.f32.gmra.mrb[0].mxu0 %v438
        %v633 = vpop.f32.mrb[0].mxu0
        %v634 = vadd.f32 %v383, %v633
        %v635 = vpop.f32.mrb[0].mxu0
        %636 = vmatprep.mubr.f32.mxu0 0.0
        %637 = vmatmul.mubr.f32.gmra.mrb[0].mxu0 %v441
        %v638 = vpop.f32.mrb[0].mxu0
        %v639 = vadd.f32 %v383, %v638
        %v640 = vpop.f32.mrb[0].mxu0
        %641 = vmatprep.mubr.f32.mxu0 0.0
        %642 = vmatmul.mubr.f32.gmra.mrb[0].mxu0 %v444
        %v643 = vpop.f32.mrb[0].mxu0
        %v644 = vadd.f32 %v383, %v643
        %v645 = vpop.f32.mrb[0].mxu0
        %646 = vmatprep.mubr.f32.mxu0 0.0
        %647 = vmatmul.mubr.f32.gmra.mrb[0].mxu0 %v447
        %v648 = vpop.f32.mrb[0].mxu0
        %v649 = vadd.f32 %v383, %v648
        %v650 = vpop.f32.mrb[0].mxu0
        %651 = vmatprep.mubr.f32.mxu0 0.0
        %652 = vmatmul.mubr.f32.gmra.mrb[0].mxu0 %v450
        %v653 = vpop.f32.mrb[0].mxu0
        %v654 = vadd.f32 %v383, %v653
        %v655 = vpop.f32.mrb[0].mxu0
        %656 = vmatprep.mubr.f32.mxu0 0.0
        %657 = vmatmul.mubr.f32.gmra.mrb[0].mxu0 %v453
        %v658 = vpop.f32.mrb[0].mxu0
        %v659 = vadd.f32 %v383, %v658
        %v660 = vpop.f32.mrb[0].mxu0
        %661 = vmatprep.mubr.f32.mxu0 0.0
        %662 = vmatmul.mubr.f32.gmra.mrb[0].mxu0 %v456
        %v663 = vpop.f32.mrb[0].mxu0
        %v664 = vadd.f32 %v383, %v663
        %v665 = vpop.f32.mrb[0].mxu0
        %666 = vmatprep.mubr.f32.mxu0 0.0
        %667 = vmatmul.mubr.f32.gmra.mrb[0].mxu0 %v459
        %v668 = vpop.f32.mrb[0].mxu0
        %v669 = vadd.f32 %v383, %v668
        %v670 = vpop.f32.mrb[0].mxu0
        %671 = vmatprep.mubr.f32.mxu0 0.0
        %672 = vmatmul.mubr.f32.gmra.mrb[0].mxu0 %v462
        %v673 = vpop.f32.mrb[0].mxu0
        %v674 = vadd.f32 %v383, %v673
        %v675 = vpop.f32.mrb[0].mxu0
        %676 = vmatprep.mubr.f32.mxu0 0.0
        %677 = vmatmul.mubr.f32.gmra.mrb[0].mxu0 %v465
        %v678 = vpop.f32.mrb[0].mxu0
        %v679 = vadd.f32 %v383, %v678
        %v680 = vpop.f32.mrb[0].mxu0
        %681 = vmatprep.mubr.f32.mxu0 0.0
        %682 = vmatmul.mubr.f32.gmra.mrb[0].mxu0 %v468
        %v683 = vpop.f32.mrb[0].mxu0
        %v684 = vadd.f32 %v383, %v683
        %v685 = vpop.f32.mrb[0].mxu0
        %686 = vmatprep.mubr.f32.mxu0 0.0
        %687 = vmatmul.mubr.f32.gmra.mrb[0].mxu0 %v471
        %v688 = vpop.f32.mrb[0].mxu0
        %v689 = vadd.f32 %v383, %v688
        %v690 = vpop.f32.mrb[0].mxu0
        %691 = vmatprep.mubr.f32.mxu0 0.0
        %692 = vmatmul.mubr.f32.gmra.mrb[0].mxu0 %v474
        %v693 = vpop.f32.mrb[0].mxu0
        %v694 = vadd.f32 %v383, %v693
        %v695 = vpop.f32.mrb[0].mxu0
        %696 = vmatprep.mubr.f32.mxu0 0.0
        %697 = vmatmul.mubr.f32.gmra.mrb[0].mxu0 %v477
        %v698 = vpop.f32.mrb[0].mxu0
        %v699 = vadd.f32 %v383, %v698
        %v700 = vpop.f32.mrb[0].mxu0
        %701 = vmatprep.mubr.f32.mxu0 0.0
        %702 = vmatmul.mubr.f32.gmra.mrb[0].mxu0 %v480
        %v703 = vpop.f32.mrb[0].mxu0
        %v704 = vadd.f32 %v383, %v703
        %v705 = vpop.f32.mrb[0].mxu0
        %706 = vdwg.mxu0
        %739 = vrot.lane.b32.xlu0 %v549, 120
        %v740 = vpop.permute.xlu0 %739
        %741 = vrot.lane.b32.xlu0 %v554, 120
        %v742 = vpop.permute.xlu0 %741
        %743 = vrot.lane.b32.xlu0 %v559, 120
        %v744 = vpop.permute.xlu0 %743
        %745 = vrot.lane.b32.xlu0 %v564, 120
        %v746 = vpop.permute.xlu0 %745
        %747 = vrot.lane.b32.xlu0 %v569, 120
        %v748 = vpop.permute.xlu0 %747
        %749 = vrot.lane.b32.xlu0 %v574, 120
        %v750 = vpop.permute.xlu0 %749
        %751 = vrot.lane.b32.xlu0 %v579, 120
        %v752 = vpop.permute.xlu0 %751
        %753 = vrot.lane.b32.xlu0 %v584, 120
        %v754 = vpop.permute.xlu0 %753
        %755 = vrot.lane.b32.xlu0 %v589, 120
        %v756 = vpop.permute.xlu0 %755
        %757 = vrot.lane.b32.xlu0 %v594, 120
        %v758 = vpop.permute.xlu0 %757
        %759 = vrot.lane.b32.xlu0 %v599, 120
        %v760 = vpop.permute.xlu0 %759
        %761 = vrot.lane.b32.xlu0 %v604, 120
        %v762 = vpop.permute.xlu0 %761
        %763 = vrot.lane.b32.xlu0 %v609, 120
        %v764 = vpop.permute.xlu0 %763
        %765 = vrot.lane.b32.xlu0 %v614, 120
        %v766 = vpop.permute.xlu0 %765
        %767 = vrot.lane.b32.xlu0 %v619, 120
        %v768 = vpop.permute.xlu0 %767
        %769 = vrot.lane.b32.xlu0 %v624, 120
        %v770 = vpop.permute.xlu0 %769
        %771 = vrot.lane.b32.xlu0 %v629, 120
        %v772 = vpop.permute.xlu0 %771
        %773 = vrot.lane.b32.xlu0 %v634, 120
        %v774 = vpop.permute.xlu0 %773
        %775 = vrot.lane.b32.xlu0 %v639, 120
        %v776 = vpop.permute.xlu0 %775
        %777 = vrot.lane.b32.xlu0 %v644, 120
        %v778 = vpop.permute.xlu0 %777
        %779 = vrot.lane.b32.xlu0 %v649, 120
        %v780 = vpop.permute.xlu0 %779
        %781 = vrot.lane.b32.xlu0 %v654, 120
        %v782 = vpop.permute.xlu0 %781
        %783 = vrot.lane.b32.xlu0 %v659, 120
        %v784 = vpop.permute.xlu0 %783
        %785 = vrot.lane.b32.xlu0 %v664, 120
        %v786 = vpop.permute.xlu0 %785
        %787 = vrot.lane.b32.xlu0 %v669, 120
        %v788 = vpop.permute.xlu0 %787
        %789 = vrot.lane.b32.xlu0 %v674, 120
        %v790 = vpop.permute.xlu0 %789
        %791 = vrot.lane.b32.xlu0 %v679, 120
        %v792 = vpop.permute.xlu0 %791
        %793 = vrot.lane.b32.xlu0 %v684, 120
        %v794 = vpop.permute.xlu0 %793
        %795 = vrot.lane.b32.xlu0 %v689, 120
        %v796 = vpop.permute.xlu0 %795
        %797 = vrot.lane.b32.xlu0 %v694, 120
        %v798 = vpop.permute.xlu0 %797
        %799 = vrot.lane.b32.xlu0 %v699, 120
        %v800 = vpop.permute.xlu0 %799
        %801 = vrot.lane.b32.xlu0 %v704, 120
        %v802 = vpop.permute.xlu0 %801
        %803 = vrot.lane.b32.xlu0 %v549, 112
        %v804 = vpop.permute.xlu0 %803
        %805 = vrot.lane.b32.xlu0 %v554, 112
        %v806 = vpop.permute.xlu0 %805
        %807 = vrot.lane.b32.xlu0 %v559, 112
        %v808 = vpop.permute.xlu0 %807
        %809 = vrot.lane.b32.xlu0 %v564, 112
        %v810 = vpop.permute.xlu0 %809
        %811 = vrot.lane.b32.xlu0 %v569, 112
        %v812 = vpop.permute.xlu0 %811
        %813 = vrot.lane.b32.xlu0 %v574, 112
        %v814 = vpop.permute.xlu0 %813
        %815 = vrot.lane.b32.xlu0 %v579, 112
        %v816 = vpop.permute.xlu0 %815
        %817 = vrot.lane.b32.xlu0 %v584, 112
        %v818 = vpop.permute.xlu0 %817
        %819 = vrot.lane.b32.xlu0 %v589, 112
        %v820 = vpop.permute.xlu0 %819
        %821 = vrot.lane.b32.xlu0 %v594, 112
        %v822 = vpop.permute.xlu0 %821
        %823 = vrot.lane.b32.xlu0 %v599, 112
        %v824 = vpop.permute.xlu0 %823
        %825 = vrot.lane.b32.xlu0 %v604, 112
        %v826 = vpop.permute.xlu0 %825
        %827 = vrot.lane.b32.xlu0 %v609, 112
        %v828 = vpop.permute.xlu0 %827
        %829 = vrot.lane.b32.xlu0 %v614, 112
        %v830 = vpop.permute.xlu0 %829
        %831 = vrot.lane.b32.xlu0 %v619, 112
        %v832 = vpop.permute.xlu0 %831
        %833 = vrot.lane.b32.xlu0 %v624, 112
        %v834 = vpop.permute.xlu0 %833
        %835 = vrot.lane.b32.xlu0 %v629, 112
        %v836 = vpop.permute.xlu0 %835
        %837 = vrot.lane.b32.xlu0 %v634, 112
        %v838 = vpop.permute.xlu0 %837
        %839 = vrot.lane.b32.xlu0 %v639, 112
        %v840 = vpop.permute.xlu0 %839
        %841 = vrot.lane.b32.xlu0 %v644, 112
        %v842 = vpop.permute.xlu0 %841
        %843 = vrot.lane.b32.xlu0 %v649, 112
        %v844 = vpop.permute.xlu0 %843
        %845 = vrot.lane.b32.xlu0 %v654, 112
        %v846 = vpop.permute.xlu0 %845
        %847 = vrot.lane.b32.xlu0 %v659, 112
        %v848 = vpop.permute.xlu0 %847
        %849 = vrot.lane.b32.xlu0 %v664, 112
        %v850 = vpop.permute.xlu0 %849
        %851 = vrot.lane.b32.xlu0 %v669, 112
        %v852 = vpop.permute.xlu0 %851
        %853 = vrot.lane.b32.xlu0 %v674, 112
        %v854 = vpop.permute.xlu0 %853
        %855 = vrot.lane.b32.xlu0 %v679, 112
        %v856 = vpop.permute.xlu0 %855
        %857 = vrot.lane.b32.xlu0 %v684, 112
        %v858 = vpop.permute.xlu0 %857
        %859 = vrot.lane.b32.xlu0 %v689, 112
        %v860 = vpop.permute.xlu0 %859
        %861 = vrot.lane.b32.xlu0 %v694, 112
        %v862 = vpop.permute.xlu0 %861
        %863 = vrot.lane.b32.xlu0 %v699, 112
        %v864 = vpop.permute.xlu0 %863
        %865 = vrot.lane.b32.xlu0 %v704, 112
        %v866 = vpop.permute.xlu0 %865
        %867 = vrot.lane.b32.xlu0 %v549, 104
        %v868 = vpop.permute.xlu0 %867
        %869 = vrot.lane.b32.xlu0 %v554, 104
        %v870 = vpop.permute.xlu0 %869
        %871 = vrot.lane.b32.xlu0 %v559, 104
        %v872 = vpop.permute.xlu0 %871
        %873 = vrot.lane.b32.xlu0 %v564, 104
        %v874 = vpop.permute.xlu0 %873
        %875 = vrot.lane.b32.xlu0 %v569, 104
        %v876 = vpop.permute.xlu0 %875
        %877 = vrot.lane.b32.xlu0 %v574, 104
        %v878 = vpop.permute.xlu0 %877
        %879 = vrot.lane.b32.xlu0 %v579, 104
        %v880 = vpop.permute.xlu0 %879
        %881 = vrot.lane.b32.xlu0 %v584, 104
        %v882 = vpop.permute.xlu0 %881
        %883 = vrot.lane.b32.xlu0 %v589, 104
        %v884 = vpop.permute.xlu0 %883
        %885 = vrot.lane.b32.xlu0 %v594, 104
        %v886 = vpop.permute.xlu0 %885
        %887 = vrot.lane.b32.xlu0 %v599, 104
        %v888 = vpop.permute.xlu0 %887
        %889 = vrot.lane.b32.xlu0 %v604, 104
        %v890 = vpop.permute.xlu0 %889
        %891 = vrot.lane.b32.xlu0 %v609, 104
        %v892 = vpop.permute.xlu0 %891
        %893 = vrot.lane.b32.xlu0 %v614, 104
        %v894 = vpop.permute.xlu0 %893
        %895 = vrot.lane.b32.xlu0 %v619, 104
        %v896 = vpop.permute.xlu0 %895
        %897 = vrot.lane.b32.xlu0 %v624, 104
        %v898 = vpop.permute.xlu0 %897
        %899 = vrot.lane.b32.xlu0 %v629, 104
        %v900 = vpop.permute.xlu0 %899
        %901 = vrot.lane.b32.xlu0 %v634, 104
        %v902 = vpop.permute.xlu0 %901
        %903 = vrot.lane.b32.xlu0 %v639, 104
        %v904 = vpop.permute.xlu0 %903
        %905 = vrot.lane.b32.xlu0 %v644, 104
        %v906 = vpop.permute.xlu0 %905
        %907 = vrot.lane.b32.xlu0 %v649, 104
        %v908 = vpop.permute.xlu0 %907
        %909 = vrot.lane.b32.xlu0 %v654, 104
        %v910 = vpop.permute.xlu0 %909
        %911 = vrot.lane.b32.xlu0 %v659, 104
        %v912 = vpop.permute.xlu0 %911
        %913 = vrot.lane.b32.xlu0 %v664, 104
        %v914 = vpop.permute.xlu0 %913
        %915 = vrot.lane.b32.xlu0 %v669, 104
        %v916 = vpop.permute.xlu0 %915
        %917 = vrot.lane.b32.xlu0 %v674, 104
        %v918 = vpop.permute.xlu0 %917
        %919 = vrot.lane.b32.xlu0 %v679, 104
        %v920 = vpop.permute.xlu0 %919
        %921 = vrot.lane.b32.xlu0 %v684, 104
        %v922 = vpop.permute.xlu0 %921
        %923 = vrot.lane.b32.xlu0 %v689, 104
        %v924 = vpop.permute.xlu0 %923
        %925 = vrot.lane.b32.xlu0 %v694, 104
        %v926 = vpop.permute.xlu0 %925
        %927 = vrot.lane.b32.xlu0 %v699, 104
        %v928 = vpop.permute.xlu0 %927
        %929 = vrot.lane.b32.xlu0 %v704, 104
        %v930 = vpop.permute.xlu0 %929
        %931 = vrot.lane.b32.xlu0 %v549, 96
        %v932 = vpop.permute.xlu0 %931
        %933 = vrot.lane.b32.xlu0 %v554, 96
        %v934 = vpop.permute.xlu0 %933
        %935 = vrot.lane.b32.xlu0 %v559, 96
        %v936 = vpop.permute.xlu0 %935
        %937 = vrot.lane.b32.xlu0 %v564, 96
        %v938 = vpop.permute.xlu0 %937
        %939 = vrot.lane.b32.xlu0 %v569, 96
        %v940 = vpop.permute.xlu0 %939
        %941 = vrot.lane.b32.xlu0 %v574, 96
        %v942 = vpop.permute.xlu0 %941
        %943 = vrot.lane.b32.xlu0 %v579, 96
        %v944 = vpop.permute.xlu0 %943
        %945 = vrot.lane.b32.xlu0 %v584, 96
        %v946 = vpop.permute.xlu0 %945
        %vm947 = vcmask 64512
        %v948 = vsel %vm947, %v549, 0
        %v950 = vsel %vm947, %v554, 0
        %v952 = vsel %vm947, %v559, 0
        %v954 = vsel %vm947, %v564, 0
        %v956 = vsel %vm947, %v569, 0
        %v958 = vsel %vm947, %v574, 0
        %v960 = vsel %vm947, %v579, 0
        %v962 = vsel %vm947, %v584, 0
        %v964 = vsel %vm947, %v932, 0
        %v966 = vsel %vm947, %v934, 0
        %v968 = vsel %vm947, %v936, 0
        %v970 = vsel %vm947, %v938, 0
        %v972 = vsel %vm947, %v940, 0
        %v974 = vsel %vm947, %v942, 0
        %v976 = vsel %vm947, %v944, 0
        %v978 = vsel %vm947, %v946, 0
        %980 = vmatprep.subr.mxu0 0.0
        %981 = vmatpush1.xpose.msra.mxu0 %v964
        %982 = vmatprep.subr.mxu0 0.0
        %983 = vmatpush1.xpose.msra.mxu0 %v966
        %984 = vmatprep.subr.mxu0 0.0
        %985 = vmatpush1.xpose.msra.mxu0 %v968
        %986 = vmatprep.subr.mxu0 0.0
        %987 = vmatpush1.xpose.msra.mxu0 %v970
        %988 = vmatprep.subr.mxu0 0.0
        %989 = vmatpush1.xpose.msra.mxu0 %v972
        %990 = vmatprep.subr.mxu0 0.0
        %991 = vmatpush1.xpose.msra.mxu0 %v974
        %992 = vmatprep.subr.mxu0 0.0
        %993 = vmatpush1.xpose.msra.mxu0 %v976
        %994 = vmatprep.subr.mxu0 0.0
        %995 = vmatpush1.xpose.msra.mxu0 %v978
        %996 = vmatprep.subr.mxu0 0.0
        %997 = vmatpush1.xpose.msra.mxu0 0.0
        %998 = vmatprep.subr.mxu0 0.0
        %999 = vmatpush1.xpose.msra.mxu0 0.0
        %1000 = vmatprep.subr.mxu0 0.0
        %1001 = vmatpush1.xpose.msra.mxu0 0.0
        %1002 = vmatprep.subr.mxu0 0.0
        %1003 = vmatpush1.xpose.msra.mxu0 0.0
        %1004 = vmatprep.subr.mxu0 0.0
        %1005 = vmatpush1.xpose.msra.mxu0 0.0
        %1006 = vmatprep.subr.mxu0 0.0
        %1007 = vmatpush1.xpose.msra.mxu0 0.0
        %1008 = vmatprep.subr.mxu0 0.0
        %1009 = vmatpush1.xpose.msra.mxu0 0.0
        %1010 = vmatprep.subr.mxu0 0.0
        %1011 = vmatpush1.xpose.msra.mxu0 0.0
        %1012 = vmatprep.subr.mxu0 0.0
        %1013 = vmatpush1.xpose.msra.mxu0 0.0
        %1014 = vmatprep.subr.mxu0 0.0
        %1015 = vmatpush1.xpose.msra.mxu0 0.0
        %1016 = vmatprep.subr.mxu0 0.0
        %1017 = vmatpush1.xpose.msra.mxu0 0.0
        %1018 = vmatprep.subr.mxu0 0.0
        %1019 = vmatpush1.xpose.msra.mxu0 0.0
        %1020 = vmatprep.subr.mxu0 0.0
        %1021 = vmatpush1.xpose.msra.mxu0 0.0
        %1022 = vmatprep.subr.mxu0 0.0
        %1023 = vmatpush1.xpose.msra.mxu0 0.0
        %1024 = vmatprep.subr.mxu0 0.0
        %1025 = vmatpush1.xpose.msra.mxu0 0.0
        %1026 = vmatprep.subr.mxu0 0.0
        %1027 = vmatpush1.xpose.msra.mxu0 0.0
        %1028 = vmatprep.subr.mxu0 0.0
        %1029 = vmatpush1.xpose.msra.mxu0 0.0
        %1030 = vmatprep.subr.mxu0 0.0
        %1031 = vmatpush1.xpose.msra.mxu0 0.0
        %1032 = vmatprep.subr.mxu0 0.0
        %1033 = vmatpush1.xpose.msra.mxu0 0.0
        %1034 = vmatprep.subr.mxu0 0.0
        %1035 = vmatpush1.xpose.msra.mxu0 0.0
        %1036 = vmatprep.subr.mxu0 0.0
        %1037 = vmatpush1.xpose.msra.mxu0 0.0
        %1038 = vmatprep.subr.mxu0 0.0
        %1039 = vmatpush1.xpose.msra.mxu0 0.0
        %1040 = vmatprep.subr.mxu0 0.0
        %1041 = vmatpush1.xpose.msra.mxu0 0.0
        %1042 = vmatprep.subr.mxu0 0.0
        %1043 = vmatpush1.xpose.msra.mxu0 0.0
        %1044 = vmatprep.mubr.f32.mxu0 0.0
        %1045 = vmatmul.mubr.f32.gmra.mrb[0].mxu0 %v948
        %v1046 = vpop.f32.mrb[0].mxu0
        %v1047 = vadd.f32 0.0, %v1046
        %v1048 = vpop.f32.mrb[0].mxu0
        %1049 = vmatprep.mubr.f32.mxu0 0.0
        %1050 = vmatmul.mubr.f32.gmra.mrb[0].mxu0 %v950
        %v1051 = vpop.f32.mrb[0].mxu0
        %v1052 = vadd.f32 0.0, %v1051
        %v1053 = vpop.f32.mrb[0].mxu0
        %1054 = vmatprep.mubr.f32.mxu0 0.0
        %1055 = vmatmul.mubr.f32.gmra.mrb[0].mxu0 %v952
        %v1056 = vpop.f32.mrb[0].mxu0
        %v1057 = vadd.f32 0.0, %v1056
        %v1058 = vpop.f32.mrb[0].mxu0
        %1059 = vmatprep.mubr.f32.mxu0 0.0
        %1060 = vmatmul.mubr.f32.gmra.mrb[0].mxu0 %v954
        %v1061 = vpop.f32.mrb[0].mxu0
        %v1062 = vadd.f32 0.0, %v1061
        %v1063 = vpop.f32.mrb[0].mxu0
        %1064 = vmatprep.mubr.f32.mxu0 0.0
        %1065 = vmatmul.mubr.f32.gmra.mrb[0].mxu0 %v956
        %v1066 = vpop.f32.mrb[0].mxu0
        %v1067 = vadd.f32 0.0, %v1066
        %v1068 = vpop.f32.mrb[0].mxu0
        %1069 = vmatprep.mubr.f32.mxu0 0.0
        %1070 = vmatmul.mubr.f32.gmra.mrb[0].mxu0 %v958
        %v1071 = vpop.f32.mrb[0].mxu0
        %v1072 = vadd.f32 0.0, %v1071
        %v1073 = vpop.f32.mrb[0].mxu0
        %1074 = vmatprep.mubr.f32.mxu0 0.0
        %1075 = vmatmul.mubr.f32.gmra.mrb[0].mxu0 %v960
        %v1076 = vpop.f32.mrb[0].mxu0
        %v1077 = vadd.f32 0.0, %v1076
        %v1078 = vpop.f32.mrb[0].mxu0
        %1079 = vmatprep.mubr.f32.mxu0 0.0
        %1080 = vmatmul.mubr.f32.gmra.mrb[0].mxu0 %v962
        %v1081 = vpop.f32.mrb[0].mxu0
        %v1082 = vadd.f32 0.0, %v1081
        %v1083 = vpop.f32.mrb[0].mxu0
        %1084 = vdwg.mxu0
        %1085 = vrot.lane.b32.xlu0 %v589, 96
        %v1086 = vpop.permute.xlu0 %1085
        %1087 = vrot.lane.b32.xlu0 %v594, 96
        %v1088 = vpop.permute.xlu0 %1087
        %1089 = vrot.lane.b32.xlu0 %v599, 96
        %v1090 = vpop.permute.xlu0 %1089
        %1091 = vrot.lane.b32.xlu0 %v604, 96
        %v1092 = vpop.permute.xlu0 %1091
        %1093 = vrot.lane.b32.xlu0 %v609, 96
        %v1094 = vpop.permute.xlu0 %1093
        %1095 = vrot.lane.b32.xlu0 %v614, 96
        %v1096 = vpop.permute.xlu0 %1095
        %1097 = vrot.lane.b32.xlu0 %v619, 96
        %v1098 = vpop.permute.xlu0 %1097
        %1099 = vrot.lane.b32.xlu0 %v624, 96
        %v1100 = vpop.permute.xlu0 %1099
        %v1101 = vsel %vm947, %v589, 0
        %v1103 = vsel %vm947, %v594, 0
        %v1105 = vsel %vm947, %v599, 0
        %v1107 = vsel %vm947, %v604, 0
        %v1109 = vsel %vm947, %v609, 0
        %v1111 = vsel %vm947, %v614, 0
        %v1113 = vsel %vm947, %v619, 0
        %v1115 = vsel %vm947, %v624, 0
        %v1117 = vsel %vm947, %v1086, 0
        %v1119 = vsel %vm947, %v1088, 0
        %v1121 = vsel %vm947, %v1090, 0
        %v1123 = vsel %vm947, %v1092, 0
        %v1125 = vsel %vm947, %v1094, 0
        %v1127 = vsel %vm947, %v1096, 0
        %v1129 = vsel %vm947, %v1098, 0
        %v1131 = vsel %vm947, %v1100, 0
        %1133 = vmatprep.subr.mxu0 0.0
        %1134 = vmatpush1.xpose.msra.mxu0 %v1117
        %1135 = vmatprep.subr.mxu0 0.0
        %1136 = vmatpush1.xpose.msra.mxu0 %v1119
        %1137 = vmatprep.subr.mxu0 0.0
        %1138 = vmatpush1.xpose.msra.mxu0 %v1121
        %1139 = vmatprep.subr.mxu0 0.0
        %1140 = vmatpush1.xpose.msra.mxu0 %v1123
        %1141 = vmatprep.subr.mxu0 0.0
        %1142 = vmatpush1.xpose.msra.mxu0 %v1125
        %1143 = vmatprep.subr.mxu0 0.0
        %1144 = vmatpush1.xpose.msra.mxu0 %v1127
        %1145 = vmatprep.subr.mxu0 0.0
        %1146 = vmatpush1.xpose.msra.mxu0 %v1129
        %1147 = vmatprep.subr.mxu0 0.0
        %1148 = vmatpush1.xpose.msra.mxu0 %v1131
        %1149 = vmatprep.subr.mxu0 0.0
        %1150 = vmatpush1.xpose.msra.mxu0 0.0
        %1151 = vmatprep.subr.mxu0 0.0
        %1152 = vmatpush1.xpose.msra.mxu0 0.0
        %1153 = vmatprep.subr.mxu0 0.0
        %1154 = vmatpush1.xpose.msra.mxu0 0.0
        %1155 = vmatprep.subr.mxu0 0.0
        %1156 = vmatpush1.xpose.msra.mxu0 0.0
        %1157 = vmatprep.subr.mxu0 0.0
        %1158 = vmatpush1.xpose.msra.mxu0 0.0
        %1159 = vmatprep.subr.mxu0 0.0
        %1160 = vmatpush1.xpose.msra.mxu0 0.0
        %1161 = vmatprep.subr.mxu0 0.0
        %1162 = vmatpush1.xpose.msra.mxu0 0.0
        %1163 = vmatprep.subr.mxu0 0.0
        %1164 = vmatpush1.xpose.msra.mxu0 0.0
        %1165 = vmatprep.subr.mxu0 0.0
        %1166 = vmatpush1.xpose.msra.mxu0 0.0
        %1167 = vmatprep.subr.mxu0 0.0
        %1168 = vmatpush1.xpose.msra.mxu0 0.0
        %1169 = vmatprep.subr.mxu0 0.0
        %1170 = vmatpush1.xpose.msra.mxu0 0.0
        %1171 = vmatprep.subr.mxu0 0.0
        %1172 = vmatpush1.xpose.msra.mxu0 0.0
        %1173 = vmatprep.subr.mxu0 0.0
        %1174 = vmatpush1.xpose.msra.mxu0 0.0
        %1175 = vmatprep.subr.mxu0 0.0
        %1176 = vmatpush1.xpose.msra.mxu0 0.0
        %1177 = vmatprep.subr.mxu0 0.0
        %1178 = vmatpush1.xpose.msra.mxu0 0.0
        %1179 = vmatprep.subr.mxu0 0.0
        %1180 = vmatpush1.xpose.msra.mxu0 0.0
        %1181 = vmatprep.subr.mxu0 0.0
        %1182 = vmatpush1.xpose.msra.mxu0 0.0
        %1183 = vmatprep.subr.mxu0 0.0
        %1184 = vmatpush1.xpose.msra.mxu0 0.0
        %1185 = vmatprep.subr.mxu0 0.0
        %1186 = vmatpush1.xpose.msra.mxu0 0.0
        %1187 = vmatprep.subr.mxu0 0.0
        %1188 = vmatpush1.xpose.msra.mxu0 0.0
        %1189 = vmatprep.subr.mxu0 0.0
        %1190 = vmatpush1.xpose.msra.mxu0 0.0
        %1191 = vmatprep.subr.mxu0 0.0
        %1192 = vmatpush1.xpose.msra.mxu0 0.0
        %1193 = vmatprep.subr.mxu0 0.0
        %1194 = vmatpush1.xpose.msra.mxu0 0.0
        %1195 = vmatprep.subr.mxu0 0.0
        %1196 = vmatpush1.xpose.msra.mxu0 0.0
        %1197 = vmatprep.mubr.f32.mxu0 0.0
        %1198 = vmatmul.mubr.f32.gmra.mrb[0].mxu0 %v1101
        %v1199 = vpop.f32.mrb[0].mxu0
        %v1200 = vadd.f32 0.0, %v1199
        %v1201 = vpop.f32.mrb[0].mxu0
        %1202 = vmatprep.mubr.f32.mxu0 0.0
        %1203 = vmatmul.mubr.f32.gmra.mrb[0].mxu0 %v1103
        %v1204 = vpop.f32.mrb[0].mxu0
        %v1205 = vadd.f32 0.0, %v1204
        %v1206 = vpop.f32.mrb[0].mxu0
        %1207 = vmatprep.mubr.f32.mxu0 0.0
        %1208 = vmatmul.mubr.f32.gmra.mrb[0].mxu0 %v1105
        %v1209 = vpop.f32.mrb[0].mxu0
        %v1210 = vadd.f32 0.0, %v1209
        %v1211 = vpop.f32.mrb[0].mxu0
        %1212 = vmatprep.mubr.f32.mxu0 0.0
        %1213 = vmatmul.mubr.f32.gmra.mrb[0].mxu0 %v1107
        %v1214 = vpop.f32.mrb[0].mxu0
        %v1215 = vadd.f32 0.0, %v1214
        %v1216 = vpop.f32.mrb[0].mxu0
        %1217 = vmatprep.mubr.f32.mxu0 0.0
        %1218 = vmatmul.mubr.f32.gmra.mrb[0].mxu0 %v1109
        %v1219 = vpop.f32.mrb[0].mxu0
        %v1220 = vadd.f32 0.0, %v1219
        %v1221 = vpop.f32.mrb[0].mxu0
        %1222 = vmatprep.mubr.f32.mxu0 0.0
        %1223 = vmatmul.mubr.f32.gmra.mrb[0].mxu0 %v1111
        %v1224 = vpop.f32.mrb[0].mxu0
        %v1225 = vadd.f32 0.0, %v1224
        %v1226 = vpop.f32.mrb[0].mxu0
        %1227 = vmatprep.mubr.f32.mxu0 0.0
        %1228 = vmatmul.mubr.f32.gmra.mrb[0].mxu0 %v1113
        %v1229 = vpop.f32.mrb[0].mxu0
        %v1230 = vadd.f32 0.0, %v1229
        %v1231 = vpop.f32.mrb[0].mxu0
        %1232 = vmatprep.mubr.f32.mxu0 0.0
        %1233 = vmatmul.mubr.f32.gmra.mrb[0].mxu0 %v1115
        %v1234 = vpop.f32.mrb[0].mxu0
        %v1235 = vadd.f32 0.0, %v1234
        %v1236 = vpop.f32.mrb[0].mxu0
        %1237 = vdwg.mxu0
        %1238 = vrot.lane.b32.xlu0 %v629, 96
        %v1239 = vpop.permute.xlu0 %1238
        %1240 = vrot.lane.b32.xlu0 %v634, 96
        %v1241 = vpop.permute.xlu0 %1240
        %1242 = vrot.lane.b32.xlu0 %v639, 96
        %v1243 = vpop.permute.xlu0 %1242
        %1244 = vrot.lane.b32.xlu0 %v644, 96
        %v1245 = vpop.permute.xlu0 %1244
        %1246 = vrot.lane.b32.xlu0 %v649, 96
        %v1247 = vpop.permute.xlu0 %1246
        %1248 = vrot.lane.b32.xlu0 %v654, 96
        %v1249 = vpop.permute.xlu0 %1248
        %1250 = vrot.lane.b32.xlu0 %v659, 96
        %v1251 = vpop.permute.xlu0 %1250
        %1252 = vrot.lane.b32.xlu0 %v664, 96
        %v1253 = vpop.permute.xlu0 %1252
        %v1254 = vsel %vm947, %v629, 0
        %v1256 = vsel %vm947, %v634, 0
        %v1258 = vsel %vm947, %v639, 0
        %v1260 = vsel %vm947, %v644, 0
        %v1262 = vsel %vm947, %v649, 0
        %v1264 = vsel %vm947, %v654, 0
        %v1266 = vsel %vm947, %v659, 0
        %v1268 = vsel %vm947, %v664, 0
        %v1270 = vsel %vm947, %v1239, 0
        %v1272 = vsel %vm947, %v1241, 0
        %v1274 = vsel %vm947, %v1243, 0
        %v1276 = vsel %vm947, %v1245, 0
        %v1278 = vsel %vm947, %v1247, 0
        %v1280 = vsel %vm947, %v1249, 0
        %v1282 = vsel %vm947, %v1251, 0
        %v1284 = vsel %vm947, %v1253, 0
        %1286 = vmatprep.subr.mxu0 0.0
        %1287 = vmatpush1.xpose.msra.mxu0 %v1270
        %1288 = vmatprep.subr.mxu0 0.0
        %1289 = vmatpush1.xpose.msra.mxu0 %v1272
        %1290 = vmatprep.subr.mxu0 0.0
        %1291 = vmatpush1.xpose.msra.mxu0 %v1274
        %1292 = vmatprep.subr.mxu0 0.0
        %1293 = vmatpush1.xpose.msra.mxu0 %v1276
        %1294 = vmatprep.subr.mxu0 0.0
        %1295 = vmatpush1.xpose.msra.mxu0 %v1278
        %1296 = vmatprep.subr.mxu0 0.0
        %1297 = vmatpush1.xpose.msra.mxu0 %v1280
        %1298 = vmatprep.subr.mxu0 0.0
        %1299 = vmatpush1.xpose.msra.mxu0 %v1282
        %1300 = vmatprep.subr.mxu0 0.0
        %1301 = vmatpush1.xpose.msra.mxu0 %v1284
        %1302 = vmatprep.subr.mxu0 0.0
        %1303 = vmatpush1.xpose.msra.mxu0 0.0
        %1304 = vmatprep.subr.mxu0 0.0
        %1305 = vmatpush1.xpose.msra.mxu0 0.0
        %1306 = vmatprep.subr.mxu0 0.0
        %1307 = vmatpush1.xpose.msra.mxu0 0.0
        %1308 = vmatprep.subr.mxu0 0.0
        %1309 = vmatpush1.xpose.msra.mxu0 0.0
        %1310 = vmatprep.subr.mxu0 0.0
        %1311 = vmatpush1.xpose.msra.mxu0 0.0
        %1312 = vmatprep.subr.mxu0 0.0
        %1313 = vmatpush1.xpose.msra.mxu0 0.0
        %1314 = vmatprep.subr.mxu0 0.0
        %1315 = vmatpush1.xpose.msra.mxu0 0.0
        %1316 = vmatprep.subr.mxu0 0.0
        %1317 = vmatpush1.xpose.msra.mxu0 0.0
        %1318 = vmatprep.subr.mxu0 0.0
        %1319 = vmatpush1.xpose.msra.mxu0 0.0
        %1320 = vmatprep.subr.mxu0 0.0
        %1321 = vmatpush1.xpose.msra.mxu0 0.0
        %1322 = vmatprep.subr.mxu0 0.0
        %1323 = vmatpush1.xpose.msra.mxu0 0.0
        %1324 = vmatprep.subr.mxu0 0.0
        %1325 = vmatpush1.xpose.msra.mxu0 0.0
        %1326 = vmatprep.subr.mxu0 0.0
        %1327 = vmatpush1.xpose.msra.mxu0 0.0
        %1328 = vmatprep.subr.mxu0 0.0
        %1329 = vmatpush1.xpose.msra.mxu0 0.0
        %1330 = vmatprep.subr.mxu0 0.0
        %1331 = vmatpush1.xpose.msra.mxu0 0.0
        %1332 = vmatprep.subr.mxu0 0.0
        %1333 = vmatpush1.xpose.msra.mxu0 0.0
        %1334 = vmatprep.subr.mxu0 0.0
        %1335 = vmatpush1.xpose.msra.mxu0 0.0
        %1336 = vmatprep.subr.mxu0 0.0
        %1337 = vmatpush1.xpose.msra.mxu0 0.0
        %1338 = vmatprep.subr.mxu0 0.0
        %1339 = vmatpush1.xpose.msra.mxu0 0.0
        %1340 = vmatprep.subr.mxu0 0.0
        %1341 = vmatpush1.xpose.msra.mxu0 0.0
        %1342 = vmatprep.subr.mxu0 0.0
        %1343 = vmatpush1.xpose.msra.mxu0 0.0
        %1344 = vmatprep.subr.mxu0 0.0
        %1345 = vmatpush1.xpose.msra.mxu0 0.0
        %1346 = vmatprep.subr.mxu0 0.0
        %1347 = vmatpush1.xpose.msra.mxu0 0.0
        %1348 = vmatprep.subr.mxu0 0.0
        %1349 = vmatpush1.xpose.msra.mxu0 0.0
        %1350 = vmatprep.mubr.f32.mxu0 0.0
        %1351 = vmatmul.mubr.f32.gmra.mrb[0].mxu0 %v1254
        %v1352 = vpop.f32.mrb[0].mxu0
        %v1353 = vadd.f32 0.0, %v1352
        %v1354 = vpop.f32.mrb[0].mxu0
        %1355 = vmatprep.mubr.f32.mxu0 0.0
        %1356 = vmatmul.mubr.f32.gmra.mrb[0].mxu0 %v1256
        %v1357 = vpop.f32.mrb[0].mxu0
        %v1358 = vadd.f32 0.0, %v1357
        %v1359 = vpop.f32.mrb[0].mxu0
        %1360 = vmatprep.mubr.f32.mxu0 0.0
        %1361 = vmatmul.mubr.f32.gmra.mrb[0].mxu0 %v1258
        %v1362 = vpop.f32.mrb[0].mxu0
        %v1363 = vadd.f32 0.0, %v1362
        %v1364 = vpop.f32.mrb[0].mxu0
        %1365 = vmatprep.mubr.f32.mxu0 0.0
        %1366 = vmatmul.mubr.f32.gmra.mrb[0].mxu0 %v1260
        %v1367 = vpop.f32.mrb[0].mxu0
        %v1368 = vadd.f32 0.0, %v1367
        %v1369 = vpop.f32.mrb[0].mxu0
        %1370 = vmatprep.mubr.f32.mxu0 0.0
        %1371 = vmatmul.mubr.f32.gmra.mrb[0].mxu0 %v1262
        %v1372 = vpop.f32.mrb[0].mxu0
        %v1373 = vadd.f32 0.0, %v1372
        %v1374 = vpop.f32.mrb[0].mxu0
        %1375 = vmatprep.mubr.f32.mxu0 0.0
        %1376 = vmatmul.mubr.f32.gmra.mrb[0].mxu0 %v1264
        %v1377 = vpop.f32.mrb[0].mxu0
        %v1378 = vadd.f32 0.0, %v1377
        %v1379 = vpop.f32.mrb[0].mxu0
        %1380 = vmatprep.mubr.f32.mxu0 0.0
        %1381 = vmatmul.mubr.f32.gmra.mrb[0].mxu0 %v1266
        %v1382 = vpop.f32.mrb[0].mxu0
        %v1383 = vadd.f32 0.0, %v1382
        %v1384 = vpop.f32.mrb[0].mxu0
        %1385 = vmatprep.mubr.f32.mxu0 0.0
        %1386 = vmatmul.mubr.f32.gmra.mrb[0].mxu0 %v1268
        %v1387 = vpop.f32.mrb[0].mxu0
        %v1388 = vadd.f32 0.0, %v1387
        %v1389 = vpop.f32.mrb[0].mxu0
        %1390 = vdwg.mxu0
        %1391 = vrot.lane.b32.xlu0 %v669, 96
        %v1392 = vpop.permute.xlu0 %1391
        %1393 = vrot.lane.b32.xlu0 %v674, 96
        %v1394 = vpop.permute.xlu0 %1393
        %1395 = vrot.lane.b32.xlu0 %v679, 96
        %v1396 = vpop.permute.xlu0 %1395
        %1397 = vrot.lane.b32.xlu0 %v684, 96
        %v1398 = vpop.permute.xlu0 %1397
        %1399 = vrot.lane.b32.xlu0 %v689, 96
        %v1400 = vpop.permute.xlu0 %1399
        %1401 = vrot.lane.b32.xlu0 %v694, 96
        %v1402 = vpop.permute.xlu0 %1401
        %1403 = vrot.lane.b32.xlu0 %v699, 96
        %v1404 = vpop.permute.xlu0 %1403
        %1405 = vrot.lane.b32.xlu0 %v704, 96
        %v1406 = vpop.permute.xlu0 %1405
        %v1407 = vsel %vm947, %v669, 0
        %v1409 = vsel %vm947, %v674, 0
        %v1411 = vsel %vm947, %v679, 0
        %v1413 = vsel %vm947, %v684, 0
        %v1415 = vsel %vm947, %v689, 0
        %v1417 = vsel %vm947, %v694, 0
        %v1419 = vsel %vm947, %v699, 0
        %v1421 = vsel %vm947, %v704, 0
        %v1423 = vsel %vm947, %v1392, 0
        %v1425 = vsel %vm947, %v1394, 0
        %v1427 = vsel %vm947, %v1396, 0
        %v1429 = vsel %vm947, %v1398, 0
        %v1431 = vsel %vm947, %v1400, 0
        %v1433 = vsel %vm947, %v1402, 0
        %v1435 = vsel %vm947, %v1404, 0
        %v1437 = vsel %vm947, %v1406, 0
        %1439 = vmatprep.subr.mxu0 0.0
        %1440 = vmatpush1.xpose.msra.mxu0 %v1423
        %1441 = vmatprep.subr.mxu0 0.0
        %1442 = vmatpush1.xpose.msra.mxu0 %v1425
        %1443 = vmatprep.subr.mxu0 0.0
        %1444 = vmatpush1.xpose.msra.mxu0 %v1427
        %1445 = vmatprep.subr.mxu0 0.0
        %1446 = vmatpush1.xpose.msra.mxu0 %v1429
        %1447 = vmatprep.subr.mxu0 0.0
        %1448 = vmatpush1.xpose.msra.mxu0 %v1431
        %1449 = vmatprep.subr.mxu0 0.0
        %1450 = vmatpush1.xpose.msra.mxu0 %v1433
        %1451 = vmatprep.subr.mxu0 0.0
        %1452 = vmatpush1.xpose.msra.mxu0 %v1435
        %1453 = vmatprep.subr.mxu0 0.0
        %1454 = vmatpush1.xpose.msra.mxu0 %v1437
        %1455 = vmatprep.subr.mxu0 0.0
        %1456 = vmatpush1.xpose.msra.mxu0 0.0
        %1457 = vmatprep.subr.mxu0 0.0
        %1458 = vmatpush1.xpose.msra.mxu0 0.0
        %1459 = vmatprep.subr.mxu0 0.0
        %1460 = vmatpush1.xpose.msra.mxu0 0.0
        %1461 = vmatprep.subr.mxu0 0.0
        %1462 = vmatpush1.xpose.msra.mxu0 0.0
        %1463 = vmatprep.subr.mxu0 0.0
        %1464 = vmatpush1.xpose.msra.mxu0 0.0
        %1465 = vmatprep.subr.mxu0 0.0
        %1466 = vmatpush1.xpose.msra.mxu0 0.0
        %1467 = vmatprep.subr.mxu0 0.0
        %1468 = vmatpush1.xpose.msra.mxu0 0.0
        %1469 = vmatprep.subr.mxu0 0.0
        %1470 = vmatpush1.xpose.msra.mxu0 0.0
        %1471 = vmatprep.subr.mxu0 0.0
        %1472 = vmatpush1.xpose.msra.mxu0 0.0
        %1473 = vmatprep.subr.mxu0 0.0
        %1474 = vmatpush1.xpose.msra.mxu0 0.0
        %1475 = vmatprep.subr.mxu0 0.0
        %1476 = vmatpush1.xpose.msra.mxu0 0.0
        %1477 = vmatprep.subr.mxu0 0.0
        %1478 = vmatpush1.xpose.msra.mxu0 0.0
        %1479 = vmatprep.subr.mxu0 0.0
        %1480 = vmatpush1.xpose.msra.mxu0 0.0
        %1481 = vmatprep.subr.mxu0 0.0
        %1482 = vmatpush1.xpose.msra.mxu0 0.0
        %1483 = vmatprep.subr.mxu0 0.0
        %1484 = vmatpush1.xpose.msra.mxu0 0.0
        %1485 = vmatprep.subr.mxu0 0.0
        %1486 = vmatpush1.xpose.msra.mxu0 0.0
        %1487 = vmatprep.subr.mxu0 0.0
        %1488 = vmatpush1.xpose.msra.mxu0 0.0
        %1489 = vmatprep.subr.mxu0 0.0
        %1490 = vmatpush1.xpose.msra.mxu0 0.0
        %1491 = vmatprep.subr.mxu0 0.0
        %1492 = vmatpush1.xpose.msra.mxu0 0.0
        %1493 = vmatprep.subr.mxu0 0.0
        %1494 = vmatpush1.xpose.msra.mxu0 0.0
        %1495 = vmatprep.subr.mxu0 0.0
        %1496 = vmatpush1.xpose.msra.mxu0 0.0
        %1497 = vmatprep.subr.mxu0 0.0
        %1498 = vmatpush1.xpose.msra.mxu0 0.0
        %1499 = vmatprep.subr.mxu0 0.0
        %1500 = vmatpush1.xpose.msra.mxu0 0.0
        %1501 = vmatprep.subr.mxu0 0.0
        %1502 = vmatpush1.xpose.msra.mxu0 0.0
        %1503 = vmatprep.mubr.f32.mxu0 0.0
        %1504 = vmatmul.mubr.f32.gmra.mrb[0].mxu0 %v1407
        %v1505 = vpop.f32.mrb[0].mxu0
        %v1506 = vadd.f32 0.0, %v1505
        %v1507 = vpop.f32.mrb[0].mxu0
        %1508 = vmatprep.mubr.f32.mxu0 0.0
        %1509 = vmatmul.mubr.f32.gmra.mrb[0].mxu0 %v1409
        %v1510 = vpop.f32.mrb[0].mxu0
        %v1511 = vadd.f32 0.0, %v1510
        %v1512 = vpop.f32.mrb[0].mxu0
        %1513 = vmatprep.mubr.f32.mxu0 0.0
        %1514 = vmatmul.mubr.f32.gmra.mrb[0].mxu0 %v1411
        %v1515 = vpop.f32.mrb[0].mxu0
        %v1516 = vadd.f32 0.0, %v1515
        %v1517 = vpop.f32.mrb[0].mxu0
        %1518 = vmatprep.mubr.f32.mxu0 0.0
        %1519 = vmatmul.mubr.f32.gmra.mrb[0].mxu0 %v1413
        %v1520 = vpop.f32.mrb[0].mxu0
        %v1521 = vadd.f32 0.0, %v1520
        %v1522 = vpop.f32.mrb[0].mxu0
        %1523 = vmatprep.mubr.f32.mxu0 0.0
        %1524 = vmatmul.mubr.f32.gmra.mrb[0].mxu0 %v1415
        %v1525 = vpop.f32.mrb[0].mxu0
        %v1526 = vadd.f32 0.0, %v1525
        %v1527 = vpop.f32.mrb[0].mxu0
        %1528 = vmatprep.mubr.f32.mxu0 0.0
        %1529 = vmatmul.mubr.f32.gmra.mrb[0].mxu0 %v1417
        %v1530 = vpop.f32.mrb[0].mxu0
        %v1531 = vadd.f32 0.0, %v1530
        %v1532 = vpop.f32.mrb[0].mxu0
        %1533 = vmatprep.mubr.f32.mxu0 0.0
        %1534 = vmatmul.mubr.f32.gmra.mrb[0].mxu0 %v1419
        %v1535 = vpop.f32.mrb[0].mxu0
        %v1536 = vadd.f32 0.0, %v1535
        %v1537 = vpop.f32.mrb[0].mxu0
        %1538 = vmatprep.mubr.f32.mxu0 0.0
        %1539 = vmatmul.mubr.f32.gmra.mrb[0].mxu0 %v1421
        %v1540 = vpop.f32.mrb[0].mxu0
        %v1541 = vadd.f32 0.0, %v1540
        %v1542 = vpop.f32.mrb[0].mxu0
        %1543 = vdwg.mxu0
        %1544 = vrot.lane.b32.xlu0 %v740, 96
        %v1545 = vpop.permute.xlu0 %1544
        %1546 = vrot.lane.b32.xlu0 %v742, 96
        %v1547 = vpop.permute.xlu0 %1546
        %1548 = vrot.lane.b32.xlu0 %v744, 96
        %v1549 = vpop.permute.xlu0 %1548
        %1550 = vrot.lane.b32.xlu0 %v746, 96
        %v1551 = vpop.permute.xlu0 %1550
        %1552 = vrot.lane.b32.xlu0 %v748, 96
        %v1553 = vpop.permute.xlu0 %1552
        %1554 = vrot.lane.b32.xlu0 %v750, 96
        %v1555 = vpop.permute.xlu0 %1554
        %1556 = vrot.lane.b32.xlu0 %v752, 96
        %v1557 = vpop.permute.xlu0 %1556
        %1558 = vrot.lane.b32.xlu0 %v754, 96
        %v1559 = vpop.permute.xlu0 %1558
        %v1560 = vsel %vm947, %v740, 0
        %v1562 = vsel %vm947, %v742, 0
        %v1564 = vsel %vm947, %v744, 0
        %v1566 = vsel %vm947, %v746, 0
        %v1568 = vsel %vm947, %v748, 0
        %v1570 = vsel %vm947, %v750, 0
        %v1572 = vsel %vm947, %v752, 0
        %v1574 = vsel %vm947, %v754, 0
        %v1576 = vsel %vm947, %v1545, 0
        %v1578 = vsel %vm947, %v1547, 0
        %v1580 = vsel %vm947, %v1549, 0
        %v1582 = vsel %vm947, %v1551, 0
        %v1584 = vsel %vm947, %v1553, 0
        %v1586 = vsel %vm947, %v1555, 0
        %v1588 = vsel %vm947, %v1557, 0
        %v1590 = vsel %vm947, %v1559, 0
        %1592 = vmatprep.subr.mxu0 0.0
        %1593 = vmatpush1.xpose.msra.mxu0 %v1576
        %1594 = vmatprep.subr.mxu0 0.0
        %1595 = vmatpush1.xpose.msra.mxu0 %v1578
        %1596 = vmatprep.subr.mxu0 0.0
        %1597 = vmatpush1.xpose.msra.mxu0 %v1580
        %1598 = vmatprep.subr.mxu0 0.0
        %1599 = vmatpush1.xpose.msra.mxu0 %v1582
        %1600 = vmatprep.subr.mxu0 0.0
        %1601 = vmatpush1.xpose.msra.mxu0 %v1584
        %1602 = vmatprep.subr.mxu0 0.0
        %1603 = vmatpush1.xpose.msra.mxu0 %v1586
        %1604 = vmatprep.subr.mxu0 0.0
        %1605 = vmatpush1.xpose.msra.mxu0 %v1588
        %1606 = vmatprep.subr.mxu0 0.0
        %1607 = vmatpush1.xpose.msra.mxu0 %v1590
        %1608 = vmatprep.subr.mxu0 0.0
        %1609 = vmatpush1.xpose.msra.mxu0 0.0
        %1610 = vmatprep.subr.mxu0 0.0
        %1611 = vmatpush1.xpose.msra.mxu0 0.0
        %1612 = vmatprep.subr.mxu0 0.0
        %1613 = vmatpush1.xpose.msra.mxu0 0.0
        %1614 = vmatprep.subr.mxu0 0.0
        %1615 = vmatpush1.xpose.msra.mxu0 0.0
        %1616 = vmatprep.subr.mxu0 0.0
        %1617 = vmatpush1.xpose.msra.mxu0 0.0
        %1618 = vmatprep.subr.mxu0 0.0
        %1619 = vmatpush1.xpose.msra.mxu0 0.0
        %1620 = vmatprep.subr.mxu0 0.0
        %1621 = vmatpush1.xpose.msra.mxu0 0.0
        %1622 = vmatprep.subr.mxu0 0.0
        %1623 = vmatpush1.xpose.msra.mxu0 0.0
        %1624 = vmatprep.subr.mxu0 0.0
        %1625 = vmatpush1.xpose.msra.mxu0 0.0
        %1626 = vmatprep.subr.mxu0 0.0
        %1627 = vmatpush1.xpose.msra.mxu0 0.0
        %1628 = vmatprep.subr.mxu0 0.0
        %1629 = vmatpush1.xpose.msra.mxu0 0.0
        %1630 = vmatprep.subr.mxu0 0.0
        %1631 = vmatpush1.xpose.msra.mxu0 0.0
        %1632 = vmatprep.subr.mxu0 0.0
        %1633 = vmatpush1.xpose.msra.mxu0 0.0
        %1634 = vmatprep.subr.mxu0 0.0
        %1635 = vmatpush1.xpose.msra.mxu0 0.0
        %1636 = vmatprep.subr.mxu0 0.0
        %1637 = vmatpush1.xpose.msra.mxu0 0.0
        %1638 = vmatprep.subr.mxu0 0.0
        %1639 = vmatpush1.xpose.msra.mxu0 0.0
        %1640 = vmatprep.subr.mxu0 0.0
        %1641 = vmatpush1.xpose.msra.mxu0 0.0
        %1642 = vmatprep.subr.mxu0 0.0
        %1643 = vmatpush1.xpose.msra.mxu0 0.0
        %1644 = vmatprep.subr.mxu0 0.0
        %1645 = vmatpush1.xpose.msra.mxu0 0.0
        %1646 = vmatprep.subr.mxu0 0.0
        %1647 = vmatpush1.xpose.msra.mxu0 0.0
        %1648 = vmatprep.subr.mxu0 0.0
        %1649 = vmatpush1.xpose.msra.mxu0 0.0
        %1650 = vmatprep.subr.mxu0 0.0
        %1651 = vmatpush1.xpose.msra.mxu0 0.0
        %1652 = vmatprep.subr.mxu0 0.0
        %1653 = vmatpush1.xpose.msra.mxu0 0.0
        %1654 = vmatprep.subr.mxu0 0.0
        %1655 = vmatpush1.xpose.msra.mxu0 0.0
        %1656 = vmatprep.mubr.f32.mxu0 0.0
        %1657 = vmatmul.mubr.f32.gmra.mrb[0].mxu0 %v1560
        %v1658 = vpop.f32.mrb[0].mxu0
        %v1659 = vadd.f32 0.0, %v1658
        %v1660 = vpop.f32.mrb[0].mxu0
        %1661 = vmatprep.mubr.f32.mxu0 0.0
        %1662 = vmatmul.mubr.f32.gmra.mrb[0].mxu0 %v1562
        %v1663 = vpop.f32.mrb[0].mxu0
        %v1664 = vadd.f32 0.0, %v1663
        %v1665 = vpop.f32.mrb[0].mxu0
        %1666 = vmatprep.mubr.f32.mxu0 0.0
        %1667 = vmatmul.mubr.f32.gmra.mrb[0].mxu0 %v1564
        %v1668 = vpop.f32.mrb[0].mxu0
        %v1669 = vadd.f32 0.0, %v1668
        %v1670 = vpop.f32.mrb[0].mxu0
        %1671 = vmatprep.mubr.f32.mxu0 0.0
        %1672 = vmatmul.mubr.f32.gmra.mrb[0].mxu0 %v1566
        %v1673 = vpop.f32.mrb[0].mxu0
        %v1674 = vadd.f32 0.0, %v1673
        %v1675 = vpop.f32.mrb[0].mxu0
        %1676 = vmatprep.mubr.f32.mxu0 0.0
        %1677 = vmatmul.mubr.f32.gmra.mrb[0].mxu0 %v1568
        %v1678 = vpop.f32.mrb[0].mxu0
        %v1679 = vadd.f32 0.0, %v1678
        %v1680 = vpop.f32.mrb[0].mxu0
        %1681 = vmatprep.mubr.f32.mxu0 0.0
        %1682 = vmatmul.mubr.f32.gmra.mrb[0].mxu0 %v1570
        %v1683 = vpop.f32.mrb[0].mxu0
        %v1684 = vadd.f32 0.0, %v1683
        %v1685 = vpop.f32.mrb[0].mxu0
        %1686 = vmatprep.mubr.f32.mxu0 0.0
        %1687 = vmatmul.mubr.f32.gmra.mrb[0].mxu0 %v1572
        %v1688 = vpop.f32.mrb[0].mxu0
        %v1689 = vadd.f32 0.0, %v1688
        %v1690 = vpop.f32.mrb[0].mxu0
        %1691 = vmatprep.mubr.f32.mxu0 0.0
        %1692 = vmatmul.mubr.f32.gmra.mrb[0].mxu0 %v1574
        %v1693 = vpop.f32.mrb[0].mxu0
        %v1694 = vadd.f32 0.0, %v1693
        %v1695 = vpop.f32.mrb[0].mxu0
        %1696 = vdwg.mxu0
        %1697 = vrot.lane.b32.xlu0 %v756, 96
        %v1698 = vpop.permute.xlu0 %1697
        %1699 = vrot.lane.b32.xlu0 %v758, 96
        %v1700 = vpop.permute.xlu0 %1699
        %1701 = vrot.lane.b32.xlu0 %v760, 96
        %v1702 = vpop.permute.xlu0 %1701
        %1703 = vrot.lane.b32.xlu0 %v762, 96
        %v1704 = vpop.permute.xlu0 %1703
        %1705 = vrot.lane.b32.xlu0 %v764, 96
        %v1706 = vpop.permute.xlu0 %1705
        %1707 = vrot.lane.b32.xlu0 %v766, 96
        %v1708 = vpop.permute.xlu0 %1707
        %1709 = vrot.lane.b32.xlu0 %v768, 96
        %v1710 = vpop.permute.xlu0 %1709
        %1711 = vrot.lane.b32.xlu0 %v770, 96
        %v1712 = vpop.permute.xlu0 %1711
        %v1713 = vsel %vm947, %v756, 0
        %v1715 = vsel %vm947, %v758, 0
        %v1717 = vsel %vm947, %v760, 0
        %v1719 = vsel %vm947, %v762, 0
        %v1721 = vsel %vm947, %v764, 0
        %v1723 = vsel %vm947, %v766, 0
        %v1725 = vsel %vm947, %v768, 0
        %v1727 = vsel %vm947, %v770, 0
        %v1729 = vsel %vm947, %v1698, 0
        %v1731 = vsel %vm947, %v1700, 0
        %v1733 = vsel %vm947, %v1702, 0
        %v1735 = vsel %vm947, %v1704, 0
        %v1737 = vsel %vm947, %v1706, 0
        %v1739 = vsel %vm947, %v1708, 0
        %v1741 = vsel %vm947, %v1710, 0
        %v1743 = vsel %vm947, %v1712, 0
        %1745 = vmatprep.subr.mxu0 0.0
        %1746 = vmatpush1.xpose.msra.mxu0 %v1729
        %1747 = vmatprep.subr.mxu0 0.0
        %1748 = vmatpush1.xpose.msra.mxu0 %v1731
        %1749 = vmatprep.subr.mxu0 0.0
        %1750 = vmatpush1.xpose.msra.mxu0 %v1733
        %1751 = vmatprep.subr.mxu0 0.0
        %1752 = vmatpush1.xpose.msra.mxu0 %v1735
        %1753 = vmatprep.subr.mxu0 0.0
        %1754 = vmatpush1.xpose.msra.mxu0 %v1737
        %1755 = vmatprep.subr.mxu0 0.0
        %1756 = vmatpush1.xpose.msra.mxu0 %v1739
        %1757 = vmatprep.subr.mxu0 0.0
        %1758 = vmatpush1.xpose.msra.mxu0 %v1741
        %1759 = vmatprep.subr.mxu0 0.0
        %1760 = vmatpush1.xpose.msra.mxu0 %v1743
        %1761 = vmatprep.subr.mxu0 0.0
        %1762 = vmatpush1.xpose.msra.mxu0 0.0
        %1763 = vmatprep.subr.mxu0 0.0
        %1764 = vmatpush1.xpose.msra.mxu0 0.0
        %1765 = vmatprep.subr.mxu0 0.0
        %1766 = vmatpush1.xpose.msra.mxu0 0.0
        %1767 = vmatprep.subr.mxu0 0.0
        %1768 = vmatpush1.xpose.msra.mxu0 0.0
        %1769 = vmatprep.subr.mxu0 0.0
        %1770 = vmatpush1.xpose.msra.mxu0 0.0
        %1771 = vmatprep.subr.mxu0 0.0
        %1772 = vmatpush1.xpose.msra.mxu0 0.0
        %1773 = vmatprep.subr.mxu0 0.0
        %1774 = vmatpush1.xpose.msra.mxu0 0.0
        %1775 = vmatprep.subr.mxu0 0.0
        %1776 = vmatpush1.xpose.msra.mxu0 0.0
        %1777 = vmatprep.subr.mxu0 0.0
        %1778 = vmatpush1.xpose.msra.mxu0 0.0
        %1779 = vmatprep.subr.mxu0 0.0
        %1780 = vmatpush1.xpose.msra.mxu0 0.0
        %1781 = vmatprep.subr.mxu0 0.0
        %1782 = vmatpush1.xpose.msra.mxu0 0.0
        %1783 = vmatprep.subr.mxu0 0.0
        %1784 = vmatpush1.xpose.msra.mxu0 0.0
        %1785 = vmatprep.subr.mxu0 0.0
        %1786 = vmatpush1.xpose.msra.mxu0 0.0
        %1787 = vmatprep.subr.mxu0 0.0
        %1788 = vmatpush1.xpose.msra.mxu0 0.0
        %1789 = vmatprep.subr.mxu0 0.0
        %1790 = vmatpush1.xpose.msra.mxu0 0.0
        %1791 = vmatprep.subr.mxu0 0.0
        %1792 = vmatpush1.xpose.msra.mxu0 0.0
        %1793 = vmatprep.subr.mxu0 0.0
        %1794 = vmatpush1.xpose.msra.mxu0 0.0
        %1795 = vmatprep.subr.mxu0 0.0
        %1796 = vmatpush1.xpose.msra.mxu0 0.0
        %1797 = vmatprep.subr.mxu0 0.0
        %1798 = vmatpush1.xpose.msra.mxu0 0.0
        %1799 = vmatprep.subr.mxu0 0.0
        %1800 = vmatpush1.xpose.msra.mxu0 0.0
        %1801 = vmatprep.subr.mxu0 0.0
        %1802 = vmatpush1.xpose.msra.mxu0 0.0
        %1803 = vmatprep.subr.mxu0 0.0
        %1804 = vmatpush1.xpose.msra.mxu0 0.0
        %1805 = vmatprep.subr.mxu0 0.0
        %1806 = vmatpush1.xpose.msra.mxu0 0.0
        %1807 = vmatprep.subr.mxu0 0.0
        %1808 = vmatpush1.xpose.msra.mxu0 0.0
        %1809 = vmatprep.mubr.f32.mxu0 0.0
        %1810 = vmatmul.mubr.f32.gmra.mrb[0].mxu0 %v1713
        %v1811 = vpop.f32.mrb[0].mxu0
        %v1812 = vadd.f32 0.0, %v1811
        %v1813 = vpop.f32.mrb[0].mxu0
        %1814 = vmatprep.mubr.f32.mxu0 0.0
        %1815 = vmatmul.mubr.f32.gmra.mrb[0].mxu0 %v1715
        %v1816 = vpop.f32.mrb[0].mxu0
        %v1817 = vadd.f32 0.0, %v1816
        %v1818 = vpop.f32.mrb[0].mxu0
        %1819 = vmatprep.mubr.f32.mxu0 0.0
        %1820 = vmatmul.mubr.f32.gmra.mrb[0].mxu0 %v1717
        %v1821 = vpop.f32.mrb[0].mxu0
        %v1822 = vadd.f32 0.0, %v1821
        %v1823 = vpop.f32.mrb[0].mxu0
        %1824 = vmatprep.mubr.f32.mxu0 0.0
        %1825 = vmatmul.mubr.f32.gmra.mrb[0].mxu0 %v1719
        %v1826 = vpop.f32.mrb[0].mxu0
        %v1827 = vadd.f32 0.0, %v1826
        %v1828 = vpop.f32.mrb[0].mxu0
        %1829 = vmatprep.mubr.f32.mxu0 0.0
        %1830 = vmatmul.mubr.f32.gmra.mrb[0].mxu0 %v1721
        %v1831 = vpop.f32.mrb[0].mxu0
        %v1832 = vadd.f32 0.0, %v1831
        %v1833 = vpop.f32.mrb[0].mxu0
        %1834 = vmatprep.mubr.f32.mxu0 0.0
        %1835 = vmatmul.mubr.f32.gmra.mrb[0].mxu0 %v1723
        %v1836 = vpop.f32.mrb[0].mxu0
        %v1837 = vadd.f32 0.0, %v1836
        %v1838 = vpop.f32.mrb[0].mxu0
        %1839 = vmatprep.mubr.f32.mxu0 0.0
        %1840 = vmatmul.mubr.f32.gmra.mrb[0].mxu0 %v1725
        %v1841 = vpop.f32.mrb[0].mxu0
        %v1842 = vadd.f32 0.0, %v1841
        %v1843 = vpop.f32.mrb[0].mxu0
        %1844 = vmatprep.mubr.f32.mxu0 0.0
        %1845 = vmatmul.mubr.f32.gmra.mrb[0].mxu0 %v1727
        %v1846 = vpop.f32.mrb[0].mxu0
        %v1847 = vadd.f32 0.0, %v1846
        %v1848 = vpop.f32.mrb[0].mxu0
        %1849 = vdwg.mxu0
        %1850 = vrot.lane.b32.xlu0 %v772, 96
        %v1851 = vpop.permute.xlu0 %1850
        %1852 = vrot.lane.b32.xlu0 %v774, 96
        %v1853 = vpop.permute.xlu0 %1852
        %1854 = vrot.lane.b32.xlu0 %v776, 96
        %v1855 = vpop.permute.xlu0 %1854
        %1856 = vrot.lane.b32.xlu0 %v778, 96
        %v1857 = vpop.permute.xlu0 %1856
        %1858 = vrot.lane.b32.xlu0 %v780, 96
        %v1859 = vpop.permute.xlu0 %1858
        %1860 = vrot.lane.b32.xlu0 %v782, 96
        %v1861 = vpop.permute.xlu0 %1860
        %1862 = vrot.lane.b32.xlu0 %v784, 96
        %v1863 = vpop.permute.xlu0 %1862
        %1864 = vrot.lane.b32.xlu0 %v786, 96
        %v1865 = vpop.permute.xlu0 %1864
        %v1866 = vsel %vm947, %v772, 0
        %v1868 = vsel %vm947, %v774, 0
        %v1870 = vsel %vm947, %v776, 0
        %v1872 = vsel %vm947, %v778, 0
        %v1874 = vsel %vm947, %v780, 0
        %v1876 = vsel %vm947, %v782, 0
        %v1878 = vsel %vm947, %v784, 0
        %v1880 = vsel %vm947, %v786, 0
        %v1882 = vsel %vm947, %v1851, 0
        %v1884 = vsel %vm947, %v1853, 0
        %v1886 = vsel %vm947, %v1855, 0
        %v1888 = vsel %vm947, %v1857, 0
        %v1890 = vsel %vm947, %v1859, 0
        %v1892 = vsel %vm947, %v1861, 0
        %v1894 = vsel %vm947, %v1863, 0
        %v1896 = vsel %vm947, %v1865, 0
        %1898 = vmatprep.subr.mxu0 0.0
        %1899 = vmatpush1.xpose.msra.mxu0 %v1882
        %1900 = vmatprep.subr.mxu0 0.0
        %1901 = vmatpush1.xpose.msra.mxu0 %v1884
        %1902 = vmatprep.subr.mxu0 0.0
        %1903 = vmatpush1.xpose.msra.mxu0 %v1886
        %1904 = vmatprep.subr.mxu0 0.0
        %1905 = vmatpush1.xpose.msra.mxu0 %v1888
        %1906 = vmatprep.subr.mxu0 0.0
        %1907 = vmatpush1.xpose.msra.mxu0 %v1890
        %1908 = vmatprep.subr.mxu0 0.0
        %1909 = vmatpush1.xpose.msra.mxu0 %v1892
        %1910 = vmatprep.subr.mxu0 0.0
        %1911 = vmatpush1.xpose.msra.mxu0 %v1894
        %1912 = vmatprep.subr.mxu0 0.0
        %1913 = vmatpush1.xpose.msra.mxu0 %v1896
        %1914 = vmatprep.subr.mxu0 0.0
        %1915 = vmatpush1.xpose.msra.mxu0 0.0
        %1916 = vmatprep.subr.mxu0 0.0
        %1917 = vmatpush1.xpose.msra.mxu0 0.0
        %1918 = vmatprep.subr.mxu0 0.0
        %1919 = vmatpush1.xpose.msra.mxu0 0.0
        %1920 = vmatprep.subr.mxu0 0.0
        %1921 = vmatpush1.xpose.msra.mxu0 0.0
        %1922 = vmatprep.subr.mxu0 0.0
        %1923 = vmatpush1.xpose.msra.mxu0 0.0
        %1924 = vmatprep.subr.mxu0 0.0
        %1925 = vmatpush1.xpose.msra.mxu0 0.0
        %1926 = vmatprep.subr.mxu0 0.0
        %1927 = vmatpush1.xpose.msra.mxu0 0.0
        %1928 = vmatprep.subr.mxu0 0.0
        %1929 = vmatpush1.xpose.msra.mxu0 0.0
        %1930 = vmatprep.subr.mxu0 0.0
        %1931 = vmatpush1.xpose.msra.mxu0 0.0
        %1932 = vmatprep.subr.mxu0 0.0
        %1933 = vmatpush1.xpose.msra.mxu0 0.0
        %1934 = vmatprep.subr.mxu0 0.0
        %1935 = vmatpush1.xpose.msra.mxu0 0.0
        %1936 = vmatprep.subr.mxu0 0.0
        %1937 = vmatpush1.xpose.msra.mxu0 0.0
        %1938 = vmatprep.subr.mxu0 0.0
        %1939 = vmatpush1.xpose.msra.mxu0 0.0
        %1940 = vmatprep.subr.mxu0 0.0
        %1941 = vmatpush1.xpose.msra.mxu0 0.0
        %1942 = vmatprep.subr.mxu0 0.0
        %1943 = vmatpush1.xpose.msra.mxu0 0.0
        %1944 = vmatprep.subr.mxu0 0.0
        %1945 = vmatpush1.xpose.msra.mxu0 0.0
        %1946 = vmatprep.subr.mxu0 0.0
        %1947 = vmatpush1.xpose.msra.mxu0 0.0
        %1948 = vmatprep.subr.mxu0 0.0
        %1949 = vmatpush1.xpose.msra.mxu0 0.0
        %1950 = vmatprep.subr.mxu0 0.0
        %1951 = vmatpush1.xpose.msra.mxu0 0.0
        %1952 = vmatprep.subr.mxu0 0.0
        %1953 = vmatpush1.xpose.msra.mxu0 0.0
        %1954 = vmatprep.subr.mxu0 0.0
        %1955 = vmatpush1.xpose.msra.mxu0 0.0
        %1956 = vmatprep.subr.mxu0 0.0
        %1957 = vmatpush1.xpose.msra.mxu0 0.0
        %1958 = vmatprep.subr.mxu0 0.0
        %1959 = vmatpush1.xpose.msra.mxu0 0.0
        %1960 = vmatprep.subr.mxu0 0.0
        %1961 = vmatpush1.xpose.msra.mxu0 0.0
        %1962 = vmatprep.mubr.f32.mxu0 0.0
        %1963 = vmatmul.mubr.f32.gmra.mrb[0].mxu0 %v1866
        %v1964 = vpop.f32.mrb[0].mxu0
        %v1965 = vadd.f32 0.0, %v1964
        %v1966 = vpop.f32.mrb[0].mxu0
        %1967 = vmatprep.mubr.f32.mxu0 0.0
        %1968 = vmatmul.mubr.f32.gmra.mrb[0].mxu0 %v1868
        %v1969 = vpop.f32.mrb[0].mxu0
        %v1970 = vadd.f32 0.0, %v1969
        %v1971 = vpop.f32.mrb[0].mxu0
        %1972 = vmatprep.mubr.f32.mxu0 0.0
        %1973 = vmatmul.mubr.f32.gmra.mrb[0].mxu0 %v1870
        %v1974 = vpop.f32.mrb[0].mxu0
        %v1975 = vadd.f32 0.0, %v1974
        %v1976 = vpop.f32.mrb[0].mxu0
        %1977 = vmatprep.mubr.f32.mxu0 0.0
        %1978 = vmatmul.mubr.f32.gmra.mrb[0].mxu0 %v1872
        %v1979 = vpop.f32.mrb[0].mxu0
        %v1980 = vadd.f32 0.0, %v1979
        %v1981 = vpop.f32.mrb[0].mxu0
        %1982 = vmatprep.mubr.f32.mxu0 0.0
        %1983 = vmatmul.mubr.f32.gmra.mrb[0].mxu0 %v1874
        %v1984 = vpop.f32.mrb[0].mxu0
        %v1985 = vadd.f32 0.0, %v1984
        %v1986 = vpop.f32.mrb[0].mxu0
        %1987 = vmatprep.mubr.f32.mxu0 0.0
        %1988 = vmatmul.mubr.f32.gmra.mrb[0].mxu0 %v1876
        %v1989 = vpop.f32.mrb[0].mxu0
        %v1990 = vadd.f32 0.0, %v1989
        %v1991 = vpop.f32.mrb[0].mxu0
        %1992 = vmatprep.mubr.f32.mxu0 0.0
        %1993 = vmatmul.mubr.f32.gmra.mrb[0].mxu0 %v1878
        %v1994 = vpop.f32.mrb[0].mxu0
        %v1995 = vadd.f32 0.0, %v1994
        %v1996 = vpop.f32.mrb[0].mxu0
        %1997 = vmatprep.mubr.f32.mxu0 0.0
        %1998 = vmatmul.mubr.f32.gmra.mrb[0].mxu0 %v1880
        %v1999 = vpop.f32.mrb[0].mxu0
        %v2000 = vadd.f32 0.0, %v1999
        %v2001 = vpop.f32.mrb[0].mxu0
        %2002 = vdwg.mxu0
        %2003 = vrot.lane.b32.xlu0 %v788, 96
        %v2004 = vpop.permute.xlu0 %2003
        %2005 = vrot.lane.b32.xlu0 %v790, 96
        %v2006 = vpop.permute.xlu0 %2005
        %2007 = vrot.lane.b32.xlu0 %v792, 96
        %v2008 = vpop.permute.xlu0 %2007
        %2009 = vrot.lane.b32.xlu0 %v794, 96
        %v2010 = vpop.permute.xlu0 %2009
        %2011 = vrot.lane.b32.xlu0 %v796, 96
        %v2012 = vpop.permute.xlu0 %2011
        %2013 = vrot.lane.b32.xlu0 %v798, 96
        %v2014 = vpop.permute.xlu0 %2013
        %2015 = vrot.lane.b32.xlu0 %v800, 96
        %v2016 = vpop.permute.xlu0 %2015
        %2017 = vrot.lane.b32.xlu0 %v802, 96
        %v2018 = vpop.permute.xlu0 %2017
        %v2019 = vsel %vm947, %v788, 0
        %v2021 = vsel %vm947, %v790, 0
        %v2023 = vsel %vm947, %v792, 0
        %v2025 = vsel %vm947, %v794, 0
        %v2027 = vsel %vm947, %v796, 0
        %v2029 = vsel %vm947, %v798, 0
        %v2031 = vsel %vm947, %v800, 0
        %v2033 = vsel %vm947, %v802, 0
        %v2035 = vsel %vm947, %v2004, 0
        %v2037 = vsel %vm947, %v2006, 0
        %v2039 = vsel %vm947, %v2008, 0
        %v2041 = vsel %vm947, %v2010, 0
        %v2043 = vsel %vm947, %v2012, 0
        %v2045 = vsel %vm947, %v2014, 0
        %v2047 = vsel %vm947, %v2016, 0
        %v2049 = vsel %vm947, %v2018, 0
        %2051 = vmatprep.subr.mxu0 0.0
        %2052 = vmatpush1.xpose.msra.mxu0 %v2035
        %2053 = vmatprep.subr.mxu0 0.0
        %2054 = vmatpush1.xpose.msra.mxu0 %v2037
        %2055 = vmatprep.subr.mxu0 0.0
        %2056 = vmatpush1.xpose.msra.mxu0 %v2039
        %2057 = vmatprep.subr.mxu0 0.0
        %2058 = vmatpush1.xpose.msra.mxu0 %v2041
        %2059 = vmatprep.subr.mxu0 0.0
        %2060 = vmatpush1.xpose.msra.mxu0 %v2043
        %2061 = vmatprep.subr.mxu0 0.0
        %2062 = vmatpush1.xpose.msra.mxu0 %v2045
        %2063 = vmatprep.subr.mxu0 0.0
        %2064 = vmatpush1.xpose.msra.mxu0 %v2047
        %2065 = vmatprep.subr.mxu0 0.0
        %2066 = vmatpush1.xpose.msra.mxu0 %v2049
        %2067 = vmatprep.subr.mxu0 0.0
        %2068 = vmatpush1.xpose.msra.mxu0 0.0
        %2069 = vmatprep.subr.mxu0 0.0
        %2070 = vmatpush1.xpose.msra.mxu0 0.0
        %2071 = vmatprep.subr.mxu0 0.0
        %2072 = vmatpush1.xpose.msra.mxu0 0.0
        %2073 = vmatprep.subr.mxu0 0.0
        %2074 = vmatpush1.xpose.msra.mxu0 0.0
        %2075 = vmatprep.subr.mxu0 0.0
        %2076 = vmatpush1.xpose.msra.mxu0 0.0
        %2077 = vmatprep.subr.mxu0 0.0
        %2078 = vmatpush1.xpose.msra.mxu0 0.0
        %2079 = vmatprep.subr.mxu0 0.0
        %2080 = vmatpush1.xpose.msra.mxu0 0.0
        %2081 = vmatprep.subr.mxu0 0.0
        %2082 = vmatpush1.xpose.msra.mxu0 0.0
        %2083 = vmatprep.subr.mxu0 0.0
        %2084 = vmatpush1.xpose.msra.mxu0 0.0
        %2085 = vmatprep.subr.mxu0 0.0
        %2086 = vmatpush1.xpose.msra.mxu0 0.0
        %2087 = vmatprep.subr.mxu0 0.0
        %2088 = vmatpush1.xpose.msra.mxu0 0.0
        %2089 = vmatprep.subr.mxu0 0.0
        %2090 = vmatpush1.xpose.msra.mxu0 0.0
        %2091 = vmatprep.subr.mxu0 0.0
        %2092 = vmatpush1.xpose.msra.mxu0 0.0
        %2093 = vmatprep.subr.mxu0 0.0
        %2094 = vmatpush1.xpose.msra.mxu0 0.0
        %2095 = vmatprep.subr.mxu0 0.0
        %2096 = vmatpush1.xpose.msra.mxu0 0.0
        %2097 = vmatprep.subr.mxu0 0.0
        %2098 = vmatpush1.xpose.msra.mxu0 0.0
        %2099 = vmatprep.subr.mxu0 0.0
        %2100 = vmatpush1.xpose.msra.mxu0 0.0
        %2101 = vmatprep.subr.mxu0 0.0
        %2102 = vmatpush1.xpose.msra.mxu0 0.0
        %2103 = vmatprep.subr.mxu0 0.0
        %2104 = vmatpush1.xpose.msra.mxu0 0.0
        %2105 = vmatprep.subr.mxu0 0.0
        %2106 = vmatpush1.xpose.msra.mxu0 0.0
        %2107 = vmatprep.subr.mxu0 0.0
        %2108 = vmatpush1.xpose.msra.mxu0 0.0
        %2109 = vmatprep.subr.mxu0 0.0
        %2110 = vmatpush1.xpose.msra.mxu0 0.0
        %2111 = vmatprep.subr.mxu0 0.0
        %2112 = vmatpush1.xpose.msra.mxu0 0.0
        %2113 = vmatprep.subr.mxu0 0.0
        %2114 = vmatpush1.xpose.msra.mxu0 0.0
        %2115 = vmatprep.mubr.f32.mxu0 0.0
        %2116 = vmatmul.mubr.f32.gmra.mrb[0].mxu0 %v2019
        %v2117 = vpop.f32.mrb[0].mxu0
        %v2118 = vadd.f32 0.0, %v2117
        %v2119 = vpop.f32.mrb[0].mxu0
        %2120 = vmatprep.mubr.f32.mxu0 0.0
        %2121 = vmatmul.mubr.f32.gmra.mrb[0].mxu0 %v2021
        %v2122 = vpop.f32.mrb[0].mxu0
        %v2123 = vadd.f32 0.0, %v2122
        %v2124 = vpop.f32.mrb[0].mxu0
        %2125 = vmatprep.mubr.f32.mxu0 0.0
        %2126 = vmatmul.mubr.f32.gmra.mrb[0].mxu0 %v2023
        %v2127 = vpop.f32.mrb[0].mxu0
        %v2128 = vadd.f32 0.0, %v2127
        %v2129 = vpop.f32.mrb[0].mxu0
        %2130 = vmatprep.mubr.f32.mxu0 0.0
        %2131 = vmatmul.mubr.f32.gmra.mrb[0].mxu0 %v2025
        %v2132 = vpop.f32.mrb[0].mxu0
        %v2133 = vadd.f32 0.0, %v2132
        %v2134 = vpop.f32.mrb[0].mxu0
        %2135 = vmatprep.mubr.f32.mxu0 0.0
        %2136 = vmatmul.mubr.f32.gmra.mrb[0].mxu0 %v2027
        %v2137 = vpop.f32.mrb[0].mxu0
        %v2138 = vadd.f32 0.0, %v2137
        %v2139 = vpop.f32.mrb[0].mxu0
        %2140 = vmatprep.mubr.f32.mxu0 0.0
        %2141 = vmatmul.mubr.f32.gmra.mrb[0].mxu0 %v2029
        %v2142 = vpop.f32.mrb[0].mxu0
        %v2143 = vadd.f32 0.0, %v2142
        %v2144 = vpop.f32.mrb[0].mxu0
        %2145 = vmatprep.mubr.f32.mxu0 0.0
        %2146 = vmatmul.mubr.f32.gmra.mrb[0].mxu0 %v2031
        %v2147 = vpop.f32.mrb[0].mxu0
        %v2148 = vadd.f32 0.0, %v2147
        %v2149 = vpop.f32.mrb[0].mxu0
        %2150 = vmatprep.mubr.f32.mxu0 0.0
        %2151 = vmatmul.mubr.f32.gmra.mrb[0].mxu0 %v2033
        %v2152 = vpop.f32.mrb[0].mxu0
        %v2153 = vadd.f32 0.0, %v2152
        %v2154 = vpop.f32.mrb[0].mxu0
        %2155 = vdwg.mxu0
        %2156 = vrot.lane.b32.xlu0 %v804, 96
        %v2157 = vpop.permute.xlu0 %2156
        %2158 = vrot.lane.b32.xlu0 %v806, 96
        %v2159 = vpop.permute.xlu0 %2158
        %2160 = vrot.lane.b32.xlu0 %v808, 96
        %v2161 = vpop.permute.xlu0 %2160
        %2162 = vrot.lane.b32.xlu0 %v810, 96
        %v2163 = vpop.permute.xlu0 %2162
        %2164 = vrot.lane.b32.xlu0 %v812, 96
        %v2165 = vpop.permute.xlu0 %2164
        %2166 = vrot.lane.b32.xlu0 %v814, 96
        %v2167 = vpop.permute.xlu0 %2166
        %2168 = vrot.lane.b32.xlu0 %v816, 96
        %v2169 = vpop.permute.xlu0 %2168
        %2170 = vrot.lane.b32.xlu0 %v818, 96
        %v2171 = vpop.permute.xlu0 %2170
        %v2172 = vsel %vm947, %v804, 0
        %v2174 = vsel %vm947, %v806, 0
        %v2176 = vsel %vm947, %v808, 0
        %v2178 = vsel %vm947, %v810, 0
        %v2180 = vsel %vm947, %v812, 0
        %v2182 = vsel %vm947, %v814, 0
        %v2184 = vsel %vm947, %v816, 0
        %v2186 = vsel %vm947, %v818, 0
        %v2188 = vsel %vm947, %v2157, 0
        %v2190 = vsel %vm947, %v2159, 0
        %v2192 = vsel %vm947, %v2161, 0
        %v2194 = vsel %vm947, %v2163, 0
        %v2196 = vsel %vm947, %v2165, 0
        %v2198 = vsel %vm947, %v2167, 0
        %v2200 = vsel %vm947, %v2169, 0
        %v2202 = vsel %vm947, %v2171, 0
        %2204 = vmatprep.subr.mxu0 0.0
        %2205 = vmatpush1.xpose.msra.mxu0 %v2188
        %2206 = vmatprep.subr.mxu0 0.0
        %2207 = vmatpush1.xpose.msra.mxu0 %v2190
        %2208 = vmatprep.subr.mxu0 0.0
        %2209 = vmatpush1.xpose.msra.mxu0 %v2192
        %2210 = vmatprep.subr.mxu0 0.0
        %2211 = vmatpush1.xpose.msra.mxu0 %v2194
        %2212 = vmatprep.subr.mxu0 0.0
        %2213 = vmatpush1.xpose.msra.mxu0 %v2196
        %2214 = vmatprep.subr.mxu0 0.0
        %2215 = vmatpush1.xpose.msra.mxu0 %v2198
        %2216 = vmatprep.subr.mxu0 0.0
        %2217 = vmatpush1.xpose.msra.mxu0 %v2200
        %2218 = vmatprep.subr.mxu0 0.0
        %2219 = vmatpush1.xpose.msra.mxu0 %v2202
        %2220 = vmatprep.subr.mxu0 0.0
        %2221 = vmatpush1.xpose.msra.mxu0 0.0
        %2222 = vmatprep.subr.mxu0 0.0
        %2223 = vmatpush1.xpose.msra.mxu0 0.0
        %2224 = vmatprep.subr.mxu0 0.0
        %2225 = vmatpush1.xpose.msra.mxu0 0.0
        %2226 = vmatprep.subr.mxu0 0.0
        %2227 = vmatpush1.xpose.msra.mxu0 0.0
        %2228 = vmatprep.subr.mxu0 0.0
        %2229 = vmatpush1.xpose.msra.mxu0 0.0
        %2230 = vmatprep.subr.mxu0 0.0
        %2231 = vmatpush1.xpose.msra.mxu0 0.0
        %2232 = vmatprep.subr.mxu0 0.0
        %2233 = vmatpush1.xpose.msra.mxu0 0.0
        %2234 = vmatprep.subr.mxu0 0.0
        %2235 = vmatpush1.xpose.msra.mxu0 0.0
        %2236 = vmatprep.subr.mxu0 0.0
        %2237 = vmatpush1.xpose.msra.mxu0 0.0
        %2238 = vmatprep.subr.mxu0 0.0
        %2239 = vmatpush1.xpose.msra.mxu0 0.0
        %2240 = vmatprep.subr.mxu0 0.0
        %2241 = vmatpush1.xpose.msra.mxu0 0.0
        %2242 = vmatprep.subr.mxu0 0.0
        %2243 = vmatpush1.xpose.msra.mxu0 0.0
        %2244 = vmatprep.subr.mxu0 0.0
        %2245 = vmatpush1.xpose.msra.mxu0 0.0
        %2246 = vmatprep.subr.mxu0 0.0
        %2247 = vmatpush1.xpose.msra.mxu0 0.0
        %2248 = vmatprep.subr.mxu0 0.0
        %2249 = vmatpush1.xpose.msra.mxu0 0.0
        %2250 = vmatprep.subr.mxu0 0.0
        %2251 = vmatpush1.xpose.msra.mxu0 0.0
        %2252 = vmatprep.subr.mxu0 0.0
        %2253 = vmatpush1.xpose.msra.mxu0 0.0
        %2254 = vmatprep.subr.mxu0 0.0
        %2255 = vmatpush1.xpose.msra.mxu0 0.0
        %2256 = vmatprep.subr.mxu0 0.0
        %2257 = vmatpush1.xpose.msra.mxu0 0.0
        %2258 = vmatprep.subr.mxu0 0.0
        %2259 = vmatpush1.xpose.msra.mxu0 0.0
        %2260 = vmatprep.subr.mxu0 0.0
        %2261 = vmatpush1.xpose.msra.mxu0 0.0
        %2262 = vmatprep.subr.mxu0 0.0
        %2263 = vmatpush1.xpose.msra.mxu0 0.0
        %2264 = vmatprep.subr.mxu0 0.0
        %2265 = vmatpush1.xpose.msra.mxu0 0.0
        %2266 = vmatprep.subr.mxu0 0.0
        %2267 = vmatpush1.xpose.msra.mxu0 0.0
        %2268 = vmatprep.mubr.f32.mxu0 0.0
        %2269 = vmatmul.mubr.f32.gmra.mrb[0].mxu0 %v2172
        %v2270 = vpop.f32.mrb[0].mxu0
        %v2271 = vadd.f32 0.0, %v2270
        %v2272 = vpop.f32.mrb[0].mxu0
        %2273 = vmatprep.mubr.f32.mxu0 0.0
        %2274 = vmatmul.mubr.f32.gmra.mrb[0].mxu0 %v2174
        %v2275 = vpop.f32.mrb[0].mxu0
        %v2276 = vadd.f32 0.0, %v2275
        %v2277 = vpop.f32.mrb[0].mxu0
        %2278 = vmatprep.mubr.f32.mxu0 0.0
        %2279 = vmatmul.mubr.f32.gmra.mrb[0].mxu0 %v2176
        %v2280 = vpop.f32.mrb[0].mxu0
        %v2281 = vadd.f32 0.0, %v2280
        %v2282 = vpop.f32.mrb[0].mxu0
        %2283 = vmatprep.mubr.f32.mxu0 0.0
        %2284 = vmatmul.mubr.f32.gmra.mrb[0].mxu0 %v2178
        %v2285 = vpop.f32.mrb[0].mxu0
        %v2286 = vadd.f32 0.0, %v2285
        %v2287 = vpop.f32.mrb[0].mxu0
        %2288 = vmatprep.mubr.f32.mxu0 0.0
        %2289 = vmatmul.mubr.f32.gmra.mrb[0].mxu0 %v2180
        %v2290 = vpop.f32.mrb[0].mxu0
        %v2291 = vadd.f32 0.0, %v2290
        %v2292 = vpop.f32.mrb[0].mxu0
        %2293 = vmatprep.mubr.f32.mxu0 0.0
        %2294 = vmatmul.mubr.f32.gmra.mrb[0].mxu0 %v2182
        %v2295 = vpop.f32.mrb[0].mxu0
        %v2296 = vadd.f32 0.0, %v2295
        %v2297 = vpop.f32.mrb[0].mxu0
        %2298 = vmatprep.mubr.f32.mxu0 0.0
        %2299 = vmatmul.mubr.f32.gmra.mrb[0].mxu0 %v2184
        %v2300 = vpop.f32.mrb[0].mxu0
        %v2301 = vadd.f32 0.0, %v2300
        %v2302 = vpop.f32.mrb[0].mxu0
        %2303 = vmatprep.mubr.f32.mxu0 0.0
        %2304 = vmatmul.mubr.f32.gmra.mrb[0].mxu0 %v2186
        %v2305 = vpop.f32.mrb[0].mxu0
        %v2306 = vadd.f32 0.0, %v2305
        %v2307 = vpop.f32.mrb[0].mxu0
        %2308 = vdwg.mxu0
        %2309 = vrot.lane.b32.xlu0 %v820, 96
        %v2310 = vpop.permute.xlu0 %2309
        %2311 = vrot.lane.b32.xlu0 %v822, 96
        %v2312 = vpop.permute.xlu0 %2311
        %2313 = vrot.lane.b32.xlu0 %v824, 96
        %v2314 = vpop.permute.xlu0 %2313
        %2315 = vrot.lane.b32.xlu0 %v826, 96
        %v2316 = vpop.permute.xlu0 %2315
        %2317 = vrot.lane.b32.xlu0 %v828, 96
        %v2318 = vpop.permute.xlu0 %2317
        %2319 = vrot.lane.b32.xlu0 %v830, 96
        %v2320 = vpop.permute.xlu0 %2319
        %2321 = vrot.lane.b32.xlu0 %v832, 96
        %v2322 = vpop.permute.xlu0 %2321
        %2323 = vrot.lane.b32.xlu0 %v834, 96
        %v2324 = vpop.permute.xlu0 %2323
        %v2325 = vsel %vm947, %v820, 0
        %v2327 = vsel %vm947, %v822, 0
        %v2329 = vsel %vm947, %v824, 0
        %v2331 = vsel %vm947, %v826, 0
        %v2333 = vsel %vm947, %v828, 0
        %v2335 = vsel %vm947, %v830, 0
        %v2337 = vsel %vm947, %v832, 0
        %v2339 = vsel %vm947, %v834, 0
        %v2341 = vsel %vm947, %v2310, 0
        %v2343 = vsel %vm947, %v2312, 0
        %v2345 = vsel %vm947, %v2314, 0
        %v2347 = vsel %vm947, %v2316, 0
        %v2349 = vsel %vm947, %v2318, 0
        %v2351 = vsel %vm947, %v2320, 0
        %v2353 = vsel %vm947, %v2322, 0
        %v2355 = vsel %vm947, %v2324, 0
        %2357 = vmatprep.subr.mxu0 0.0
        %2358 = vmatpush1.xpose.msra.mxu0 %v2341
        %2359 = vmatprep.subr.mxu0 0.0
        %2360 = vmatpush1.xpose.msra.mxu0 %v2343
        %2361 = vmatprep.subr.mxu0 0.0
        %2362 = vmatpush1.xpose.msra.mxu0 %v2345
        %2363 = vmatprep.subr.mxu0 0.0
        %2364 = vmatpush1.xpose.msra.mxu0 %v2347
        %2365 = vmatprep.subr.mxu0 0.0
        %2366 = vmatpush1.xpose.msra.mxu0 %v2349
        %2367 = vmatprep.subr.mxu0 0.0
        %2368 = vmatpush1.xpose.msra.mxu0 %v2351
        %2369 = vmatprep.subr.mxu0 0.0
        %2370 = vmatpush1.xpose.msra.mxu0 %v2353
        %2371 = vmatprep.subr.mxu0 0.0
        %2372 = vmatpush1.xpose.msra.mxu0 %v2355
        %2373 = vmatprep.subr.mxu0 0.0
        %2374 = vmatpush1.xpose.msra.mxu0 0.0
        %2375 = vmatprep.subr.mxu0 0.0
        %2376 = vmatpush1.xpose.msra.mxu0 0.0
        %2377 = vmatprep.subr.mxu0 0.0
        %2378 = vmatpush1.xpose.msra.mxu0 0.0
        %2379 = vmatprep.subr.mxu0 0.0
        %2380 = vmatpush1.xpose.msra.mxu0 0.0
        %2381 = vmatprep.subr.mxu0 0.0
        %2382 = vmatpush1.xpose.msra.mxu0 0.0
        %2383 = vmatprep.subr.mxu0 0.0
        %2384 = vmatpush1.xpose.msra.mxu0 0.0
        %2385 = vmatprep.subr.mxu0 0.0
        %2386 = vmatpush1.xpose.msra.mxu0 0.0
        %2387 = vmatprep.subr.mxu0 0.0
        %2388 = vmatpush1.xpose.msra.mxu0 0.0
        %2389 = vmatprep.subr.mxu0 0.0
        %2390 = vmatpush1.xpose.msra.mxu0 0.0
        %2391 = vmatprep.subr.mxu0 0.0
        %2392 = vmatpush1.xpose.msra.mxu0 0.0
        %2393 = vmatprep.subr.mxu0 0.0
        %2394 = vmatpush1.xpose.msra.mxu0 0.0
        %2395 = vmatprep.subr.mxu0 0.0
        %2396 = vmatpush1.xpose.msra.mxu0 0.0
        %2397 = vmatprep.subr.mxu0 0.0
        %2398 = vmatpush1.xpose.msra.mxu0 0.0
        %2399 = vmatprep.subr.mxu0 0.0
        %2400 = vmatpush1.xpose.msra.mxu0 0.0
        %2401 = vmatprep.subr.mxu0 0.0
        %2402 = vmatpush1.xpose.msra.mxu0 0.0
        %2403 = vmatprep.subr.mxu0 0.0
        %2404 = vmatpush1.xpose.msra.mxu0 0.0
        %2405 = vmatprep.subr.mxu0 0.0
        %2406 = vmatpush1.xpose.msra.mxu0 0.0
        %2407 = vmatprep.subr.mxu0 0.0
        %2408 = vmatpush1.xpose.msra.mxu0 0.0
        %2409 = vmatprep.subr.mxu0 0.0
        %2410 = vmatpush1.xpose.msra.mxu0 0.0
        %2411 = vmatprep.subr.mxu0 0.0
        %2412 = vmatpush1.xpose.msra.mxu0 0.0
        %2413 = vmatprep.subr.mxu0 0.0
        %2414 = vmatpush1.xpose.msra.mxu0 0.0
        %2415 = vmatprep.subr.mxu0 0.0
        %2416 = vmatpush1.xpose.msra.mxu0 0.0
        %2417 = vmatprep.subr.mxu0 0.0
        %2418 = vmatpush1.xpose.msra.mxu0 0.0
        %2419 = vmatprep.subr.mxu0 0.0
        %2420 = vmatpush1.xpose.msra.mxu0 0.0
        %2421 = vmatprep.mubr.f32.mxu0 0.0
        %2422 = vmatmul.mubr.f32.gmra.mrb[0].mxu0 %v2325
        %v2423 = vpop.f32.mrb[0].mxu0
        %v2424 = vadd.f32 0.0, %v2423
        %v2425 = vpop.f32.mrb[0].mxu0
        %2426 = vmatprep.mubr.f32.mxu0 0.0
        %2427 = vmatmul.mubr.f32.gmra.mrb[0].mxu0 %v2327
        %v2428 = vpop.f32.mrb[0].mxu0
        %v2429 = vadd.f32 0.0, %v2428
        %v2430 = vpop.f32.mrb[0].mxu0
        %2431 = vmatprep.mubr.f32.mxu0 0.0
        %2432 = vmatmul.mubr.f32.gmra.mrb[0].mxu0 %v2329
        %v2433 = vpop.f32.mrb[0].mxu0
        %v2434 = vadd.f32 0.0, %v2433
        %v2435 = vpop.f32.mrb[0].mxu0
        %2436 = vmatprep.mubr.f32.mxu0 0.0
        %2437 = vmatmul.mubr.f32.gmra.mrb[0].mxu0 %v2331
        %v2438 = vpop.f32.mrb[0].mxu0
        %v2439 = vadd.f32 0.0, %v2438
        %v2440 = vpop.f32.mrb[0].mxu0
        %2441 = vmatprep.mubr.f32.mxu0 0.0
        %2442 = vmatmul.mubr.f32.gmra.mrb[0].mxu0 %v2333
        %v2443 = vpop.f32.mrb[0].mxu0
        %v2444 = vadd.f32 0.0, %v2443
        %v2445 = vpop.f32.mrb[0].mxu0
        %2446 = vmatprep.mubr.f32.mxu0 0.0
        %2447 = vmatmul.mubr.f32.gmra.mrb[0].mxu0 %v2335
        %v2448 = vpop.f32.mrb[0].mxu0
        %v2449 = vadd.f32 0.0, %v2448
        %v2450 = vpop.f32.mrb[0].mxu0
        %2451 = vmatprep.mubr.f32.mxu0 0.0
        %2452 = vmatmul.mubr.f32.gmra.mrb[0].mxu0 %v2337
        %v2453 = vpop.f32.mrb[0].mxu0
        %v2454 = vadd.f32 0.0, %v2453
        %v2455 = vpop.f32.mrb[0].mxu0
        %2456 = vmatprep.mubr.f32.mxu0 0.0
        %2457 = vmatmul.mubr.f32.gmra.mrb[0].mxu0 %v2339
        %v2458 = vpop.f32.mrb[0].mxu0
        %v2459 = vadd.f32 0.0, %v2458
        %v2460 = vpop.f32.mrb[0].mxu0
        %2461 = vdwg.mxu0
        %2462 = vrot.lane.b32.xlu0 %v836, 96
        %v2463 = vpop.permute.xlu0 %2462
        %2464 = vrot.lane.b32.xlu0 %v838, 96
        %v2465 = vpop.permute.xlu0 %2464
        %2466 = vrot.lane.b32.xlu0 %v840, 96
        %v2467 = vpop.permute.xlu0 %2466
        %2468 = vrot.lane.b32.xlu0 %v842, 96
        %v2469 = vpop.permute.xlu0 %2468
        %2470 = vrot.lane.b32.xlu0 %v844, 96
        %v2471 = vpop.permute.xlu0 %2470
        %2472 = vrot.lane.b32.xlu0 %v846, 96
        %v2473 = vpop.permute.xlu0 %2472
        %2474 = vrot.lane.b32.xlu0 %v848, 96
        %v2475 = vpop.permute.xlu0 %2474
        %2476 = vrot.lane.b32.xlu0 %v850, 96
        %v2477 = vpop.permute.xlu0 %2476
        %v2478 = vsel %vm947, %v836, 0
        %v2480 = vsel %vm947, %v838, 0
        %v2482 = vsel %vm947, %v840, 0
        %v2484 = vsel %vm947, %v842, 0
        %v2486 = vsel %vm947, %v844, 0
        %v2488 = vsel %vm947, %v846, 0
        %v2490 = vsel %vm947, %v848, 0
        %v2492 = vsel %vm947, %v850, 0
        %v2494 = vsel %vm947, %v2463, 0
        %v2496 = vsel %vm947, %v2465, 0
        %v2498 = vsel %vm947, %v2467, 0
        %v2500 = vsel %vm947, %v2469, 0
        %v2502 = vsel %vm947, %v2471, 0
        %v2504 = vsel %vm947, %v2473, 0
        %v2506 = vsel %vm947, %v2475, 0
        %v2508 = vsel %vm947, %v2477, 0
        %2510 = vmatprep.subr.mxu0 0.0
        %2511 = vmatpush1.xpose.msra.mxu0 %v2494
        %2512 = vmatprep.subr.mxu0 0.0
        %2513 = vmatpush1.xpose.msra.mxu0 %v2496
        %2514 = vmatprep.subr.mxu0 0.0
        %2515 = vmatpush1.xpose.msra.mxu0 %v2498
        %2516 = vmatprep.subr.mxu0 0.0
        %2517 = vmatpush1.xpose.msra.mxu0 %v2500
        %2518 = vmatprep.subr.mxu0 0.0
        %2519 = vmatpush1.xpose.msra.mxu0 %v2502
        %2520 = vmatprep.subr.mxu0 0.0
        %2521 = vmatpush1.xpose.msra.mxu0 %v2504
        %2522 = vmatprep.subr.mxu0 0.0
        %2523 = vmatpush1.xpose.msra.mxu0 %v2506
        %2524 = vmatprep.subr.mxu0 0.0
        %2525 = vmatpush1.xpose.msra.mxu0 %v2508
        %2526 = vmatprep.subr.mxu0 0.0
        %2527 = vmatpush1.xpose.msra.mxu0 0.0
        %2528 = vmatprep.subr.mxu0 0.0
        %2529 = vmatpush1.xpose.msra.mxu0 0.0
        %2530 = vmatprep.subr.mxu0 0.0
        %2531 = vmatpush1.xpose.msra.mxu0 0.0
        %2532 = vmatprep.subr.mxu0 0.0
        %2533 = vmatpush1.xpose.msra.mxu0 0.0
        %2534 = vmatprep.subr.mxu0 0.0
        %2535 = vmatpush1.xpose.msra.mxu0 0.0
        %2536 = vmatprep.subr.mxu0 0.0
        %2537 = vmatpush1.xpose.msra.mxu0 0.0
        %2538 = vmatprep.subr.mxu0 0.0
        %2539 = vmatpush1.xpose.msra.mxu0 0.0
        %2540 = vmatprep.subr.mxu0 0.0
        %2541 = vmatpush1.xpose.msra.mxu0 0.0
        %2542 = vmatprep.subr.mxu0 0.0
        %2543 = vmatpush1.xpose.msra.mxu0 0.0
        %2544 = vmatprep.subr.mxu0 0.0
        %2545 = vmatpush1.xpose.msra.mxu0 0.0
        %2546 = vmatprep.subr.mxu0 0.0
        %2547 = vmatpush1.xpose.msra.mxu0 0.0
        %2548 = vmatprep.subr.mxu0 0.0
        %2549 = vmatpush1.xpose.msra.mxu0 0.0
        %2550 = vmatprep.subr.mxu0 0.0
        %2551 = vmatpush1.xpose.msra.mxu0 0.0
        %2552 = vmatprep.subr.mxu0 0.0
        %2553 = vmatpush1.xpose.msra.mxu0 0.0
        %2554 = vmatprep.subr.mxu0 0.0
        %2555 = vmatpush1.xpose.msra.mxu0 0.0
        %2556 = vmatprep.subr.mxu0 0.0
        %2557 = vmatpush1.xpose.msra.mxu0 0.0
        %2558 = vmatprep.subr.mxu0 0.0
        %2559 = vmatpush1.xpose.msra.mxu0 0.0
        %2560 = vmatprep.subr.mxu0 0.0
        %2561 = vmatpush1.xpose.msra.mxu0 0.0
        %2562 = vmatprep.subr.mxu0 0.0
        %2563 = vmatpush1.xpose.msra.mxu0 0.0
        %2564 = vmatprep.subr.mxu0 0.0
        %2565 = vmatpush1.xpose.msra.mxu0 0.0
        %2566 = vmatprep.subr.mxu0 0.0
        %2567 = vmatpush1.xpose.msra.mxu0 0.0
        %2568 = vmatprep.subr.mxu0 0.0
        %2569 = vmatpush1.xpose.msra.mxu0 0.0
        %2570 = vmatprep.subr.mxu0 0.0
        %2571 = vmatpush1.xpose.msra.mxu0 0.0
        %2572 = vmatprep.subr.mxu0 0.0
        %2573 = vmatpush1.xpose.msra.mxu0 0.0
        %2574 = vmatprep.mubr.f32.mxu0 0.0
        %2575 = vmatmul.mubr.f32.gmra.mrb[0].mxu0 %v2478
        %v2576 = vpop.f32.mrb[0].mxu0
        %v2577 = vadd.f32 0.0, %v2576
        %v2578 = vpop.f32.mrb[0].mxu0
        %2579 = vmatprep.mubr.f32.mxu0 0.0
        %2580 = vmatmul.mubr.f32.gmra.mrb[0].mxu0 %v2480
        %v2581 = vpop.f32.mrb[0].mxu0
        %v2582 = vadd.f32 0.0, %v2581
        %v2583 = vpop.f32.mrb[0].mxu0
        %2584 = vmatprep.mubr.f32.mxu0 0.0
        %2585 = vmatmul.mubr.f32.gmra.mrb[0].mxu0 %v2482
        %v2586 = vpop.f32.mrb[0].mxu0
        %v2587 = vadd.f32 0.0, %v2586
        %v2588 = vpop.f32.mrb[0].mxu0
        %2589 = vmatprep.mubr.f32.mxu0 0.0
        %2590 = vmatmul.mubr.f32.gmra.mrb[0].mxu0 %v2484
        %v2591 = vpop.f32.mrb[0].mxu0
        %v2592 = vadd.f32 0.0, %v2591
        %v2593 = vpop.f32.mrb[0].mxu0
        %2594 = vmatprep.mubr.f32.mxu0 0.0
        %2595 = vmatmul.mubr.f32.gmra.mrb[0].mxu0 %v2486
        %v2596 = vpop.f32.mrb[0].mxu0
        %v2597 = vadd.f32 0.0, %v2596
        %v2598 = vpop.f32.mrb[0].mxu0
        %2599 = vmatprep.mubr.f32.mxu0 0.0
        %2600 = vmatmul.mubr.f32.gmra.mrb[0].mxu0 %v2488
        %v2601 = vpop.f32.mrb[0].mxu0
        %v2602 = vadd.f32 0.0, %v2601
        %v2603 = vpop.f32.mrb[0].mxu0
        %2604 = vmatprep.mubr.f32.mxu0 0.0
        %2605 = vmatmul.mubr.f32.gmra.mrb[0].mxu0 %v2490
        %v2606 = vpop.f32.mrb[0].mxu0
        %v2607 = vadd.f32 0.0, %v2606
        %v2608 = vpop.f32.mrb[0].mxu0
        %2609 = vmatprep.mubr.f32.mxu0 0.0
        %2610 = vmatmul.mubr.f32.gmra.mrb[0].mxu0 %v2492
        %v2611 = vpop.f32.mrb[0].mxu0
        %v2612 = vadd.f32 0.0, %v2611
        %v2613 = vpop.f32.mrb[0].mxu0
        %2614 = vdwg.mxu0
        %2615 = vrot.lane.b32.xlu0 %v852, 96
        %v2616 = vpop.permute.xlu0 %2615
        %2617 = vrot.lane.b32.xlu0 %v854, 96
        %v2618 = vpop.permute.xlu0 %2617
        %2619 = vrot.lane.b32.xlu0 %v856, 96
        %v2620 = vpop.permute.xlu0 %2619
        %2621 = vrot.lane.b32.xlu0 %v858, 96
        %v2622 = vpop.permute.xlu0 %2621
        %2623 = vrot.lane.b32.xlu0 %v860, 96
        %v2624 = vpop.permute.xlu0 %2623
        %2625 = vrot.lane.b32.xlu0 %v862, 96
        %v2626 = vpop.permute.xlu0 %2625
        %2627 = vrot.lane.b32.xlu0 %v864, 96
        %v2628 = vpop.permute.xlu0 %2627
        %2629 = vrot.lane.b32.xlu0 %v866, 96
        %v2630 = vpop.permute.xlu0 %2629
        %v2631 = vsel %vm947, %v852, 0
        %v2633 = vsel %vm947, %v854, 0
        %v2635 = vsel %vm947, %v856, 0
        %v2637 = vsel %vm947, %v858, 0
        %v2639 = vsel %vm947, %v860, 0
        %v2641 = vsel %vm947, %v862, 0
        %v2643 = vsel %vm947, %v864, 0
        %v2645 = vsel %vm947, %v866, 0
        %v2647 = vsel %vm947, %v2616, 0
        %v2649 = vsel %vm947, %v2618, 0
        %v2651 = vsel %vm947, %v2620, 0
        %v2653 = vsel %vm947, %v2622, 0
        %v2655 = vsel %vm947, %v2624, 0
        %v2657 = vsel %vm947, %v2626, 0
        %v2659 = vsel %vm947, %v2628, 0
        %v2661 = vsel %vm947, %v2630, 0
        %2663 = vmatprep.subr.mxu0 0.0
        %2664 = vmatpush1.xpose.msra.mxu0 %v2647
        %2665 = vmatprep.subr.mxu0 0.0
        %2666 = vmatpush1.xpose.msra.mxu0 %v2649
        %2667 = vmatprep.subr.mxu0 0.0
        %2668 = vmatpush1.xpose.msra.mxu0 %v2651
        %2669 = vmatprep.subr.mxu0 0.0
        %2670 = vmatpush1.xpose.msra.mxu0 %v2653
        %2671 = vmatprep.subr.mxu0 0.0
        %2672 = vmatpush1.xpose.msra.mxu0 %v2655
        %2673 = vmatprep.subr.mxu0 0.0
        %2674 = vmatpush1.xpose.msra.mxu0 %v2657
        %2675 = vmatprep.subr.mxu0 0.0
        %2676 = vmatpush1.xpose.msra.mxu0 %v2659
        %2677 = vmatprep.subr.mxu0 0.0
        %2678 = vmatpush1.xpose.msra.mxu0 %v2661
        %2679 = vmatprep.subr.mxu0 0.0
        %2680 = vmatpush1.xpose.msra.mxu0 0.0
        %2681 = vmatprep.subr.mxu0 0.0
        %2682 = vmatpush1.xpose.msra.mxu0 0.0
        %2683 = vmatprep.subr.mxu0 0.0
        %2684 = vmatpush1.xpose.msra.mxu0 0.0
        %2685 = vmatprep.subr.mxu0 0.0
        %2686 = vmatpush1.xpose.msra.mxu0 0.0
        %2687 = vmatprep.subr.mxu0 0.0
        %2688 = vmatpush1.xpose.msra.mxu0 0.0
        %2689 = vmatprep.subr.mxu0 0.0
        %2690 = vmatpush1.xpose.msra.mxu0 0.0
        %2691 = vmatprep.subr.mxu0 0.0
        %2692 = vmatpush1.xpose.msra.mxu0 0.0
        %2693 = vmatprep.subr.mxu0 0.0
        %2694 = vmatpush1.xpose.msra.mxu0 0.0
        %2695 = vmatprep.subr.mxu0 0.0
        %2696 = vmatpush1.xpose.msra.mxu0 0.0
        %2697 = vmatprep.subr.mxu0 0.0
        %2698 = vmatpush1.xpose.msra.mxu0 0.0
        %2699 = vmatprep.subr.mxu0 0.0
        %2700 = vmatpush1.xpose.msra.mxu0 0.0
        %2701 = vmatprep.subr.mxu0 0.0
        %2702 = vmatpush1.xpose.msra.mxu0 0.0
        %2703 = vmatprep.subr.mxu0 0.0
        %2704 = vmatpush1.xpose.msra.mxu0 0.0
        %2705 = vmatprep.subr.mxu0 0.0
        %2706 = vmatpush1.xpose.msra.mxu0 0.0
        %2707 = vmatprep.subr.mxu0 0.0
        %2708 = vmatpush1.xpose.msra.mxu0 0.0
        %2709 = vmatprep.subr.mxu0 0.0
        %2710 = vmatpush1.xpose.msra.mxu0 0.0
        %2711 = vmatprep.subr.mxu0 0.0
        %2712 = vmatpush1.xpose.msra.mxu0 0.0
        %2713 = vmatprep.subr.mxu0 0.0
        %2714 = vmatpush1.xpose.msra.mxu0 0.0
        %2715 = vmatprep.subr.mxu0 0.0
        %2716 = vmatpush1.xpose.msra.mxu0 0.0
        %2717 = vmatprep.subr.mxu0 0.0
        %2718 = vmatpush1.xpose.msra.mxu0 0.0
        %2719 = vmatprep.subr.mxu0 0.0
        %2720 = vmatpush1.xpose.msra.mxu0 0.0
        %2721 = vmatprep.subr.mxu0 0.0
        %2722 = vmatpush1.xpose.msra.mxu0 0.0
        %2723 = vmatprep.subr.mxu0 0.0
        %2724 = vmatpush1.xpose.msra.mxu0 0.0
        %2725 = vmatprep.subr.mxu0 0.0
        %2726 = vmatpush1.xpose.msra.mxu0 0.0
        %2727 = vmatprep.mubr.f32.mxu0 0.0
        %2728 = vmatmul.mubr.f32.gmra.mrb[0].mxu0 %v2631
        %v2729 = vpop.f32.mrb[0].mxu0
        %v2730 = vadd.f32 0.0, %v2729
        %v2731 = vpop.f32.mrb[0].mxu0
        %2732 = vmatprep.mubr.f32.mxu0 0.0
        %2733 = vmatmul.mubr.f32.gmra.mrb[0].mxu0 %v2633
        %v2734 = vpop.f32.mrb[0].mxu0
        %v2735 = vadd.f32 0.0, %v2734
        %v2736 = vpop.f32.mrb[0].mxu0
        %2737 = vmatprep.mubr.f32.mxu0 0.0
        %2738 = vmatmul.mubr.f32.gmra.mrb[0].mxu0 %v2635
        %v2739 = vpop.f32.mrb[0].mxu0
        %v2740 = vadd.f32 0.0, %v2739
        %v2741 = vpop.f32.mrb[0].mxu0
        %2742 = vmatprep.mubr.f32.mxu0 0.0
        %2743 = vmatmul.mubr.f32.gmra.mrb[0].mxu0 %v2637
        %v2744 = vpop.f32.mrb[0].mxu0
        %v2745 = vadd.f32 0.0, %v2744
        %v2746 = vpop.f32.mrb[0].mxu0
        %2747 = vmatprep.mubr.f32.mxu0 0.0
        %2748 = vmatmul.mubr.f32.gmra.mrb[0].mxu0 %v2639
        %v2749 = vpop.f32.mrb[0].mxu0
        %v2750 = vadd.f32 0.0, %v2749
        %v2751 = vpop.f32.mrb[0].mxu0
        %2752 = vmatprep.mubr.f32.mxu0 0.0
        %2753 = vmatmul.mubr.f32.gmra.mrb[0].mxu0 %v2641
        %v2754 = vpop.f32.mrb[0].mxu0
        %v2755 = vadd.f32 0.0, %v2754
        %v2756 = vpop.f32.mrb[0].mxu0
        %2757 = vmatprep.mubr.f32.mxu0 0.0
        %2758 = vmatmul.mubr.f32.gmra.mrb[0].mxu0 %v2643
        %v2759 = vpop.f32.mrb[0].mxu0
        %v2760 = vadd.f32 0.0, %v2759
        %v2761 = vpop.f32.mrb[0].mxu0
        %2762 = vmatprep.mubr.f32.mxu0 0.0
        %2763 = vmatmul.mubr.f32.gmra.mrb[0].mxu0 %v2645
        %v2764 = vpop.f32.mrb[0].mxu0
        %v2765 = vadd.f32 0.0, %v2764
        %v2766 = vpop.f32.mrb[0].mxu0
        %2767 = vdwg.mxu0
        %2768 = vrot.lane.b32.xlu0 %v868, 96
        %v2769 = vpop.permute.xlu0 %2768
        %2770 = vrot.lane.b32.xlu0 %v870, 96
        %v2771 = vpop.permute.xlu0 %2770
        %2772 = vrot.lane.b32.xlu0 %v872, 96
        %v2773 = vpop.permute.xlu0 %2772
        %2774 = vrot.lane.b32.xlu0 %v874, 96
        %v2775 = vpop.permute.xlu0 %2774
        %2776 = vrot.lane.b32.xlu0 %v876, 96
        %v2777 = vpop.permute.xlu0 %2776
        %2778 = vrot.lane.b32.xlu0 %v878, 96
        %v2779 = vpop.permute.xlu0 %2778
        %2780 = vrot.lane.b32.xlu0 %v880, 96
        %v2781 = vpop.permute.xlu0 %2780
        %2782 = vrot.lane.b32.xlu0 %v882, 96
        %v2783 = vpop.permute.xlu0 %2782
        %v2784 = vsel %vm947, %v868, 0
        %v2786 = vsel %vm947, %v870, 0
        %v2788 = vsel %vm947, %v872, 0
        %v2790 = vsel %vm947, %v874, 0
        %v2792 = vsel %vm947, %v876, 0
        %v2794 = vsel %vm947, %v878, 0
        %v2796 = vsel %vm947, %v880, 0
        %v2798 = vsel %vm947, %v882, 0
        %v2800 = vsel %vm947, %v2769, 0
        %v2802 = vsel %vm947, %v2771, 0
        %v2804 = vsel %vm947, %v2773, 0
        %v2806 = vsel %vm947, %v2775, 0
        %v2808 = vsel %vm947, %v2777, 0
        %v2810 = vsel %vm947, %v2779, 0
        %v2812 = vsel %vm947, %v2781, 0
        %v2814 = vsel %vm947, %v2783, 0
        %2816 = vmatprep.subr.mxu0 0.0
        %2817 = vmatpush1.xpose.msra.mxu0 %v2800
        %2818 = vmatprep.subr.mxu0 0.0
        %2819 = vmatpush1.xpose.msra.mxu0 %v2802
        %2820 = vmatprep.subr.mxu0 0.0
        %2821 = vmatpush1.xpose.msra.mxu0 %v2804
        %2822 = vmatprep.subr.mxu0 0.0
        %2823 = vmatpush1.xpose.msra.mxu0 %v2806
        %2824 = vmatprep.subr.mxu0 0.0
        %2825 = vmatpush1.xpose.msra.mxu0 %v2808
        %2826 = vmatprep.subr.mxu0 0.0
        %2827 = vmatpush1.xpose.msra.mxu0 %v2810
        %2828 = vmatprep.subr.mxu0 0.0
        %2829 = vmatpush1.xpose.msra.mxu0 %v2812
        %2830 = vmatprep.subr.mxu0 0.0
        %2831 = vmatpush1.xpose.msra.mxu0 %v2814
        %2832 = vmatprep.subr.mxu0 0.0
        %2833 = vmatpush1.xpose.msra.mxu0 0.0
        %2834 = vmatprep.subr.mxu0 0.0
        %2835 = vmatpush1.xpose.msra.mxu0 0.0
        %2836 = vmatprep.subr.mxu0 0.0
        %2837 = vmatpush1.xpose.msra.mxu0 0.0
        %2838 = vmatprep.subr.mxu0 0.0
        %2839 = vmatpush1.xpose.msra.mxu0 0.0
        %2840 = vmatprep.subr.mxu0 0.0
        %2841 = vmatpush1.xpose.msra.mxu0 0.0
        %2842 = vmatprep.subr.mxu0 0.0
        %2843 = vmatpush1.xpose.msra.mxu0 0.0
        %2844 = vmatprep.subr.mxu0 0.0
        %2845 = vmatpush1.xpose.msra.mxu0 0.0
        %2846 = vmatprep.subr.mxu0 0.0
        %2847 = vmatpush1.xpose.msra.mxu0 0.0
        %2848 = vmatprep.subr.mxu0 0.0
        %2849 = vmatpush1.xpose.msra.mxu0 0.0
        %2850 = vmatprep.subr.mxu0 0.0
        %2851 = vmatpush1.xpose.msra.mxu0 0.0
        %2852 = vmatprep.subr.mxu0 0.0
        %2853 = vmatpush1.xpose.msra.mxu0 0.0
        %2854 = vmatprep.subr.mxu0 0.0
        %2855 = vmatpush1.xpose.msra.mxu0 0.0
        %2856 = vmatprep.subr.mxu0 0.0
        %2857 = vmatpush1.xpose.msra.mxu0 0.0
        %2858 = vmatprep.subr.mxu0 0.0
        %2859 = vmatpush1.xpose.msra.mxu0 0.0
        %2860 = vmatprep.subr.mxu0 0.0
        %2861 = vmatpush1.xpose.msra.mxu0 0.0
        %2862 = vmatprep.subr.mxu0 0.0
        %2863 = vmatpush1.xpose.msra.mxu0 0.0
        %2864 = vmatprep.subr.mxu0 0.0
        %2865 = vmatpush1.xpose.msra.mxu0 0.0
        %2866 = vmatprep.subr.mxu0 0.0
        %2867 = vmatpush1.xpose.msra.mxu0 0.0
        %2868 = vmatprep.subr.mxu0 0.0
        %2869 = vmatpush1.xpose.msra.mxu0 0.0
        %2870 = vmatprep.subr.mxu0 0.0
        %2871 = vmatpush1.xpose.msra.mxu0 0.0
        %2872 = vmatprep.subr.mxu0 0.0
        %2873 = vmatpush1.xpose.msra.mxu0 0.0
        %2874 = vmatprep.subr.mxu0 0.0
        %2875 = vmatpush1.xpose.msra.mxu0 0.0
        %2876 = vmatprep.subr.mxu0 0.0
        %2877 = vmatpush1.xpose.msra.mxu0 0.0
        %2878 = vmatprep.subr.mxu0 0.0
        %2879 = vmatpush1.xpose.msra.mxu0 0.0
        %2880 = vmatprep.mubr.f32.mxu0 0.0
        %2881 = vmatmul.mubr.f32.gmra.mrb[0].mxu0 %v2784
        %v2882 = vpop.f32.mrb[0].mxu0
        %v2883 = vadd.f32 0.0, %v2882
        %v2884 = vpop.f32.mrb[0].mxu0
        %2885 = vmatprep.mubr.f32.mxu0 0.0
        %2886 = vmatmul.mubr.f32.gmra.mrb[0].mxu0 %v2786
        %v2887 = vpop.f32.mrb[0].mxu0
        %v2888 = vadd.f32 0.0, %v2887
        %v2889 = vpop.f32.mrb[0].mxu0
        %2890 = vmatprep.mubr.f32.mxu0 0.0
        %2891 = vmatmul.mubr.f32.gmra.mrb[0].mxu0 %v2788
        %v2892 = vpop.f32.mrb[0].mxu0
        %v2893 = vadd.f32 0.0, %v2892
        %v2894 = vpop.f32.mrb[0].mxu0
        %2895 = vmatprep.mubr.f32.mxu0 0.0
        %2896 = vmatmul.mubr.f32.gmra.mrb[0].mxu0 %v2790
        %v2897 = vpop.f32.mrb[0].mxu0
        %v2898 = vadd.f32 0.0, %v2897
        %v2899 = vpop.f32.mrb[0].mxu0
        %2900 = vmatprep.mubr.f32.mxu0 0.0
        %2901 = vmatmul.mubr.f32.gmra.mrb[0].mxu0 %v2792
        %v2902 = vpop.f32.mrb[0].mxu0
        %v2903 = vadd.f32 0.0, %v2902
        %v2904 = vpop.f32.mrb[0].mxu0
        %2905 = vmatprep.mubr.f32.mxu0 0.0
        %2906 = vmatmul.mubr.f32.gmra.mrb[0].mxu0 %v2794
        %v2907 = vpop.f32.mrb[0].mxu0
        %v2908 = vadd.f32 0.0, %v2907
        %v2909 = vpop.f32.mrb[0].mxu0
        %2910 = vmatprep.mubr.f32.mxu0 0.0
        %2911 = vmatmul.mubr.f32.gmra.mrb[0].mxu0 %v2796
        %v2912 = vpop.f32.mrb[0].mxu0
        %v2913 = vadd.f32 0.0, %v2912
        %v2914 = vpop.f32.mrb[0].mxu0
        %2915 = vmatprep.mubr.f32.mxu0 0.0
        %2916 = vmatmul.mubr.f32.gmra.mrb[0].mxu0 %v2798
        %v2917 = vpop.f32.mrb[0].mxu0
        %v2918 = vadd.f32 0.0, %v2917
        %v2919 = vpop.f32.mrb[0].mxu0
        %2920 = vdwg.mxu0
        %2921 = vrot.lane.b32.xlu0 %v884, 96
        %v2922 = vpop.permute.xlu0 %2921
        %2923 = vrot.lane.b32.xlu0 %v886, 96
        %v2924 = vpop.permute.xlu0 %2923
        %2925 = vrot.lane.b32.xlu0 %v888, 96
        %v2926 = vpop.permute.xlu0 %2925
        %2927 = vrot.lane.b32.xlu0 %v890, 96
        %v2928 = vpop.permute.xlu0 %2927
        %2929 = vrot.lane.b32.xlu0 %v892, 96
        %v2930 = vpop.permute.xlu0 %2929
        %2931 = vrot.lane.b32.xlu0 %v894, 96
        %v2932 = vpop.permute.xlu0 %2931
        %2933 = vrot.lane.b32.xlu0 %v896, 96
        %v2934 = vpop.permute.xlu0 %2933
        %2935 = vrot.lane.b32.xlu0 %v898, 96
        %v2936 = vpop.permute.xlu0 %2935
        %v2937 = vsel %vm947, %v884, 0
        %v2939 = vsel %vm947, %v886, 0
        %v2941 = vsel %vm947, %v888, 0
        %v2943 = vsel %vm947, %v890, 0
        %v2945 = vsel %vm947, %v892, 0
        %v2947 = vsel %vm947, %v894, 0
        %v2949 = vsel %vm947, %v896, 0
        %v2951 = vsel %vm947, %v898, 0
        %v2953 = vsel %vm947, %v2922, 0
        %v2955 = vsel %vm947, %v2924, 0
        %v2957 = vsel %vm947, %v2926, 0
        %v2959 = vsel %vm947, %v2928, 0
        %v2961 = vsel %vm947, %v2930, 0
        %v2963 = vsel %vm947, %v2932, 0
        %v2965 = vsel %vm947, %v2934, 0
        %v2967 = vsel %vm947, %v2936, 0
        %2969 = vmatprep.subr.mxu0 0.0
        %2970 = vmatpush1.xpose.msra.mxu0 %v2953
        %2971 = vmatprep.subr.mxu0 0.0
        %2972 = vmatpush1.xpose.msra.mxu0 %v2955
        %2973 = vmatprep.subr.mxu0 0.0
        %2974 = vmatpush1.xpose.msra.mxu0 %v2957
        %2975 = vmatprep.subr.mxu0 0.0
        %2976 = vmatpush1.xpose.msra.mxu0 %v2959
        %2977 = vmatprep.subr.mxu0 0.0
        %2978 = vmatpush1.xpose.msra.mxu0 %v2961
        %2979 = vmatprep.subr.mxu0 0.0
        %2980 = vmatpush1.xpose.msra.mxu0 %v2963
        %2981 = vmatprep.subr.mxu0 0.0
        %2982 = vmatpush1.xpose.msra.mxu0 %v2965
        %2983 = vmatprep.subr.mxu0 0.0
        %2984 = vmatpush1.xpose.msra.mxu0 %v2967
        %2985 = vmatprep.subr.mxu0 0.0
        %2986 = vmatpush1.xpose.msra.mxu0 0.0
        %2987 = vmatprep.subr.mxu0 0.0
        %2988 = vmatpush1.xpose.msra.mxu0 0.0
        %2989 = vmatprep.subr.mxu0 0.0
        %2990 = vmatpush1.xpose.msra.mxu0 0.0
        %2991 = vmatprep.subr.mxu0 0.0
        %2992 = vmatpush1.xpose.msra.mxu0 0.0
        %2993 = vmatprep.subr.mxu0 0.0
        %2994 = vmatpush1.xpose.msra.mxu0 0.0
        %2995 = vmatprep.subr.mxu0 0.0
        %2996 = vmatpush1.xpose.msra.mxu0 0.0
        %2997 = vmatprep.subr.mxu0 0.0
        %2998 = vmatpush1.xpose.msra.mxu0 0.0
        %2999 = vmatprep.subr.mxu0 0.0
        %3000 = vmatpush1.xpose.msra.mxu0 0.0
        %3001 = vmatprep.subr.mxu0 0.0
        %3002 = vmatpush1.xpose.msra.mxu0 0.0
        %3003 = vmatprep.subr.mxu0 0.0
        %3004 = vmatpush1.xpose.msra.mxu0 0.0
        %3005 = vmatprep.subr.mxu0 0.0
        %3006 = vmatpush1.xpose.msra.mxu0 0.0
        %3007 = vmatprep.subr.mxu0 0.0
        %3008 = vmatpush1.xpose.msra.mxu0 0.0
        %3009 = vmatprep.subr.mxu0 0.0
        %3010 = vmatpush1.xpose.msra.mxu0 0.0
        %3011 = vmatprep.subr.mxu0 0.0
        %3012 = vmatpush1.xpose.msra.mxu0 0.0
        %3013 = vmatprep.subr.mxu0 0.0
        %3014 = vmatpush1.xpose.msra.mxu0 0.0
        %3015 = vmatprep.subr.mxu0 0.0
        %3016 = vmatpush1.xpose.msra.mxu0 0.0
        %3017 = vmatprep.subr.mxu0 0.0
        %3018 = vmatpush1.xpose.msra.mxu0 0.0
        %3019 = vmatprep.subr.mxu0 0.0
        %3020 = vmatpush1.xpose.msra.mxu0 0.0
        %3021 = vmatprep.subr.mxu0 0.0
        %3022 = vmatpush1.xpose.msra.mxu0 0.0
        %3023 = vmatprep.subr.mxu0 0.0
        %3024 = vmatpush1.xpose.msra.mxu0 0.0
        %3025 = vmatprep.subr.mxu0 0.0
        %3026 = vmatpush1.xpose.msra.mxu0 0.0
        %3027 = vmatprep.subr.mxu0 0.0
        %3028 = vmatpush1.xpose.msra.mxu0 0.0
        %3029 = vmatprep.subr.mxu0 0.0
        %3030 = vmatpush1.xpose.msra.mxu0 0.0
        %3031 = vmatprep.subr.mxu0 0.0
        %3032 = vmatpush1.xpose.msra.mxu0 0.0
        %3033 = vmatprep.mubr.f32.mxu0 0.0
        %3034 = vmatmul.mubr.f32.gmra.mrb[0].mxu0 %v2937
        %v3035 = vpop.f32.mrb[0].mxu0
        %v3036 = vadd.f32 0.0, %v3035
        %v3037 = vpop.f32.mrb[0].mxu0
        %3038 = vmatprep.mubr.f32.mxu0 0.0
        %3039 = vmatmul.mubr.f32.gmra.mrb[0].mxu0 %v2939
        %v3040 = vpop.f32.mrb[0].mxu0
        %v3041 = vadd.f32 0.0, %v3040
        %v3042 = vpop.f32.mrb[0].mxu0
        %3043 = vmatprep.mubr.f32.mxu0 0.0
        %3044 = vmatmul.mubr.f32.gmra.mrb[0].mxu0 %v2941
        %v3045 = vpop.f32.mrb[0].mxu0
        %v3046 = vadd.f32 0.0, %v3045
        %v3047 = vpop.f32.mrb[0].mxu0
        %3048 = vmatprep.mubr.f32.mxu0 0.0
        %3049 = vmatmul.mubr.f32.gmra.mrb[0].mxu0 %v2943
        %v3050 = vpop.f32.mrb[0].mxu0
        %v3051 = vadd.f32 0.0, %v3050
        %v3052 = vpop.f32.mrb[0].mxu0
        %3053 = vmatprep.mubr.f32.mxu0 0.0
        %3054 = vmatmul.mubr.f32.gmra.mrb[0].mxu0 %v2945
        %v3055 = vpop.f32.mrb[0].mxu0
        %v3056 = vadd.f32 0.0, %v3055
        %v3057 = vpop.f32.mrb[0].mxu0
        %3058 = vmatprep.mubr.f32.mxu0 0.0
        %3059 = vmatmul.mubr.f32.gmra.mrb[0].mxu0 %v2947
        %v3060 = vpop.f32.mrb[0].mxu0
        %v3061 = vadd.f32 0.0, %v3060
        %v3062 = vpop.f32.mrb[0].mxu0
        %3063 = vmatprep.mubr.f32.mxu0 0.0
        %3064 = vmatmul.mubr.f32.gmra.mrb[0].mxu0 %v2949
        %v3065 = vpop.f32.mrb[0].mxu0
        %v3066 = vadd.f32 0.0, %v3065
        %v3067 = vpop.f32.mrb[0].mxu0
        %3068 = vmatprep.mubr.f32.mxu0 0.0
        %3069 = vmatmul.mubr.f32.gmra.mrb[0].mxu0 %v2951
        %v3070 = vpop.f32.mrb[0].mxu0
        %v3071 = vadd.f32 0.0, %v3070
        %v3072 = vpop.f32.mrb[0].mxu0
        %3073 = vdwg.mxu0
        %3074 = vrot.lane.b32.xlu0 %v900, 96
        %v3075 = vpop.permute.xlu0 %3074
        %3076 = vrot.lane.b32.xlu0 %v902, 96
        %v3077 = vpop.permute.xlu0 %3076
        %3078 = vrot.lane.b32.xlu0 %v904, 96
        %v3079 = vpop.permute.xlu0 %3078
        %3080 = vrot.lane.b32.xlu0 %v906, 96
        %v3081 = vpop.permute.xlu0 %3080
        %3082 = vrot.lane.b32.xlu0 %v908, 96
        %v3083 = vpop.permute.xlu0 %3082
        %3084 = vrot.lane.b32.xlu0 %v910, 96
        %v3085 = vpop.permute.xlu0 %3084
        %3086 = vrot.lane.b32.xlu0 %v912, 96
        %v3087 = vpop.permute.xlu0 %3086
        %3088 = vrot.lane.b32.xlu0 %v914, 96
        %v3089 = vpop.permute.xlu0 %3088
        %v3090 = vsel %vm947, %v900, 0
        %v3092 = vsel %vm947, %v902, 0
        %v3094 = vsel %vm947, %v904, 0
        %v3096 = vsel %vm947, %v906, 0
        %v3098 = vsel %vm947, %v908, 0
        %v3100 = vsel %vm947, %v910, 0
        %v3102 = vsel %vm947, %v912, 0
        %v3104 = vsel %vm947, %v914, 0
        %v3106 = vsel %vm947, %v3075, 0
        %v3108 = vsel %vm947, %v3077, 0
        %v3110 = vsel %vm947, %v3079, 0
        %v3112 = vsel %vm947, %v3081, 0
        %v3114 = vsel %vm947, %v3083, 0
        %v3116 = vsel %vm947, %v3085, 0
        %v3118 = vsel %vm947, %v3087, 0
        %v3120 = vsel %vm947, %v3089, 0
        %3122 = vmatprep.subr.mxu0 0.0
        %3123 = vmatpush1.xpose.msra.mxu0 %v3106
        %3124 = vmatprep.subr.mxu0 0.0
        %3125 = vmatpush1.xpose.msra.mxu0 %v3108
        %3126 = vmatprep.subr.mxu0 0.0
        %3127 = vmatpush1.xpose.msra.mxu0 %v3110
        %3128 = vmatprep.subr.mxu0 0.0
        %3129 = vmatpush1.xpose.msra.mxu0 %v3112
        %3130 = vmatprep.subr.mxu0 0.0
        %3131 = vmatpush1.xpose.msra.mxu0 %v3114
        %3132 = vmatprep.subr.mxu0 0.0
        %3133 = vmatpush1.xpose.msra.mxu0 %v3116
        %3134 = vmatprep.subr.mxu0 0.0
        %3135 = vmatpush1.xpose.msra.mxu0 %v3118
        %3136 = vmatprep.subr.mxu0 0.0
        %3137 = vmatpush1.xpose.msra.mxu0 %v3120
        %3138 = vmatprep.subr.mxu0 0.0
        %3139 = vmatpush1.xpose.msra.mxu0 0.0
        %3140 = vmatprep.subr.mxu0 0.0
        %3141 = vmatpush1.xpose.msra.mxu0 0.0
        %3142 = vmatprep.subr.mxu0 0.0
        %3143 = vmatpush1.xpose.msra.mxu0 0.0
        %3144 = vmatprep.subr.mxu0 0.0
        %3145 = vmatpush1.xpose.msra.mxu0 0.0
        %3146 = vmatprep.subr.mxu0 0.0
        %3147 = vmatpush1.xpose.msra.mxu0 0.0
        %3148 = vmatprep.subr.mxu0 0.0
        %3149 = vmatpush1.xpose.msra.mxu0 0.0
        %3150 = vmatprep.subr.mxu0 0.0
        %3151 = vmatpush1.xpose.msra.mxu0 0.0
        %3152 = vmatprep.subr.mxu0 0.0
        %3153 = vmatpush1.xpose.msra.mxu0 0.0
        %3154 = vmatprep.subr.mxu0 0.0
        %3155 = vmatpush1.xpose.msra.mxu0 0.0
        %3156 = vmatprep.subr.mxu0 0.0
        %3157 = vmatpush1.xpose.msra.mxu0 0.0
        %3158 = vmatprep.subr.mxu0 0.0
        %3159 = vmatpush1.xpose.msra.mxu0 0.0
        %3160 = vmatprep.subr.mxu0 0.0
        %3161 = vmatpush1.xpose.msra.mxu0 0.0
        %3162 = vmatprep.subr.mxu0 0.0
        %3163 = vmatpush1.xpose.msra.mxu0 0.0
        %3164 = vmatprep.subr.mxu0 0.0
        %3165 = vmatpush1.xpose.msra.mxu0 0.0
        %3166 = vmatprep.subr.mxu0 0.0
        %3167 = vmatpush1.xpose.msra.mxu0 0.0
        %3168 = vmatprep.subr.mxu0 0.0
        %3169 = vmatpush1.xpose.msra.mxu0 0.0
        %3170 = vmatprep.subr.mxu0 0.0
        %3171 = vmatpush1.xpose.msra.mxu0 0.0
        %3172 = vmatprep.subr.mxu0 0.0
        %3173 = vmatpush1.xpose.msra.mxu0 0.0
        %3174 = vmatprep.subr.mxu0 0.0
        %3175 = vmatpush1.xpose.msra.mxu0 0.0
        %3176 = vmatprep.subr.mxu0 0.0
        %3177 = vmatpush1.xpose.msra.mxu0 0.0
        %3178 = vmatprep.subr.mxu0 0.0
        %3179 = vmatpush1.xpose.msra.mxu0 0.0
        %3180 = vmatprep.subr.mxu0 0.0
        %3181 = vmatpush1.xpose.msra.mxu0 0.0
        %3182 = vmatprep.subr.mxu0 0.0
        %3183 = vmatpush1.xpose.msra.mxu0 0.0
        %3184 = vmatprep.subr.mxu0 0.0
        %3185 = vmatpush1.xpose.msra.mxu0 0.0
        %3186 = vmatprep.mubr.f32.mxu0 0.0
        %3187 = vmatmul.mubr.f32.gmra.mrb[0].mxu0 %v3090
        %v3188 = vpop.f32.mrb[0].mxu0
        %v3189 = vadd.f32 0.0, %v3188
        %v3190 = vpop.f32.mrb[0].mxu0
        %3191 = vmatprep.mubr.f32.mxu0 0.0
        %3192 = vmatmul.mubr.f32.gmra.mrb[0].mxu0 %v3092
        %v3193 = vpop.f32.mrb[0].mxu0
        %v3194 = vadd.f32 0.0, %v3193
        %v3195 = vpop.f32.mrb[0].mxu0
        %3196 = vmatprep.mubr.f32.mxu0 0.0
        %3197 = vmatmul.mubr.f32.gmra.mrb[0].mxu0 %v3094
        %v3198 = vpop.f32.mrb[0].mxu0
        %v3199 = vadd.f32 0.0, %v3198
        %v3200 = vpop.f32.mrb[0].mxu0
        %3201 = vmatprep.mubr.f32.mxu0 0.0
        %3202 = vmatmul.mubr.f32.gmra.mrb[0].mxu0 %v3096
        %v3203 = vpop.f32.mrb[0].mxu0
        %v3204 = vadd.f32 0.0, %v3203
        %v3205 = vpop.f32.mrb[0].mxu0
        %3206 = vmatprep.mubr.f32.mxu0 0.0
        %3207 = vmatmul.mubr.f32.gmra.mrb[0].mxu0 %v3098
        %v3208 = vpop.f32.mrb[0].mxu0
        %v3209 = vadd.f32 0.0, %v3208
        %v3210 = vpop.f32.mrb[0].mxu0
        %3211 = vmatprep.mubr.f32.mxu0 0.0
        %3212 = vmatmul.mubr.f32.gmra.mrb[0].mxu0 %v3100
        %v3213 = vpop.f32.mrb[0].mxu0
        %v3214 = vadd.f32 0.0, %v3213
        %v3215 = vpop.f32.mrb[0].mxu0
        %3216 = vmatprep.mubr.f32.mxu0 0.0
        %3217 = vmatmul.mubr.f32.gmra.mrb[0].mxu0 %v3102
        %v3218 = vpop.f32.mrb[0].mxu0
        %v3219 = vadd.f32 0.0, %v3218
        %v3220 = vpop.f32.mrb[0].mxu0
        %3221 = vmatprep.mubr.f32.mxu0 0.0
        %3222 = vmatmul.mubr.f32.gmra.mrb[0].mxu0 %v3104
        %v3223 = vpop.f32.mrb[0].mxu0
        %v3224 = vadd.f32 0.0, %v3223
        %v3225 = vpop.f32.mrb[0].mxu0
        %3226 = vdwg.mxu0
        %3227 = vrot.lane.b32.xlu0 %v916, 96
        %v3228 = vpop.permute.xlu0 %3227
        %3229 = vrot.lane.b32.xlu0 %v918, 96
        %v3230 = vpop.permute.xlu0 %3229
        %3231 = vrot.lane.b32.xlu0 %v920, 96
        %v3232 = vpop.permute.xlu0 %3231
        %3233 = vrot.lane.b32.xlu0 %v922, 96
        %v3234 = vpop.permute.xlu0 %3233
        %3235 = vrot.lane.b32.xlu0 %v924, 96
        %v3236 = vpop.permute.xlu0 %3235
        %3237 = vrot.lane.b32.xlu0 %v926, 96
        %v3238 = vpop.permute.xlu0 %3237
        %3239 = vrot.lane.b32.xlu0 %v928, 96
        %v3240 = vpop.permute.xlu0 %3239
        %3241 = vrot.lane.b32.xlu0 %v930, 96
        %v3242 = vpop.permute.xlu0 %3241
        %v3243 = vsel %vm947, %v916, 0
        %v3245 = vsel %vm947, %v918, 0
        %v3247 = vsel %vm947, %v920, 0
        %v3249 = vsel %vm947, %v922, 0
        %v3251 = vsel %vm947, %v924, 0
        %v3253 = vsel %vm947, %v926, 0
        %v3255 = vsel %vm947, %v928, 0
        %v3257 = vsel %vm947, %v930, 0
        %v3259 = vsel %vm947, %v3228, 0
        %v3261 = vsel %vm947, %v3230, 0
        %v3263 = vsel %vm947, %v3232, 0
        %v3265 = vsel %vm947, %v3234, 0
        %v3267 = vsel %vm947, %v3236, 0
        %v3269 = vsel %vm947, %v3238, 0
        %v3271 = vsel %vm947, %v3240, 0
        %v3273 = vsel %vm947, %v3242, 0
        %3275 = vmatprep.subr.mxu0 0.0
        %3276 = vmatpush1.xpose.msra.mxu0 %v3259
        %3277 = vmatprep.subr.mxu0 0.0
        %3278 = vmatpush1.xpose.msra.mxu0 %v3261
        %3279 = vmatprep.subr.mxu0 0.0
        %3280 = vmatpush1.xpose.msra.mxu0 %v3263
        %3281 = vmatprep.subr.mxu0 0.0
        %3282 = vmatpush1.xpose.msra.mxu0 %v3265
        %3283 = vmatprep.subr.mxu0 0.0
        %3284 = vmatpush1.xpose.msra.mxu0 %v3267
        %3285 = vmatprep.subr.mxu0 0.0
        %3286 = vmatpush1.xpose.msra.mxu0 %v3269
        %3287 = vmatprep.subr.mxu0 0.0
        %3288 = vmatpush1.xpose.msra.mxu0 %v3271
        %3289 = vmatprep.subr.mxu0 0.0
        %3290 = vmatpush1.xpose.msra.mxu0 %v3273
        %3291 = vmatprep.subr.mxu0 0.0
        %3292 = vmatpush1.xpose.msra.mxu0 0.0
        %3293 = vmatprep.subr.mxu0 0.0
        %3294 = vmatpush1.xpose.msra.mxu0 0.0
        %3295 = vmatprep.subr.mxu0 0.0
        %3296 = vmatpush1.xpose.msra.mxu0 0.0
        %3297 = vmatprep.subr.mxu0 0.0
        %3298 = vmatpush1.xpose.msra.mxu0 0.0
        %3299 = vmatprep.subr.mxu0 0.0
        %3300 = vmatpush1.xpose.msra.mxu0 0.0
        %3301 = vmatprep.subr.mxu0 0.0
        %3302 = vmatpush1.xpose.msra.mxu0 0.0
        %3303 = vmatprep.subr.mxu0 0.0
        %3304 = vmatpush1.xpose.msra.mxu0 0.0
        %3305 = vmatprep.subr.mxu0 0.0
        %3306 = vmatpush1.xpose.msra.mxu0 0.0
        %3307 = vmatprep.subr.mxu0 0.0
        %3308 = vmatpush1.xpose.msra.mxu0 0.0
        %3309 = vmatprep.subr.mxu0 0.0
        %3310 = vmatpush1.xpose.msra.mxu0 0.0
        %3311 = vmatprep.subr.mxu0 0.0
        %3312 = vmatpush1.xpose.msra.mxu0 0.0
        %3313 = vmatprep.subr.mxu0 0.0
        %3314 = vmatpush1.xpose.msra.mxu0 0.0
        %3315 = vmatprep.subr.mxu0 0.0
        %3316 = vmatpush1.xpose.msra.mxu0 0.0
        %3317 = vmatprep.subr.mxu0 0.0
        %3318 = vmatpush1.xpose.msra.mxu0 0.0
        %3319 = vmatprep.subr.mxu0 0.0
        %3320 = vmatpush1.xpose.msra.mxu0 0.0
        %3321 = vmatprep.subr.mxu0 0.0
        %3322 = vmatpush1.xpose.msra.mxu0 0.0
        %3323 = vmatprep.subr.mxu0 0.0
        %3324 = vmatpush1.xpose.msra.mxu0 0.0
        %3325 = vmatprep.subr.mxu0 0.0
        %3326 = vmatpush1.xpose.msra.mxu0 0.0
        %3327 = vmatprep.subr.mxu0 0.0
        %3328 = vmatpush1.xpose.msra.mxu0 0.0
        %3329 = vmatprep.subr.mxu0 0.0
        %3330 = vmatpush1.xpose.msra.mxu0 0.0
        %3331 = vmatprep.subr.mxu0 0.0
        %3332 = vmatpush1.xpose.msra.mxu0 0.0
        %3333 = vmatprep.subr.mxu0 0.0
        %3334 = vmatpush1.xpose.msra.mxu0 0.0
        %3335 = vmatprep.subr.mxu0 0.0
        %3336 = vmatpush1.xpose.msra.mxu0 0.0
        %3337 = vmatprep.subr.mxu0 0.0
        %3338 = vmatpush1.xpose.msra.mxu0 0.0
        %3339 = vmatprep.mubr.f32.mxu0 0.0
        %3340 = vmatmul.mubr.f32.gmra.mrb[0].mxu0 %v3243
        %v3341 = vpop.f32.mrb[0].mxu0
        %v3342 = vadd.f32 0.0, %v3341
        %v3343 = vpop.f32.mrb[0].mxu0
        %3344 = vmatprep.mubr.f32.mxu0 0.0
        %3345 = vmatmul.mubr.f32.gmra.mrb[0].mxu0 %v3245
        %v3346 = vpop.f32.mrb[0].mxu0
        %v3347 = vadd.f32 0.0, %v3346
        %v3348 = vpop.f32.mrb[0].mxu0
        %3349 = vmatprep.mubr.f32.mxu0 0.0
        %3350 = vmatmul.mubr.f32.gmra.mrb[0].mxu0 %v3247
        %v3351 = vpop.f32.mrb[0].mxu0
        %v3352 = vadd.f32 0.0, %v3351
        %v3353 = vpop.f32.mrb[0].mxu0
        %3354 = vmatprep.mubr.f32.mxu0 0.0
        %3355 = vmatmul.mubr.f32.gmra.mrb[0].mxu0 %v3249
        %v3356 = vpop.f32.mrb[0].mxu0
        %v3357 = vadd.f32 0.0, %v3356
        %v3358 = vpop.f32.mrb[0].mxu0
        %3359 = vmatprep.mubr.f32.mxu0 0.0
        %3360 = vmatmul.mubr.f32.gmra.mrb[0].mxu0 %v3251
        %v3361 = vpop.f32.mrb[0].mxu0
        %v3362 = vadd.f32 0.0, %v3361
        %v3363 = vpop.f32.mrb[0].mxu0
        %3364 = vmatprep.mubr.f32.mxu0 0.0
        %3365 = vmatmul.mubr.f32.gmra.mrb[0].mxu0 %v3253
        %v3366 = vpop.f32.mrb[0].mxu0
        %v3367 = vadd.f32 0.0, %v3366
        %v3368 = vpop.f32.mrb[0].mxu0
        %3369 = vmatprep.mubr.f32.mxu0 0.0
        %3370 = vmatmul.mubr.f32.gmra.mrb[0].mxu0 %v3255
        %v3371 = vpop.f32.mrb[0].mxu0
        %v3372 = vadd.f32 0.0, %v3371
        %v3373 = vpop.f32.mrb[0].mxu0
        %3374 = vmatprep.mubr.f32.mxu0 0.0
        %3375 = vmatmul.mubr.f32.gmra.mrb[0].mxu0 %v3257
        %v3376 = vpop.f32.mrb[0].mxu0
        %v3377 = vadd.f32 0.0, %v3376
        %v3378 = vpop.f32.mrb[0].mxu0
        %3379 = vdwg.mxu0
        %v3380 = vld [vmem:[#allocation11] sm:$0xff]
        %v3381 = vld [vmem:[#allocation11 + $0x8] sm:$0xff]
        %v3382 = vld [vmem:[#allocation11 + $0x10] sm:$0xff]
        %v3383 = vld [vmem:[#allocation11 + $0x18] sm:$0xff]
        %v3384 = vld [vmem:[#allocation11 + $0x20] sm:$0xff]
        %v3385 = vld [vmem:[#allocation11 + $0x28] sm:$0xff]
        %v3386 = vld [vmem:[#allocation11 + $0x30] sm:$0xff]
        %v3387 = vld [vmem:[#allocation11 + $0x38] sm:$0xff]
        %v3388 = vld [vmem:[#allocation11 + $0x40] sm:$0xff]
        %v3389 = vld [vmem:[#allocation11 + $0x48] sm:$0xff]
        %v3390 = vld [vmem:[#allocation11 + $0x50] sm:$0xff]
        %v3391 = vld [vmem:[#allocation11 + $0x58] sm:$0xff]
        %v3392 = vld [vmem:[#allocation11 + $0x60] sm:$0xff]
        %v3393 = vld [vmem:[#allocation11 + $0x68] sm:$0xff]
        %v3394 = vld [vmem:[#allocation11 + $0x70] sm:$0xff]
        %v3395 = vld [vmem:[#allocation11 + $0x78] sm:$0xff]
        %v3396 = vld [vmem:[#allocation11 + $0x80] sm:$0xff]
        %v3397 = vld [vmem:[#allocation11 + $0x88] sm:$0xff]
        %v3398 = vld [vmem:[#allocation11 + $0x90] sm:$0xff]
        %v3399 = vld [vmem:[#allocation11 + $0x98] sm:$0xff]
        %v3400 = vld [vmem:[#allocation11 + $0xa0] sm:$0xff]
        %v3401 = vld [vmem:[#allocation11 + $0xa8] sm:$0xff]
        %v3402 = vld [vmem:[#allocation11 + $0xb0] sm:$0xff]
        %v3403 = vld [vmem:[#allocation11 + $0xb8] sm:$0xff]
        %v3404 = vld [vmem:[#allocation11 + $0xc0] sm:$0xff]
        %v3405 = vld [vmem:[#allocation11 + $0xc8] sm:$0xff]
        %v3406 = vld [vmem:[#allocation11 + $0xd0] sm:$0xff]
        %v3407 = vld [vmem:[#allocation11 + $0xd8] sm:$0xff]
        %v3408 = vld [vmem:[#allocation11 + $0xe0] sm:$0xff]
        %v3409 = vld [vmem:[#allocation11 + $0xe8] sm:$0xff]
        %v3410 = vld [vmem:[#allocation11 + $0xf0] sm:$0xff]
        %v3411 = vld [vmem:[#allocation11 + $0xf8] sm:$0xff]
        %v3412 = vld [vmem:[#allocation11 + $0x100] sm:$0xff]
        %v3413 = vld [vmem:[#allocation11 + $0x108] sm:$0xff]
        %v3414 = vld [vmem:[#allocation11 + $0x110] sm:$0xff]
        %v3415 = vld [vmem:[#allocation11 + $0x118] sm:$0xff]
        %v3416 = vld [vmem:[#allocation11 + $0x120] sm:$0xff]
        %v3417 = vld [vmem:[#allocation11 + $0x128] sm:$0xff]
        %v3418 = vld [vmem:[#allocation11 + $0x130] sm:$0xff]
        %v3419 = vld [vmem:[#allocation11 + $0x138] sm:$0xff]
        %v3420 = vld [vmem:[#allocation11 + $0x140] sm:$0xff]
        %v3421 = vld [vmem:[#allocation11 + $0x148] sm:$0xff]
        %v3422 = vld [vmem:[#allocation11 + $0x150] sm:$0xff]
        %v3423 = vld [vmem:[#allocation11 + $0x158] sm:$0xff]
        %v3424 = vld [vmem:[#allocation11 + $0x160] sm:$0xff]
        %v3425 = vld [vmem:[#allocation11 + $0x168] sm:$0xff]
        %v3426 = vld [vmem:[#allocation11 + $0x170] sm:$0xff]
        %v3427 = vld [vmem:[#allocation11 + $0x178] sm:$0xff]
        %v3428 = vld [vmem:[#allocation11 + $0x180] sm:$0xff]
        %v3429 = vld [vmem:[#allocation11 + $0x188] sm:$0xff]
        %v3430 = vld [vmem:[#allocation11 + $0x190] sm:$0xff]
        %v3431 = vld [vmem:[#allocation11 + $0x198] sm:$0xff]
        %v3432 = vld [vmem:[#allocation11 + $0x1a0] sm:$0xff]
        %v3433 = vld [vmem:[#allocation11 + $0x1a8] sm:$0xff]
        %v3434 = vld [vmem:[#allocation11 + $0x1b0] sm:$0xff]
        %v3435 = vld [vmem:[#allocation11 + $0x1b8] sm:$0xff]
        %v3436 = vld [vmem:[#allocation11 + $0x1c0] sm:$0xff]
        %v3437 = vld [vmem:[#allocation11 + $0x1c8] sm:$0xff]
        %v3438 = vld [vmem:[#allocation11 + $0x1d0] sm:$0xff]
        %v3439 = vld [vmem:[#allocation11 + $0x1d8] sm:$0xff]
        %v3440 = vld [vmem:[#allocation11 + $0x1e0] sm:$0xff]
        %v3441 = vld [vmem:[#allocation11 + $0x1e8] sm:$0xff]
        %v3442 = vld [vmem:[#allocation11 + $0x1f0] sm:$0xff]
        %v3443 = vld [vmem:[#allocation11 + $0x1f8] sm:$0xff]
        %v3444 = vld [vmem:[#allocation11 + $0x200] sm:$0xff]
        %v3445 = vld [vmem:[#allocation11 + $0x208] sm:$0xff]
        %v3446 = vld [vmem:[#allocation11 + $0x210] sm:$0xff]
        %v3447 = vld [vmem:[#allocation11 + $0x218] sm:$0xff]
        %v3448 = vld [vmem:[#allocation11 + $0x220] sm:$0xff]
        %v3449 = vld [vmem:[#allocation11 + $0x228] sm:$0xff]
        %v3450 = vld [vmem:[#allocation11 + $0x230] sm:$0xff]
        %v3451 = vld [vmem:[#allocation11 + $0x238] sm:$0xff]
        %v3452 = vld [vmem:[#allocation11 + $0x240] sm:$0xff]
        %v3453 = vld [vmem:[#allocation11 + $0x248] sm:$0xff]
        %v3454 = vld [vmem:[#allocation11 + $0x250] sm:$0xff]
        %v3455 = vld [vmem:[#allocation11 + $0x258] sm:$0xff]
        %v3456 = vld [vmem:[#allocation11 + $0x260] sm:$0xff]
        %v3457 = vld [vmem:[#allocation11 + $0x268] sm:$0xff]
        %v3458 = vld [vmem:[#allocation11 + $0x270] sm:$0xff]
        %v3459 = vld [vmem:[#allocation11 + $0x278] sm:$0xff]
        %v3460 = vld [vmem:[#allocation11 + $0x280] sm:$0xff]
        %v3461 = vld [vmem:[#allocation11 + $0x288] sm:$0xff]
        %v3462 = vld [vmem:[#allocation11 + $0x290] sm:$0xff]
        %v3463 = vld [vmem:[#allocation11 + $0x298] sm:$0xff]
        %v3464 = vld [vmem:[#allocation11 + $0x2a0] sm:$0xff]
        %v3465 = vld [vmem:[#allocation11 + $0x2a8] sm:$0xff]
        %v3466 = vld [vmem:[#allocation11 + $0x2b0] sm:$0xff]
        %v3467 = vld [vmem:[#allocation11 + $0x2b8] sm:$0xff]
        %v3468 = vld [vmem:[#allocation11 + $0x2c0] sm:$0xff]
        %v3469 = vld [vmem:[#allocation11 + $0x2c8] sm:$0xff]
        %v3470 = vld [vmem:[#allocation11 + $0x2d0] sm:$0xff]
        %v3471 = vld [vmem:[#allocation11 + $0x2d8] sm:$0xff]
        %v3472 = vld [vmem:[#allocation11 + $0x2e0] sm:$0xff]
        %v3473 = vld [vmem:[#allocation11 + $0x2e8] sm:$0xff]
        %v3474 = vld [vmem:[#allocation11 + $0x2f0] sm:$0xff]
        %v3475 = vld [vmem:[#allocation11 + $0x2f8] sm:$0xff]
        %v3476 = vld [vmem:[#allocation11 + $0x300] sm:$0xff]
        %v3477 = vld [vmem:[#allocation11 + $0x308] sm:$0xff]
        %v3478 = vld [vmem:[#allocation11 + $0x310] sm:$0xff]
        %v3479 = vld [vmem:[#allocation11 + $0x318] sm:$0xff]
        %v3480 = vld [vmem:[#allocation11 + $0x320] sm:$0xff]
        %v3481 = vld [vmem:[#allocation11 + $0x328] sm:$0xff]
        %v3482 = vld [vmem:[#allocation11 + $0x330] sm:$0xff]
        %v3483 = vld [vmem:[#allocation11 + $0x338] sm:$0xff]
        %v3484 = vld [vmem:[#allocation11 + $0x340] sm:$0xff]
        %v3485 = vld [vmem:[#allocation11 + $0x348] sm:$0xff]
        %v3486 = vld [vmem:[#allocation11 + $0x350] sm:$0xff]
        %v3487 = vld [vmem:[#allocation11 + $0x358] sm:$0xff]
        %v3488 = vld [vmem:[#allocation11 + $0x360] sm:$0xff]
        %v3489 = vld [vmem:[#allocation11 + $0x368] sm:$0xff]
        %v3490 = vld [vmem:[#allocation11 + $0x370] sm:$0xff]
        %v3491 = vld [vmem:[#allocation11 + $0x378] sm:$0xff]
        %v3492 = vld [vmem:[#allocation11 + $0x380] sm:$0xff]
        %v3493 = vld [vmem:[#allocation11 + $0x388] sm:$0xff]
        %v3494 = vld [vmem:[#allocation11 + $0x390] sm:$0xff]
        %v3495 = vld [vmem:[#allocation11 + $0x398] sm:$0xff]
        %v3496 = vld [vmem:[#allocation11 + $0x3a0] sm:$0xff]
        %v3497 = vld [vmem:[#allocation11 + $0x3a8] sm:$0xff]
        %v3498 = vld [vmem:[#allocation11 + $0x3b0] sm:$0xff]
        %v3499 = vld [vmem:[#allocation11 + $0x3b8] sm:$0xff]
        %v3500 = vld [vmem:[#allocation11 + $0x3c0] sm:$0xff]
        %v3501 = vld [vmem:[#allocation11 + $0x3c8] sm:$0xff]
        %v3502 = vld [vmem:[#allocation11 + $0x3d0] sm:$0xff]
        %v3503 = vld [vmem:[#allocation11 + $0x3d8] sm:$0xff]
        %v3504 = vld [vmem:[#allocation11 + $0x3e0] sm:$0xff]
        %v3505 = vld [vmem:[#allocation11 + $0x3e8] sm:$0xff]
        %v3506 = vld [vmem:[#allocation11 + $0x3f0] sm:$0xff]
        %v3507 = vld [vmem:[#allocation11 + $0x3f8] sm:$0xff]
        %v3508 = vadd.f32 %v1047, %v3380
        %v3509 = vadd.f32 %v1052, %v3381
        %v3510 = vadd.f32 %v1057, %v3382
        %v3511 = vadd.f32 %v1062, %v3383
        %v3512 = vadd.f32 %v1067, %v3384
        %v3513 = vadd.f32 %v1072, %v3385
        %v3514 = vadd.f32 %v1077, %v3386
        %v3515 = vadd.f32 %v1082, %v3387
        %v3516 = vadd.f32 %v1200, %v3388
        %v3517 = vadd.f32 %v1205, %v3389
        %v3518 = vadd.f32 %v1210, %v3390
        %v3519 = vadd.f32 %v1215, %v3391
        %v3520 = vadd.f32 %v1220, %v3392
        %v3521 = vadd.f32 %v1225, %v3393
        %v3522 = vadd.f32 %v1230, %v3394
        %v3523 = vadd.f32 %v1235, %v3395
        %v3524 = vadd.f32 %v1353, %v3396
        %v3525 = vadd.f32 %v1358, %v3397
        %v3526 = vadd.f32 %v1363, %v3398
        %v3527 = vadd.f32 %v1368, %v3399
        %v3528 = vadd.f32 %v1373, %v3400
        %v3529 = vadd.f32 %v1378, %v3401
        %v3530 = vadd.f32 %v1383, %v3402
        %v3531 = vadd.f32 %v1388, %v3403
        %v3532 = vadd.f32 %v1506, %v3404
        %v3533 = vadd.f32 %v1511, %v3405
        %v3534 = vadd.f32 %v1516, %v3406
        %v3535 = vadd.f32 %v1521, %v3407
        %v3536 = vadd.f32 %v1526, %v3408
        %v3537 = vadd.f32 %v1531, %v3409
        %v3538 = vadd.f32 %v1536, %v3410
        %v3539 = vadd.f32 %v1541, %v3411
        %v3540 = vadd.f32 %v1659, %v3412
        %v3541 = vadd.f32 %v1664, %v3413
        %v3542 = vadd.f32 %v1669, %v3414
        %v3543 = vadd.f32 %v1674, %v3415
        %v3544 = vadd.f32 %v1679, %v3416
        %v3545 = vadd.f32 %v1684, %v3417
        %v3546 = vadd.f32 %v1689, %v3418
        %v3547 = vadd.f32 %v1694, %v3419
        %v3548 = vadd.f32 %v1812, %v3420
        %v3549 = vadd.f32 %v1817, %v3421
        %v3550 = vadd.f32 %v1822, %v3422
        %v3551 = vadd.f32 %v1827, %v3423
        %v3552 = vadd.f32 %v1832, %v3424
        %v3553 = vadd.f32 %v1837, %v3425
        %v3554 = vadd.f32 %v1842, %v3426
        %v3555 = vadd.f32 %v1847, %v3427
        %v3556 = vadd.f32 %v1965, %v3428
        %v3557 = vadd.f32 %v1970, %v3429
        %v3558 = vadd.f32 %v1975, %v3430
        %v3559 = vadd.f32 %v1980, %v3431
        %v3560 = vadd.f32 %v1985, %v3432
        %v3561 = vadd.f32 %v1990, %v3433
        %v3562 = vadd.f32 %v1995, %v3434
        %v3563 = vadd.f32 %v2000, %v3435
        %v3564 = vadd.f32 %v2118, %v3436
        %v3565 = vadd.f32 %v2123, %v3437
        %v3566 = vadd.f32 %v2128, %v3438
        %v3567 = vadd.f32 %v2133, %v3439
        %v3568 = vadd.f32 %v2138, %v3440
        %v3569 = vadd.f32 %v2143, %v3441
        %v3570 = vadd.f32 %v2148, %v3442
        %v3571 = vadd.f32 %v2153, %v3443
        %v3572 = vadd.f32 %v2271, %v3444
        %v3573 = vadd.f32 %v2276, %v3445
        %v3574 = vadd.f32 %v2281, %v3446
        %v3575 = vadd.f32 %v2286, %v3447
        %v3576 = vadd.f32 %v2291, %v3448
        %v3577 = vadd.f32 %v2296, %v3449
        %v3578 = vadd.f32 %v2301, %v3450
        %v3579 = vadd.f32 %v2306, %v3451
        %v3580 = vadd.f32 %v2424, %v3452
        %v3581 = vadd.f32 %v2429, %v3453
        %v3582 = vadd.f32 %v2434, %v3454
        %v3583 = vadd.f32 %v2439, %v3455
        %v3584 = vadd.f32 %v2444, %v3456
        %v3585 = vadd.f32 %v2449, %v3457
        %v3586 = vadd.f32 %v2454, %v3458
        %v3587 = vadd.f32 %v2459, %v3459
        %v3588 = vadd.f32 %v2577, %v3460
        %v3589 = vadd.f32 %v2582, %v3461
        %v3590 = vadd.f32 %v2587, %v3462
        %v3591 = vadd.f32 %v2592, %v3463
        %v3592 = vadd.f32 %v2597, %v3464
        %v3593 = vadd.f32 %v2602, %v3465
        %v3594 = vadd.f32 %v2607, %v3466
        %v3595 = vadd.f32 %v2612, %v3467
        %v3596 = vadd.f32 %v2730, %v3468
        %v3597 = vadd.f32 %v2735, %v3469
        %v3598 = vadd.f32 %v2740, %v3470
        %v3599 = vadd.f32 %v2745, %v3471
        %v3600 = vadd.f32 %v2750, %v3472
        %v3601 = vadd.f32 %v2755, %v3473
        %v3602 = vadd.f32 %v2760, %v3474
        %v3603 = vadd.f32 %v2765, %v3475
        %v3604 = vadd.f32 %v2883, %v3476
        %v3605 = vadd.f32 %v2888, %v3477
        %v3606 = vadd.f32 %v2893, %v3478
        %v3607 = vadd.f32 %v2898, %v3479
        %v3608 = vadd.f32 %v2903, %v3480
        %v3609 = vadd.f32 %v2908, %v3481
        %v3610 = vadd.f32 %v2913, %v3482
        %v3611 = vadd.f32 %v2918, %v3483
        %v3612 = vadd.f32 %v3036, %v3484
        %v3613 = vadd.f32 %v3041, %v3485
        %v3614 = vadd.f32 %v3046, %v3486
        %v3615 = vadd.f32 %v3051, %v3487
        %v3616 = vadd.f32 %v3056, %v3488
        %v3617 = vadd.f32 %v3061, %v3489
        %v3618 = vadd.f32 %v3066, %v3490
        %v3619 = vadd.f32 %v3071, %v3491
        %v3620 = vadd.f32 %v3189, %v3492
        %v3621 = vadd.f32 %v3194, %v3493
        %v3622 = vadd.f32 %v3199, %v3494
        %v3623 = vadd.f32 %v3204, %v3495
        %v3624 = vadd.f32 %v3209, %v3496
        %v3625 = vadd.f32 %v3214, %v3497
        %v3626 = vadd.f32 %v3219, %v3498
        %v3627 = vadd.f32 %v3224, %v3499
        %v3628 = vadd.f32 %v3342, %v3500
        %v3629 = vadd.f32 %v3347, %v3501
        %v3630 = vadd.f32 %v3352, %v3502
        %v3631 = vadd.f32 %v3357, %v3503
        %v3632 = vadd.f32 %v3362, %v3504
        %v3633 = vadd.f32 %v3367, %v3505
        %v3634 = vadd.f32 %v3372, %v3506
        %v3635 = vadd.f32 %v3377, %v3507
        %vm3636 = vcmask 523264
        %v3637 = vsel %vm3636, %v3508, -inf
        %3638 = vmax.xlane.f32.xlu0 %v3637
        %v3639 = vpop.xlane.xlu0 %3638
        %v3640 = vsel %vm3636, %v3509, -inf
        %3641 = vmax.xlane.f32.xlu0 %v3640
        %v3642 = vpop.xlane.xlu0 %3641
        %v3643 = vsel %vm3636, %v3510, -inf
        %3644 = vmax.xlane.f32.xlu0 %v3643
        %v3645 = vpop.xlane.xlu0 %3644
        %v3646 = vsel %vm3636, %v3511, -inf
        %3647 = vmax.xlane.f32.xlu0 %v3646
        %v3648 = vpop.xlane.xlu0 %3647
        %v3649 = vsel %vm3636, %v3512, -inf
        %3650 = vmax.xlane.f32.xlu0 %v3649
        %v3651 = vpop.xlane.xlu0 %3650
        %v3652 = vsel %vm3636, %v3513, -inf
        %3653 = vmax.xlane.f32.xlu0 %v3652
        %v3654 = vpop.xlane.xlu0 %3653
        %v3655 = vsel %vm3636, %v3514, -inf
        %3656 = vmax.xlane.f32.xlu0 %v3655
        %v3657 = vpop.xlane.xlu0 %3656
        %v3658 = vsel %vm3636, %v3515, -inf
        %3659 = vmax.xlane.f32.xlu0 %v3658
        %v3660 = vpop.xlane.xlu0 %3659
        %v3661 = vsel %vm3636, %v3516, -inf
        %3662 = vmax.xlane.f32.xlu0 %v3661
        %v3663 = vpop.xlane.xlu0 %3662
        %v3664 = vsel %vm3636, %v3517, -inf
        %3665 = vmax.xlane.f32.xlu0 %v3664
        %v3666 = vpop.xlane.xlu0 %3665
        %v3667 = vsel %vm3636, %v3518, -inf
        %3668 = vmax.xlane.f32.xlu0 %v3667
        %v3669 = vpop.xlane.xlu0 %3668
        %v3670 = vsel %vm3636, %v3519, -inf
        %3671 = vmax.xlane.f32.xlu0 %v3670
        %v3672 = vpop.xlane.xlu0 %3671
        %v3673 = vsel %vm3636, %v3520, -inf
        %3674 = vmax.xlane.f32.xlu0 %v3673
        %v3675 = vpop.xlane.xlu0 %3674
        %v3676 = vsel %vm3636, %v3521, -inf
        %3677 = vmax.xlane.f32.xlu0 %v3676
        %v3678 = vpop.xlane.xlu0 %3677
        %v3679 = vsel %vm3636, %v3522, -inf
        %3680 = vmax.xlane.f32.xlu0 %v3679
        %v3681 = vpop.xlane.xlu0 %3680
        %v3682 = vsel %vm3636, %v3523, -inf
        %3683 = vmax.xlane.f32.xlu0 %v3682
        %v3684 = vpop.xlane.xlu0 %3683
        %v3685 = vsel %vm3636, %v3524, -inf
        %3686 = vmax.xlane.f32.xlu0 %v3685
        %v3687 = vpop.xlane.xlu0 %3686
        %v3688 = vsel %vm3636, %v3525, -inf
        %3689 = vmax.xlane.f32.xlu0 %v3688
        %v3690 = vpop.xlane.xlu0 %3689
        %v3691 = vsel %vm3636, %v3526, -inf
        %3692 = vmax.xlane.f32.xlu0 %v3691
        %v3693 = vpop.xlane.xlu0 %3692
        %v3694 = vsel %vm3636, %v3527, -inf
        %3695 = vmax.xlane.f32.xlu0 %v3694
        %v3696 = vpop.xlane.xlu0 %3695
        %v3697 = vsel %vm3636, %v3528, -inf
        %3698 = vmax.xlane.f32.xlu0 %v3697
        %v3699 = vpop.xlane.xlu0 %3698
        %v3700 = vsel %vm3636, %v3529, -inf
        %3701 = vmax.xlane.f32.xlu0 %v3700
        %v3702 = vpop.xlane.xlu0 %3701
        %v3703 = vsel %vm3636, %v3530, -inf
        %3704 = vmax.xlane.f32.xlu0 %v3703
        %v3705 = vpop.xlane.xlu0 %3704
        %v3706 = vsel %vm3636, %v3531, -inf
        %3707 = vmax.xlane.f32.xlu0 %v3706
        %v3708 = vpop.xlane.xlu0 %3707
        %v3709 = vsel %vm3636, %v3532, -inf
        %3710 = vmax.xlane.f32.xlu0 %v3709
        %v3711 = vpop.xlane.xlu0 %3710
        %v3712 = vsel %vm3636, %v3533, -inf
        %3713 = vmax.xlane.f32.xlu0 %v3712
        %v3714 = vpop.xlane.xlu0 %3713
        %v3715 = vsel %vm3636, %v3534, -inf
        %3716 = vmax.xlane.f32.xlu0 %v3715
        %v3717 = vpop.xlane.xlu0 %3716
        %v3718 = vsel %vm3636, %v3535, -inf
        %3719 = vmax.xlane.f32.xlu0 %v3718
        %v3720 = vpop.xlane.xlu0 %3719
        %v3721 = vsel %vm3636, %v3536, -inf
        %3722 = vmax.xlane.f32.xlu0 %v3721
        %v3723 = vpop.xlane.xlu0 %3722
        %v3724 = vsel %vm3636, %v3537, -inf
        %3725 = vmax.xlane.f32.xlu0 %v3724
        %v3726 = vpop.xlane.xlu0 %3725
        %v3727 = vsel %vm3636, %v3538, -inf
        %3728 = vmax.xlane.f32.xlu0 %v3727
        %v3729 = vpop.xlane.xlu0 %3728
        %v3730 = vsel %vm3636, %v3539, -inf
        %3731 = vmax.xlane.f32.xlu0 %v3730
        %v3732 = vpop.xlane.xlu0 %3731
        %v3733 = vsel %vm3636, %v3540, -inf
        %3734 = vmax.xlane.f32.xlu0 %v3733
        %v3735 = vpop.xlane.xlu0 %3734
        %v3736 = vsel %vm3636, %v3541, -inf
        %3737 = vmax.xlane.f32.xlu0 %v3736
        %v3738 = vpop.xlane.xlu0 %3737
        %v3739 = vsel %vm3636, %v3542, -inf
        %3740 = vmax.xlane.f32.xlu0 %v3739
        %v3741 = vpop.xlane.xlu0 %3740
        %v3742 = vsel %vm3636, %v3543, -inf
        %3743 = vmax.xlane.f32.xlu0 %v3742
        %v3744 = vpop.xlane.xlu0 %3743
        %v3745 = vsel %vm3636, %v3544, -inf
        %3746 = vmax.xlane.f32.xlu0 %v3745
        %v3747 = vpop.xlane.xlu0 %3746
        %v3748 = vsel %vm3636, %v3545, -inf
        %3749 = vmax.xlane.f32.xlu0 %v3748
        %v3750 = vpop.xlane.xlu0 %3749
        %v3751 = vsel %vm3636, %v3546, -inf
        %3752 = vmax.xlane.f32.xlu0 %v3751
        %v3753 = vpop.xlane.xlu0 %3752
        %v3754 = vsel %vm3636, %v3547, -inf
        %3755 = vmax.xlane.f32.xlu0 %v3754
        %v3756 = vpop.xlane.xlu0 %3755
        %v3757 = vsel %vm3636, %v3548, -inf
        %3758 = vmax.xlane.f32.xlu0 %v3757
        %v3759 = vpop.xlane.xlu0 %3758
        %v3760 = vsel %vm3636, %v3549, -inf
        %3761 = vmax.xlane.f32.xlu0 %v3760
        %v3762 = vpop.xlane.xlu0 %3761
        %v3763 = vsel %vm3636, %v3550, -inf
        %3764 = vmax.xlane.f32.xlu0 %v3763
        %v3765 = vpop.xlane.xlu0 %3764
        %v3766 = vsel %vm3636, %v3551, -inf
        %3767 = vmax.xlane.f32.xlu0 %v3766
        %v3768 = vpop.xlane.xlu0 %3767
        %v3769 = vsel %vm3636, %v3552, -inf
        %3770 = vmax.xlane.f32.xlu0 %v3769
        %v3771 = vpop.xlane.xlu0 %3770
        %v3772 = vsel %vm3636, %v3553, -inf
        %3773 = vmax.xlane.f32.xlu0 %v3772
        %v3774 = vpop.xlane.xlu0 %3773
        %v3775 = vsel %vm3636, %v3554, -inf
        %3776 = vmax.xlane.f32.xlu0 %v3775
        %v3777 = vpop.xlane.xlu0 %3776
        %v3778 = vsel %vm3636, %v3555, -inf
        %3779 = vmax.xlane.f32.xlu0 %v3778
        %v3780 = vpop.xlane.xlu0 %3779
        %v3781 = vsel %vm3636, %v3556, -inf
        %3782 = vmax.xlane.f32.xlu0 %v3781
        %v3783 = vpop.xlane.xlu0 %3782
        %v3784 = vsel %vm3636, %v3557, -inf
        %3785 = vmax.xlane.f32.xlu0 %v3784
        %v3786 = vpop.xlane.xlu0 %3785
        %v3787 = vsel %vm3636, %v3558, -inf
        %3788 = vmax.xlane.f32.xlu0 %v3787
        %v3789 = vpop.xlane.xlu0 %3788
        %v3790 = vsel %vm3636, %v3559, -inf
        %3791 = vmax.xlane.f32.xlu0 %v3790
        %v3792 = vpop.xlane.xlu0 %3791
        %v3793 = vsel %vm3636, %v3560, -inf
        %3794 = vmax.xlane.f32.xlu0 %v3793
        %v3795 = vpop.xlane.xlu0 %3794
        %v3796 = vsel %vm3636, %v3561, -inf
        %3797 = vmax.xlane.f32.xlu0 %v3796
        %v3798 = vpop.xlane.xlu0 %3797
        %v3799 = vsel %vm3636, %v3562, -inf
        %3800 = vmax.xlane.f32.xlu0 %v3799
        %v3801 = vpop.xlane.xlu0 %3800
        %v3802 = vsel %vm3636, %v3563, -inf
        %3803 = vmax.xlane.f32.xlu0 %v3802
        %v3804 = vpop.xlane.xlu0 %3803
        %v3805 = vsel %vm3636, %v3564, -inf
        %3806 = vmax.xlane.f32.xlu0 %v3805
        %v3807 = vpop.xlane.xlu0 %3806
        %v3808 = vsel %vm3636, %v3565, -inf
        %3809 = vmax.xlane.f32.xlu0 %v3808
        %v3810 = vpop.xlane.xlu0 %3809
        %v3811 = vsel %vm3636, %v3566, -inf
        %3812 = vmax.xlane.f32.xlu0 %v3811
        %v3813 = vpop.xlane.xlu0 %3812
        %v3814 = vsel %vm3636, %v3567, -inf
        %3815 = vmax.xlane.f32.xlu0 %v3814
        %v3816 = vpop.xlane.xlu0 %3815
        %v3817 = vsel %vm3636, %v3568, -inf
        %3818 = vmax.xlane.f32.xlu0 %v3817
        %v3819 = vpop.xlane.xlu0 %3818
        %v3820 = vsel %vm3636, %v3569, -inf
        %3821 = vmax.xlane.f32.xlu0 %v3820
        %v3822 = vpop.xlane.xlu0 %3821
        %v3823 = vsel %vm3636, %v3570, -inf
        %3824 = vmax.xlane.f32.xlu0 %v3823
        %v3825 = vpop.xlane.xlu0 %3824
        %v3826 = vsel %vm3636, %v3571, -inf
        %3827 = vmax.xlane.f32.xlu0 %v3826
        %v3828 = vpop.xlane.xlu0 %3827
        %v3829 = vsel %vm3636, %v3572, -inf
        %3830 = vmax.xlane.f32.xlu0 %v3829
        %v3831 = vpop.xlane.xlu0 %3830
        %v3832 = vsel %vm3636, %v3573, -inf
        %3833 = vmax.xlane.f32.xlu0 %v3832
        %v3834 = vpop.xlane.xlu0 %3833
        %v3835 = vsel %vm3636, %v3574, -inf
        %3836 = vmax.xlane.f32.xlu0 %v3835
        %v3837 = vpop.xlane.xlu0 %3836
        %v3838 = vsel %vm3636, %v3575, -inf
        %3839 = vmax.xlane.f32.xlu0 %v3838
        %v3840 = vpop.xlane.xlu0 %3839
        %v3841 = vsel %vm3636, %v3576, -inf
        %3842 = vmax.xlane.f32.xlu0 %v3841
        %v3843 = vpop.xlane.xlu0 %3842
        %v3844 = vsel %vm3636, %v3577, -inf
        %3845 = vmax.xlane.f32.xlu0 %v3844
        %v3846 = vpop.xlane.xlu0 %3845
        %v3847 = vsel %vm3636, %v3578, -inf
        %3848 = vmax.xlane.f32.xlu0 %v3847
        %v3849 = vpop.xlane.xlu0 %3848
        %v3850 = vsel %vm3636, %v3579, -inf
        %3851 = vmax.xlane.f32.xlu0 %v3850
        %v3852 = vpop.xlane.xlu0 %3851
        %v3853 = vsel %vm3636, %v3580, -inf
        %3854 = vmax.xlane.f32.xlu0 %v3853
        %v3855 = vpop.xlane.xlu0 %3854
        %v3856 = vsel %vm3636, %v3581, -inf
        %3857 = vmax.xlane.f32.xlu0 %v3856
        %v3858 = vpop.xlane.xlu0 %3857
        %v3859 = vsel %vm3636, %v3582, -inf
        %3860 = vmax.xlane.f32.xlu0 %v3859
        %v3861 = vpop.xlane.xlu0 %3860
        %v3862 = vsel %vm3636, %v3583, -inf
        %3863 = vmax.xlane.f32.xlu0 %v3862
        %v3864 = vpop.xlane.xlu0 %3863
        %v3865 = vsel %vm3636, %v3584, -inf
        %3866 = vmax.xlane.f32.xlu0 %v3865
        %v3867 = vpop.xlane.xlu0 %3866
        %v3868 = vsel %vm3636, %v3585, -inf
        %3869 = vmax.xlane.f32.xlu0 %v3868
        %v3870 = vpop.xlane.xlu0 %3869
        %v3871 = vsel %vm3636, %v3586, -inf
        %3872 = vmax.xlane.f32.xlu0 %v3871
        %v3873 = vpop.xlane.xlu0 %3872
        %v3874 = vsel %vm3636, %v3587, -inf
        %3875 = vmax.xlane.f32.xlu0 %v3874
        %v3876 = vpop.xlane.xlu0 %3875
        %v3877 = vsel %vm3636, %v3588, -inf
        %3878 = vmax.xlane.f32.xlu0 %v3877
        %v3879 = vpop.xlane.xlu0 %3878
        %v3880 = vsel %vm3636, %v3589, -inf
        %3881 = vmax.xlane.f32.xlu0 %v3880
        %v3882 = vpop.xlane.xlu0 %3881
        %v3883 = vsel %vm3636, %v3590, -inf
        %3884 = vmax.xlane.f32.xlu0 %v3883
        %v3885 = vpop.xlane.xlu0 %3884
        %v3886 = vsel %vm3636, %v3591, -inf
        %3887 = vmax.xlane.f32.xlu0 %v3886
        %v3888 = vpop.xlane.xlu0 %3887
        %v3889 = vsel %vm3636, %v3592, -inf
        %3890 = vmax.xlane.f32.xlu0 %v3889
        %v3891 = vpop.xlane.xlu0 %3890
        %v3892 = vsel %vm3636, %v3593, -inf
        %3893 = vmax.xlane.f32.xlu0 %v3892
        %v3894 = vpop.xlane.xlu0 %3893
        %v3895 = vsel %vm3636, %v3594, -inf
        %3896 = vmax.xlane.f32.xlu0 %v3895
        %v3897 = vpop.xlane.xlu0 %3896
        %v3898 = vsel %vm3636, %v3595, -inf
        %3899 = vmax.xlane.f32.xlu0 %v3898
        %v3900 = vpop.xlane.xlu0 %3899
        %v3901 = vsel %vm3636, %v3596, -inf
        %3902 = vmax.xlane.f32.xlu0 %v3901
        %v3903 = vpop.xlane.xlu0 %3902
        %v3904 = vsel %vm3636, %v3597, -inf
        %3905 = vmax.xlane.f32.xlu0 %v3904
        %v3906 = vpop.xlane.xlu0 %3905
        %v3907 = vsel %vm3636, %v3598, -inf
        %3908 = vmax.xlane.f32.xlu0 %v3907
        %v3909 = vpop.xlane.xlu0 %3908
        %v3910 = vsel %vm3636, %v3599, -inf
        %3911 = vmax.xlane.f32.xlu0 %v3910
        %v3912 = vpop.xlane.xlu0 %3911
        %v3913 = vsel %vm3636, %v3600, -inf
        %3914 = vmax.xlane.f32.xlu0 %v3913
        %v3915 = vpop.xlane.xlu0 %3914
        %v3916 = vsel %vm3636, %v3601, -inf
        %3917 = vmax.xlane.f32.xlu0 %v3916
        %v3918 = vpop.xlane.xlu0 %3917
        %v3919 = vsel %vm3636, %v3602, -inf
        %3920 = vmax.xlane.f32.xlu0 %v3919
        %v3921 = vpop.xlane.xlu0 %3920
        %v3922 = vsel %vm3636, %v3603, -inf
        %3923 = vmax.xlane.f32.xlu0 %v3922
        %v3924 = vpop.xlane.xlu0 %3923
        %v3925 = vsel %vm3636, %v3604, -inf
        %3926 = vmax.xlane.f32.xlu0 %v3925
        %v3927 = vpop.xlane.xlu0 %3926
        %v3928 = vsel %vm3636, %v3605, -inf
        %3929 = vmax.xlane.f32.xlu0 %v3928
        %v3930 = vpop.xlane.xlu0 %3929
        %v3931 = vsel %vm3636, %v3606, -inf
        %3932 = vmax.xlane.f32.xlu0 %v3931
        %v3933 = vpop.xlane.xlu0 %3932
        %v3934 = vsel %vm3636, %v3607, -inf
        %3935 = vmax.xlane.f32.xlu0 %v3934
        %v3936 = vpop.xlane.xlu0 %3935
        %v3937 = vsel %vm3636, %v3608, -inf
        %3938 = vmax.xlane.f32.xlu0 %v3937
        %v3939 = vpop.xlane.xlu0 %3938
        %v3940 = vsel %vm3636, %v3609, -inf
        %3941 = vmax.xlane.f32.xlu0 %v3940
        %v3942 = vpop.xlane.xlu0 %3941
        %v3943 = vsel %vm3636, %v3610, -inf
        %3944 = vmax.xlane.f32.xlu0 %v3943
        %v3945 = vpop.xlane.xlu0 %3944
        %v3946 = vsel %vm3636, %v3611, -inf
        %3947 = vmax.xlane.f32.xlu0 %v3946
        %v3948 = vpop.xlane.xlu0 %3947
        %v3949 = vsel %vm3636, %v3612, -inf
        %3950 = vmax.xlane.f32.xlu0 %v3949
        %v3951 = vpop.xlane.xlu0 %3950
        %v3952 = vsel %vm3636, %v3613, -inf
        %3953 = vmax.xlane.f32.xlu0 %v3952
        %v3954 = vpop.xlane.xlu0 %3953
        %v3955 = vsel %vm3636, %v3614, -inf
        %3956 = vmax.xlane.f32.xlu0 %v3955
        %v3957 = vpop.xlane.xlu0 %3956
        %v3958 = vsel %vm3636, %v3615, -inf
        %3959 = vmax.xlane.f32.xlu0 %v3958
        %v3960 = vpop.xlane.xlu0 %3959
        %v3961 = vsel %vm3636, %v3616, -inf
        %3962 = vmax.xlane.f32.xlu0 %v3961
        %v3963 = vpop.xlane.xlu0 %3962
        %v3964 = vsel %vm3636, %v3617, -inf
        %3965 = vmax.xlane.f32.xlu0 %v3964
        %v3966 = vpop.xlane.xlu0 %3965
        %v3967 = vsel %vm3636, %v3618, -inf
        %3968 = vmax.xlane.f32.xlu0 %v3967
        %v3969 = vpop.xlane.xlu0 %3968
        %v3970 = vsel %vm3636, %v3619, -inf
        %3971 = vmax.xlane.f32.xlu0 %v3970
        %v3972 = vpop.xlane.xlu0 %3971
        %v3973 = vsel %vm3636, %v3620, -inf
        %3974 = vmax.xlane.f32.xlu0 %v3973
        %v3975 = vpop.xlane.xlu0 %3974
        %v3976 = vsel %vm3636, %v3621, -inf
        %3977 = vmax.xlane.f32.xlu0 %v3976
        %v3978 = vpop.xlane.xlu0 %3977
        %v3979 = vsel %vm3636, %v3622, -inf
        %3980 = vmax.xlane.f32.xlu0 %v3979
        %v3981 = vpop.xlane.xlu0 %3980
        %v3982 = vsel %vm3636, %v3623, -inf
        %3983 = vmax.xlane.f32.xlu0 %v3982
        %v3984 = vpop.xlane.xlu0 %3983
        %v3985 = vsel %vm3636, %v3624, -inf
        %3986 = vmax.xlane.f32.xlu0 %v3985
        %v3987 = vpop.xlane.xlu0 %3986
        %v3988 = vsel %vm3636, %v3625, -inf
        %3989 = vmax.xlane.f32.xlu0 %v3988
        %v3990 = vpop.xlane.xlu0 %3989
        %v3991 = vsel %vm3636, %v3626, -inf
        %3992 = vmax.xlane.f32.xlu0 %v3991
        %v3993 = vpop.xlane.xlu0 %3992
        %v3994 = vsel %vm3636, %v3627, -inf
        %3995 = vmax.xlane.f32.xlu0 %v3994
        %v3996 = vpop.xlane.xlu0 %3995
        %v3997 = vsel %vm3636, %v3628, -inf
        %3998 = vmax.xlane.f32.xlu0 %v3997
        %v3999 = vpop.xlane.xlu0 %3998
        %v4000 = vsel %vm3636, %v3629, -inf
        %4001 = vmax.xlane.f32.xlu0 %v4000
        %v4002 = vpop.xlane.xlu0 %4001
        %v4003 = vsel %vm3636, %v3630, -inf
        %4004 = vmax.xlane.f32.xlu0 %v4003
        %v4005 = vpop.xlane.xlu0 %4004
        %v4006 = vsel %vm3636, %v3631, -inf
        %4007 = vmax.xlane.f32.xlu0 %v4006
        %v4008 = vpop.xlane.xlu0 %4007
        %v4009 = vsel %vm3636, %v3632, -inf
        %4010 = vmax.xlane.f32.xlu0 %v4009
        %v4011 = vpop.xlane.xlu0 %4010
        %v4012 = vsel %vm3636, %v3633, -inf
        %4013 = vmax.xlane.f32.xlu0 %v4012
        %v4014 = vpop.xlane.xlu0 %4013
        %v4015 = vsel %vm3636, %v3634, -inf
        %4016 = vmax.xlane.f32.xlu0 %v4015
        %v4017 = vpop.xlane.xlu0 %4016
        %v4018 = vsel %vm3636, %v3635, -inf
        %4019 = vmax.xlane.f32.xlu0 %v4018
        %v4020 = vpop.xlane.xlu0 %4019
        %v4021 = vsub.f32 %v3508, %v3639
        %v4022 = vsub.f32 %v3509, %v3642
        %v4023 = vsub.f32 %v3510, %v3645
        %v4024 = vsub.f32 %v3511, %v3648
        %v4025 = vsub.f32 %v3512, %v3651
        %v4026 = vsub.f32 %v3513, %v3654
        %v4027 = vsub.f32 %v3514, %v3657
        %v4028 = vsub.f32 %v3515, %v3660
        %v4029 = vsub.f32 %v3516, %v3663
        %v4030 = vsub.f32 %v3517, %v3666
        %v4031 = vsub.f32 %v3518, %v3669
        %v4032 = vsub.f32 %v3519, %v3672
        %v4033 = vsub.f32 %v3520, %v3675
        %v4034 = vsub.f32 %v3521, %v3678
        %v4035 = vsub.f32 %v3522, %v3681
        %v4036 = vsub.f32 %v3523, %v3684
        %v4037 = vsub.f32 %v3524, %v3687
        %v4038 = vsub.f32 %v3525, %v3690
        %v4039 = vsub.f32 %v3526, %v3693
        %v4040 = vsub.f32 %v3527, %v3696
        %v4041 = vsub.f32 %v3528, %v3699
        %v4042 = vsub.f32 %v3529, %v3702
        %v4043 = vsub.f32 %v3530, %v3705
        %v4044 = vsub.f32 %v3531, %v3708
        %v4045 = vsub.f32 %v3532, %v3711
        %v4046 = vsub.f32 %v3533, %v3714
        %v4047 = vsub.f32 %v3534, %v3717
        %v4048 = vsub.f32 %v3535, %v3720
        %v4049 = vsub.f32 %v3536, %v3723
        %v4050 = vsub.f32 %v3537, %v3726
        %v4051 = vsub.f32 %v3538, %v3729
        %v4052 = vsub.f32 %v3539, %v3732
        %v4053 = vsub.f32 %v3540, %v3735
        %v4054 = vsub.f32 %v3541, %v3738
        %v4055 = vsub.f32 %v3542, %v3741
        %v4056 = vsub.f32 %v3543, %v3744
        %v4057 = vsub.f32 %v3544, %v3747
        %v4058 = vsub.f32 %v3545, %v3750
        %v4059 = vsub.f32 %v3546, %v3753
        %v4060 = vsub.f32 %v3547, %v3756
        %v4061 = vsub.f32 %v3548, %v3759
        %v4062 = vsub.f32 %v3549, %v3762
        %v4063 = vsub.f32 %v3550, %v3765
        %v4064 = vsub.f32 %v3551, %v3768
        %v4065 = vsub.f32 %v3552, %v3771
        %v4066 = vsub.f32 %v3553, %v3774
        %v4067 = vsub.f32 %v3554, %v3777
        %v4068 = vsub.f32 %v3555, %v3780
        %v4069 = vsub.f32 %v3556, %v3783
        %v4070 = vsub.f32 %v3557, %v3786
        %v4071 = vsub.f32 %v3558, %v3789
        %v4072 = vsub.f32 %v3559, %v3792
        %v4073 = vsub.f32 %v3560, %v3795
        %v4074 = vsub.f32 %v3561, %v3798
        %v4075 = vsub.f32 %v3562, %v3801
        %v4076 = vsub.f32 %v3563, %v3804
        %v4077 = vsub.f32 %v3564, %v3807
        %v4078 = vsub.f32 %v3565, %v3810
        %v4079 = vsub.f32 %v3566, %v3813
        %v4080 = vsub.f32 %v3567, %v3816
        %v4081 = vsub.f32 %v3568, %v3819
        %v4082 = vsub.f32 %v3569, %v3822
        %v4083 = vsub.f32 %v3570, %v3825
        %v4084 = vsub.f32 %v3571, %v3828
        %v4085 = vsub.f32 %v3572, %v3831
        %v4086 = vsub.f32 %v3573, %v3834
        %v4087 = vsub.f32 %v3574, %v3837
        %v4088 = vsub.f32 %v3575, %v3840
        %v4089 = vsub.f32 %v3576, %v3843
        %v4090 = vsub.f32 %v3577, %v3846
        %v4091 = vsub.f32 %v3578, %v3849
        %v4092 = vsub.f32 %v3579, %v3852
        %v4093 = vsub.f32 %v3580, %v3855
        %v4094 = vsub.f32 %v3581, %v3858
        %v4095 = vsub.f32 %v3582, %v3861
        %v4096 = vsub.f32 %v3583, %v3864
        %v4097 = vsub.f32 %v3584, %v3867
        %v4098 = vsub.f32 %v3585, %v3870
        %v4099 = vsub.f32 %v3586, %v3873
        %v4100 = vsub.f32 %v3587, %v3876
        %v4101 = vsub.f32 %v3588, %v3879
        %v4102 = vsub.f32 %v3589, %v3882
        %v4103 = vsub.f32 %v3590, %v3885
        %v4104 = vsub.f32 %v3591, %v3888
        %v4105 = vsub.f32 %v3592, %v3891
        %v4106 = vsub.f32 %v3593, %v3894
        %v4107 = vsub.f32 %v3594, %v3897
        %v4108 = vsub.f32 %v3595, %v3900
        %v4109 = vsub.f32 %v3596, %v3903
        %v4110 = vsub.f32 %v3597, %v3906
        %v4111 = vsub.f32 %v3598, %v3909
        %v4112 = vsub.f32 %v3599, %v3912
        %v4113 = vsub.f32 %v3600, %v3915
        %v4114 = vsub.f32 %v3601, %v3918
        %v4115 = vsub.f32 %v3602, %v3921
        %v4116 = vsub.f32 %v3603, %v3924
        %v4117 = vsub.f32 %v3604, %v3927
        %v4118 = vsub.f32 %v3605, %v3930
        %v4119 = vsub.f32 %v3606, %v3933
        %v4120 = vsub.f32 %v3607, %v3936
        %v4121 = vsub.f32 %v3608, %v3939
        %v4122 = vsub.f32 %v3609, %v3942
        %v4123 = vsub.f32 %v3610, %v3945
        %v4124 = vsub.f32 %v3611, %v3948
        %v4125 = vsub.f32 %v3612, %v3951
        %v4126 = vsub.f32 %v3613, %v3954
        %v4127 = vsub.f32 %v3614, %v3957
        %v4128 = vsub.f32 %v3615, %v3960
        %v4129 = vsub.f32 %v3616, %v3963
        %v4130 = vsub.f32 %v3617, %v3966
        %v4131 = vsub.f32 %v3618, %v3969
        %v4132 = vsub.f32 %v3619, %v3972
        %v4133 = vsub.f32 %v3620, %v3975
        %v4134 = vsub.f32 %v3621, %v3978
        %v4135 = vsub.f32 %v3622, %v3981
        %v4136 = vsub.f32 %v3623, %v3984
        %v4137 = vsub.f32 %v3624, %v3987
        %v4138 = vsub.f32 %v3625, %v3990
        %v4139 = vsub.f32 %v3626, %v3993
        %v4140 = vsub.f32 %v3627, %v3996
        %v4141 = vsub.f32 %v3628, %v3999
        %v4142 = vsub.f32 %v3629, %v4002
        %v4143 = vsub.f32 %v3630, %v4005
        %v4144 = vsub.f32 %v3631, %v4008
        %v4145 = vsub.f32 %v3632, %v4011
        %v4146 = vsub.f32 %v3633, %v4014
        %v4147 = vsub.f32 %v3634, %v4017
        %v4148 = vsub.f32 %v3635, %v4020
        %v4149 = vmul.f32 %v4021, 1.442695
        %v4150 = vpow.pop %v4149
        %v4151 = vmul.f32 %v4022, 1.442695
        %v4152 = vpow.pop %v4151
        %v4153 = vmul.f32 %v4023, 1.442695
        %v4154 = vpow.pop %v4153
        %v4155 = vmul.f32 %v4024, 1.442695
        %v4156 = vpow.pop %v4155
        %v4157 = vmul.f32 %v4025, 1.442695
        %v4158 = vpow.pop %v4157
        %v4159 = vmul.f32 %v4026, 1.442695
        %v4160 = vpow.pop %v4159
        %v4161 = vmul.f32 %v4027, 1.442695
        %v4162 = vpow.pop %v4161
        %v4163 = vmul.f32 %v4028, 1.442695
        %v4164 = vpow.pop %v4163
        %v4165 = vmul.f32 %v4029, 1.442695
        %v4166 = vpow.pop %v4165
        %v4167 = vmul.f32 %v4030, 1.442695
        %v4168 = vpow.pop %v4167
        %v4169 = vmul.f32 %v4031, 1.442695
        %v4170 = vpow.pop %v4169
        %v4171 = vmul.f32 %v4032, 1.442695
        %v4172 = vpow.pop %v4171
        %v4173 = vmul.f32 %v4033, 1.442695
        %v4174 = vpow.pop %v4173
        %v4175 = vmul.f32 %v4034, 1.442695
        %v4176 = vpow.pop %v4175
        %v4177 = vmul.f32 %v4035, 1.442695
        %v4178 = vpow.pop %v4177
        %v4179 = vmul.f32 %v4036, 1.442695
        %v4180 = vpow.pop %v4179
        %v4181 = vmul.f32 %v4037, 1.442695
        %v4182 = vpow.pop %v4181
        %v4183 = vmul.f32 %v4038, 1.442695
        %v4184 = vpow.pop %v4183
        %v4185 = vmul.f32 %v4039, 1.442695
        %v4186 = vpow.pop %v4185
        %v4187 = vmul.f32 %v4040, 1.442695
        %v4188 = vpow.pop %v4187
        %v4189 = vmul.f32 %v4041, 1.442695
        %v4190 = vpow.pop %v4189
        %v4191 = vmul.f32 %v4042, 1.442695
        %v4192 = vpow.pop %v4191
        %v4193 = vmul.f32 %v4043, 1.442695
        %v4194 = vpow.pop %v4193
        %v4195 = vmul.f32 %v4044, 1.442695
        %v4196 = vpow.pop %v4195
        %v4197 = vmul.f32 %v4045, 1.442695
        %v4198 = vpow.pop %v4197
        %v4199 = vmul.f32 %v4046, 1.442695
        %v4200 = vpow.pop %v4199
        %v4201 = vmul.f32 %v4047, 1.442695
        %v4202 = vpow.pop %v4201
        %v4203 = vmul.f32 %v4048, 1.442695
        %v4204 = vpow.pop %v4203
        %v4205 = vmul.f32 %v4049, 1.442695
        %v4206 = vpow.pop %v4205
        %v4207 = vmul.f32 %v4050, 1.442695
        %v4208 = vpow.pop %v4207
        %v4209 = vmul.f32 %v4051, 1.442695
        %v4210 = vpow.pop %v4209
        %v4211 = vmul.f32 %v4052, 1.442695
        %v4212 = vpow.pop %v4211
        %v4213 = vmul.f32 %v4053, 1.442695
        %v4214 = vpow.pop %v4213
        %v4215 = vmul.f32 %v4054, 1.442695
        %v4216 = vpow.pop %v4215
        %v4217 = vmul.f32 %v4055, 1.442695
        %v4218 = vpow.pop %v4217
        %v4219 = vmul.f32 %v4056, 1.442695
        %v4220 = vpow.pop %v4219
        %v4221 = vmul.f32 %v4057, 1.442695
        %v4222 = vpow.pop %v4221
        %v4223 = vmul.f32 %v4058, 1.442695
        %v4224 = vpow.pop %v4223
        %v4225 = vmul.f32 %v4059, 1.442695
        %v4226 = vpow.pop %v4225
        %v4227 = vmul.f32 %v4060, 1.442695
        %v4228 = vpow.pop %v4227
        %v4229 = vmul.f32 %v4061, 1.442695
        %v4230 = vpow.pop %v4229
        %v4231 = vmul.f32 %v4062, 1.442695
        %v4232 = vpow.pop %v4231
        %v4233 = vmul.f32 %v4063, 1.442695
        %v4234 = vpow.pop %v4233
        %v4235 = vmul.f32 %v4064, 1.442695
        %v4236 = vpow.pop %v4235
        %v4237 = vmul.f32 %v4065, 1.442695
        %v4238 = vpow.pop %v4237
        %v4239 = vmul.f32 %v4066, 1.442695
        %v4240 = vpow.pop %v4239
        %v4241 = vmul.f32 %v4067, 1.442695
        %v4242 = vpow.pop %v4241
        %v4243 = vmul.f32 %v4068, 1.442695
        %v4244 = vpow.pop %v4243
        %v4245 = vmul.f32 %v4069, 1.442695
        %v4246 = vpow.pop %v4245
        %v4247 = vmul.f32 %v4070, 1.442695
        %v4248 = vpow.pop %v4247
        %v4249 = vmul.f32 %v4071, 1.442695
        %v4250 = vpow.pop %v4249
        %v4251 = vmul.f32 %v4072, 1.442695
        %v4252 = vpow.pop %v4251
        %v4253 = vmul.f32 %v4073, 1.442695
        %v4254 = vpow.pop %v4253
        %v4255 = vmul.f32 %v4074, 1.442695
        %v4256 = vpow.pop %v4255
        %v4257 = vmul.f32 %v4075, 1.442695
        %v4258 = vpow.pop %v4257
        %v4259 = vmul.f32 %v4076, 1.442695
        %v4260 = vpow.pop %v4259
        %v4261 = vmul.f32 %v4077, 1.442695
        %v4262 = vpow.pop %v4261
        %v4263 = vmul.f32 %v4078, 1.442695
        %v4264 = vpow.pop %v4263
        %v4265 = vmul.f32 %v4079, 1.442695
        %v4266 = vpow.pop %v4265
        %v4267 = vmul.f32 %v4080, 1.442695
        %v4268 = vpow.pop %v4267
        %v4269 = vmul.f32 %v4081, 1.442695
        %v4270 = vpow.pop %v4269
        %v4271 = vmul.f32 %v4082, 1.442695
        %v4272 = vpow.pop %v4271
        %v4273 = vmul.f32 %v4083, 1.442695
        %v4274 = vpow.pop %v4273
        %v4275 = vmul.f32 %v4084, 1.442695
        %v4276 = vpow.pop %v4275
        %v4277 = vmul.f32 %v4085, 1.442695
        %v4278 = vpow.pop %v4277
        %v4279 = vmul.f32 %v4086, 1.442695
        %v4280 = vpow.pop %v4279
        %v4281 = vmul.f32 %v4087, 1.442695
        %v4282 = vpow.pop %v4281
        %v4283 = vmul.f32 %v4088, 1.442695
        %v4284 = vpow.pop %v4283
        %v4285 = vmul.f32 %v4089, 1.442695
        %v4286 = vpow.pop %v4285
        %v4287 = vmul.f32 %v4090, 1.442695
        %v4288 = vpow.pop %v4287
        %v4289 = vmul.f32 %v4091, 1.442695
        %v4290 = vpow.pop %v4289
        %v4291 = vmul.f32 %v4092, 1.442695
        %v4292 = vpow.pop %v4291
        %v4293 = vmul.f32 %v4093, 1.442695
        %v4294 = vpow.pop %v4293
        %v4295 = vmul.f32 %v4094, 1.442695
        %v4296 = vpow.pop %v4295
        %v4297 = vmul.f32 %v4095, 1.442695
        %v4298 = vpow.pop %v4297
        %v4299 = vmul.f32 %v4096, 1.442695
        %v4300 = vpow.pop %v4299
        %v4301 = vmul.f32 %v4097, 1.442695
        %v4302 = vpow.pop %v4301
        %v4303 = vmul.f32 %v4098, 1.442695
        %v4304 = vpow.pop %v4303
        %v4305 = vmul.f32 %v4099, 1.442695
        %v4306 = vpow.pop %v4305
        %v4307 = vmul.f32 %v4100, 1.442695
        %v4308 = vpow.pop %v4307
        %v4309 = vmul.f32 %v4101, 1.442695
        %v4310 = vpow.pop %v4309
        %v4311 = vmul.f32 %v4102, 1.442695
        %v4312 = vpow.pop %v4311
        %v4313 = vmul.f32 %v4103, 1.442695
        %v4314 = vpow.pop %v4313
        %v4315 = vmul.f32 %v4104, 1.442695
        %v4316 = vpow.pop %v4315
        %v4317 = vmul.f32 %v4105, 1.442695
        %v4318 = vpow.pop %v4317
        %v4319 = vmul.f32 %v4106, 1.442695
        %v4320 = vpow.pop %v4319
        %v4321 = vmul.f32 %v4107, 1.442695
        %v4322 = vpow.pop %v4321
        %v4323 = vmul.f32 %v4108, 1.442695
        %v4324 = vpow.pop %v4323
        %v4325 = vmul.f32 %v4109, 1.442695
        %v4326 = vpow.pop %v4325
        %v4327 = vmul.f32 %v4110, 1.442695
        %v4328 = vpow.pop %v4327
        %v4329 = vmul.f32 %v4111, 1.442695
        %v4330 = vpow.pop %v4329
        %v4331 = vmul.f32 %v4112, 1.442695
        %v4332 = vpow.pop %v4331
        %v4333 = vmul.f32 %v4113, 1.442695
        %v4334 = vpow.pop %v4333
        %v4335 = vmul.f32 %v4114, 1.442695
        %v4336 = vpow.pop %v4335
        %v4337 = vmul.f32 %v4115, 1.442695
        %v4338 = vpow.pop %v4337
        %v4339 = vmul.f32 %v4116, 1.442695
        %v4340 = vpow.pop %v4339
        %v4341 = vmul.f32 %v4117, 1.442695
        %v4342 = vpow.pop %v4341
        %v4343 = vmul.f32 %v4118, 1.442695
        %v4344 = vpow.pop %v4343
        %v4345 = vmul.f32 %v4119, 1.442695
        %v4346 = vpow.pop %v4345
        %v4347 = vmul.f32 %v4120, 1.442695
        %v4348 = vpow.pop %v4347
        %v4349 = vmul.f32 %v4121, 1.442695
        %v4350 = vpow.pop %v4349
        %v4351 = vmul.f32 %v4122, 1.442695
        %v4352 = vpow.pop %v4351
        %v4353 = vmul.f32 %v4123, 1.442695
        %v4354 = vpow.pop %v4353
        %v4355 = vmul.f32 %v4124, 1.442695
        %v4356 = vpow.pop %v4355
        %v4357 = vmul.f32 %v4125, 1.442695
        %v4358 = vpow.pop %v4357
        %v4359 = vmul.f32 %v4126, 1.442695
        %v4360 = vpow.pop %v4359
        %v4361 = vmul.f32 %v4127, 1.442695
        %v4362 = vpow.pop %v4361
        %v4363 = vmul.f32 %v4128, 1.442695
        %v4364 = vpow.pop %v4363
        %v4365 = vmul.f32 %v4129, 1.442695
        %v4366 = vpow.pop %v4365
        %v4367 = vmul.f32 %v4130, 1.442695
        %v4368 = vpow.pop %v4367
        %v4369 = vmul.f32 %v4131, 1.442695
        %v4370 = vpow.pop %v4369
        %v4371 = vmul.f32 %v4132, 1.442695
        %v4372 = vpow.pop %v4371
        %v4373 = vmul.f32 %v4133, 1.442695
        %v4374 = vpow.pop %v4373
        %v4375 = vmul.f32 %v4134, 1.442695
        %v4376 = vpow.pop %v4375
        %v4377 = vmul.f32 %v4135, 1.442695
        %v4378 = vpow.pop %v4377
        %v4379 = vmul.f32 %v4136, 1.442695
        %v4380 = vpow.pop %v4379
        %v4381 = vmul.f32 %v4137, 1.442695
        %v4382 = vpow.pop %v4381
        %v4383 = vmul.f32 %v4138, 1.442695
        %v4384 = vpow.pop %v4383
        %v4385 = vmul.f32 %v4139, 1.442695
        %v4386 = vpow.pop %v4385
        %v4387 = vmul.f32 %v4140, 1.442695
        %v4388 = vpow.pop %v4387
        %v4389 = vmul.f32 %v4141, 1.442695
        %v4390 = vpow.pop %v4389
        %v4391 = vmul.f32 %v4142, 1.442695
        %v4392 = vpow.pop %v4391
        %v4393 = vmul.f32 %v4143, 1.442695
        %v4394 = vpow.pop %v4393
        %v4395 = vmul.f32 %v4144, 1.442695
        %v4396 = vpow.pop %v4395
        %v4397 = vmul.f32 %v4145, 1.442695
        %v4398 = vpow.pop %v4397
        %v4399 = vmul.f32 %v4146, 1.442695
        %v4400 = vpow.pop %v4399
        %v4401 = vmul.f32 %v4147, 1.442695
        %v4402 = vpow.pop %v4401
        %v4403 = vmul.f32 %v4148, 1.442695
        %v4404 = vpow.pop %v4403
        %v4405 = vsel %vm3636, %v4150, 0.0
        %4406 = vadd.xlane.f32.xlu0 %v4405
        %v4407 = vpop.xlane.xlu0 %4406
        %v4408 = vsel %vm3636, %v4152, 0.0
        %4409 = vadd.xlane.f32.xlu0 %v4408
        %v4410 = vpop.xlane.xlu0 %4409
        %v4411 = vsel %vm3636, %v4154, 0.0
        %4412 = vadd.xlane.f32.xlu0 %v4411
        %v4413 = vpop.xlane.xlu0 %4412
        %v4414 = vsel %vm3636, %v4156, 0.0
        %4415 = vadd.xlane.f32.xlu0 %v4414
        %v4416 = vpop.xlane.xlu0 %4415
        %v4417 = vsel %vm3636, %v4158, 0.0
        %4418 = vadd.xlane.f32.xlu0 %v4417
        %v4419 = vpop.xlane.xlu0 %4418
        %v4420 = vsel %vm3636, %v4160, 0.0
        %4421 = vadd.xlane.f32.xlu0 %v4420
        %v4422 = vpop.xlane.xlu0 %4421
        %v4423 = vsel %vm3636, %v4162, 0.0
        %4424 = vadd.xlane.f32.xlu0 %v4423
        %v4425 = vpop.xlane.xlu0 %4424
        %v4426 = vsel %vm3636, %v4164, 0.0
        %4427 = vadd.xlane.f32.xlu0 %v4426
        %v4428 = vpop.xlane.xlu0 %4427
        %v4429 = vsel %vm3636, %v4166, 0.0
        %4430 = vadd.xlane.f32.xlu0 %v4429
        %v4431 = vpop.xlane.xlu0 %4430
        %v4432 = vsel %vm3636, %v4168, 0.0
        %4433 = vadd.xlane.f32.xlu0 %v4432
        %v4434 = vpop.xlane.xlu0 %4433
        %v4435 = vsel %vm3636, %v4170, 0.0
        %4436 = vadd.xlane.f32.xlu0 %v4435
        %v4437 = vpop.xlane.xlu0 %4436
        %v4438 = vsel %vm3636, %v4172, 0.0
        %4439 = vadd.xlane.f32.xlu0 %v4438
        %v4440 = vpop.xlane.xlu0 %4439
        %v4441 = vsel %vm3636, %v4174, 0.0
        %4442 = vadd.xlane.f32.xlu0 %v4441
        %v4443 = vpop.xlane.xlu0 %4442
        %v4444 = vsel %vm3636, %v4176, 0.0
        %4445 = vadd.xlane.f32.xlu0 %v4444
        %v4446 = vpop.xlane.xlu0 %4445
        %v4447 = vsel %vm3636, %v4178, 0.0
        %4448 = vadd.xlane.f32.xlu0 %v4447
        %v4449 = vpop.xlane.xlu0 %4448
        %v4450 = vsel %vm3636, %v4180, 0.0
        %4451 = vadd.xlane.f32.xlu0 %v4450
        %v4452 = vpop.xlane.xlu0 %4451
        %v4453 = vsel %vm3636, %v4182, 0.0
        %4454 = vadd.xlane.f32.xlu0 %v4453
        %v4455 = vpop.xlane.xlu0 %4454
        %v4456 = vsel %vm3636, %v4184, 0.0
        %4457 = vadd.xlane.f32.xlu0 %v4456
        %v4458 = vpop.xlane.xlu0 %4457
        %v4459 = vsel %vm3636, %v4186, 0.0
        %4460 = vadd.xlane.f32.xlu0 %v4459
        %v4461 = vpop.xlane.xlu0 %4460
        %v4462 = vsel %vm3636, %v4188, 0.0
        %4463 = vadd.xlane.f32.xlu0 %v4462
        %v4464 = vpop.xlane.xlu0 %4463
        %v4465 = vsel %vm3636, %v4190, 0.0
        %4466 = vadd.xlane.f32.xlu0 %v4465
        %v4467 = vpop.xlane.xlu0 %4466
        %v4468 = vsel %vm3636, %v4192, 0.0
        %4469 = vadd.xlane.f32.xlu0 %v4468
        %v4470 = vpop.xlane.xlu0 %4469
        %v4471 = vsel %vm3636, %v4194, 0.0
        %4472 = vadd.xlane.f32.xlu0 %v4471
        %v4473 = vpop.xlane.xlu0 %4472
        %v4474 = vsel %vm3636, %v4196, 0.0
        %4475 = vadd.xlane.f32.xlu0 %v4474
        %v4476 = vpop.xlane.xlu0 %4475
        %v4477 = vsel %vm3636, %v4198, 0.0
        %4478 = vadd.xlane.f32.xlu0 %v4477
        %v4479 = vpop.xlane.xlu0 %4478
        %v4480 = vsel %vm3636, %v4200, 0.0
        %4481 = vadd.xlane.f32.xlu0 %v4480
        %v4482 = vpop.xlane.xlu0 %4481
        %v4483 = vsel %vm3636, %v4202, 0.0
        %4484 = vadd.xlane.f32.xlu0 %v4483
        %v4485 = vpop.xlane.xlu0 %4484
        %v4486 = vsel %vm3636, %v4204, 0.0
        %4487 = vadd.xlane.f32.xlu0 %v4486
        %v4488 = vpop.xlane.xlu0 %4487
        %v4489 = vsel %vm3636, %v4206, 0.0
        %4490 = vadd.xlane.f32.xlu0 %v4489
        %v4491 = vpop.xlane.xlu0 %4490
        %v4492 = vsel %vm3636, %v4208, 0.0
        %4493 = vadd.xlane.f32.xlu0 %v4492
        %v4494 = vpop.xlane.xlu0 %4493
        %v4495 = vsel %vm3636, %v4210, 0.0
        %4496 = vadd.xlane.f32.xlu0 %v4495
        %v4497 = vpop.xlane.xlu0 %4496
        %v4498 = vsel %vm3636, %v4212, 0.0
        %4499 = vadd.xlane.f32.xlu0 %v4498
        %v4500 = vpop.xlane.xlu0 %4499
        %v4501 = vsel %vm3636, %v4214, 0.0
        %4502 = vadd.xlane.f32.xlu0 %v4501
        %v4503 = vpop.xlane.xlu0 %4502
        %v4504 = vsel %vm3636, %v4216, 0.0
        %4505 = vadd.xlane.f32.xlu0 %v4504
        %v4506 = vpop.xlane.xlu0 %4505
        %v4507 = vsel %vm3636, %v4218, 0.0
        %4508 = vadd.xlane.f32.xlu0 %v4507
        %v4509 = vpop.xlane.xlu0 %4508
        %v4510 = vsel %vm3636, %v4220, 0.0
        %4511 = vadd.xlane.f32.xlu0 %v4510
        %v4512 = vpop.xlane.xlu0 %4511
        %v4513 = vsel %vm3636, %v4222, 0.0
        %4514 = vadd.xlane.f32.xlu0 %v4513
        %v4515 = vpop.xlane.xlu0 %4514
        %v4516 = vsel %vm3636, %v4224, 0.0
        %4517 = vadd.xlane.f32.xlu0 %v4516
        %v4518 = vpop.xlane.xlu0 %4517
        %v4519 = vsel %vm3636, %v4226, 0.0
        %4520 = vadd.xlane.f32.xlu0 %v4519
        %v4521 = vpop.xlane.xlu0 %4520
        %v4522 = vsel %vm3636, %v4228, 0.0
        %4523 = vadd.xlane.f32.xlu0 %v4522
        %v4524 = vpop.xlane.xlu0 %4523
        %v4525 = vsel %vm3636, %v4230, 0.0
        %4526 = vadd.xlane.f32.xlu0 %v4525
        %v4527 = vpop.xlane.xlu0 %4526
        %v4528 = vsel %vm3636, %v4232, 0.0
        %4529 = vadd.xlane.f32.xlu0 %v4528
        %v4530 = vpop.xlane.xlu0 %4529
        %v4531 = vsel %vm3636, %v4234, 0.0
        %4532 = vadd.xlane.f32.xlu0 %v4531
        %v4533 = vpop.xlane.xlu0 %4532
        %v4534 = vsel %vm3636, %v4236, 0.0
        %4535 = vadd.xlane.f32.xlu0 %v4534
        %v4536 = vpop.xlane.xlu0 %4535
        %v4537 = vsel %vm3636, %v4238, 0.0
        %4538 = vadd.xlane.f32.xlu0 %v4537
        %v4539 = vpop.xlane.xlu0 %4538
        %v4540 = vsel %vm3636, %v4240, 0.0
        %4541 = vadd.xlane.f32.xlu0 %v4540
        %v4542 = vpop.xlane.xlu0 %4541
        %v4543 = vsel %vm3636, %v4242, 0.0
        %4544 = vadd.xlane.f32.xlu0 %v4543
        %v4545 = vpop.xlane.xlu0 %4544
        %v4546 = vsel %vm3636, %v4244, 0.0
        %4547 = vadd.xlane.f32.xlu0 %v4546
        %v4548 = vpop.xlane.xlu0 %4547
        %v4549 = vsel %vm3636, %v4246, 0.0
        %4550 = vadd.xlane.f32.xlu0 %v4549
        %v4551 = vpop.xlane.xlu0 %4550
        %v4552 = vsel %vm3636, %v4248, 0.0
        %4553 = vadd.xlane.f32.xlu0 %v4552
        %v4554 = vpop.xlane.xlu0 %4553
        %v4555 = vsel %vm3636, %v4250, 0.0
        %4556 = vadd.xlane.f32.xlu0 %v4555
        %v4557 = vpop.xlane.xlu0 %4556
        %v4558 = vsel %vm3636, %v4252, 0.0
        %4559 = vadd.xlane.f32.xlu0 %v4558
        %v4560 = vpop.xlane.xlu0 %4559
        %v4561 = vsel %vm3636, %v4254, 0.0
        %4562 = vadd.xlane.f32.xlu0 %v4561
        %v4563 = vpop.xlane.xlu0 %4562
        %v4564 = vsel %vm3636, %v4256, 0.0
        %4565 = vadd.xlane.f32.xlu0 %v4564
        %v4566 = vpop.xlane.xlu0 %4565
        %v4567 = vsel %vm3636, %v4258, 0.0
        %4568 = vadd.xlane.f32.xlu0 %v4567
        %v4569 = vpop.xlane.xlu0 %4568
        %v4570 = vsel %vm3636, %v4260, 0.0
        %4571 = vadd.xlane.f32.xlu0 %v4570
        %v4572 = vpop.xlane.xlu0 %4571
        %v4573 = vsel %vm3636, %v4262, 0.0
        %4574 = vadd.xlane.f32.xlu0 %v4573
        %v4575 = vpop.xlane.xlu0 %4574
        %v4576 = vsel %vm3636, %v4264, 0.0
        %4577 = vadd.xlane.f32.xlu0 %v4576
        %v4578 = vpop.xlane.xlu0 %4577
        %v4579 = vsel %vm3636, %v4266, 0.0
        %4580 = vadd.xlane.f32.xlu0 %v4579
        %v4581 = vpop.xlane.xlu0 %4580
        %v4582 = vsel %vm3636, %v4268, 0.0
        %4583 = vadd.xlane.f32.xlu0 %v4582
        %v4584 = vpop.xlane.xlu0 %4583
        %v4585 = vsel %vm3636, %v4270, 0.0
        %4586 = vadd.xlane.f32.xlu0 %v4585
        %v4587 = vpop.xlane.xlu0 %4586
        %v4588 = vsel %vm3636, %v4272, 0.0
        %4589 = vadd.xlane.f32.xlu0 %v4588
        %v4590 = vpop.xlane.xlu0 %4589
        %v4591 = vsel %vm3636, %v4274, 0.0
        %4592 = vadd.xlane.f32.xlu0 %v4591
        %v4593 = vpop.xlane.xlu0 %4592
        %v4594 = vsel %vm3636, %v4276, 0.0
        %4595 = vadd.xlane.f32.xlu0 %v4594
        %v4596 = vpop.xlane.xlu0 %4595
        %v4597 = vsel %vm3636, %v4278, 0.0
        %4598 = vadd.xlane.f32.xlu0 %v4597
        %v4599 = vpop.xlane.xlu0 %4598
        %v4600 = vsel %vm3636, %v4280, 0.0
        %4601 = vadd.xlane.f32.xlu0 %v4600
        %v4602 = vpop.xlane.xlu0 %4601
        %v4603 = vsel %vm3636, %v4282, 0.0
        %4604 = vadd.xlane.f32.xlu0 %v4603
        %v4605 = vpop.xlane.xlu0 %4604
        %v4606 = vsel %vm3636, %v4284, 0.0
        %4607 = vadd.xlane.f32.xlu0 %v4606
        %v4608 = vpop.xlane.xlu0 %4607
        %v4609 = vsel %vm3636, %v4286, 0.0
        %4610 = vadd.xlane.f32.xlu0 %v4609
        %v4611 = vpop.xlane.xlu0 %4610
        %v4612 = vsel %vm3636, %v4288, 0.0
        %4613 = vadd.xlane.f32.xlu0 %v4612
        %v4614 = vpop.xlane.xlu0 %4613
        %v4615 = vsel %vm3636, %v4290, 0.0
        %4616 = vadd.xlane.f32.xlu0 %v4615
        %v4617 = vpop.xlane.xlu0 %4616
        %v4618 = vsel %vm3636, %v4292, 0.0
        %4619 = vadd.xlane.f32.xlu0 %v4618
        %v4620 = vpop.xlane.xlu0 %4619
        %v4621 = vsel %vm3636, %v4294, 0.0
        %4622 = vadd.xlane.f32.xlu0 %v4621
        %v4623 = vpop.xlane.xlu0 %4622
        %v4624 = vsel %vm3636, %v4296, 0.0
        %4625 = vadd.xlane.f32.xlu0 %v4624
        %v4626 = vpop.xlane.xlu0 %4625
        %v4627 = vsel %vm3636, %v4298, 0.0
        %4628 = vadd.xlane.f32.xlu0 %v4627
        %v4629 = vpop.xlane.xlu0 %4628
        %v4630 = vsel %vm3636, %v4300, 0.0
        %4631 = vadd.xlane.f32.xlu0 %v4630
        %v4632 = vpop.xlane.xlu0 %4631
        %v4633 = vsel %vm3636, %v4302, 0.0
        %4634 = vadd.xlane.f32.xlu0 %v4633
        %v4635 = vpop.xlane.xlu0 %4634
        %v4636 = vsel %vm3636, %v4304, 0.0
        %4637 = vadd.xlane.f32.xlu0 %v4636
        %v4638 = vpop.xlane.xlu0 %4637
        %v4639 = vsel %vm3636, %v4306, 0.0
        %4640 = vadd.xlane.f32.xlu0 %v4639
        %v4641 = vpop.xlane.xlu0 %4640
        %v4642 = vsel %vm3636, %v4308, 0.0
        %4643 = vadd.xlane.f32.xlu0 %v4642
        %v4644 = vpop.xlane.xlu0 %4643
        %v4645 = vsel %vm3636, %v4310, 0.0
        %4646 = vadd.xlane.f32.xlu0 %v4645
        %v4647 = vpop.xlane.xlu0 %4646
        %v4648 = vsel %vm3636, %v4312, 0.0
        %4649 = vadd.xlane.f32.xlu0 %v4648
        %v4650 = vpop.xlane.xlu0 %4649
        %v4651 = vsel %vm3636, %v4314, 0.0
        %4652 = vadd.xlane.f32.xlu0 %v4651
        %v4653 = vpop.xlane.xlu0 %4652
        %v4654 = vsel %vm3636, %v4316, 0.0
        %4655 = vadd.xlane.f32.xlu0 %v4654
        %v4656 = vpop.xlane.xlu0 %4655
        %v4657 = vsel %vm3636, %v4318, 0.0
        %4658 = vadd.xlane.f32.xlu0 %v4657
        %v4659 = vpop.xlane.xlu0 %4658
        %v4660 = vsel %vm3636, %v4320, 0.0
        %4661 = vadd.xlane.f32.xlu0 %v4660
        %v4662 = vpop.xlane.xlu0 %4661
        %v4663 = vsel %vm3636, %v4322, 0.0
        %4664 = vadd.xlane.f32.xlu0 %v4663
        %v4665 = vpop.xlane.xlu0 %4664
        %v4666 = vsel %vm3636, %v4324, 0.0
        %4667 = vadd.xlane.f32.xlu0 %v4666
        %v4668 = vpop.xlane.xlu0 %4667
        %v4669 = vsel %vm3636, %v4326, 0.0
        %4670 = vadd.xlane.f32.xlu0 %v4669
        %v4671 = vpop.xlane.xlu0 %4670
        %v4672 = vsel %vm3636, %v4328, 0.0
        %4673 = vadd.xlane.f32.xlu0 %v4672
        %v4674 = vpop.xlane.xlu0 %4673
        %v4675 = vsel %vm3636, %v4330, 0.0
        %4676 = vadd.xlane.f32.xlu0 %v4675
        %v4677 = vpop.xlane.xlu0 %4676
        %v4678 = vsel %vm3636, %v4332, 0.0
        %4679 = vadd.xlane.f32.xlu0 %v4678
        %v4680 = vpop.xlane.xlu0 %4679
        %v4681 = vsel %vm3636, %v4334, 0.0
        %4682 = vadd.xlane.f32.xlu0 %v4681
        %v4683 = vpop.xlane.xlu0 %4682
        %v4684 = vsel %vm3636, %v4336, 0.0
        %4685 = vadd.xlane.f32.xlu0 %v4684
        %v4686 = vpop.xlane.xlu0 %4685
        %v4687 = vsel %vm3636, %v4338, 0.0
        %4688 = vadd.xlane.f32.xlu0 %v4687
        %v4689 = vpop.xlane.xlu0 %4688
        %v4690 = vsel %vm3636, %v4340, 0.0
        %4691 = vadd.xlane.f32.xlu0 %v4690
        %v4692 = vpop.xlane.xlu0 %4691
        %v4693 = vsel %vm3636, %v4342, 0.0
        %4694 = vadd.xlane.f32.xlu0 %v4693
        %v4695 = vpop.xlane.xlu0 %4694
        %v4696 = vsel %vm3636, %v4344, 0.0
        %4697 = vadd.xlane.f32.xlu0 %v4696
        %v4698 = vpop.xlane.xlu0 %4697
        %v4699 = vsel %vm3636, %v4346, 0.0
        %4700 = vadd.xlane.f32.xlu0 %v4699
        %v4701 = vpop.xlane.xlu0 %4700
        %v4702 = vsel %vm3636, %v4348, 0.0
        %4703 = vadd.xlane.f32.xlu0 %v4702
        %v4704 = vpop.xlane.xlu0 %4703
        %v4705 = vsel %vm3636, %v4350, 0.0
        %4706 = vadd.xlane.f32.xlu0 %v4705
        %v4707 = vpop.xlane.xlu0 %4706
        %v4708 = vsel %vm3636, %v4352, 0.0
        %4709 = vadd.xlane.f32.xlu0 %v4708
        %v4710 = vpop.xlane.xlu0 %4709
        %v4711 = vsel %vm3636, %v4354, 0.0
        %4712 = vadd.xlane.f32.xlu0 %v4711
        %v4713 = vpop.xlane.xlu0 %4712
        %v4714 = vsel %vm3636, %v4356, 0.0
        %4715 = vadd.xlane.f32.xlu0 %v4714
        %v4716 = vpop.xlane.xlu0 %4715
        %v4717 = vsel %vm3636, %v4358, 0.0
        %4718 = vadd.xlane.f32.xlu0 %v4717
        %v4719 = vpop.xlane.xlu0 %4718
        %v4720 = vsel %vm3636, %v4360, 0.0
        %4721 = vadd.xlane.f32.xlu0 %v4720
        %v4722 = vpop.xlane.xlu0 %4721
        %v4723 = vsel %vm3636, %v4362, 0.0
        %4724 = vadd.xlane.f32.xlu0 %v4723
        %v4725 = vpop.xlane.xlu0 %4724
        %v4726 = vsel %vm3636, %v4364, 0.0
        %4727 = vadd.xlane.f32.xlu0 %v4726
        %v4728 = vpop.xlane.xlu0 %4727
        %v4729 = vsel %vm3636, %v4366, 0.0
        %4730 = vadd.xlane.f32.xlu0 %v4729
        %v4731 = vpop.xlane.xlu0 %4730
        %v4732 = vsel %vm3636, %v4368, 0.0
        %4733 = vadd.xlane.f32.xlu0 %v4732
        %v4734 = vpop.xlane.xlu0 %4733
        %v4735 = vsel %vm3636, %v4370, 0.0
        %4736 = vadd.xlane.f32.xlu0 %v4735
        %v4737 = vpop.xlane.xlu0 %4736
        %v4738 = vsel %vm3636, %v4372, 0.0
        %4739 = vadd.xlane.f32.xlu0 %v4738
        %v4740 = vpop.xlane.xlu0 %4739
        %v4741 = vsel %vm3636, %v4374, 0.0
        %4742 = vadd.xlane.f32.xlu0 %v4741
        %v4743 = vpop.xlane.xlu0 %4742
        %v4744 = vsel %vm3636, %v4376, 0.0
        %4745 = vadd.xlane.f32.xlu0 %v4744
        %v4746 = vpop.xlane.xlu0 %4745
        %v4747 = vsel %vm3636, %v4378, 0.0
        %4748 = vadd.xlane.f32.xlu0 %v4747
        %v4749 = vpop.xlane.xlu0 %4748
        %v4750 = vsel %vm3636, %v4380, 0.0
        %4751 = vadd.xlane.f32.xlu0 %v4750
        %v4752 = vpop.xlane.xlu0 %4751
        %v4753 = vsel %vm3636, %v4382, 0.0
        %4754 = vadd.xlane.f32.xlu0 %v4753
        %v4755 = vpop.xlane.xlu0 %4754
        %v4756 = vsel %vm3636, %v4384, 0.0
        %4757 = vadd.xlane.f32.xlu0 %v4756
        %v4758 = vpop.xlane.xlu0 %4757
        %v4759 = vsel %vm3636, %v4386, 0.0
        %4760 = vadd.xlane.f32.xlu0 %v4759
        %v4761 = vpop.xlane.xlu0 %4760
        %v4762 = vsel %vm3636, %v4388, 0.0
        %4763 = vadd.xlane.f32.xlu0 %v4762
        %v4764 = vpop.xlane.xlu0 %4763
        %v4765 = vsel %vm3636, %v4390, 0.0
        %4766 = vadd.xlane.f32.xlu0 %v4765
        %v4767 = vpop.xlane.xlu0 %4766
        %v4768 = vsel %vm3636, %v4392, 0.0
        %4769 = vadd.xlane.f32.xlu0 %v4768
        %v4770 = vpop.xlane.xlu0 %4769
        %v4771 = vsel %vm3636, %v4394, 0.0
        %4772 = vadd.xlane.f32.xlu0 %v4771
        %v4773 = vpop.xlane.xlu0 %4772
        %v4774 = vsel %vm3636, %v4396, 0.0
        %4775 = vadd.xlane.f32.xlu0 %v4774
        %v4776 = vpop.xlane.xlu0 %4775
        %v4777 = vsel %vm3636, %v4398, 0.0
        %4778 = vadd.xlane.f32.xlu0 %v4777
        %v4779 = vpop.xlane.xlu0 %4778
        %v4780 = vsel %vm3636, %v4400, 0.0
        %4781 = vadd.xlane.f32.xlu0 %v4780
        %v4782 = vpop.xlane.xlu0 %4781
        %v4783 = vsel %vm3636, %v4402, 0.0
        %4784 = vadd.xlane.f32.xlu0 %v4783
        %v4785 = vpop.xlane.xlu0 %4784
        %v4786 = vsel %vm3636, %v4404, 0.0
        %4787 = vadd.xlane.f32.xlu0 %v4786
        %v4788 = vpop.xlane.xlu0 %4787
        %v4789 = vrcp.pop %v4407
        %v4790 = vrcp.pop %v4410
        %v4791 = vrcp.pop %v4413
        %v4792 = vrcp.pop %v4416
        %v4793 = vrcp.pop %v4419
        %v4794 = vrcp.pop %v4422
        %v4795 = vrcp.pop %v4425
        %v4796 = vrcp.pop %v4428
        %v4797 = vrcp.pop %v4431
        %v4798 = vrcp.pop %v4434
        %v4799 = vrcp.pop %v4437
        %v4800 = vrcp.pop %v4440
        %v4801 = vrcp.pop %v4443
        %v4802 = vrcp.pop %v4446
        %v4803 = vrcp.pop %v4449
        %v4804 = vrcp.pop %v4452
        %v4805 = vrcp.pop %v4455
        %v4806 = vrcp.pop %v4458
        %v4807 = vrcp.pop %v4461
        %v4808 = vrcp.pop %v4464
        %v4809 = vrcp.pop %v4467
        %v4810 = vrcp.pop %v4470
        %v4811 = vrcp.pop %v4473
        %v4812 = vrcp.pop %v4476
        %v4813 = vrcp.pop %v4479
        %v4814 = vrcp.pop %v4482
        %v4815 = vrcp.pop %v4485
        %v4816 = vrcp.pop %v4488
        %v4817 = vrcp.pop %v4491
        %v4818 = vrcp.pop %v4494
        %v4819 = vrcp.pop %v4497
        %v4820 = vrcp.pop %v4500
        %v4821 = vrcp.pop %v4503
        %v4822 = vrcp.pop %v4506
        %v4823 = vrcp.pop %v4509
        %v4824 = vrcp.pop %v4512
        %v4825 = vrcp.pop %v4515
        %v4826 = vrcp.pop %v4518
        %v4827 = vrcp.pop %v4521
        %v4828 = vrcp.pop %v4524
        %v4829 = vrcp.pop %v4527
        %v4830 = vrcp.pop %v4530
        %v4831 = vrcp.pop %v4533
        %v4832 = vrcp.pop %v4536
        %v4833 = vrcp.pop %v4539
        %v4834 = vrcp.pop %v4542
        %v4835 = vrcp.pop %v4545
        %v4836 = vrcp.pop %v4548
        %v4837 = vrcp.pop %v4551
        %v4838 = vrcp.pop %v4554
        %v4839 = vrcp.pop %v4557
        %v4840 = vrcp.pop %v4560
        %v4841 = vrcp.pop %v4563
        %v4842 = vrcp.pop %v4566
        %v4843 = vrcp.pop %v4569
        %v4844 = vrcp.pop %v4572
        %v4845 = vrcp.pop %v4575
        %v4846 = vrcp.pop %v4578
        %v4847 = vrcp.pop %v4581
        %v4848 = vrcp.pop %v4584
        %v4849 = vrcp.pop %v4587
        %v4850 = vrcp.pop %v4590
        %v4851 = vrcp.pop %v4593
        %v4852 = vrcp.pop %v4596
        %v4853 = vrcp.pop %v4599
        %v4854 = vrcp.pop %v4602
        %v4855 = vrcp.pop %v4605
        %v4856 = vrcp.pop %v4608
        %v4857 = vrcp.pop %v4611
        %v4858 = vrcp.pop %v4614
        %v4859 = vrcp.pop %v4617
        %v4860 = vrcp.pop %v4620
        %v4861 = vrcp.pop %v4623
        %v4862 = vrcp.pop %v4626
        %v4863 = vrcp.pop %v4629
        %v4864 = vrcp.pop %v4632
        %v4865 = vrcp.pop %v4635
        %v4866 = vrcp.pop %v4638
        %v4867 = vrcp.pop %v4641
        %v4868 = vrcp.pop %v4644
        %v4869 = vrcp.pop %v4647
        %v4870 = vrcp.pop %v4650
        %v4871 = vrcp.pop %v4653
        %v4872 = vrcp.pop %v4656
        %v4873 = vrcp.pop %v4659
        %v4874 = vrcp.pop %v4662
        %v4875 = vrcp.pop %v4665
        %v4876 = vrcp.pop %v4668
        %v4877 = vrcp.pop %v4671
        %v4878 = vrcp.pop %v4674
        %v4879 = vrcp.pop %v4677
        %v4880 = vrcp.pop %v4680
        %v4881 = vrcp.pop %v4683
        %v4882 = vrcp.pop %v4686
        %v4883 = vrcp.pop %v4689
        %v4884 = vrcp.pop %v4692
        %v4885 = vrcp.pop %v4695
        %v4886 = vrcp.pop %v4698
        %v4887 = vrcp.pop %v4701
        %v4888 = vrcp.pop %v4704
        %v4889 = vrcp.pop %v4707
        %v4890 = vrcp.pop %v4710
        %v4891 = vrcp.pop %v4713
        %v4892 = vrcp.pop %v4716
        %v4893 = vrcp.pop %v4719
        %v4894 = vrcp.pop %v4722
        %v4895 = vrcp.pop %v4725
        %v4896 = vrcp.pop %v4728
        %v4897 = vrcp.pop %v4731
        %v4898 = vrcp.pop %v4734
        %v4899 = vrcp.pop %v4737
        %v4900 = vrcp.pop %v4740
        %v4901 = vrcp.pop %v4743
        %v4902 = vrcp.pop %v4746
        %v4903 = vrcp.pop %v4749
        %v4904 = vrcp.pop %v4752
        %v4905 = vrcp.pop %v4755
        %v4906 = vrcp.pop %v4758
        %v4907 = vrcp.pop %v4761
        %v4908 = vrcp.pop %v4764
        %v4909 = vrcp.pop %v4767
        %v4910 = vrcp.pop %v4770
        %v4911 = vrcp.pop %v4773
        %v4912 = vrcp.pop %v4776
        %v4913 = vrcp.pop %v4779
        %v4914 = vrcp.pop %v4782
        %v4915 = vrcp.pop %v4785
        %v4916 = vrcp.pop %v4788
        %v4917 = vmul.f32 %v4150, %v4789
        %v4918 = vmul.f32 %v4152, %v4790
        %v4919 = vmul.f32 %v4154, %v4791
        %v4920 = vmul.f32 %v4156, %v4792
        %v4921 = vmul.f32 %v4158, %v4793
        %v4922 = vmul.f32 %v4160, %v4794
        %v4923 = vmul.f32 %v4162, %v4795
        %v4924 = vmul.f32 %v4164, %v4796
        %v4925 = vmul.f32 %v4166, %v4797
        %v4926 = vmul.f32 %v4168, %v4798
        %v4927 = vmul.f32 %v4170, %v4799
        %v4928 = vmul.f32 %v4172, %v4800
        %v4929 = vmul.f32 %v4174, %v4801
        %v4930 = vmul.f32 %v4176, %v4802
        %v4931 = vmul.f32 %v4178, %v4803
        %v4932 = vmul.f32 %v4180, %v4804
        %v4933 = vmul.f32 %v4182, %v4805
        %v4934 = vmul.f32 %v4184, %v4806
        %v4935 = vmul.f32 %v4186, %v4807
        %v4936 = vmul.f32 %v4188, %v4808
        %v4937 = vmul.f32 %v4190, %v4809
        %v4938 = vmul.f32 %v4192, %v4810
        %v4939 = vmul.f32 %v4194, %v4811
        %v4940 = vmul.f32 %v4196, %v4812
        %v4941 = vmul.f32 %v4198, %v4813
        %v4942 = vmul.f32 %v4200, %v4814
        %v4943 = vmul.f32 %v4202, %v4815
        %v4944 = vmul.f32 %v4204, %v4816
        %v4945 = vmul.f32 %v4206, %v4817
        %v4946 = vmul.f32 %v4208, %v4818
        %v4947 = vmul.f32 %v4210, %v4819
        %v4948 = vmul.f32 %v4212, %v4820
        %v4949 = vmul.f32 %v4214, %v4821
        %v4950 = vmul.f32 %v4216, %v4822
        %v4951 = vmul.f32 %v4218, %v4823
        %v4952 = vmul.f32 %v4220, %v4824
        %v4953 = vmul.f32 %v4222, %v4825
        %v4954 = vmul.f32 %v4224, %v4826
        %v4955 = vmul.f32 %v4226, %v4827
        %v4956 = vmul.f32 %v4228, %v4828
        %v4957 = vmul.f32 %v4230, %v4829
        %v4958 = vmul.f32 %v4232, %v4830
        %v4959 = vmul.f32 %v4234, %v4831
        %v4960 = vmul.f32 %v4236, %v4832
        %v4961 = vmul.f32 %v4238, %v4833
        %v4962 = vmul.f32 %v4240, %v4834
        %v4963 = vmul.f32 %v4242, %v4835
        %v4964 = vmul.f32 %v4244, %v4836
        %v4965 = vmul.f32 %v4246, %v4837
        %v4966 = vmul.f32 %v4248, %v4838
        %v4967 = vmul.f32 %v4250, %v4839
        %v4968 = vmul.f32 %v4252, %v4840
        %v4969 = vmul.f32 %v4254, %v4841
        %v4970 = vmul.f32 %v4256, %v4842
        %v4971 = vmul.f32 %v4258, %v4843
        %v4972 = vmul.f32 %v4260, %v4844
        %v4973 = vmul.f32 %v4262, %v4845
        %v4974 = vmul.f32 %v4264, %v4846
        %v4975 = vmul.f32 %v4266, %v4847
        %v4976 = vmul.f32 %v4268, %v4848
        %v4977 = vmul.f32 %v4270, %v4849
        %v4978 = vmul.f32 %v4272, %v4850
        %v4979 = vmul.f32 %v4274, %v4851
        %v4980 = vmul.f32 %v4276, %v4852
        %v4981 = vmul.f32 %v4278, %v4853
        %v4982 = vmul.f32 %v4280, %v4854
        %v4983 = vmul.f32 %v4282, %v4855
        %v4984 = vmul.f32 %v4284, %v4856
        %v4985 = vmul.f32 %v4286, %v4857
        %v4986 = vmul.f32 %v4288, %v4858
        %v4987 = vmul.f32 %v4290, %v4859
        %v4988 = vmul.f32 %v4292, %v4860
        %v4989 = vmul.f32 %v4294, %v4861
        %v4990 = vmul.f32 %v4296, %v4862
        %v4991 = vmul.f32 %v4298, %v4863
        %v4992 = vmul.f32 %v4300, %v4864
        %v4993 = vmul.f32 %v4302, %v4865
        %v4994 = vmul.f32 %v4304, %v4866
        %v4995 = vmul.f32 %v4306, %v4867
        %v4996 = vmul.f32 %v4308, %v4868
        %v4997 = vmul.f32 %v4310, %v4869
        %v4998 = vmul.f32 %v4312, %v4870
        %v4999 = vmul.f32 %v4314, %v4871
        %v5000 = vmul.f32 %v4316, %v4872
        %v5001 = vmul.f32 %v4318, %v4873
        %v5002 = vmul.f32 %v4320, %v4874
        %v5003 = vmul.f32 %v4322, %v4875
        %v5004 = vmul.f32 %v4324, %v4876
        %v5005 = vmul.f32 %v4326, %v4877
        %v5006 = vmul.f32 %v4328, %v4878
        %v5007 = vmul.f32 %v4330, %v4879
        %v5008 = vmul.f32 %v4332, %v4880
        %v5009 = vmul.f32 %v4334, %v4881
        %v5010 = vmul.f32 %v4336, %v4882
        %v5011 = vmul.f32 %v4338, %v4883
        %v5012 = vmul.f32 %v4340, %v4884
        %v5013 = vmul.f32 %v4342, %v4885
        %v5014 = vmul.f32 %v4344, %v4886
        %v5015 = vmul.f32 %v4346, %v4887
        %v5016 = vmul.f32 %v4348, %v4888
        %v5017 = vmul.f32 %v4350, %v4889
        %v5018 = vmul.f32 %v4352, %v4890
        %v5019 = vmul.f32 %v4354, %v4891
        %v5020 = vmul.f32 %v4356, %v4892
        %v5021 = vmul.f32 %v4358, %v4893
        %v5022 = vmul.f32 %v4360, %v4894
        %v5023 = vmul.f32 %v4362, %v4895
        %v5024 = vmul.f32 %v4364, %v4896
        %v5025 = vmul.f32 %v4366, %v4897
        %v5026 = vmul.f32 %v4368, %v4898
        %v5027 = vmul.f32 %v4370, %v4899
        %v5028 = vmul.f32 %v4372, %v4900
        %v5029 = vmul.f32 %v4374, %v4901
        %v5030 = vmul.f32 %v4376, %v4902
        %v5031 = vmul.f32 %v4378, %v4903
        %v5032 = vmul.f32 %v4380, %v4904
        %v5033 = vmul.f32 %v4382, %v4905
        %v5034 = vmul.f32 %v4384, %v4906
        %v5035 = vmul.f32 %v4386, %v4907
        %v5036 = vmul.f32 %v4388, %v4908
        %v5037 = vmul.f32 %v4390, %v4909
        %v5038 = vmul.f32 %v4392, %v4910
        %v5039 = vmul.f32 %v4394, %v4911
        %v5040 = vmul.f32 %v4396, %v4912
        %v5041 = vmul.f32 %v4398, %v4913
        %v5042 = vmul.f32 %v4400, %v4914
        %v5043 = vmul.f32 %v4402, %v4915
        %v5044 = vmul.f32 %v4404, %v4916
        %5045 = vrot.lane.b32.xlu0 %v549, 64
        %v5046 = vpop.permute.xlu0 %5045
        %5047 = vrot.lane.b32.xlu0 %v554, 64
        %v5048 = vpop.permute.xlu0 %5047
        %5049 = vrot.lane.b32.xlu0 %v559, 64
        %v5050 = vpop.permute.xlu0 %5049
        %5051 = vrot.lane.b32.xlu0 %v564, 64
        %v5052 = vpop.permute.xlu0 %5051
        %5053 = vrot.lane.b32.xlu0 %v569, 64
        %v5054 = vpop.permute.xlu0 %5053
        %5055 = vrot.lane.b32.xlu0 %v574, 64
        %v5056 = vpop.permute.xlu0 %5055
        %5057 = vrot.lane.b32.xlu0 %v579, 64
        %v5058 = vpop.permute.xlu0 %5057
        %5059 = vrot.lane.b32.xlu0 %v584, 64
        %v5060 = vpop.permute.xlu0 %5059
        %v5070 = vsel %vm3636, %v4917, 0
        %v5073 = vsel %vm3636, %v4918, 0
        %v5076 = vsel %vm3636, %v4919, 0
        %v5079 = vsel %vm3636, %v4920, 0
        %v5082 = vsel %vm3636, %v4921, 0
        %v5085 = vsel %vm3636, %v4922, 0
        %v5088 = vsel %vm3636, %v4923, 0
        %v5091 = vsel %vm3636, %v4924, 0
        %5093 = vmatprep.subr.mxu0 0.0
        %5094 = vmatpush1.msra.mxu0 %v5046
        %5095 = vmatprep.subr.mxu0 0.0
        %5096 = vmatpush1.msra.mxu0 %v5048
        %5097 = vmatprep.subr.mxu0 0.0
        %5098 = vmatpush1.msra.mxu0 %v5050
        %5099 = vmatprep.subr.mxu0 0.0
        %5100 = vmatpush1.msra.mxu0 %v5052
        %5101 = vmatprep.subr.mxu0 0.0
        %5102 = vmatpush1.msra.mxu0 %v5054
        %5103 = vmatprep.subr.mxu0 0.0
        %5104 = vmatpush1.msra.mxu0 %v5056
        %5105 = vmatprep.subr.mxu0 0.0
        %5106 = vmatpush1.msra.mxu0 %v5058
        %5107 = vmatprep.subr.mxu0 0.0
        %5108 = vmatpush1.msra.mxu0 %v5060
        %5109 = vmatprep.subr.mxu0 0.0
        %5110 = vmatpush1.msra.mxu0 0.0
        %5111 = vmatprep.subr.mxu0 0.0
        %5112 = vmatpush1.msra.mxu0 0.0
        %5113 = vmatprep.subr.mxu0 0.0
        %5114 = vmatpush1.msra.mxu0 0.0
        %5115 = vmatprep.subr.mxu0 0.0
        %5116 = vmatpush1.msra.mxu0 0.0
        %5117 = vmatprep.subr.mxu0 0.0
        %5118 = vmatpush1.msra.mxu0 0.0
        %5119 = vmatprep.subr.mxu0 0.0
        %5120 = vmatpush1.msra.mxu0 0.0
        %5121 = vmatprep.subr.mxu0 0.0
        %5122 = vmatpush1.msra.mxu0 0.0
        %5123 = vmatprep.subr.mxu0 0.0
        %5124 = vmatpush1.msra.mxu0 0.0
        %5125 = vmatprep.subr.mxu0 0.0
        %5126 = vmatpush1.msra.mxu0 0.0
        %5127 = vmatprep.subr.mxu0 0.0
        %5128 = vmatpush1.msra.mxu0 0.0
        %5129 = vmatprep.subr.mxu0 0.0
        %5130 = vmatpush1.msra.mxu0 0.0
        %5131 = vmatprep.subr.mxu0 0.0
        %5132 = vmatpush1.msra.mxu0 0.0
        %5133 = vmatprep.subr.mxu0 0.0
        %5134 = vmatpush1.msra.mxu0 0.0
        %5135 = vmatprep.subr.mxu0 0.0
        %5136 = vmatpush1.msra.mxu0 0.0
        %5137 = vmatprep.subr.mxu0 0.0
        %5138 = vmatpush1.msra.mxu0 0.0
        %5139 = vmatprep.subr.mxu0 0.0
        %5140 = vmatpush1.msra.mxu0 0.0
        %5141 = vmatprep.subr.mxu0 0.0
        %5142 = vmatpush1.msra.mxu0 0.0
        %5143 = vmatprep.subr.mxu0 0.0
        %5144 = vmatpush1.msra.mxu0 0.0
        %5145 = vmatprep.subr.mxu0 0.0
        %5146 = vmatpush1.msra.mxu0 0.0
        %5147 = vmatprep.subr.mxu0 0.0
        %5148 = vmatpush1.msra.mxu0 0.0
        %5149 = vmatprep.subr.mxu0 0.0
        %5150 = vmatpush1.msra.mxu0 0.0
        %5151 = vmatprep.subr.mxu0 0.0
        %5152 = vmatpush1.msra.mxu0 0.0
        %5153 = vmatprep.subr.mxu0 0.0
        %5154 = vmatpush1.msra.mxu0 0.0
        %5155 = vmatprep.subr.mxu0 0.0
        %5156 = vmatpush1.msra.mxu0 0.0
        %5157 = vmatprep.mubr.f32.mxu0 0.0
        %5158 = vmatmul.mubr.f32.gmra.mrb[0].mxu0 %v5070
        %v5159 = vpop.f32.mrb[0].mxu0
        %v5160 = vadd.f32 0.0, %v5159
        %v5161 = vpop.f32.mrb[0].mxu0
        %5162 = vmatprep.mubr.f32.mxu0 0.0
        %5163 = vmatmul.mubr.f32.gmra.mrb[0].mxu0 %v5073
        %v5164 = vpop.f32.mrb[0].mxu0
        %v5165 = vadd.f32 0.0, %v5164
        %v5166 = vpop.f32.mrb[0].mxu0
        %5167 = vmatprep.mubr.f32.mxu0 0.0
        %5168 = vmatmul.mubr.f32.gmra.mrb[0].mxu0 %v5076
        %v5169 = vpop.f32.mrb[0].mxu0
        %v5170 = vadd.f32 0.0, %v5169
        %v5171 = vpop.f32.mrb[0].mxu0
        %5172 = vmatprep.mubr.f32.mxu0 0.0
        %5173 = vmatmul.mubr.f32.gmra.mrb[0].mxu0 %v5079
        %v5174 = vpop.f32.mrb[0].mxu0
        %v5175 = vadd.f32 0.0, %v5174
        %v5176 = vpop.f32.mrb[0].mxu0
        %5177 = vmatprep.mubr.f32.mxu0 0.0
        %5178 = vmatmul.mubr.f32.gmra.mrb[0].mxu0 %v5082
        %v5179 = vpop.f32.mrb[0].mxu0
        %v5180 = vadd.f32 0.0, %v5179
        %v5181 = vpop.f32.mrb[0].mxu0
        %5182 = vmatprep.mubr.f32.mxu0 0.0
        %5183 = vmatmul.mubr.f32.gmra.mrb[0].mxu0 %v5085
        %v5184 = vpop.f32.mrb[0].mxu0
        %v5185 = vadd.f32 0.0, %v5184
        %v5186 = vpop.f32.mrb[0].mxu0
        %5187 = vmatprep.mubr.f32.mxu0 0.0
        %5188 = vmatmul.mubr.f32.gmra.mrb[0].mxu0 %v5088
        %v5189 = vpop.f32.mrb[0].mxu0
        %v5190 = vadd.f32 0.0, %v5189
        %v5191 = vpop.f32.mrb[0].mxu0
        %5192 = vmatprep.mubr.f32.mxu0 0.0
        %5193 = vmatmul.mubr.f32.gmra.mrb[0].mxu0 %v5091
        %v5194 = vpop.f32.mrb[0].mxu0
        %v5195 = vadd.f32 0.0, %v5194
        %v5196 = vpop.f32.mrb[0].mxu0
        %5197 = vdwg.mxu0
        %5198 = vrot.lane.b32.xlu0 %v589, 64
        %v5199 = vpop.permute.xlu0 %5198
        %5200 = vrot.lane.b32.xlu0 %v594, 64
        %v5201 = vpop.permute.xlu0 %5200
        %5202 = vrot.lane.b32.xlu0 %v599, 64
        %v5203 = vpop.permute.xlu0 %5202
        %5204 = vrot.lane.b32.xlu0 %v604, 64
        %v5205 = vpop.permute.xlu0 %5204
        %5206 = vrot.lane.b32.xlu0 %v609, 64
        %v5207 = vpop.permute.xlu0 %5206
        %5208 = vrot.lane.b32.xlu0 %v614, 64
        %v5209 = vpop.permute.xlu0 %5208
        %5210 = vrot.lane.b32.xlu0 %v619, 64
        %v5211 = vpop.permute.xlu0 %5210
        %5212 = vrot.lane.b32.xlu0 %v624, 64
        %v5213 = vpop.permute.xlu0 %5212
        %v5223 = vsel %vm3636, %v4925, 0
        %v5226 = vsel %vm3636, %v4926, 0
        %v5229 = vsel %vm3636, %v4927, 0
        %v5232 = vsel %vm3636, %v4928, 0
        %v5235 = vsel %vm3636, %v4929, 0
        %v5238 = vsel %vm3636, %v4930, 0
        %v5241 = vsel %vm3636, %v4931, 0
        %v5244 = vsel %vm3636, %v4932, 0
        %5246 = vmatprep.subr.mxu0 0.0
        %5247 = vmatpush1.msra.mxu0 %v5199
        %5248 = vmatprep.subr.mxu0 0.0
        %5249 = vmatpush1.msra.mxu0 %v5201
        %5250 = vmatprep.subr.mxu0 0.0
        %5251 = vmatpush1.msra.mxu0 %v5203
        %5252 = vmatprep.subr.mxu0 0.0
        %5253 = vmatpush1.msra.mxu0 %v5205
        %5254 = vmatprep.subr.mxu0 0.0
        %5255 = vmatpush1.msra.mxu0 %v5207
        %5256 = vmatprep.subr.mxu0 0.0
        %5257 = vmatpush1.msra.mxu0 %v5209
        %5258 = vmatprep.subr.mxu0 0.0
        %5259 = vmatpush1.msra.mxu0 %v5211
        %5260 = vmatprep.subr.mxu0 0.0
        %5261 = vmatpush1.msra.mxu0 %v5213
        %5262 = vmatprep.subr.mxu0 0.0
        %5263 = vmatpush1.msra.mxu0 0.0
        %5264 = vmatprep.subr.mxu0 0.0
        %5265 = vmatpush1.msra.mxu0 0.0
        %5266 = vmatprep.subr.mxu0 0.0
        %5267 = vmatpush1.msra.mxu0 0.0
        %5268 = vmatprep.subr.mxu0 0.0
        %5269 = vmatpush1.msra.mxu0 0.0
        %5270 = vmatprep.subr.mxu0 0.0
        %5271 = vmatpush1.msra.mxu0 0.0
        %5272 = vmatprep.subr.mxu0 0.0
        %5273 = vmatpush1.msra.mxu0 0.0
        %5274 = vmatprep.subr.mxu0 0.0
        %5275 = vmatpush1.msra.mxu0 0.0
        %5276 = vmatprep.subr.mxu0 0.0
        %5277 = vmatpush1.msra.mxu0 0.0
        %5278 = vmatprep.subr.mxu0 0.0
        %5279 = vmatpush1.msra.mxu0 0.0
        %5280 = vmatprep.subr.mxu0 0.0
        %5281 = vmatpush1.msra.mxu0 0.0
        %5282 = vmatprep.subr.mxu0 0.0
        %5283 = vmatpush1.msra.mxu0 0.0
        %5284 = vmatprep.subr.mxu0 0.0
        %5285 = vmatpush1.msra.mxu0 0.0
        %5286 = vmatprep.subr.mxu0 0.0
        %5287 = vmatpush1.msra.mxu0 0.0
        %5288 = vmatprep.subr.mxu0 0.0
        %5289 = vmatpush1.msra.mxu0 0.0
        %5290 = vmatprep.subr.mxu0 0.0
        %5291 = vmatpush1.msra.mxu0 0.0
        %5292 = vmatprep.subr.mxu0 0.0
        %5293 = vmatpush1.msra.mxu0 0.0
        %5294 = vmatprep.subr.mxu0 0.0
        %5295 = vmatpush1.msra.mxu0 0.0
        %5296 = vmatprep.subr.mxu0 0.0
        %5297 = vmatpush1.msra.mxu0 0.0
        %5298 = vmatprep.subr.mxu0 0.0
        %5299 = vmatpush1.msra.mxu0 0.0
        %5300 = vmatprep.subr.mxu0 0.0
        %5301 = vmatpush1.msra.mxu0 0.0
        %5302 = vmatprep.subr.mxu0 0.0
        %5303 = vmatpush1.msra.mxu0 0.0
        %5304 = vmatprep.subr.mxu0 0.0
        %5305 = vmatpush1.msra.mxu0 0.0
        %5306 = vmatprep.subr.mxu0 0.0
        %5307 = vmatpush1.msra.mxu0 0.0
        %5308 = vmatprep.subr.mxu0 0.0
        %5309 = vmatpush1.msra.mxu0 0.0
        %5310 = vmatprep.mubr.f32.mxu0 0.0
        %5311 = vmatmul.mubr.f32.gmra.mrb[0].mxu0 %v5223
        %v5312 = vpop.f32.mrb[0].mxu0
        %v5313 = vadd.f32 0.0, %v5312
        %v5314 = vpop.f32.mrb[0].mxu0
        %5315 = vmatprep.mubr.f32.mxu0 0.0
        %5316 = vmatmul.mubr.f32.gmra.mrb[0].mxu0 %v5226
        %v5317 = vpop.f32.mrb[0].mxu0
        %v5318 = vadd.f32 0.0, %v5317
        %v5319 = vpop.f32.mrb[0].mxu0
        %5320 = vmatprep.mubr.f32.mxu0 0.0
        %5321 = vmatmul.mubr.f32.gmra.mrb[0].mxu0 %v5229
        %v5322 = vpop.f32.mrb[0].mxu0
        %v5323 = vadd.f32 0.0, %v5322
        %v5324 = vpop.f32.mrb[0].mxu0
        %5325 = vmatprep.mubr.f32.mxu0 0.0
        %5326 = vmatmul.mubr.f32.gmra.mrb[0].mxu0 %v5232
        %v5327 = vpop.f32.mrb[0].mxu0
        %v5328 = vadd.f32 0.0, %v5327
        %v5329 = vpop.f32.mrb[0].mxu0
        %5330 = vmatprep.mubr.f32.mxu0 0.0
        %5331 = vmatmul.mubr.f32.gmra.mrb[0].mxu0 %v5235
        %v5332 = vpop.f32.mrb[0].mxu0
        %v5333 = vadd.f32 0.0, %v5332
        %v5334 = vpop.f32.mrb[0].mxu0
        %5335 = vmatprep.mubr.f32.mxu0 0.0
        %5336 = vmatmul.mubr.f32.gmra.mrb[0].mxu0 %v5238
        %v5337 = vpop.f32.mrb[0].mxu0
        %v5338 = vadd.f32 0.0, %v5337
        %v5339 = vpop.f32.mrb[0].mxu0
        %5340 = vmatprep.mubr.f32.mxu0 0.0
        %5341 = vmatmul.mubr.f32.gmra.mrb[0].mxu0 %v5241
        %v5342 = vpop.f32.mrb[0].mxu0
        %v5343 = vadd.f32 0.0, %v5342
        %v5344 = vpop.f32.mrb[0].mxu0
        %5345 = vmatprep.mubr.f32.mxu0 0.0
        %5346 = vmatmul.mubr.f32.gmra.mrb[0].mxu0 %v5244
        %v5347 = vpop.f32.mrb[0].mxu0
        %v5348 = vadd.f32 0.0, %v5347
        %v5349 = vpop.f32.mrb[0].mxu0
        %5350 = vdwg.mxu0
        %5351 = vrot.lane.b32.xlu0 %v629, 64
        %v5352 = vpop.permute.xlu0 %5351
        %5353 = vrot.lane.b32.xlu0 %v634, 64
        %v5354 = vpop.permute.xlu0 %5353
        %5355 = vrot.lane.b32.xlu0 %v639, 64
        %v5356 = vpop.permute.xlu0 %5355
        %5357 = vrot.lane.b32.xlu0 %v644, 64
        %v5358 = vpop.permute.xlu0 %5357
        %5359 = vrot.lane.b32.xlu0 %v649, 64
        %v5360 = vpop.permute.xlu0 %5359
        %5361 = vrot.lane.b32.xlu0 %v654, 64
        %v5362 = vpop.permute.xlu0 %5361
        %5363 = vrot.lane.b32.xlu0 %v659, 64
        %v5364 = vpop.permute.xlu0 %5363
        %5365 = vrot.lane.b32.xlu0 %v664, 64
        %v5366 = vpop.permute.xlu0 %5365
        %v5376 = vsel %vm3636, %v4933, 0
        %v5379 = vsel %vm3636, %v4934, 0
        %v5382 = vsel %vm3636, %v4935, 0
        %v5385 = vsel %vm3636, %v4936, 0
        %v5388 = vsel %vm3636, %v4937, 0
        %v5391 = vsel %vm3636, %v4938, 0
        %v5394 = vsel %vm3636, %v4939, 0
        %v5397 = vsel %vm3636, %v4940, 0
        %5399 = vmatprep.subr.mxu0 0.0
        %5400 = vmatpush1.msra.mxu0 %v5352
        %5401 = vmatprep.subr.mxu0 0.0
        %5402 = vmatpush1.msra.mxu0 %v5354
        %5403 = vmatprep.subr.mxu0 0.0
        %5404 = vmatpush1.msra.mxu0 %v5356
        %5405 = vmatprep.subr.mxu0 0.0
        %5406 = vmatpush1.msra.mxu0 %v5358
        %5407 = vmatprep.subr.mxu0 0.0
        %5408 = vmatpush1.msra.mxu0 %v5360
        %5409 = vmatprep.subr.mxu0 0.0
        %5410 = vmatpush1.msra.mxu0 %v5362
        %5411 = vmatprep.subr.mxu0 0.0
        %5412 = vmatpush1.msra.mxu0 %v5364
        %5413 = vmatprep.subr.mxu0 0.0
        %5414 = vmatpush1.msra.mxu0 %v5366
        %5415 = vmatprep.subr.mxu0 0.0
        %5416 = vmatpush1.msra.mxu0 0.0
        %5417 = vmatprep.subr.mxu0 0.0
        %5418 = vmatpush1.msra.mxu0 0.0
        %5419 = vmatprep.subr.mxu0 0.0
        %5420 = vmatpush1.msra.mxu0 0.0
        %5421 = vmatprep.subr.mxu0 0.0
        %5422 = vmatpush1.msra.mxu0 0.0
        %5423 = vmatprep.subr.mxu0 0.0
        %5424 = vmatpush1.msra.mxu0 0.0
        %5425 = vmatprep.subr.mxu0 0.0
        %5426 = vmatpush1.msra.mxu0 0.0
        %5427 = vmatprep.subr.mxu0 0.0
        %5428 = vmatpush1.msra.mxu0 0.0
        %5429 = vmatprep.subr.mxu0 0.0
        %5430 = vmatpush1.msra.mxu0 0.0
        %5431 = vmatprep.subr.mxu0 0.0
        %5432 = vmatpush1.msra.mxu0 0.0
        %5433 = vmatprep.subr.mxu0 0.0
        %5434 = vmatpush1.msra.mxu0 0.0
        %5435 = vmatprep.subr.mxu0 0.0
        %5436 = vmatpush1.msra.mxu0 0.0
        %5437 = vmatprep.subr.mxu0 0.0
        %5438 = vmatpush1.msra.mxu0 0.0
        %5439 = vmatprep.subr.mxu0 0.0
        %5440 = vmatpush1.msra.mxu0 0.0
        %5441 = vmatprep.subr.mxu0 0.0
        %5442 = vmatpush1.msra.mxu0 0.0
        %5443 = vmatprep.subr.mxu0 0.0
        %5444 = vmatpush1.msra.mxu0 0.0
        %5445 = vmatprep.subr.mxu0 0.0
        %5446 = vmatpush1.msra.mxu0 0.0
        %5447 = vmatprep.subr.mxu0 0.0
        %5448 = vmatpush1.msra.mxu0 0.0
        %5449 = vmatprep.subr.mxu0 0.0
        %5450 = vmatpush1.msra.mxu0 0.0
        %5451 = vmatprep.subr.mxu0 0.0
        %5452 = vmatpush1.msra.mxu0 0.0
        %5453 = vmatprep.subr.mxu0 0.0
        %5454 = vmatpush1.msra.mxu0 0.0
        %5455 = vmatprep.subr.mxu0 0.0
        %5456 = vmatpush1.msra.mxu0 0.0
        %5457 = vmatprep.subr.mxu0 0.0
        %5458 = vmatpush1.msra.mxu0 0.0
        %5459 = vmatprep.subr.mxu0 0.0
        %5460 = vmatpush1.msra.mxu0 0.0
        %5461 = vmatprep.subr.mxu0 0.0
        %5462 = vmatpush1.msra.mxu0 0.0
        %5463 = vmatprep.mubr.f32.mxu0 0.0
        %5464 = vmatmul.mubr.f32.gmra.mrb[0].mxu0 %v5376
        %v5465 = vpop.f32.mrb[0].mxu0
        %v5466 = vadd.f32 0.0, %v5465
        %v5467 = vpop.f32.mrb[0].mxu0
        %5468 = vmatprep.mubr.f32.mxu0 0.0
        %5469 = vmatmul.mubr.f32.gmra.mrb[0].mxu0 %v5379
        %v5470 = vpop.f32.mrb[0].mxu0
        %v5471 = vadd.f32 0.0, %v5470
        %v5472 = vpop.f32.mrb[0].mxu0
        %5473 = vmatprep.mubr.f32.mxu0 0.0
        %5474 = vmatmul.mubr.f32.gmra.mrb[0].mxu0 %v5382
        %v5475 = vpop.f32.mrb[0].mxu0
        %v5476 = vadd.f32 0.0, %v5475
        %v5477 = vpop.f32.mrb[0].mxu0
        %5478 = vmatprep.mubr.f32.mxu0 0.0
        %5479 = vmatmul.mubr.f32.gmra.mrb[0].mxu0 %v5385
        %v5480 = vpop.f32.mrb[0].mxu0
        %v5481 = vadd.f32 0.0, %v5480
        %v5482 = vpop.f32.mrb[0].mxu0
        %5483 = vmatprep.mubr.f32.mxu0 0.0
        %5484 = vmatmul.mubr.f32.gmra.mrb[0].mxu0 %v5388
        %v5485 = vpop.f32.mrb[0].mxu0
        %v5486 = vadd.f32 0.0, %v5485
        %v5487 = vpop.f32.mrb[0].mxu0
        %5488 = vmatprep.mubr.f32.mxu0 0.0
        %5489 = vmatmul.mubr.f32.gmra.mrb[0].mxu0 %v5391
        %v5490 = vpop.f32.mrb[0].mxu0
        %v5491 = vadd.f32 0.0, %v5490
        %v5492 = vpop.f32.mrb[0].mxu0
        %5493 = vmatprep.mubr.f32.mxu0 0.0
        %5494 = vmatmul.mubr.f32.gmra.mrb[0].mxu0 %v5394
        %v5495 = vpop.f32.mrb[0].mxu0
        %v5496 = vadd.f32 0.0, %v5495
        %v5497 = vpop.f32.mrb[0].mxu0
        %5498 = vmatprep.mubr.f32.mxu0 0.0
        %5499 = vmatmul.mubr.f32.gmra.mrb[0].mxu0 %v5397
        %v5500 = vpop.f32.mrb[0].mxu0
        %v5501 = vadd.f32 0.0, %v5500
        %v5502 = vpop.f32.mrb[0].mxu0
        %5503 = vdwg.mxu0
        %5504 = vrot.lane.b32.xlu0 %v669, 64
        %v5505 = vpop.permute.xlu0 %5504
        %5506 = vrot.lane.b32.xlu0 %v674, 64
        %v5507 = vpop.permute.xlu0 %5506
        %5508 = vrot.lane.b32.xlu0 %v679, 64
        %v5509 = vpop.permute.xlu0 %5508
        %5510 = vrot.lane.b32.xlu0 %v684, 64
        %v5511 = vpop.permute.xlu0 %5510
        %5512 = vrot.lane.b32.xlu0 %v689, 64
        %v5513 = vpop.permute.xlu0 %5512
        %5514 = vrot.lane.b32.xlu0 %v694, 64
        %v5515 = vpop.permute.xlu0 %5514
        %5516 = vrot.lane.b32.xlu0 %v699, 64
        %v5517 = vpop.permute.xlu0 %5516
        %5518 = vrot.lane.b32.xlu0 %v704, 64
        %v5519 = vpop.permute.xlu0 %5518
        %v5529 = vsel %vm3636, %v4941, 0
        %v5532 = vsel %vm3636, %v4942, 0
        %v5535 = vsel %vm3636, %v4943, 0
        %v5538 = vsel %vm3636, %v4944, 0
        %v5541 = vsel %vm3636, %v4945, 0
        %v5544 = vsel %vm3636, %v4946, 0
        %v5547 = vsel %vm3636, %v4947, 0
        %v5550 = vsel %vm3636, %v4948, 0
        %5552 = vmatprep.subr.mxu0 0.0
        %5553 = vmatpush1.msra.mxu0 %v5505
        %5554 = vmatprep.subr.mxu0 0.0
        %5555 = vmatpush1.msra.mxu0 %v5507
        %5556 = vmatprep.subr.mxu0 0.0
        %5557 = vmatpush1.msra.mxu0 %v5509
        %5558 = vmatprep.subr.mxu0 0.0
        %5559 = vmatpush1.msra.mxu0 %v5511
        %5560 = vmatprep.subr.mxu0 0.0
        %5561 = vmatpush1.msra.mxu0 %v5513
        %5562 = vmatprep.subr.mxu0 0.0
        %5563 = vmatpush1.msra.mxu0 %v5515
        %5564 = vmatprep.subr.mxu0 0.0
        %5565 = vmatpush1.msra.mxu0 %v5517
        %5566 = vmatprep.subr.mxu0 0.0
        %5567 = vmatpush1.msra.mxu0 %v5519
        %5568 = vmatprep.subr.mxu0 0.0
        %5569 = vmatpush1.msra.mxu0 0.0
        %5570 = vmatprep.subr.mxu0 0.0
        %5571 = vmatpush1.msra.mxu0 0.0
        %5572 = vmatprep.subr.mxu0 0.0
        %5573 = vmatpush1.msra.mxu0 0.0
        %5574 = vmatprep.subr.mxu0 0.0
        %5575 = vmatpush1.msra.mxu0 0.0
        %5576 = vmatprep.subr.mxu0 0.0
        %5577 = vmatpush1.msra.mxu0 0.0
        %5578 = vmatprep.subr.mxu0 0.0
        %5579 = vmatpush1.msra.mxu0 0.0
        %5580 = vmatprep.subr.mxu0 0.0
        %5581 = vmatpush1.msra.mxu0 0.0
        %5582 = vmatprep.subr.mxu0 0.0
        %5583 = vmatpush1.msra.mxu0 0.0
        %5584 = vmatprep.subr.mxu0 0.0
        %5585 = vmatpush1.msra.mxu0 0.0
        %5586 = vmatprep.subr.mxu0 0.0
        %5587 = vmatpush1.msra.mxu0 0.0
        %5588 = vmatprep.subr.mxu0 0.0
        %5589 = vmatpush1.msra.mxu0 0.0
        %5590 = vmatprep.subr.mxu0 0.0
        %5591 = vmatpush1.msra.mxu0 0.0
        %5592 = vmatprep.subr.mxu0 0.0
        %5593 = vmatpush1.msra.mxu0 0.0
        %5594 = vmatprep.subr.mxu0 0.0
        %5595 = vmatpush1.msra.mxu0 0.0
        %5596 = vmatprep.subr.mxu0 0.0
        %5597 = vmatpush1.msra.mxu0 0.0
        %5598 = vmatprep.subr.mxu0 0.0
        %5599 = vmatpush1.msra.mxu0 0.0
        %5600 = vmatprep.subr.mxu0 0.0
        %5601 = vmatpush1.msra.mxu0 0.0
        %5602 = vmatprep.subr.mxu0 0.0
        %5603 = vmatpush1.msra.mxu0 0.0
        %5604 = vmatprep.subr.mxu0 0.0
        %5605 = vmatpush1.msra.mxu0 0.0
        %5606 = vmatprep.subr.mxu0 0.0
        %5607 = vmatpush1.msra.mxu0 0.0
        %5608 = vmatprep.subr.mxu0 0.0
        %5609 = vmatpush1.msra.mxu0 0.0
        %5610 = vmatprep.subr.mxu0 0.0
        %5611 = vmatpush1.msra.mxu0 0.0
        %5612 = vmatprep.subr.mxu0 0.0
        %5613 = vmatpush1.msra.mxu0 0.0
        %5614 = vmatprep.subr.mxu0 0.0
        %5615 = vmatpush1.msra.mxu0 0.0
        %5616 = vmatprep.mubr.f32.mxu0 0.0
        %5617 = vmatmul.mubr.f32.gmra.mrb[0].mxu0 %v5529
        %v5618 = vpop.f32.mrb[0].mxu0
        %v5619 = vadd.f32 0.0, %v5618
        %v5620 = vpop.f32.mrb[0].mxu0
        %5621 = vmatprep.mubr.f32.mxu0 0.0
        %5622 = vmatmul.mubr.f32.gmra.mrb[0].mxu0 %v5532
        %v5623 = vpop.f32.mrb[0].mxu0
        %v5624 = vadd.f32 0.0, %v5623
        %v5625 = vpop.f32.mrb[0].mxu0
        %5626 = vmatprep.mubr.f32.mxu0 0.0
        %5627 = vmatmul.mubr.f32.gmra.mrb[0].mxu0 %v5535
        %v5628 = vpop.f32.mrb[0].mxu0
        %v5629 = vadd.f32 0.0, %v5628
        %v5630 = vpop.f32.mrb[0].mxu0
        %5631 = vmatprep.mubr.f32.mxu0 0.0
        %5632 = vmatmul.mubr.f32.gmra.mrb[0].mxu0 %v5538
        %v5633 = vpop.f32.mrb[0].mxu0
        %v5634 = vadd.f32 0.0, %v5633
        %v5635 = vpop.f32.mrb[0].mxu0
        %5636 = vmatprep.mubr.f32.mxu0 0.0
        %5637 = vmatmul.mubr.f32.gmra.mrb[0].mxu0 %v5541
        %v5638 = vpop.f32.mrb[0].mxu0
        %v5639 = vadd.f32 0.0, %v5638
        %v5640 = vpop.f32.mrb[0].mxu0
        %5641 = vmatprep.mubr.f32.mxu0 0.0
        %5642 = vmatmul.mubr.f32.gmra.mrb[0].mxu0 %v5544
        %v5643 = vpop.f32.mrb[0].mxu0
        %v5644 = vadd.f32 0.0, %v5643
        %v5645 = vpop.f32.mrb[0].mxu0
        %5646 = vmatprep.mubr.f32.mxu0 0.0
        %5647 = vmatmul.mubr.f32.gmra.mrb[0].mxu0 %v5547
        %v5648 = vpop.f32.mrb[0].mxu0
        %v5649 = vadd.f32 0.0, %v5648
        %v5650 = vpop.f32.mrb[0].mxu0
        %5651 = vmatprep.mubr.f32.mxu0 0.0
        %5652 = vmatmul.mubr.f32.gmra.mrb[0].mxu0 %v5550
        %v5653 = vpop.f32.mrb[0].mxu0
        %v5654 = vadd.f32 0.0, %v5653
        %v5655 = vpop.f32.mrb[0].mxu0
        %5656 = vdwg.mxu0
        %5657 = vrot.lane.b32.xlu0 %v740, 64
        %v5658 = vpop.permute.xlu0 %5657
        %5659 = vrot.lane.b32.xlu0 %v742, 64
        %v5660 = vpop.permute.xlu0 %5659
        %5661 = vrot.lane.b32.xlu0 %v744, 64
        %v5662 = vpop.permute.xlu0 %5661
        %5663 = vrot.lane.b32.xlu0 %v746, 64
        %v5664 = vpop.permute.xlu0 %5663
        %5665 = vrot.lane.b32.xlu0 %v748, 64
        %v5666 = vpop.permute.xlu0 %5665
        %5667 = vrot.lane.b32.xlu0 %v750, 64
        %v5668 = vpop.permute.xlu0 %5667
        %5669 = vrot.lane.b32.xlu0 %v752, 64
        %v5670 = vpop.permute.xlu0 %5669
        %5671 = vrot.lane.b32.xlu0 %v754, 64
        %v5672 = vpop.permute.xlu0 %5671
        %v5682 = vsel %vm3636, %v4949, 0
        %v5685 = vsel %vm3636, %v4950, 0
        %v5688 = vsel %vm3636, %v4951, 0
        %v5691 = vsel %vm3636, %v4952, 0
        %v5694 = vsel %vm3636, %v4953, 0
        %v5697 = vsel %vm3636, %v4954, 0
        %v5700 = vsel %vm3636, %v4955, 0
        %v5703 = vsel %vm3636, %v4956, 0
        %5705 = vmatprep.subr.mxu0 0.0
        %5706 = vmatpush1.msra.mxu0 %v5658
        %5707 = vmatprep.subr.mxu0 0.0
        %5708 = vmatpush1.msra.mxu0 %v5660
        %5709 = vmatprep.subr.mxu0 0.0
        %5710 = vmatpush1.msra.mxu0 %v5662
        %5711 = vmatprep.subr.mxu0 0.0
        %5712 = vmatpush1.msra.mxu0 %v5664
        %5713 = vmatprep.subr.mxu0 0.0
        %5714 = vmatpush1.msra.mxu0 %v5666
        %5715 = vmatprep.subr.mxu0 0.0
        %5716 = vmatpush1.msra.mxu0 %v5668
        %5717 = vmatprep.subr.mxu0 0.0
        %5718 = vmatpush1.msra.mxu0 %v5670
        %5719 = vmatprep.subr.mxu0 0.0
        %5720 = vmatpush1.msra.mxu0 %v5672
        %5721 = vmatprep.subr.mxu0 0.0
        %5722 = vmatpush1.msra.mxu0 0.0
        %5723 = vmatprep.subr.mxu0 0.0
        %5724 = vmatpush1.msra.mxu0 0.0
        %5725 = vmatprep.subr.mxu0 0.0
        %5726 = vmatpush1.msra.mxu0 0.0
        %5727 = vmatprep.subr.mxu0 0.0
        %5728 = vmatpush1.msra.mxu0 0.0
        %5729 = vmatprep.subr.mxu0 0.0
        %5730 = vmatpush1.msra.mxu0 0.0
        %5731 = vmatprep.subr.mxu0 0.0
        %5732 = vmatpush1.msra.mxu0 0.0
        %5733 = vmatprep.subr.mxu0 0.0
        %5734 = vmatpush1.msra.mxu0 0.0
        %5735 = vmatprep.subr.mxu0 0.0
        %5736 = vmatpush1.msra.mxu0 0.0
        %5737 = vmatprep.subr.mxu0 0.0
        %5738 = vmatpush1.msra.mxu0 0.0
        %5739 = vmatprep.subr.mxu0 0.0
        %5740 = vmatpush1.msra.mxu0 0.0
        %5741 = vmatprep.subr.mxu0 0.0
        %5742 = vmatpush1.msra.mxu0 0.0
        %5743 = vmatprep.subr.mxu0 0.0
        %5744 = vmatpush1.msra.mxu0 0.0
        %5745 = vmatprep.subr.mxu0 0.0
        %5746 = vmatpush1.msra.mxu0 0.0
        %5747 = vmatprep.subr.mxu0 0.0
        %5748 = vmatpush1.msra.mxu0 0.0
        %5749 = vmatprep.subr.mxu0 0.0
        %5750 = vmatpush1.msra.mxu0 0.0
        %5751 = vmatprep.subr.mxu0 0.0
        %5752 = vmatpush1.msra.mxu0 0.0
        %5753 = vmatprep.subr.mxu0 0.0
        %5754 = vmatpush1.msra.mxu0 0.0
        %5755 = vmatprep.subr.mxu0 0.0
        %5756 = vmatpush1.msra.mxu0 0.0
        %5757 = vmatprep.subr.mxu0 0.0
        %5758 = vmatpush1.msra.mxu0 0.0
        %5759 = vmatprep.subr.mxu0 0.0
        %5760 = vmatpush1.msra.mxu0 0.0
        %5761 = vmatprep.subr.mxu0 0.0
        %5762 = vmatpush1.msra.mxu0 0.0
        %5763 = vmatprep.subr.mxu0 0.0
        %5764 = vmatpush1.msra.mxu0 0.0
        %5765 = vmatprep.subr.mxu0 0.0
        %5766 = vmatpush1.msra.mxu0 0.0
        %5767 = vmatprep.subr.mxu0 0.0
        %5768 = vmatpush1.msra.mxu0 0.0
        %5769 = vmatprep.mubr.f32.mxu0 0.0
        %5770 = vmatmul.mubr.f32.gmra.mrb[0].mxu0 %v5682
        %v5771 = vpop.f32.mrb[0].mxu0
        %v5772 = vadd.f32 0.0, %v5771
        %v5773 = vpop.f32.mrb[0].mxu0
        %5774 = vmatprep.mubr.f32.mxu0 0.0
        %5775 = vmatmul.mubr.f32.gmra.mrb[0].mxu0 %v5685
        %v5776 = vpop.f32.mrb[0].mxu0
        %v5777 = vadd.f32 0.0, %v5776
        %v5778 = vpop.f32.mrb[0].mxu0
        %5779 = vmatprep.mubr.f32.mxu0 0.0
        %5780 = vmatmul.mubr.f32.gmra.mrb[0].mxu0 %v5688
        %v5781 = vpop.f32.mrb[0].mxu0
        %v5782 = vadd.f32 0.0, %v5781
        %v5783 = vpop.f32.mrb[0].mxu0
        %5784 = vmatprep.mubr.f32.mxu0 0.0
        %5785 = vmatmul.mubr.f32.gmra.mrb[0].mxu0 %v5691
        %v5786 = vpop.f32.mrb[0].mxu0
        %v5787 = vadd.f32 0.0, %v5786
        %v5788 = vpop.f32.mrb[0].mxu0
        %5789 = vmatprep.mubr.f32.mxu0 0.0
        %5790 = vmatmul.mubr.f32.gmra.mrb[0].mxu0 %v5694
        %v5791 = vpop.f32.mrb[0].mxu0
        %v5792 = vadd.f32 0.0, %v5791
        %v5793 = vpop.f32.mrb[0].mxu0
        %5794 = vmatprep.mubr.f32.mxu0 0.0
        %5795 = vmatmul.mubr.f32.gmra.mrb[0].mxu0 %v5697
        %v5796 = vpop.f32.mrb[0].mxu0
        %v5797 = vadd.f32 0.0, %v5796
        %v5798 = vpop.f32.mrb[0].mxu0
        %5799 = vmatprep.mubr.f32.mxu0 0.0
        %5800 = vmatmul.mubr.f32.gmra.mrb[0].mxu0 %v5700
        %v5801 = vpop.f32.mrb[0].mxu0
        %v5802 = vadd.f32 0.0, %v5801
        %v5803 = vpop.f32.mrb[0].mxu0
        %5804 = vmatprep.mubr.f32.mxu0 0.0
        %5805 = vmatmul.mubr.f32.gmra.mrb[0].mxu0 %v5703
        %v5806 = vpop.f32.mrb[0].mxu0
        %v5807 = vadd.f32 0.0, %v5806
        %v5808 = vpop.f32.mrb[0].mxu0
        %5809 = vdwg.mxu0
        %5810 = vrot.lane.b32.xlu0 %v756, 64
        %v5811 = vpop.permute.xlu0 %5810
        %5812 = vrot.lane.b32.xlu0 %v758, 64
        %v5813 = vpop.permute.xlu0 %5812
        %5814 = vrot.lane.b32.xlu0 %v760, 64
        %v5815 = vpop.permute.xlu0 %5814
        %5816 = vrot.lane.b32.xlu0 %v762, 64
        %v5817 = vpop.permute.xlu0 %5816
        %5818 = vrot.lane.b32.xlu0 %v764, 64
        %v5819 = vpop.permute.xlu0 %5818
        %5820 = vrot.lane.b32.xlu0 %v766, 64
        %v5821 = vpop.permute.xlu0 %5820
        %5822 = vrot.lane.b32.xlu0 %v768, 64
        %v5823 = vpop.permute.xlu0 %5822
        %5824 = vrot.lane.b32.xlu0 %v770, 64
        %v5825 = vpop.permute.xlu0 %5824
        %v5835 = vsel %vm3636, %v4957, 0
        %v5838 = vsel %vm3636, %v4958, 0
        %v5841 = vsel %vm3636, %v4959, 0
        %v5844 = vsel %vm3636, %v4960, 0
        %v5847 = vsel %vm3636, %v4961, 0
        %v5850 = vsel %vm3636, %v4962, 0
        %v5853 = vsel %vm3636, %v4963, 0
        %v5856 = vsel %vm3636, %v4964, 0
        %5858 = vmatprep.subr.mxu0 0.0
        %5859 = vmatpush1.msra.mxu0 %v5811
        %5860 = vmatprep.subr.mxu0 0.0
        %5861 = vmatpush1.msra.mxu0 %v5813
        %5862 = vmatprep.subr.mxu0 0.0
        %5863 = vmatpush1.msra.mxu0 %v5815
        %5864 = vmatprep.subr.mxu0 0.0
        %5865 = vmatpush1.msra.mxu0 %v5817
        %5866 = vmatprep.subr.mxu0 0.0
        %5867 = vmatpush1.msra.mxu0 %v5819
        %5868 = vmatprep.subr.mxu0 0.0
        %5869 = vmatpush1.msra.mxu0 %v5821
        %5870 = vmatprep.subr.mxu0 0.0
        %5871 = vmatpush1.msra.mxu0 %v5823
        %5872 = vmatprep.subr.mxu0 0.0
        %5873 = vmatpush1.msra.mxu0 %v5825
        %5874 = vmatprep.subr.mxu0 0.0
        %5875 = vmatpush1.msra.mxu0 0.0
        %5876 = vmatprep.subr.mxu0 0.0
        %5877 = vmatpush1.msra.mxu0 0.0
        %5878 = vmatprep.subr.mxu0 0.0
        %5879 = vmatpush1.msra.mxu0 0.0
        %5880 = vmatprep.subr.mxu0 0.0
        %5881 = vmatpush1.msra.mxu0 0.0
        %5882 = vmatprep.subr.mxu0 0.0
        %5883 = vmatpush1.msra.mxu0 0.0
        %5884 = vmatprep.subr.mxu0 0.0
        %5885 = vmatpush1.msra.mxu0 0.0
        %5886 = vmatprep.subr.mxu0 0.0
        %5887 = vmatpush1.msra.mxu0 0.0
        %5888 = vmatprep.subr.mxu0 0.0
        %5889 = vmatpush1.msra.mxu0 0.0
        %5890 = vmatprep.subr.mxu0 0.0
        %5891 = vmatpush1.msra.mxu0 0.0
        %5892 = vmatprep.subr.mxu0 0.0
        %5893 = vmatpush1.msra.mxu0 0.0
        %5894 = vmatprep.subr.mxu0 0.0
        %5895 = vmatpush1.msra.mxu0 0.0
        %5896 = vmatprep.subr.mxu0 0.0
        %5897 = vmatpush1.msra.mxu0 0.0
        %5898 = vmatprep.subr.mxu0 0.0
        %5899 = vmatpush1.msra.mxu0 0.0
        %5900 = vmatprep.subr.mxu0 0.0
        %5901 = vmatpush1.msra.mxu0 0.0
        %5902 = vmatprep.subr.mxu0 0.0
        %5903 = vmatpush1.msra.mxu0 0.0
        %5904 = vmatprep.subr.mxu0 0.0
        %5905 = vmatpush1.msra.mxu0 0.0
        %5906 = vmatprep.subr.mxu0 0.0
        %5907 = vmatpush1.msra.mxu0 0.0
        %5908 = vmatprep.subr.mxu0 0.0
        %5909 = vmatpush1.msra.mxu0 0.0
        %5910 = vmatprep.subr.mxu0 0.0
        %5911 = vmatpush1.msra.mxu0 0.0
        %5912 = vmatprep.subr.mxu0 0.0
        %5913 = vmatpush1.msra.mxu0 0.0
        %5914 = vmatprep.subr.mxu0 0.0
        %5915 = vmatpush1.msra.mxu0 0.0
        %5916 = vmatprep.subr.mxu0 0.0
        %5917 = vmatpush1.msra.mxu0 0.0
        %5918 = vmatprep.subr.mxu0 0.0
        %5919 = vmatpush1.msra.mxu0 0.0
        %5920 = vmatprep.subr.mxu0 0.0
        %5921 = vmatpush1.msra.mxu0 0.0
        %5922 = vmatprep.mubr.f32.mxu0 0.0
        %5923 = vmatmul.mubr.f32.gmra.mrb[0].mxu0 %v5835
        %v5924 = vpop.f32.mrb[0].mxu0
        %v5925 = vadd.f32 0.0, %v5924
        %v5926 = vpop.f32.mrb[0].mxu0
        %5927 = vmatprep.mubr.f32.mxu0 0.0
        %5928 = vmatmul.mubr.f32.gmra.mrb[0].mxu0 %v5838
        %v5929 = vpop.f32.mrb[0].mxu0
        %v5930 = vadd.f32 0.0, %v5929
        %v5931 = vpop.f32.mrb[0].mxu0
        %5932 = vmatprep.mubr.f32.mxu0 0.0
        %5933 = vmatmul.mubr.f32.gmra.mrb[0].mxu0 %v5841
        %v5934 = vpop.f32.mrb[0].mxu0
        %v5935 = vadd.f32 0.0, %v5934
        %v5936 = vpop.f32.mrb[0].mxu0
        %5937 = vmatprep.mubr.f32.mxu0 0.0
        %5938 = vmatmul.mubr.f32.gmra.mrb[0].mxu0 %v5844
        %v5939 = vpop.f32.mrb[0].mxu0
        %v5940 = vadd.f32 0.0, %v5939
        %v5941 = vpop.f32.mrb[0].mxu0
        %5942 = vmatprep.mubr.f32.mxu0 0.0
        %5943 = vmatmul.mubr.f32.gmra.mrb[0].mxu0 %v5847
        %v5944 = vpop.f32.mrb[0].mxu0
        %v5945 = vadd.f32 0.0, %v5944
        %v5946 = vpop.f32.mrb[0].mxu0
        %5947 = vmatprep.mubr.f32.mxu0 0.0
        %5948 = vmatmul.mubr.f32.gmra.mrb[0].mxu0 %v5850
        %v5949 = vpop.f32.mrb[0].mxu0
        %v5950 = vadd.f32 0.0, %v5949
        %v5951 = vpop.f32.mrb[0].mxu0
        %5952 = vmatprep.mubr.f32.mxu0 0.0
        %5953 = vmatmul.mubr.f32.gmra.mrb[0].mxu0 %v5853
        %v5954 = vpop.f32.mrb[0].mxu0
        %v5955 = vadd.f32 0.0, %v5954
        %v5956 = vpop.f32.mrb[0].mxu0
        %5957 = vmatprep.mubr.f32.mxu0 0.0
        %5958 = vmatmul.mubr.f32.gmra.mrb[0].mxu0 %v5856
        %v5959 = vpop.f32.mrb[0].mxu0
        %v5960 = vadd.f32 0.0, %v5959
        %v5961 = vpop.f32.mrb[0].mxu0
        %5962 = vdwg.mxu0
        %5963 = vrot.lane.b32.xlu0 %v772, 64
        %v5964 = vpop.permute.xlu0 %5963
        %5965 = vrot.lane.b32.xlu0 %v774, 64
        %v5966 = vpop.permute.xlu0 %5965
        %5967 = vrot.lane.b32.xlu0 %v776, 64
        %v5968 = vpop.permute.xlu0 %5967
        %5969 = vrot.lane.b32.xlu0 %v778, 64
        %v5970 = vpop.permute.xlu0 %5969
        %5971 = vrot.lane.b32.xlu0 %v780, 64
        %v5972 = vpop.permute.xlu0 %5971
        %5973 = vrot.lane.b32.xlu0 %v782, 64
        %v5974 = vpop.permute.xlu0 %5973
        %5975 = vrot.lane.b32.xlu0 %v784, 64
        %v5976 = vpop.permute.xlu0 %5975
        %5977 = vrot.lane.b32.xlu0 %v786, 64
        %v5978 = vpop.permute.xlu0 %5977
        %v5988 = vsel %vm3636, %v4965, 0
        %v5991 = vsel %vm3636, %v4966, 0
        %v5994 = vsel %vm3636, %v4967, 0
        %v5997 = vsel %vm3636, %v4968, 0
        %v6000 = vsel %vm3636, %v4969, 0
        %v6003 = vsel %vm3636, %v4970, 0
        %v6006 = vsel %vm3636, %v4971, 0
        %v6009 = vsel %vm3636, %v4972, 0
        %6011 = vmatprep.subr.mxu0 0.0
        %6012 = vmatpush1.msra.mxu0 %v5964
        %6013 = vmatprep.subr.mxu0 0.0
        %6014 = vmatpush1.msra.mxu0 %v5966
        %6015 = vmatprep.subr.mxu0 0.0
        %6016 = vmatpush1.msra.mxu0 %v5968
        %6017 = vmatprep.subr.mxu0 0.0
        %6018 = vmatpush1.msra.mxu0 %v5970
        %6019 = vmatprep.subr.mxu0 0.0
        %6020 = vmatpush1.msra.mxu0 %v5972
        %6021 = vmatprep.subr.mxu0 0.0
        %6022 = vmatpush1.msra.mxu0 %v5974
        %6023 = vmatprep.subr.mxu0 0.0
        %6024 = vmatpush1.msra.mxu0 %v5976
        %6025 = vmatprep.subr.mxu0 0.0
        %6026 = vmatpush1.msra.mxu0 %v5978
        %6027 = vmatprep.subr.mxu0 0.0
        %6028 = vmatpush1.msra.mxu0 0.0
        %6029 = vmatprep.subr.mxu0 0.0
        %6030 = vmatpush1.msra.mxu0 0.0
        %6031 = vmatprep.subr.mxu0 0.0
        %6032 = vmatpush1.msra.mxu0 0.0
        %6033 = vmatprep.subr.mxu0 0.0
        %6034 = vmatpush1.msra.mxu0 0.0
        %6035 = vmatprep.subr.mxu0 0.0
        %6036 = vmatpush1.msra.mxu0 0.0
        %6037 = vmatprep.subr.mxu0 0.0
        %6038 = vmatpush1.msra.mxu0 0.0
        %6039 = vmatprep.subr.mxu0 0.0
        %6040 = vmatpush1.msra.mxu0 0.0
        %6041 = vmatprep.subr.mxu0 0.0
        %6042 = vmatpush1.msra.mxu0 0.0
        %6043 = vmatprep.subr.mxu0 0.0
        %6044 = vmatpush1.msra.mxu0 0.0
        %6045 = vmatprep.subr.mxu0 0.0
        %6046 = vmatpush1.msra.mxu0 0.0
        %6047 = vmatprep.subr.mxu0 0.0
        %6048 = vmatpush1.msra.mxu0 0.0
        %6049 = vmatprep.subr.mxu0 0.0
        %6050 = vmatpush1.msra.mxu0 0.0
        %6051 = vmatprep.subr.mxu0 0.0
        %6052 = vmatpush1.msra.mxu0 0.0
        %6053 = vmatprep.subr.mxu0 0.0
        %6054 = vmatpush1.msra.mxu0 0.0
        %6055 = vmatprep.subr.mxu0 0.0
        %6056 = vmatpush1.msra.mxu0 0.0
        %6057 = vmatprep.subr.mxu0 0.0
        %6058 = vmatpush1.msra.mxu0 0.0
        %6059 = vmatprep.subr.mxu0 0.0
        %6060 = vmatpush1.msra.mxu0 0.0
        %6061 = vmatprep.subr.mxu0 0.0
        %6062 = vmatpush1.msra.mxu0 0.0
        %6063 = vmatprep.subr.mxu0 0.0
        %6064 = vmatpush1.msra.mxu0 0.0
        %6065 = vmatprep.subr.mxu0 0.0
        %6066 = vmatpush1.msra.mxu0 0.0
        %6067 = vmatprep.subr.mxu0 0.0
        %6068 = vmatpush1.msra.mxu0 0.0
        %6069 = vmatprep.subr.mxu0 0.0
        %6070 = vmatpush1.msra.mxu0 0.0
        %6071 = vmatprep.subr.mxu0 0.0
        %6072 = vmatpush1.msra.mxu0 0.0
        %6073 = vmatprep.subr.mxu0 0.0
        %6074 = vmatpush1.msra.mxu0 0.0
        %6075 = vmatprep.mubr.f32.mxu0 0.0
        %6076 = vmatmul.mubr.f32.gmra.mrb[0].mxu0 %v5988
        %v6077 = vpop.f32.mrb[0].mxu0
        %v6078 = vadd.f32 0.0, %v6077
        %v6079 = vpop.f32.mrb[0].mxu0
        %6080 = vmatprep.mubr.f32.mxu0 0.0
        %6081 = vmatmul.mubr.f32.gmra.mrb[0].mxu0 %v5991
        %v6082 = vpop.f32.mrb[0].mxu0
        %v6083 = vadd.f32 0.0, %v6082
        %v6084 = vpop.f32.mrb[0].mxu0
        %6085 = vmatprep.mubr.f32.mxu0 0.0
        %6086 = vmatmul.mubr.f32.gmra.mrb[0].mxu0 %v5994
        %v6087 = vpop.f32.mrb[0].mxu0
        %v6088 = vadd.f32 0.0, %v6087
        %v6089 = vpop.f32.mrb[0].mxu0
        %6090 = vmatprep.mubr.f32.mxu0 0.0
        %6091 = vmatmul.mubr.f32.gmra.mrb[0].mxu0 %v5997
        %v6092 = vpop.f32.mrb[0].mxu0
        %v6093 = vadd.f32 0.0, %v6092
        %v6094 = vpop.f32.mrb[0].mxu0
        %6095 = vmatprep.mubr.f32.mxu0 0.0
        %6096 = vmatmul.mubr.f32.gmra.mrb[0].mxu0 %v6000
        %v6097 = vpop.f32.mrb[0].mxu0
        %v6098 = vadd.f32 0.0, %v6097
        %v6099 = vpop.f32.mrb[0].mxu0
        %6100 = vmatprep.mubr.f32.mxu0 0.0
        %6101 = vmatmul.mubr.f32.gmra.mrb[0].mxu0 %v6003
        %v6102 = vpop.f32.mrb[0].mxu0
        %v6103 = vadd.f32 0.0, %v6102
        %v6104 = vpop.f32.mrb[0].mxu0
        %6105 = vmatprep.mubr.f32.mxu0 0.0
        %6106 = vmatmul.mubr.f32.gmra.mrb[0].mxu0 %v6006
        %v6107 = vpop.f32.mrb[0].mxu0
        %v6108 = vadd.f32 0.0, %v6107
        %v6109 = vpop.f32.mrb[0].mxu0
        %6110 = vmatprep.mubr.f32.mxu0 0.0
        %6111 = vmatmul.mubr.f32.gmra.mrb[0].mxu0 %v6009
        %v6112 = vpop.f32.mrb[0].mxu0
        %v6113 = vadd.f32 0.0, %v6112
        %v6114 = vpop.f32.mrb[0].mxu0
        %6115 = vdwg.mxu0
        %6116 = vrot.lane.b32.xlu0 %v788, 64
        %v6117 = vpop.permute.xlu0 %6116
        %6118 = vrot.lane.b32.xlu0 %v790, 64
        %v6119 = vpop.permute.xlu0 %6118
        %6120 = vrot.lane.b32.xlu0 %v792, 64
        %v6121 = vpop.permute.xlu0 %6120
        %6122 = vrot.lane.b32.xlu0 %v794, 64
        %v6123 = vpop.permute.xlu0 %6122
        %6124 = vrot.lane.b32.xlu0 %v796, 64
        %v6125 = vpop.permute.xlu0 %6124
        %6126 = vrot.lane.b32.xlu0 %v798, 64
        %v6127 = vpop.permute.xlu0 %6126
        %6128 = vrot.lane.b32.xlu0 %v800, 64
        %v6129 = vpop.permute.xlu0 %6128
        %6130 = vrot.lane.b32.xlu0 %v802, 64
        %v6131 = vpop.permute.xlu0 %6130
        %v6141 = vsel %vm3636, %v4973, 0
        %v6144 = vsel %vm3636, %v4974, 0
        %v6147 = vsel %vm3636, %v4975, 0
        %v6150 = vsel %vm3636, %v4976, 0
        %v6153 = vsel %vm3636, %v4977, 0
        %v6156 = vsel %vm3636, %v4978, 0
        %v6159 = vsel %vm3636, %v4979, 0
        %v6162 = vsel %vm3636, %v4980, 0
        %6164 = vmatprep.subr.mxu0 0.0
        %6165 = vmatpush1.msra.mxu0 %v6117
        %6166 = vmatprep.subr.mxu0 0.0
        %6167 = vmatpush1.msra.mxu0 %v6119
        %6168 = vmatprep.subr.mxu0 0.0
        %6169 = vmatpush1.msra.mxu0 %v6121
        %6170 = vmatprep.subr.mxu0 0.0
        %6171 = vmatpush1.msra.mxu0 %v6123
        %6172 = vmatprep.subr.mxu0 0.0
        %6173 = vmatpush1.msra.mxu0 %v6125
        %6174 = vmatprep.subr.mxu0 0.0
        %6175 = vmatpush1.msra.mxu0 %v6127
        %6176 = vmatprep.subr.mxu0 0.0
        %6177 = vmatpush1.msra.mxu0 %v6129
        %6178 = vmatprep.subr.mxu0 0.0
        %6179 = vmatpush1.msra.mxu0 %v6131
        %6180 = vmatprep.subr.mxu0 0.0
        %6181 = vmatpush1.msra.mxu0 0.0
        %6182 = vmatprep.subr.mxu0 0.0
        %6183 = vmatpush1.msra.mxu0 0.0
        %6184 = vmatprep.subr.mxu0 0.0
        %6185 = vmatpush1.msra.mxu0 0.0
        %6186 = vmatprep.subr.mxu0 0.0
        %6187 = vmatpush1.msra.mxu0 0.0
        %6188 = vmatprep.subr.mxu0 0.0
        %6189 = vmatpush1.msra.mxu0 0.0
        %6190 = vmatprep.subr.mxu0 0.0
        %6191 = vmatpush1.msra.mxu0 0.0
        %6192 = vmatprep.subr.mxu0 0.0
        %6193 = vmatpush1.msra.mxu0 0.0
        %6194 = vmatprep.subr.mxu0 0.0
        %6195 = vmatpush1.msra.mxu0 0.0
        %6196 = vmatprep.subr.mxu0 0.0
        %6197 = vmatpush1.msra.mxu0 0.0
        %6198 = vmatprep.subr.mxu0 0.0
        %6199 = vmatpush1.msra.mxu0 0.0
        %6200 = vmatprep.subr.mxu0 0.0
        %6201 = vmatpush1.msra.mxu0 0.0
        %6202 = vmatprep.subr.mxu0 0.0
        %6203 = vmatpush1.msra.mxu0 0.0
        %6204 = vmatprep.subr.mxu0 0.0
        %6205 = vmatpush1.msra.mxu0 0.0
        %6206 = vmatprep.subr.mxu0 0.0
        %6207 = vmatpush1.msra.mxu0 0.0
        %6208 = vmatprep.subr.mxu0 0.0
        %6209 = vmatpush1.msra.mxu0 0.0
        %6210 = vmatprep.subr.mxu0 0.0
        %6211 = vmatpush1.msra.mxu0 0.0
        %6212 = vmatprep.subr.mxu0 0.0
        %6213 = vmatpush1.msra.mxu0 0.0
        %6214 = vmatprep.subr.mxu0 0.0
        %6215 = vmatpush1.msra.mxu0 0.0
        %6216 = vmatprep.subr.mxu0 0.0
        %6217 = vmatpush1.msra.mxu0 0.0
        %6218 = vmatprep.subr.mxu0 0.0
        %6219 = vmatpush1.msra.mxu0 0.0
        %6220 = vmatprep.subr.mxu0 0.0
        %6221 = vmatpush1.msra.mxu0 0.0
        %6222 = vmatprep.subr.mxu0 0.0
        %6223 = vmatpush1.msra.mxu0 0.0
        %6224 = vmatprep.subr.mxu0 0.0
        %6225 = vmatpush1.msra.mxu0 0.0
        %6226 = vmatprep.subr.mxu0 0.0
        %6227 = vmatpush1.msra.mxu0 0.0
        %6228 = vmatprep.mubr.f32.mxu0 0.0
        %6229 = vmatmul.mubr.f32.gmra.mrb[0].mxu0 %v6141
        %v6230 = vpop.f32.mrb[0].mxu0
        %v6231 = vadd.f32 0.0, %v6230
        %v6232 = vpop.f32.mrb[0].mxu0
        %6233 = vmatprep.mubr.f32.mxu0 0.0
        %6234 = vmatmul.mubr.f32.gmra.mrb[0].mxu0 %v6144
        %v6235 = vpop.f32.mrb[0].mxu0
        %v6236 = vadd.f32 0.0, %v6235
        %v6237 = vpop.f32.mrb[0].mxu0
        %6238 = vmatprep.mubr.f32.mxu0 0.0
        %6239 = vmatmul.mubr.f32.gmra.mrb[0].mxu0 %v6147
        %v6240 = vpop.f32.mrb[0].mxu0
        %v6241 = vadd.f32 0.0, %v6240
        %v6242 = vpop.f32.mrb[0].mxu0
        %6243 = vmatprep.mubr.f32.mxu0 0.0
        %6244 = vmatmul.mubr.f32.gmra.mrb[0].mxu0 %v6150
        %v6245 = vpop.f32.mrb[0].mxu0
        %v6246 = vadd.f32 0.0, %v6245
        %v6247 = vpop.f32.mrb[0].mxu0
        %6248 = vmatprep.mubr.f32.mxu0 0.0
        %6249 = vmatmul.mubr.f32.gmra.mrb[0].mxu0 %v6153
        %v6250 = vpop.f32.mrb[0].mxu0
        %v6251 = vadd.f32 0.0, %v6250
        %v6252 = vpop.f32.mrb[0].mxu0
        %6253 = vmatprep.mubr.f32.mxu0 0.0
        %6254 = vmatmul.mubr.f32.gmra.mrb[0].mxu0 %v6156
        %v6255 = vpop.f32.mrb[0].mxu0
        %v6256 = vadd.f32 0.0, %v6255
        %v6257 = vpop.f32.mrb[0].mxu0
        %6258 = vmatprep.mubr.f32.mxu0 0.0
        %6259 = vmatmul.mubr.f32.gmra.mrb[0].mxu0 %v6159
        %v6260 = vpop.f32.mrb[0].mxu0
        %v6261 = vadd.f32 0.0, %v6260
        %v6262 = vpop.f32.mrb[0].mxu0
        %6263 = vmatprep.mubr.f32.mxu0 0.0
        %6264 = vmatmul.mubr.f32.gmra.mrb[0].mxu0 %v6162
        %v6265 = vpop.f32.mrb[0].mxu0
        %v6266 = vadd.f32 0.0, %v6265
        %v6267 = vpop.f32.mrb[0].mxu0
        %6268 = vdwg.mxu0
        %6269 = vrot.lane.b32.xlu0 %v804, 64
        %v6270 = vpop.permute.xlu0 %6269
        %6271 = vrot.lane.b32.xlu0 %v806, 64
        %v6272 = vpop.permute.xlu0 %6271
        %6273 = vrot.lane.b32.xlu0 %v808, 64
        %v6274 = vpop.permute.xlu0 %6273
        %6275 = vrot.lane.b32.xlu0 %v810, 64
        %v6276 = vpop.permute.xlu0 %6275
        %6277 = vrot.lane.b32.xlu0 %v812, 64
        %v6278 = vpop.permute.xlu0 %6277
        %6279 = vrot.lane.b32.xlu0 %v814, 64
        %v6280 = vpop.permute.xlu0 %6279
        %6281 = vrot.lane.b32.xlu0 %v816, 64
        %v6282 = vpop.permute.xlu0 %6281
        %6283 = vrot.lane.b32.xlu0 %v818, 64
        %v6284 = vpop.permute.xlu0 %6283
        %v6294 = vsel %vm3636, %v4981, 0
        %v6297 = vsel %vm3636, %v4982, 0
        %v6300 = vsel %vm3636, %v4983, 0
        %v6303 = vsel %vm3636, %v4984, 0
        %v6306 = vsel %vm3636, %v4985, 0
        %v6309 = vsel %vm3636, %v4986, 0
        %v6312 = vsel %vm3636, %v4987, 0
        %v6315 = vsel %vm3636, %v4988, 0
        %6317 = vmatprep.subr.mxu0 0.0
        %6318 = vmatpush1.msra.mxu0 %v6270
        %6319 = vmatprep.subr.mxu0 0.0
        %6320 = vmatpush1.msra.mxu0 %v6272
        %6321 = vmatprep.subr.mxu0 0.0
        %6322 = vmatpush1.msra.mxu0 %v6274
        %6323 = vmatprep.subr.mxu0 0.0
        %6324 = vmatpush1.msra.mxu0 %v6276
        %6325 = vmatprep.subr.mxu0 0.0
        %6326 = vmatpush1.msra.mxu0 %v6278
        %6327 = vmatprep.subr.mxu0 0.0
        %6328 = vmatpush1.msra.mxu0 %v6280
        %6329 = vmatprep.subr.mxu0 0.0
        %6330 = vmatpush1.msra.mxu0 %v6282
        %6331 = vmatprep.subr.mxu0 0.0
        %6332 = vmatpush1.msra.mxu0 %v6284
        %6333 = vmatprep.subr.mxu0 0.0
        %6334 = vmatpush1.msra.mxu0 0.0
        %6335 = vmatprep.subr.mxu0 0.0
        %6336 = vmatpush1.msra.mxu0 0.0
        %6337 = vmatprep.subr.mxu0 0.0
        %6338 = vmatpush1.msra.mxu0 0.0
        %6339 = vmatprep.subr.mxu0 0.0
        %6340 = vmatpush1.msra.mxu0 0.0
        %6341 = vmatprep.subr.mxu0 0.0
        %6342 = vmatpush1.msra.mxu0 0.0
        %6343 = vmatprep.subr.mxu0 0.0
        %6344 = vmatpush1.msra.mxu0 0.0
        %6345 = vmatprep.subr.mxu0 0.0
        %6346 = vmatpush1.msra.mxu0 0.0
        %6347 = vmatprep.subr.mxu0 0.0
        %6348 = vmatpush1.msra.mxu0 0.0
        %6349 = vmatprep.subr.mxu0 0.0
        %6350 = vmatpush1.msra.mxu0 0.0
        %6351 = vmatprep.subr.mxu0 0.0
        %6352 = vmatpush1.msra.mxu0 0.0
        %6353 = vmatprep.subr.mxu0 0.0
        %6354 = vmatpush1.msra.mxu0 0.0
        %6355 = vmatprep.subr.mxu0 0.0
        %6356 = vmatpush1.msra.mxu0 0.0
        %6357 = vmatprep.subr.mxu0 0.0
        %6358 = vmatpush1.msra.mxu0 0.0
        %6359 = vmatprep.subr.mxu0 0.0
        %6360 = vmatpush1.msra.mxu0 0.0
        %6361 = vmatprep.subr.mxu0 0.0
        %6362 = vmatpush1.msra.mxu0 0.0
        %6363 = vmatprep.subr.mxu0 0.0
        %6364 = vmatpush1.msra.mxu0 0.0
        %6365 = vmatprep.subr.mxu0 0.0
        %6366 = vmatpush1.msra.mxu0 0.0
        %6367 = vmatprep.subr.mxu0 0.0
        %6368 = vmatpush1.msra.mxu0 0.0
        %6369 = vmatprep.subr.mxu0 0.0
        %6370 = vmatpush1.msra.mxu0 0.0
        %6371 = vmatprep.subr.mxu0 0.0
        %6372 = vmatpush1.msra.mxu0 0.0
        %6373 = vmatprep.subr.mxu0 0.0
        %6374 = vmatpush1.msra.mxu0 0.0
        %6375 = vmatprep.subr.mxu0 0.0
        %6376 = vmatpush1.msra.mxu0 0.0
        %6377 = vmatprep.subr.mxu0 0.0
        %6378 = vmatpush1.msra.mxu0 0.0
        %6379 = vmatprep.subr.mxu0 0.0
        %6380 = vmatpush1.msra.mxu0 0.0
        %6381 = vmatprep.mubr.f32.mxu0 0.0
        %6382 = vmatmul.mubr.f32.gmra.mrb[0].mxu0 %v6294
        %v6383 = vpop.f32.mrb[0].mxu0
        %v6384 = vadd.f32 0.0, %v6383
        %v6385 = vpop.f32.mrb[0].mxu0
        %6386 = vmatprep.mubr.f32.mxu0 0.0
        %6387 = vmatmul.mubr.f32.gmra.mrb[0].mxu0 %v6297
        %v6388 = vpop.f32.mrb[0].mxu0
        %v6389 = vadd.f32 0.0, %v6388
        %v6390 = vpop.f32.mrb[0].mxu0
        %6391 = vmatprep.mubr.f32.mxu0 0.0
        %6392 = vmatmul.mubr.f32.gmra.mrb[0].mxu0 %v6300
        %v6393 = vpop.f32.mrb[0].mxu0
        %v6394 = vadd.f32 0.0, %v6393
        %v6395 = vpop.f32.mrb[0].mxu0
        %6396 = vmatprep.mubr.f32.mxu0 0.0
        %6397 = vmatmul.mubr.f32.gmra.mrb[0].mxu0 %v6303
        %v6398 = vpop.f32.mrb[0].mxu0
        %v6399 = vadd.f32 0.0, %v6398
        %v6400 = vpop.f32.mrb[0].mxu0
        %6401 = vmatprep.mubr.f32.mxu0 0.0
        %6402 = vmatmul.mubr.f32.gmra.mrb[0].mxu0 %v6306
        %v6403 = vpop.f32.mrb[0].mxu0
        %v6404 = vadd.f32 0.0, %v6403
        %v6405 = vpop.f32.mrb[0].mxu0
        %6406 = vmatprep.mubr.f32.mxu0 0.0
        %6407 = vmatmul.mubr.f32.gmra.mrb[0].mxu0 %v6309
        %v6408 = vpop.f32.mrb[0].mxu0
        %v6409 = vadd.f32 0.0, %v6408
        %v6410 = vpop.f32.mrb[0].mxu0
        %6411 = vmatprep.mubr.f32.mxu0 0.0
        %6412 = vmatmul.mubr.f32.gmra.mrb[0].mxu0 %v6312
        %v6413 = vpop.f32.mrb[0].mxu0
        %v6414 = vadd.f32 0.0, %v6413
        %v6415 = vpop.f32.mrb[0].mxu0
        %6416 = vmatprep.mubr.f32.mxu0 0.0
        %6417 = vmatmul.mubr.f32.gmra.mrb[0].mxu0 %v6315
        %v6418 = vpop.f32.mrb[0].mxu0
        %v6419 = vadd.f32 0.0, %v6418
        %v6420 = vpop.f32.mrb[0].mxu0
        %6421 = vdwg.mxu0
        %6422 = vrot.lane.b32.xlu0 %v820, 64
        %v6423 = vpop.permute.xlu0 %6422
        %6424 = vrot.lane.b32.xlu0 %v822, 64
        %v6425 = vpop.permute.xlu0 %6424
        %6426 = vrot.lane.b32.xlu0 %v824, 64
        %v6427 = vpop.permute.xlu0 %6426
        %6428 = vrot.lane.b32.xlu0 %v826, 64
        %v6429 = vpop.permute.xlu0 %6428
        %6430 = vrot.lane.b32.xlu0 %v828, 64
        %v6431 = vpop.permute.xlu0 %6430
        %6432 = vrot.lane.b32.xlu0 %v830, 64
        %v6433 = vpop.permute.xlu0 %6432
        %6434 = vrot.lane.b32.xlu0 %v832, 64
        %v6435 = vpop.permute.xlu0 %6434
        %6436 = vrot.lane.b32.xlu0 %v834, 64
        %v6437 = vpop.permute.xlu0 %6436
        %v6447 = vsel %vm3636, %v4989, 0
        %v6450 = vsel %vm3636, %v4990, 0
        %v6453 = vsel %vm3636, %v4991, 0
        %v6456 = vsel %vm3636, %v4992, 0
        %v6459 = vsel %vm3636, %v4993, 0
        %v6462 = vsel %vm3636, %v4994, 0
        %v6465 = vsel %vm3636, %v4995, 0
        %v6468 = vsel %vm3636, %v4996, 0
        %6470 = vmatprep.subr.mxu0 0.0
        %6471 = vmatpush1.msra.mxu0 %v6423
        %6472 = vmatprep.subr.mxu0 0.0
        %6473 = vmatpush1.msra.mxu0 %v6425
        %6474 = vmatprep.subr.mxu0 0.0
        %6475 = vmatpush1.msra.mxu0 %v6427
        %6476 = vmatprep.subr.mxu0 0.0
        %6477 = vmatpush1.msra.mxu0 %v6429
        %6478 = vmatprep.subr.mxu0 0.0
        %6479 = vmatpush1.msra.mxu0 %v6431
        %6480 = vmatprep.subr.mxu0 0.0
        %6481 = vmatpush1.msra.mxu0 %v6433
        %6482 = vmatprep.subr.mxu0 0.0
        %6483 = vmatpush1.msra.mxu0 %v6435
        %6484 = vmatprep.subr.mxu0 0.0
        %6485 = vmatpush1.msra.mxu0 %v6437
        %6486 = vmatprep.subr.mxu0 0.0
        %6487 = vmatpush1.msra.mxu0 0.0
        %6488 = vmatprep.subr.mxu0 0.0
        %6489 = vmatpush1.msra.mxu0 0.0
        %6490 = vmatprep.subr.mxu0 0.0
        %6491 = vmatpush1.msra.mxu0 0.0
        %6492 = vmatprep.subr.mxu0 0.0
        %6493 = vmatpush1.msra.mxu0 0.0
        %6494 = vmatprep.subr.mxu0 0.0
        %6495 = vmatpush1.msra.mxu0 0.0
        %6496 = vmatprep.subr.mxu0 0.0
        %6497 = vmatpush1.msra.mxu0 0.0
        %6498 = vmatprep.subr.mxu0 0.0
        %6499 = vmatpush1.msra.mxu0 0.0
        %6500 = vmatprep.subr.mxu0 0.0
        %6501 = vmatpush1.msra.mxu0 0.0
        %6502 = vmatprep.subr.mxu0 0.0
        %6503 = vmatpush1.msra.mxu0 0.0
        %6504 = vmatprep.subr.mxu0 0.0
        %6505 = vmatpush1.msra.mxu0 0.0
        %6506 = vmatprep.subr.mxu0 0.0
        %6507 = vmatpush1.msra.mxu0 0.0
        %6508 = vmatprep.subr.mxu0 0.0
        %6509 = vmatpush1.msra.mxu0 0.0
        %6510 = vmatprep.subr.mxu0 0.0
        %6511 = vmatpush1.msra.mxu0 0.0
        %6512 = vmatprep.subr.mxu0 0.0
        %6513 = vmatpush1.msra.mxu0 0.0
        %6514 = vmatprep.subr.mxu0 0.0
        %6515 = vmatpush1.msra.mxu0 0.0
        %6516 = vmatprep.subr.mxu0 0.0
        %6517 = vmatpush1.msra.mxu0 0.0
        %6518 = vmatprep.subr.mxu0 0.0
        %6519 = vmatpush1.msra.mxu0 0.0
        %6520 = vmatprep.subr.mxu0 0.0
        %6521 = vmatpush1.msra.mxu0 0.0
        %6522 = vmatprep.subr.mxu0 0.0
        %6523 = vmatpush1.msra.mxu0 0.0
        %6524 = vmatprep.subr.mxu0 0.0
        %6525 = vmatpush1.msra.mxu0 0.0
        %6526 = vmatprep.subr.mxu0 0.0
        %6527 = vmatpush1.msra.mxu0 0.0
        %6528 = vmatprep.subr.mxu0 0.0
        %6529 = vmatpush1.msra.mxu0 0.0
        %6530 = vmatprep.subr.mxu0 0.0
        %6531 = vmatpush1.msra.mxu0 0.0
        %6532 = vmatprep.subr.mxu0 0.0
        %6533 = vmatpush1.msra.mxu0 0.0
        %6534 = vmatprep.mubr.f32.mxu0 0.0
        %6535 = vmatmul.mubr.f32.gmra.mrb[0].mxu0 %v6447
        %v6536 = vpop.f32.mrb[0].mxu0
        %v6537 = vadd.f32 0.0, %v6536
        %v6538 = vpop.f32.mrb[0].mxu0
        %6539 = vmatprep.mubr.f32.mxu0 0.0
        %6540 = vmatmul.mubr.f32.gmra.mrb[0].mxu0 %v6450
        %v6541 = vpop.f32.mrb[0].mxu0
        %v6542 = vadd.f32 0.0, %v6541
        %v6543 = vpop.f32.mrb[0].mxu0
        %6544 = vmatprep.mubr.f32.mxu0 0.0
        %6545 = vmatmul.mubr.f32.gmra.mrb[0].mxu0 %v6453
        %v6546 = vpop.f32.mrb[0].mxu0
        %v6547 = vadd.f32 0.0, %v6546
        %v6548 = vpop.f32.mrb[0].mxu0
        %6549 = vmatprep.mubr.f32.mxu0 0.0
        %6550 = vmatmul.mubr.f32.gmra.mrb[0].mxu0 %v6456
        %v6551 = vpop.f32.mrb[0].mxu0
        %v6552 = vadd.f32 0.0, %v6551
        %v6553 = vpop.f32.mrb[0].mxu0
        %6554 = vmatprep.mubr.f32.mxu0 0.0
        %6555 = vmatmul.mubr.f32.gmra.mrb[0].mxu0 %v6459
        %v6556 = vpop.f32.mrb[0].mxu0
        %v6557 = vadd.f32 0.0, %v6556
        %v6558 = vpop.f32.mrb[0].mxu0
        %6559 = vmatprep.mubr.f32.mxu0 0.0
        %6560 = vmatmul.mubr.f32.gmra.mrb[0].mxu0 %v6462
        %v6561 = vpop.f32.mrb[0].mxu0
        %v6562 = vadd.f32 0.0, %v6561
        %v6563 = vpop.f32.mrb[0].mxu0
        %6564 = vmatprep.mubr.f32.mxu0 0.0
        %6565 = vmatmul.mubr.f32.gmra.mrb[0].mxu0 %v6465
        %v6566 = vpop.f32.mrb[0].mxu0
        %v6567 = vadd.f32 0.0, %v6566
        %v6568 = vpop.f32.mrb[0].mxu0
        %6569 = vmatprep.mubr.f32.mxu0 0.0
        %6570 = vmatmul.mubr.f32.gmra.mrb[0].mxu0 %v6468
        %v6571 = vpop.f32.mrb[0].mxu0
        %v6572 = vadd.f32 0.0, %v6571
        %v6573 = vpop.f32.mrb[0].mxu0
        %6574 = vdwg.mxu0
        %6575 = vrot.lane.b32.xlu0 %v836, 64
        %v6576 = vpop.permute.xlu0 %6575
        %6577 = vrot.lane.b32.xlu0 %v838, 64
        %v6578 = vpop.permute.xlu0 %6577
        %6579 = vrot.lane.b32.xlu0 %v840, 64
        %v6580 = vpop.permute.xlu0 %6579
        %6581 = vrot.lane.b32.xlu0 %v842, 64
        %v6582 = vpop.permute.xlu0 %6581
        %6583 = vrot.lane.b32.xlu0 %v844, 64
        %v6584 = vpop.permute.xlu0 %6583
        %6585 = vrot.lane.b32.xlu0 %v846, 64
        %v6586 = vpop.permute.xlu0 %6585
        %6587 = vrot.lane.b32.xlu0 %v848, 64
        %v6588 = vpop.permute.xlu0 %6587
        %6589 = vrot.lane.b32.xlu0 %v850, 64
        %v6590 = vpop.permute.xlu0 %6589
        %v6600 = vsel %vm3636, %v4997, 0
        %v6603 = vsel %vm3636, %v4998, 0
        %v6606 = vsel %vm3636, %v4999, 0
        %v6609 = vsel %vm3636, %v5000, 0
        %v6612 = vsel %vm3636, %v5001, 0
        %v6615 = vsel %vm3636, %v5002, 0
        %v6618 = vsel %vm3636, %v5003, 0
        %v6621 = vsel %vm3636, %v5004, 0
        %6623 = vmatprep.subr.mxu0 0.0
        %6624 = vmatpush1.msra.mxu0 %v6576
        %6625 = vmatprep.subr.mxu0 0.0
        %6626 = vmatpush1.msra.mxu0 %v6578
        %6627 = vmatprep.subr.mxu0 0.0
        %6628 = vmatpush1.msra.mxu0 %v6580
        %6629 = vmatprep.subr.mxu0 0.0
        %6630 = vmatpush1.msra.mxu0 %v6582
        %6631 = vmatprep.subr.mxu0 0.0
        %6632 = vmatpush1.msra.mxu0 %v6584
        %6633 = vmatprep.subr.mxu0 0.0
        %6634 = vmatpush1.msra.mxu0 %v6586
        %6635 = vmatprep.subr.mxu0 0.0
        %6636 = vmatpush1.msra.mxu0 %v6588
        %6637 = vmatprep.subr.mxu0 0.0
        %6638 = vmatpush1.msra.mxu0 %v6590
        %6639 = vmatprep.subr.mxu0 0.0
        %6640 = vmatpush1.msra.mxu0 0.0
        %6641 = vmatprep.subr.mxu0 0.0
        %6642 = vmatpush1.msra.mxu0 0.0
        %6643 = vmatprep.subr.mxu0 0.0
        %6644 = vmatpush1.msra.mxu0 0.0
        %6645 = vmatprep.subr.mxu0 0.0
        %6646 = vmatpush1.msra.mxu0 0.0
        %6647 = vmatprep.subr.mxu0 0.0
        %6648 = vmatpush1.msra.mxu0 0.0
        %6649 = vmatprep.subr.mxu0 0.0
        %6650 = vmatpush1.msra.mxu0 0.0
        %6651 = vmatprep.subr.mxu0 0.0
        %6652 = vmatpush1.msra.mxu0 0.0
        %6653 = vmatprep.subr.mxu0 0.0
        %6654 = vmatpush1.msra.mxu0 0.0
        %6655 = vmatprep.subr.mxu0 0.0
        %6656 = vmatpush1.msra.mxu0 0.0
        %6657 = vmatprep.subr.mxu0 0.0
        %6658 = vmatpush1.msra.mxu0 0.0
        %6659 = vmatprep.subr.mxu0 0.0
        %6660 = vmatpush1.msra.mxu0 0.0
        %6661 = vmatprep.subr.mxu0 0.0
        %6662 = vmatpush1.msra.mxu0 0.0
        %6663 = vmatprep.subr.mxu0 0.0
        %6664 = vmatpush1.msra.mxu0 0.0
        %6665 = vmatprep.subr.mxu0 0.0
        %6666 = vmatpush1.msra.mxu0 0.0
        %6667 = vmatprep.subr.mxu0 0.0
        %6668 = vmatpush1.msra.mxu0 0.0
        %6669 = vmatprep.subr.mxu0 0.0
        %6670 = vmatpush1.msra.mxu0 0.0
        %6671 = vmatprep.subr.mxu0 0.0
        %6672 = vmatpush1.msra.mxu0 0.0
        %6673 = vmatprep.subr.mxu0 0.0
        %6674 = vmatpush1.msra.mxu0 0.0
        %6675 = vmatprep.subr.mxu0 0.0
        %6676 = vmatpush1.msra.mxu0 0.0
        %6677 = vmatprep.subr.mxu0 0.0
        %6678 = vmatpush1.msra.mxu0 0.0
        %6679 = vmatprep.subr.mxu0 0.0
        %6680 = vmatpush1.msra.mxu0 0.0
        %6681 = vmatprep.subr.mxu0 0.0
        %6682 = vmatpush1.msra.mxu0 0.0
        %6683 = vmatprep.subr.mxu0 0.0
        %6684 = vmatpush1.msra.mxu0 0.0
        %6685 = vmatprep.subr.mxu0 0.0
        %6686 = vmatpush1.msra.mxu0 0.0
        %6687 = vmatprep.mubr.f32.mxu0 0.0
        %6688 = vmatmul.mubr.f32.gmra.mrb[0].mxu0 %v6600
        %v6689 = vpop.f32.mrb[0].mxu0
        %v6690 = vadd.f32 0.0, %v6689
        %v6691 = vpop.f32.mrb[0].mxu0
        %6692 = vmatprep.mubr.f32.mxu0 0.0
        %6693 = vmatmul.mubr.f32.gmra.mrb[0].mxu0 %v6603
        %v6694 = vpop.f32.mrb[0].mxu0
        %v6695 = vadd.f32 0.0, %v6694
        %v6696 = vpop.f32.mrb[0].mxu0
        %6697 = vmatprep.mubr.f32.mxu0 0.0
        %6698 = vmatmul.mubr.f32.gmra.mrb[0].mxu0 %v6606
        %v6699 = vpop.f32.mrb[0].mxu0
        %v6700 = vadd.f32 0.0, %v6699
        %v6701 = vpop.f32.mrb[0].mxu0
        %6702 = vmatprep.mubr.f32.mxu0 0.0
        %6703 = vmatmul.mubr.f32.gmra.mrb[0].mxu0 %v6609
        %v6704 = vpop.f32.mrb[0].mxu0
        %v6705 = vadd.f32 0.0, %v6704
        %v6706 = vpop.f32.mrb[0].mxu0
        %6707 = vmatprep.mubr.f32.mxu0 0.0
        %6708 = vmatmul.mubr.f32.gmra.mrb[0].mxu0 %v6612
        %v6709 = vpop.f32.mrb[0].mxu0
        %v6710 = vadd.f32 0.0, %v6709
        %v6711 = vpop.f32.mrb[0].mxu0
        %6712 = vmatprep.mubr.f32.mxu0 0.0
        %6713 = vmatmul.mubr.f32.gmra.mrb[0].mxu0 %v6615
        %v6714 = vpop.f32.mrb[0].mxu0
        %v6715 = vadd.f32 0.0, %v6714
        %v6716 = vpop.f32.mrb[0].mxu0
        %6717 = vmatprep.mubr.f32.mxu0 0.0
        %6718 = vmatmul.mubr.f32.gmra.mrb[0].mxu0 %v6618
        %v6719 = vpop.f32.mrb[0].mxu0
        %v6720 = vadd.f32 0.0, %v6719
        %v6721 = vpop.f32.mrb[0].mxu0
        %6722 = vmatprep.mubr.f32.mxu0 0.0
        %6723 = vmatmul.mubr.f32.gmra.mrb[0].mxu0 %v6621
        %v6724 = vpop.f32.mrb[0].mxu0
        %v6725 = vadd.f32 0.0, %v6724
        %v6726 = vpop.f32.mrb[0].mxu0
        %6727 = vdwg.mxu0
        %6728 = vrot.lane.b32.xlu0 %v852, 64
        %v6729 = vpop.permute.xlu0 %6728
        %6730 = vrot.lane.b32.xlu0 %v854, 64
        %v6731 = vpop.permute.xlu0 %6730
        %6732 = vrot.lane.b32.xlu0 %v856, 64
        %v6733 = vpop.permute.xlu0 %6732
        %6734 = vrot.lane.b32.xlu0 %v858, 64
        %v6735 = vpop.permute.xlu0 %6734
        %6736 = vrot.lane.b32.xlu0 %v860, 64
        %v6737 = vpop.permute.xlu0 %6736
        %6738 = vrot.lane.b32.xlu0 %v862, 64
        %v6739 = vpop.permute.xlu0 %6738
        %6740 = vrot.lane.b32.xlu0 %v864, 64
        %v6741 = vpop.permute.xlu0 %6740
        %6742 = vrot.lane.b32.xlu0 %v866, 64
        %v6743 = vpop.permute.xlu0 %6742
        %v6753 = vsel %vm3636, %v5005, 0
        %v6756 = vsel %vm3636, %v5006, 0
        %v6759 = vsel %vm3636, %v5007, 0
        %v6762 = vsel %vm3636, %v5008, 0
        %v6765 = vsel %vm3636, %v5009, 0
        %v6768 = vsel %vm3636, %v5010, 0
        %v6771 = vsel %vm3636, %v5011, 0
        %v6774 = vsel %vm3636, %v5012, 0
        %6776 = vmatprep.subr.mxu0 0.0
        %6777 = vmatpush1.msra.mxu0 %v6729
        %6778 = vmatprep.subr.mxu0 0.0
        %6779 = vmatpush1.msra.mxu0 %v6731
        %6780 = vmatprep.subr.mxu0 0.0
        %6781 = vmatpush1.msra.mxu0 %v6733
        %6782 = vmatprep.subr.mxu0 0.0
        %6783 = vmatpush1.msra.mxu0 %v6735
        %6784 = vmatprep.subr.mxu0 0.0
        %6785 = vmatpush1.msra.mxu0 %v6737
        %6786 = vmatprep.subr.mxu0 0.0
        %6787 = vmatpush1.msra.mxu0 %v6739
        %6788 = vmatprep.subr.mxu0 0.0
        %6789 = vmatpush1.msra.mxu0 %v6741
        %6790 = vmatprep.subr.mxu0 0.0
        %6791 = vmatpush1.msra.mxu0 %v6743
        %6792 = vmatprep.subr.mxu0 0.0
        %6793 = vmatpush1.msra.mxu0 0.0
        %6794 = vmatprep.subr.mxu0 0.0
        %6795 = vmatpush1.msra.mxu0 0.0
        %6796 = vmatprep.subr.mxu0 0.0
        %6797 = vmatpush1.msra.mxu0 0.0
        %6798 = vmatprep.subr.mxu0 0.0
        %6799 = vmatpush1.msra.mxu0 0.0
        %6800 = vmatprep.subr.mxu0 0.0
        %6801 = vmatpush1.msra.mxu0 0.0
        %6802 = vmatprep.subr.mxu0 0.0
        %6803 = vmatpush1.msra.mxu0 0.0
        %6804 = vmatprep.subr.mxu0 0.0
        %6805 = vmatpush1.msra.mxu0 0.0
        %6806 = vmatprep.subr.mxu0 0.0
        %6807 = vmatpush1.msra.mxu0 0.0
        %6808 = vmatprep.subr.mxu0 0.0
        %6809 = vmatpush1.msra.mxu0 0.0
        %6810 = vmatprep.subr.mxu0 0.0
        %6811 = vmatpush1.msra.mxu0 0.0
        %6812 = vmatprep.subr.mxu0 0.0
        %6813 = vmatpush1.msra.mxu0 0.0
        %6814 = vmatprep.subr.mxu0 0.0
        %6815 = vmatpush1.msra.mxu0 0.0
        %6816 = vmatprep.subr.mxu0 0.0
        %6817 = vmatpush1.msra.mxu0 0.0
        %6818 = vmatprep.subr.mxu0 0.0
        %6819 = vmatpush1.msra.mxu0 0.0
        %6820 = vmatprep.subr.mxu0 0.0
        %6821 = vmatpush1.msra.mxu0 0.0
        %6822 = vmatprep.subr.mxu0 0.0
        %6823 = vmatpush1.msra.mxu0 0.0
        %6824 = vmatprep.subr.mxu0 0.0
        %6825 = vmatpush1.msra.mxu0 0.0
        %6826 = vmatprep.subr.mxu0 0.0
        %6827 = vmatpush1.msra.mxu0 0.0
        %6828 = vmatprep.subr.mxu0 0.0
        %6829 = vmatpush1.msra.mxu0 0.0
        %6830 = vmatprep.subr.mxu0 0.0
        %6831 = vmatpush1.msra.mxu0 0.0
        %6832 = vmatprep.subr.mxu0 0.0
        %6833 = vmatpush1.msra.mxu0 0.0
        %6834 = vmatprep.subr.mxu0 0.0
        %6835 = vmatpush1.msra.mxu0 0.0
        %6836 = vmatprep.subr.mxu0 0.0
        %6837 = vmatpush1.msra.mxu0 0.0
        %6838 = vmatprep.subr.mxu0 0.0
        %6839 = vmatpush1.msra.mxu0 0.0
        %6840 = vmatprep.mubr.f32.mxu0 0.0
        %6841 = vmatmul.mubr.f32.gmra.mrb[0].mxu0 %v6753
        %v6842 = vpop.f32.mrb[0].mxu0
        %v6843 = vadd.f32 0.0, %v6842
        %v6844 = vpop.f32.mrb[0].mxu0
        %6845 = vmatprep.mubr.f32.mxu0 0.0
        %6846 = vmatmul.mubr.f32.gmra.mrb[0].mxu0 %v6756
        %v6847 = vpop.f32.mrb[0].mxu0
        %v6848 = vadd.f32 0.0, %v6847
        %v6849 = vpop.f32.mrb[0].mxu0
        %6850 = vmatprep.mubr.f32.mxu0 0.0
        %6851 = vmatmul.mubr.f32.gmra.mrb[0].mxu0 %v6759
        %v6852 = vpop.f32.mrb[0].mxu0
        %v6853 = vadd.f32 0.0, %v6852
        %v6854 = vpop.f32.mrb[0].mxu0
        %6855 = vmatprep.mubr.f32.mxu0 0.0
        %6856 = vmatmul.mubr.f32.gmra.mrb[0].mxu0 %v6762
        %v6857 = vpop.f32.mrb[0].mxu0
        %v6858 = vadd.f32 0.0, %v6857
        %v6859 = vpop.f32.mrb[0].mxu0
        %6860 = vmatprep.mubr.f32.mxu0 0.0
        %6861 = vmatmul.mubr.f32.gmra.mrb[0].mxu0 %v6765
        %v6862 = vpop.f32.mrb[0].mxu0
        %v6863 = vadd.f32 0.0, %v6862
        %v6864 = vpop.f32.mrb[0].mxu0
        %6865 = vmatprep.mubr.f32.mxu0 0.0
        %6866 = vmatmul.mubr.f32.gmra.mrb[0].mxu0 %v6768
        %v6867 = vpop.f32.mrb[0].mxu0
        %v6868 = vadd.f32 0.0, %v6867
        %v6869 = vpop.f32.mrb[0].mxu0
        %6870 = vmatprep.mubr.f32.mxu0 0.0
        %6871 = vmatmul.mubr.f32.gmra.mrb[0].mxu0 %v6771
        %v6872 = vpop.f32.mrb[0].mxu0
        %v6873 = vadd.f32 0.0, %v6872
        %v6874 = vpop.f32.mrb[0].mxu0
        %6875 = vmatprep.mubr.f32.mxu0 0.0
        %6876 = vmatmul.mubr.f32.gmra.mrb[0].mxu0 %v6774
        %v6877 = vpop.f32.mrb[0].mxu0
        %v6878 = vadd.f32 0.0, %v6877
        %v6879 = vpop.f32.mrb[0].mxu0
        %6880 = vdwg.mxu0
        %6881 = vrot.lane.b32.xlu0 %v868, 64
        %v6882 = vpop.permute.xlu0 %6881
        %6883 = vrot.lane.b32.xlu0 %v870, 64
        %v6884 = vpop.permute.xlu0 %6883
        %6885 = vrot.lane.b32.xlu0 %v872, 64
        %v6886 = vpop.permute.xlu0 %6885
        %6887 = vrot.lane.b32.xlu0 %v874, 64
        %v6888 = vpop.permute.xlu0 %6887
        %6889 = vrot.lane.b32.xlu0 %v876, 64
        %v6890 = vpop.permute.xlu0 %6889
        %6891 = vrot.lane.b32.xlu0 %v878, 64
        %v6892 = vpop.permute.xlu0 %6891
        %6893 = vrot.lane.b32.xlu0 %v880, 64
        %v6894 = vpop.permute.xlu0 %6893
        %6895 = vrot.lane.b32.xlu0 %v882, 64
        %v6896 = vpop.permute.xlu0 %6895
        %v6906 = vsel %vm3636, %v5013, 0
        %v6909 = vsel %vm3636, %v5014, 0
        %v6912 = vsel %vm3636, %v5015, 0
        %v6915 = vsel %vm3636, %v5016, 0
        %v6918 = vsel %vm3636, %v5017, 0
        %v6921 = vsel %vm3636, %v5018, 0
        %v6924 = vsel %vm3636, %v5019, 0
        %v6927 = vsel %vm3636, %v5020, 0
        %6929 = vmatprep.subr.mxu0 0.0
        %6930 = vmatpush1.msra.mxu0 %v6882
        %6931 = vmatprep.subr.mxu0 0.0
        %6932 = vmatpush1.msra.mxu0 %v6884
        %6933 = vmatprep.subr.mxu0 0.0
        %6934 = vmatpush1.msra.mxu0 %v6886
        %6935 = vmatprep.subr.mxu0 0.0
        %6936 = vmatpush1.msra.mxu0 %v6888
        %6937 = vmatprep.subr.mxu0 0.0
        %6938 = vmatpush1.msra.mxu0 %v6890
        %6939 = vmatprep.subr.mxu0 0.0
        %6940 = vmatpush1.msra.mxu0 %v6892
        %6941 = vmatprep.subr.mxu0 0.0
        %6942 = vmatpush1.msra.mxu0 %v6894
        %6943 = vmatprep.subr.mxu0 0.0
        %6944 = vmatpush1.msra.mxu0 %v6896
        %6945 = vmatprep.subr.mxu0 0.0
        %6946 = vmatpush1.msra.mxu0 0.0
        %6947 = vmatprep.subr.mxu0 0.0
        %6948 = vmatpush1.msra.mxu0 0.0
        %6949 = vmatprep.subr.mxu0 0.0
        %6950 = vmatpush1.msra.mxu0 0.0
        %6951 = vmatprep.subr.mxu0 0.0
        %6952 = vmatpush1.msra.mxu0 0.0
        %6953 = vmatprep.subr.mxu0 0.0
        %6954 = vmatpush1.msra.mxu0 0.0
        %6955 = vmatprep.subr.mxu0 0.0
        %6956 = vmatpush1.msra.mxu0 0.0
        %6957 = vmatprep.subr.mxu0 0.0
        %6958 = vmatpush1.msra.mxu0 0.0
        %6959 = vmatprep.subr.mxu0 0.0
        %6960 = vmatpush1.msra.mxu0 0.0
        %6961 = vmatprep.subr.mxu0 0.0
        %6962 = vmatpush1.msra.mxu0 0.0
        %6963 = vmatprep.subr.mxu0 0.0
        %6964 = vmatpush1.msra.mxu0 0.0
        %6965 = vmatprep.subr.mxu0 0.0
        %6966 = vmatpush1.msra.mxu0 0.0
        %6967 = vmatprep.subr.mxu0 0.0
        %6968 = vmatpush1.msra.mxu0 0.0
        %6969 = vmatprep.subr.mxu0 0.0
        %6970 = vmatpush1.msra.mxu0 0.0
        %6971 = vmatprep.subr.mxu0 0.0
        %6972 = vmatpush1.msra.mxu0 0.0
        %6973 = vmatprep.subr.mxu0 0.0
        %6974 = vmatpush1.msra.mxu0 0.0
        %6975 = vmatprep.subr.mxu0 0.0
        %6976 = vmatpush1.msra.mxu0 0.0
        %6977 = vmatprep.subr.mxu0 0.0
        %6978 = vmatpush1.msra.mxu0 0.0
        %6979 = vmatprep.subr.mxu0 0.0
        %6980 = vmatpush1.msra.mxu0 0.0
        %6981 = vmatprep.subr.mxu0 0.0
        %6982 = vmatpush1.msra.mxu0 0.0
        %6983 = vmatprep.subr.mxu0 0.0
        %6984 = vmatpush1.msra.mxu0 0.0
        %6985 = vmatprep.subr.mxu0 0.0
        %6986 = vmatpush1.msra.mxu0 0.0
        %6987 = vmatprep.subr.mxu0 0.0
        %6988 = vmatpush1.msra.mxu0 0.0
        %6989 = vmatprep.subr.mxu0 0.0
        %6990 = vmatpush1.msra.mxu0 0.0
        %6991 = vmatprep.subr.mxu0 0.0
        %6992 = vmatpush1.msra.mxu0 0.0
        %6993 = vmatprep.mubr.f32.mxu0 0.0
        %6994 = vmatmul.mubr.f32.gmra.mrb[0].mxu0 %v6906
        %v6995 = vpop.f32.mrb[0].mxu0
        %v6996 = vadd.f32 0.0, %v6995
        %v6997 = vpop.f32.mrb[0].mxu0
        %6998 = vmatprep.mubr.f32.mxu0 0.0
        %6999 = vmatmul.mubr.f32.gmra.mrb[0].mxu0 %v6909
        %v7000 = vpop.f32.mrb[0].mxu0
        %v7001 = vadd.f32 0.0, %v7000
        %v7002 = vpop.f32.mrb[0].mxu0
        %7003 = vmatprep.mubr.f32.mxu0 0.0
        %7004 = vmatmul.mubr.f32.gmra.mrb[0].mxu0 %v6912
        %v7005 = vpop.f32.mrb[0].mxu0
        %v7006 = vadd.f32 0.0, %v7005
        %v7007 = vpop.f32.mrb[0].mxu0
        %7008 = vmatprep.mubr.f32.mxu0 0.0
        %7009 = vmatmul.mubr.f32.gmra.mrb[0].mxu0 %v6915
        %v7010 = vpop.f32.mrb[0].mxu0
        %v7011 = vadd.f32 0.0, %v7010
        %v7012 = vpop.f32.mrb[0].mxu0
        %7013 = vmatprep.mubr.f32.mxu0 0.0
        %7014 = vmatmul.mubr.f32.gmra.mrb[0].mxu0 %v6918
        %v7015 = vpop.f32.mrb[0].mxu0
        %v7016 = vadd.f32 0.0, %v7015
        %v7017 = vpop.f32.mrb[0].mxu0
        %7018 = vmatprep.mubr.f32.mxu0 0.0
        %7019 = vmatmul.mubr.f32.gmra.mrb[0].mxu0 %v6921
        %v7020 = vpop.f32.mrb[0].mxu0
        %v7021 = vadd.f32 0.0, %v7020
        %v7022 = vpop.f32.mrb[0].mxu0
        %7023 = vmatprep.mubr.f32.mxu0 0.0
        %7024 = vmatmul.mubr.f32.gmra.mrb[0].mxu0 %v6924
        %v7025 = vpop.f32.mrb[0].mxu0
        %v7026 = vadd.f32 0.0, %v7025
        %v7027 = vpop.f32.mrb[0].mxu0
        %7028 = vmatprep.mubr.f32.mxu0 0.0
        %7029 = vmatmul.mubr.f32.gmra.mrb[0].mxu0 %v6927
        %v7030 = vpop.f32.mrb[0].mxu0
        %v7031 = vadd.f32 0.0, %v7030
        %v7032 = vpop.f32.mrb[0].mxu0
        %7033 = vdwg.mxu0
        %7034 = vrot.lane.b32.xlu0 %v884, 64
        %v7035 = vpop.permute.xlu0 %7034
        %7036 = vrot.lane.b32.xlu0 %v886, 64
        %v7037 = vpop.permute.xlu0 %7036
        %7038 = vrot.lane.b32.xlu0 %v888, 64
        %v7039 = vpop.permute.xlu0 %7038
        %7040 = vrot.lane.b32.xlu0 %v890, 64
        %v7041 = vpop.permute.xlu0 %7040
        %7042 = vrot.lane.b32.xlu0 %v892, 64
        %v7043 = vpop.permute.xlu0 %7042
        %7044 = vrot.lane.b32.xlu0 %v894, 64
        %v7045 = vpop.permute.xlu0 %7044
        %7046 = vrot.lane.b32.xlu0 %v896, 64
        %v7047 = vpop.permute.xlu0 %7046
        %7048 = vrot.lane.b32.xlu0 %v898, 64
        %v7049 = vpop.permute.xlu0 %7048
        %v7059 = vsel %vm3636, %v5021, 0
        %v7062 = vsel %vm3636, %v5022, 0
        %v7065 = vsel %vm3636, %v5023, 0
        %v7068 = vsel %vm3636, %v5024, 0
        %v7071 = vsel %vm3636, %v5025, 0
        %v7074 = vsel %vm3636, %v5026, 0
        %v7077 = vsel %vm3636, %v5027, 0
        %v7080 = vsel %vm3636, %v5028, 0
        %7082 = vmatprep.subr.mxu0 0.0
        %7083 = vmatpush1.msra.mxu0 %v7035
        %7084 = vmatprep.subr.mxu0 0.0
        %7085 = vmatpush1.msra.mxu0 %v7037
        %7086 = vmatprep.subr.mxu0 0.0
        %7087 = vmatpush1.msra.mxu0 %v7039
        %7088 = vmatprep.subr.mxu0 0.0
        %7089 = vmatpush1.msra.mxu0 %v7041
        %7090 = vmatprep.subr.mxu0 0.0
        %7091 = vmatpush1.msra.mxu0 %v7043
        %7092 = vmatprep.subr.mxu0 0.0
        %7093 = vmatpush1.msra.mxu0 %v7045
        %7094 = vmatprep.subr.mxu0 0.0
        %7095 = vmatpush1.msra.mxu0 %v7047
        %7096 = vmatprep.subr.mxu0 0.0
        %7097 = vmatpush1.msra.mxu0 %v7049
        %7098 = vmatprep.subr.mxu0 0.0
        %7099 = vmatpush1.msra.mxu0 0.0
        %7100 = vmatprep.subr.mxu0 0.0
        %7101 = vmatpush1.msra.mxu0 0.0
        %7102 = vmatprep.subr.mxu0 0.0
        %7103 = vmatpush1.msra.mxu0 0.0
        %7104 = vmatprep.subr.mxu0 0.0
        %7105 = vmatpush1.msra.mxu0 0.0
        %7106 = vmatprep.subr.mxu0 0.0
        %7107 = vmatpush1.msra.mxu0 0.0
        %7108 = vmatprep.subr.mxu0 0.0
        %7109 = vmatpush1.msra.mxu0 0.0
        %7110 = vmatprep.subr.mxu0 0.0
        %7111 = vmatpush1.msra.mxu0 0.0
        %7112 = vmatprep.subr.mxu0 0.0
        %7113 = vmatpush1.msra.mxu0 0.0
        %7114 = vmatprep.subr.mxu0 0.0
        %7115 = vmatpush1.msra.mxu0 0.0
        %7116 = vmatprep.subr.mxu0 0.0
        %7117 = vmatpush1.msra.mxu0 0.0
        %7118 = vmatprep.subr.mxu0 0.0
        %7119 = vmatpush1.msra.mxu0 0.0
        %7120 = vmatprep.subr.mxu0 0.0
        %7121 = vmatpush1.msra.mxu0 0.0
        %7122 = vmatprep.subr.mxu0 0.0
        %7123 = vmatpush1.msra.mxu0 0.0
        %7124 = vmatprep.subr.mxu0 0.0
        %7125 = vmatpush1.msra.mxu0 0.0
        %7126 = vmatprep.subr.mxu0 0.0
        %7127 = vmatpush1.msra.mxu0 0.0
        %7128 = vmatprep.subr.mxu0 0.0
        %7129 = vmatpush1.msra.mxu0 0.0
        %7130 = vmatprep.subr.mxu0 0.0
        %7131 = vmatpush1.msra.mxu0 0.0
        %7132 = vmatprep.subr.mxu0 0.0
        %7133 = vmatpush1.msra.mxu0 0.0
        %7134 = vmatprep.subr.mxu0 0.0
        %7135 = vmatpush1.msra.mxu0 0.0
        %7136 = vmatprep.subr.mxu0 0.0
        %7137 = vmatpush1.msra.mxu0 0.0
        %7138 = vmatprep.subr.mxu0 0.0
        %7139 = vmatpush1.msra.mxu0 0.0
        %7140 = vmatprep.subr.mxu0 0.0
        %7141 = vmatpush1.msra.mxu0 0.0
        %7142 = vmatprep.subr.mxu0 0.0
        %7143 = vmatpush1.msra.mxu0 0.0
        %7144 = vmatprep.subr.mxu0 0.0
        %7145 = vmatpush1.msra.mxu0 0.0
        %7146 = vmatprep.mubr.f32.mxu0 0.0
        %7147 = vmatmul.mubr.f32.gmra.mrb[0].mxu0 %v7059
        %v7148 = vpop.f32.mrb[0].mxu0
        %v7149 = vadd.f32 0.0, %v7148
        %v7150 = vpop.f32.mrb[0].mxu0
        %7151 = vmatprep.mubr.f32.mxu0 0.0
        %7152 = vmatmul.mubr.f32.gmra.mrb[0].mxu0 %v7062
        %v7153 = vpop.f32.mrb[0].mxu0
        %v7154 = vadd.f32 0.0, %v7153
        %v7155 = vpop.f32.mrb[0].mxu0
        %7156 = vmatprep.mubr.f32.mxu0 0.0
        %7157 = vmatmul.mubr.f32.gmra.mrb[0].mxu0 %v7065
        %v7158 = vpop.f32.mrb[0].mxu0
        %v7159 = vadd.f32 0.0, %v7158
        %v7160 = vpop.f32.mrb[0].mxu0
        %7161 = vmatprep.mubr.f32.mxu0 0.0
        %7162 = vmatmul.mubr.f32.gmra.mrb[0].mxu0 %v7068
        %v7163 = vpop.f32.mrb[0].mxu0
        %v7164 = vadd.f32 0.0, %v7163
        %v7165 = vpop.f32.mrb[0].mxu0
        %7166 = vmatprep.mubr.f32.mxu0 0.0
        %7167 = vmatmul.mubr.f32.gmra.mrb[0].mxu0 %v7071
        %v7168 = vpop.f32.mrb[0].mxu0
        %v7169 = vadd.f32 0.0, %v7168
        %v7170 = vpop.f32.mrb[0].mxu0
        %7171 = vmatprep.mubr.f32.mxu0 0.0
        %7172 = vmatmul.mubr.f32.gmra.mrb[0].mxu0 %v7074
        %v7173 = vpop.f32.mrb[0].mxu0
        %v7174 = vadd.f32 0.0, %v7173
        %v7175 = vpop.f32.mrb[0].mxu0
        %7176 = vmatprep.mubr.f32.mxu0 0.0
        %7177 = vmatmul.mubr.f32.gmra.mrb[0].mxu0 %v7077
        %v7178 = vpop.f32.mrb[0].mxu0
        %v7179 = vadd.f32 0.0, %v7178
        %v7180 = vpop.f32.mrb[0].mxu0
        %7181 = vmatprep.mubr.f32.mxu0 0.0
        %7182 = vmatmul.mubr.f32.gmra.mrb[0].mxu0 %v7080
        %v7183 = vpop.f32.mrb[0].mxu0
        %v7184 = vadd.f32 0.0, %v7183
        %v7185 = vpop.f32.mrb[0].mxu0
        %7186 = vdwg.mxu0
        %7187 = vrot.lane.b32.xlu0 %v900, 64
        %v7188 = vpop.permute.xlu0 %7187
        %7189 = vrot.lane.b32.xlu0 %v902, 64
        %v7190 = vpop.permute.xlu0 %7189
        %7191 = vrot.lane.b32.xlu0 %v904, 64
        %v7192 = vpop.permute.xlu0 %7191
        %7193 = vrot.lane.b32.xlu0 %v906, 64
        %v7194 = vpop.permute.xlu0 %7193
        %7195 = vrot.lane.b32.xlu0 %v908, 64
        %v7196 = vpop.permute.xlu0 %7195
        %7197 = vrot.lane.b32.xlu0 %v910, 64
        %v7198 = vpop.permute.xlu0 %7197
        %7199 = vrot.lane.b32.xlu0 %v912, 64
        %v7200 = vpop.permute.xlu0 %7199
        %7201 = vrot.lane.b32.xlu0 %v914, 64
        %v7202 = vpop.permute.xlu0 %7201
        %v7212 = vsel %vm3636, %v5029, 0
        %v7215 = vsel %vm3636, %v5030, 0
        %v7218 = vsel %vm3636, %v5031, 0
        %v7221 = vsel %vm3636, %v5032, 0
        %v7224 = vsel %vm3636, %v5033, 0
        %v7227 = vsel %vm3636, %v5034, 0
        %v7230 = vsel %vm3636, %v5035, 0
        %v7233 = vsel %vm3636, %v5036, 0
        %7235 = vmatprep.subr.mxu0 0.0
        %7236 = vmatpush1.msra.mxu0 %v7188
        %7237 = vmatprep.subr.mxu0 0.0
        %7238 = vmatpush1.msra.mxu0 %v7190
        %7239 = vmatprep.subr.mxu0 0.0
        %7240 = vmatpush1.msra.mxu0 %v7192
        %7241 = vmatprep.subr.mxu0 0.0
        %7242 = vmatpush1.msra.mxu0 %v7194
        %7243 = vmatprep.subr.mxu0 0.0
        %7244 = vmatpush1.msra.mxu0 %v7196
        %7245 = vmatprep.subr.mxu0 0.0
        %7246 = vmatpush1.msra.mxu0 %v7198
        %7247 = vmatprep.subr.mxu0 0.0
        %7248 = vmatpush1.msra.mxu0 %v7200
        %7249 = vmatprep.subr.mxu0 0.0
        %7250 = vmatpush1.msra.mxu0 %v7202
        %7251 = vmatprep.subr.mxu0 0.0
        %7252 = vmatpush1.msra.mxu0 0.0
        %7253 = vmatprep.subr.mxu0 0.0
        %7254 = vmatpush1.msra.mxu0 0.0
        %7255 = vmatprep.subr.mxu0 0.0
        %7256 = vmatpush1.msra.mxu0 0.0
        %7257 = vmatprep.subr.mxu0 0.0
        %7258 = vmatpush1.msra.mxu0 0.0
        %7259 = vmatprep.subr.mxu0 0.0
        %7260 = vmatpush1.msra.mxu0 0.0
        %7261 = vmatprep.subr.mxu0 0.0
        %7262 = vmatpush1.msra.mxu0 0.0
        %7263 = vmatprep.subr.mxu0 0.0
        %7264 = vmatpush1.msra.mxu0 0.0
        %7265 = vmatprep.subr.mxu0 0.0
        %7266 = vmatpush1.msra.mxu0 0.0
        %7267 = vmatprep.subr.mxu0 0.0
        %7268 = vmatpush1.msra.mxu0 0.0
        %7269 = vmatprep.subr.mxu0 0.0
        %7270 = vmatpush1.msra.mxu0 0.0
        %7271 = vmatprep.subr.mxu0 0.0
        %7272 = vmatpush1.msra.mxu0 0.0
        %7273 = vmatprep.subr.mxu0 0.0
        %7274 = vmatpush1.msra.mxu0 0.0
        %7275 = vmatprep.subr.mxu0 0.0
        %7276 = vmatpush1.msra.mxu0 0.0
        %7277 = vmatprep.subr.mxu0 0.0
        %7278 = vmatpush1.msra.mxu0 0.0
        %7279 = vmatprep.subr.mxu0 0.0
        %7280 = vmatpush1.msra.mxu0 0.0
        %7281 = vmatprep.subr.mxu0 0.0
        %7282 = vmatpush1.msra.mxu0 0.0
        %7283 = vmatprep.subr.mxu0 0.0
        %7284 = vmatpush1.msra.mxu0 0.0
        %7285 = vmatprep.subr.mxu0 0.0
        %7286 = vmatpush1.msra.mxu0 0.0
        %7287 = vmatprep.subr.mxu0 0.0
        %7288 = vmatpush1.msra.mxu0 0.0
        %7289 = vmatprep.subr.mxu0 0.0
        %7290 = vmatpush1.msra.mxu0 0.0
        %7291 = vmatprep.subr.mxu0 0.0
        %7292 = vmatpush1.msra.mxu0 0.0
        %7293 = vmatprep.subr.mxu0 0.0
        %7294 = vmatpush1.msra.mxu0 0.0
        %7295 = vmatprep.subr.mxu0 0.0
        %7296 = vmatpush1.msra.mxu0 0.0
        %7297 = vmatprep.subr.mxu0 0.0
        %7298 = vmatpush1.msra.mxu0 0.0
        %7299 = vmatprep.mubr.f32.mxu0 0.0
        %7300 = vmatmul.mubr.f32.gmra.mrb[0].mxu0 %v7212
        %v7301 = vpop.f32.mrb[0].mxu0
        %v7302 = vadd.f32 0.0, %v7301
        %v7303 = vpop.f32.mrb[0].mxu0
        %7304 = vmatprep.mubr.f32.mxu0 0.0
        %7305 = vmatmul.mubr.f32.gmra.mrb[0].mxu0 %v7215
        %v7306 = vpop.f32.mrb[0].mxu0
        %v7307 = vadd.f32 0.0, %v7306
        %v7308 = vpop.f32.mrb[0].mxu0
        %7309 = vmatprep.mubr.f32.mxu0 0.0
        %7310 = vmatmul.mubr.f32.gmra.mrb[0].mxu0 %v7218
        %v7311 = vpop.f32.mrb[0].mxu0
        %v7312 = vadd.f32 0.0, %v7311
        %v7313 = vpop.f32.mrb[0].mxu0
        %7314 = vmatprep.mubr.f32.mxu0 0.0
        %7315 = vmatmul.mubr.f32.gmra.mrb[0].mxu0 %v7221
        %v7316 = vpop.f32.mrb[0].mxu0
        %v7317 = vadd.f32 0.0, %v7316
        %v7318 = vpop.f32.mrb[0].mxu0
        %7319 = vmatprep.mubr.f32.mxu0 0.0
        %7320 = vmatmul.mubr.f32.gmra.mrb[0].mxu0 %v7224
        %v7321 = vpop.f32.mrb[0].mxu0
        %v7322 = vadd.f32 0.0, %v7321
        %v7323 = vpop.f32.mrb[0].mxu0
        %7324 = vmatprep.mubr.f32.mxu0 0.0
        %7325 = vmatmul.mubr.f32.gmra.mrb[0].mxu0 %v7227
        %v7326 = vpop.f32.mrb[0].mxu0
        %v7327 = vadd.f32 0.0, %v7326
        %v7328 = vpop.f32.mrb[0].mxu0
        %7329 = vmatprep.mubr.f32.mxu0 0.0
        %7330 = vmatmul.mubr.f32.gmra.mrb[0].mxu0 %v7230
        %v7331 = vpop.f32.mrb[0].mxu0
        %v7332 = vadd.f32 0.0, %v7331
        %v7333 = vpop.f32.mrb[0].mxu0
        %7334 = vmatprep.mubr.f32.mxu0 0.0
        %7335 = vmatmul.mubr.f32.gmra.mrb[0].mxu0 %v7233
        %v7336 = vpop.f32.mrb[0].mxu0
        %v7337 = vadd.f32 0.0, %v7336
        %v7338 = vpop.f32.mrb[0].mxu0
        %7339 = vdwg.mxu0
        %7340 = vrot.lane.b32.xlu0 %v916, 64
        %v7341 = vpop.permute.xlu0 %7340
        %7342 = vrot.lane.b32.xlu0 %v918, 64
        %v7343 = vpop.permute.xlu0 %7342
        %7344 = vrot.lane.b32.xlu0 %v920, 64
        %v7345 = vpop.permute.xlu0 %7344
        %7346 = vrot.lane.b32.xlu0 %v922, 64
        %v7347 = vpop.permute.xlu0 %7346
        %7348 = vrot.lane.b32.xlu0 %v924, 64
        %v7349 = vpop.permute.xlu0 %7348
        %7350 = vrot.lane.b32.xlu0 %v926, 64
        %v7351 = vpop.permute.xlu0 %7350
        %7352 = vrot.lane.b32.xlu0 %v928, 64
        %v7353 = vpop.permute.xlu0 %7352
        %7354 = vrot.lane.b32.xlu0 %v930, 64
        %v7355 = vpop.permute.xlu0 %7354
        %v7365 = vsel %vm3636, %v5037, 0
        %v7368 = vsel %vm3636, %v5038, 0
        %v7371 = vsel %vm3636, %v5039, 0
        %v7374 = vsel %vm3636, %v5040, 0
        %v7377 = vsel %vm3636, %v5041, 0
        %v7380 = vsel %vm3636, %v5042, 0
        %v7383 = vsel %vm3636, %v5043, 0
        %v7386 = vsel %vm3636, %v5044, 0
        %7388 = vmatprep.subr.mxu0 0.0
        %7389 = vmatpush1.msra.mxu0 %v7341
        %7390 = vmatprep.subr.mxu0 0.0
        %7391 = vmatpush1.msra.mxu0 %v7343
        %7392 = vmatprep.subr.mxu0 0.0
        %7393 = vmatpush1.msra.mxu0 %v7345
        %7394 = vmatprep.subr.mxu0 0.0
        %7395 = vmatpush1.msra.mxu0 %v7347
        %7396 = vmatprep.subr.mxu0 0.0
        %7397 = vmatpush1.msra.mxu0 %v7349
        %7398 = vmatprep.subr.mxu0 0.0
        %7399 = vmatpush1.msra.mxu0 %v7351
        %7400 = vmatprep.subr.mxu0 0.0
        %7401 = vmatpush1.msra.mxu0 %v7353
        %7402 = vmatprep.subr.mxu0 0.0
        %7403 = vmatpush1.msra.mxu0 %v7355
        %7404 = vmatprep.subr.mxu0 0.0
        %7405 = vmatpush1.msra.mxu0 0.0
        %7406 = vmatprep.subr.mxu0 0.0
        %7407 = vmatpush1.msra.mxu0 0.0
        %7408 = vmatprep.subr.mxu0 0.0
        %7409 = vmatpush1.msra.mxu0 0.0
        %7410 = vmatprep.subr.mxu0 0.0
        %7411 = vmatpush1.msra.mxu0 0.0
        %7412 = vmatprep.subr.mxu0 0.0
        %7413 = vmatpush1.msra.mxu0 0.0
        %7414 = vmatprep.subr.mxu0 0.0
        %7415 = vmatpush1.msra.mxu0 0.0
        %7416 = vmatprep.subr.mxu0 0.0
        %7417 = vmatpush1.msra.mxu0 0.0
        %7418 = vmatprep.subr.mxu0 0.0
        %7419 = vmatpush1.msra.mxu0 0.0
        %7420 = vmatprep.subr.mxu0 0.0
        %7421 = vmatpush1.msra.mxu0 0.0
        %7422 = vmatprep.subr.mxu0 0.0
        %7423 = vmatpush1.msra.mxu0 0.0
        %7424 = vmatprep.subr.mxu0 0.0
        %7425 = vmatpush1.msra.mxu0 0.0
        %7426 = vmatprep.subr.mxu0 0.0
        %7427 = vmatpush1.msra.mxu0 0.0
        %7428 = vmatprep.subr.mxu0 0.0
        %7429 = vmatpush1.msra.mxu0 0.0
        %7430 = vmatprep.subr.mxu0 0.0
        %7431 = vmatpush1.msra.mxu0 0.0
        %7432 = vmatprep.subr.mxu0 0.0
        %7433 = vmatpush1.msra.mxu0 0.0
        %7434 = vmatprep.subr.mxu0 0.0
        %7435 = vmatpush1.msra.mxu0 0.0
        %7436 = vmatprep.subr.mxu0 0.0
        %7437 = vmatpush1.msra.mxu0 0.0
        %7438 = vmatprep.subr.mxu0 0.0
        %7439 = vmatpush1.msra.mxu0 0.0
        %7440 = vmatprep.subr.mxu0 0.0
        %7441 = vmatpush1.msra.mxu0 0.0
        %7442 = vmatprep.subr.mxu0 0.0
        %7443 = vmatpush1.msra.mxu0 0.0
        %7444 = vmatprep.subr.mxu0 0.0
        %7445 = vmatpush1.msra.mxu0 0.0
        %7446 = vmatprep.subr.mxu0 0.0
        %7447 = vmatpush1.msra.mxu0 0.0
        %7448 = vmatprep.subr.mxu0 0.0
        %7449 = vmatpush1.msra.mxu0 0.0
        %7450 = vmatprep.subr.mxu0 0.0
        %7451 = vmatpush1.msra.mxu0 0.0
        %7452 = vmatprep.mubr.f32.mxu0 0.0
        %7453 = vmatmul.mubr.f32.gmra.mrb[0].mxu0 %v7365
        %v7454 = vpop.f32.mrb[0].mxu0
        %v7455 = vadd.f32 0.0, %v7454
        %v7456 = vpop.f32.mrb[0].mxu0
        %7457 = vmatprep.mubr.f32.mxu0 0.0
        %7458 = vmatmul.mubr.f32.gmra.mrb[0].mxu0 %v7368
        %v7459 = vpop.f32.mrb[0].mxu0
        %v7460 = vadd.f32 0.0, %v7459
        %v7461 = vpop.f32.mrb[0].mxu0
        %7462 = vmatprep.mubr.f32.mxu0 0.0
        %7463 = vmatmul.mubr.f32.gmra.mrb[0].mxu0 %v7371
        %v7464 = vpop.f32.mrb[0].mxu0
        %v7465 = vadd.f32 0.0, %v7464
        %v7466 = vpop.f32.mrb[0].mxu0
        %7467 = vmatprep.mubr.f32.mxu0 0.0
        %7468 = vmatmul.mubr.f32.gmra.mrb[0].mxu0 %v7374
        %v7469 = vpop.f32.mrb[0].mxu0
        %v7470 = vadd.f32 0.0, %v7469
        %v7471 = vpop.f32.mrb[0].mxu0
        %7472 = vmatprep.mubr.f32.mxu0 0.0
        %7473 = vmatmul.mubr.f32.gmra.mrb[0].mxu0 %v7377
        %v7474 = vpop.f32.mrb[0].mxu0
        %v7475 = vadd.f32 0.0, %v7474
        %v7476 = vpop.f32.mrb[0].mxu0
        %7477 = vmatprep.mubr.f32.mxu0 0.0
        %7478 = vmatmul.mubr.f32.gmra.mrb[0].mxu0 %v7380
        %v7479 = vpop.f32.mrb[0].mxu0
        %v7480 = vadd.f32 0.0, %v7479
        %v7481 = vpop.f32.mrb[0].mxu0
        %7482 = vmatprep.mubr.f32.mxu0 0.0
        %7483 = vmatmul.mubr.f32.gmra.mrb[0].mxu0 %v7383
        %v7484 = vpop.f32.mrb[0].mxu0
        %v7485 = vadd.f32 0.0, %v7484
        %v7486 = vpop.f32.mrb[0].mxu0
        %7487 = vmatprep.mubr.f32.mxu0 0.0
        %7488 = vmatmul.mubr.f32.gmra.mrb[0].mxu0 %v7386
        %v7489 = vpop.f32.mrb[0].mxu0
        %v7490 = vadd.f32 0.0, %v7489
        %v7491 = vpop.f32.mrb[0].mxu0
        %7492 = vdwg.mxu0
        %7525 = vrot.lane.b32.xlu0 %v5772, 8
        %v7526 = vpop.permute.xlu0 %7525
        %7527 = vrot.lane.b32.xlu0 %v5777, 8
        %v7528 = vpop.permute.xlu0 %7527
        %7529 = vrot.lane.b32.xlu0 %v5782, 8
        %v7530 = vpop.permute.xlu0 %7529
        %7531 = vrot.lane.b32.xlu0 %v5787, 8
        %v7532 = vpop.permute.xlu0 %7531
        %7533 = vrot.lane.b32.xlu0 %v5792, 8
        %v7534 = vpop.permute.xlu0 %7533
        %7535 = vrot.lane.b32.xlu0 %v5797, 8
        %v7536 = vpop.permute.xlu0 %7535
        %7537 = vrot.lane.b32.xlu0 %v5802, 8
        %v7538 = vpop.permute.xlu0 %7537
        %7539 = vrot.lane.b32.xlu0 %v5807, 8
        %v7540 = vpop.permute.xlu0 %7539
        %7541 = vrot.lane.b32.xlu0 %v5925, 8
        %v7542 = vpop.permute.xlu0 %7541
        %7543 = vrot.lane.b32.xlu0 %v5930, 8
        %v7544 = vpop.permute.xlu0 %7543
        %7545 = vrot.lane.b32.xlu0 %v5935, 8
        %v7546 = vpop.permute.xlu0 %7545
        %7547 = vrot.lane.b32.xlu0 %v5940, 8
        %v7548 = vpop.permute.xlu0 %7547
        %7549 = vrot.lane.b32.xlu0 %v5945, 8
        %v7550 = vpop.permute.xlu0 %7549
        %7551 = vrot.lane.b32.xlu0 %v5950, 8
        %v7552 = vpop.permute.xlu0 %7551
        %7553 = vrot.lane.b32.xlu0 %v5955, 8
        %v7554 = vpop.permute.xlu0 %7553
        %7555 = vrot.lane.b32.xlu0 %v5960, 8
        %v7556 = vpop.permute.xlu0 %7555
        %7557 = vrot.lane.b32.xlu0 %v6078, 8
        %v7558 = vpop.permute.xlu0 %7557
        %7559 = vrot.lane.b32.xlu0 %v6083, 8
        %v7560 = vpop.permute.xlu0 %7559
        %7561 = vrot.lane.b32.xlu0 %v6088, 8
        %v7562 = vpop.permute.xlu0 %7561
        %7563 = vrot.lane.b32.xlu0 %v6093, 8
        %v7564 = vpop.permute.xlu0 %7563
        %7565 = vrot.lane.b32.xlu0 %v6098, 8
        %v7566 = vpop.permute.xlu0 %7565
        %7567 = vrot.lane.b32.xlu0 %v6103, 8
        %v7568 = vpop.permute.xlu0 %7567
        %7569 = vrot.lane.b32.xlu0 %v6108, 8
        %v7570 = vpop.permute.xlu0 %7569
        %7571 = vrot.lane.b32.xlu0 %v6113, 8
        %v7572 = vpop.permute.xlu0 %7571
        %7573 = vrot.lane.b32.xlu0 %v6231, 8
        %v7574 = vpop.permute.xlu0 %7573
        %7575 = vrot.lane.b32.xlu0 %v6236, 8
        %v7576 = vpop.permute.xlu0 %7575
        %7577 = vrot.lane.b32.xlu0 %v6241, 8
        %v7578 = vpop.permute.xlu0 %7577
        %7579 = vrot.lane.b32.xlu0 %v6246, 8
        %v7580 = vpop.permute.xlu0 %7579
        %7581 = vrot.lane.b32.xlu0 %v6251, 8
        %v7582 = vpop.permute.xlu0 %7581
        %7583 = vrot.lane.b32.xlu0 %v6256, 8
        %v7584 = vpop.permute.xlu0 %7583
        %7585 = vrot.lane.b32.xlu0 %v6261, 8
        %v7586 = vpop.permute.xlu0 %7585
        %7587 = vrot.lane.b32.xlu0 %v6266, 8
        %v7588 = vpop.permute.xlu0 %7587
        %7653 = vrot.lane.b32.xlu0 %v6384, 16
        %v7654 = vpop.permute.xlu0 %7653
        %7655 = vrot.lane.b32.xlu0 %v6389, 16
        %v7656 = vpop.permute.xlu0 %7655
        %7657 = vrot.lane.b32.xlu0 %v6394, 16
        %v7658 = vpop.permute.xlu0 %7657
        %7659 = vrot.lane.b32.xlu0 %v6399, 16
        %v7660 = vpop.permute.xlu0 %7659
        %7661 = vrot.lane.b32.xlu0 %v6404, 16
        %v7662 = vpop.permute.xlu0 %7661
        %7663 = vrot.lane.b32.xlu0 %v6409, 16
        %v7664 = vpop.permute.xlu0 %7663
        %7665 = vrot.lane.b32.xlu0 %v6414, 16
        %v7666 = vpop.permute.xlu0 %7665
        %7667 = vrot.lane.b32.xlu0 %v6419, 16
        %v7668 = vpop.permute.xlu0 %7667
        %7669 = vrot.lane.b32.xlu0 %v6537, 16
        %v7670 = vpop.permute.xlu0 %7669
        %7671 = vrot.lane.b32.xlu0 %v6542, 16
        %v7672 = vpop.permute.xlu0 %7671
        %7673 = vrot.lane.b32.xlu0 %v6547, 16
        %v7674 = vpop.permute.xlu0 %7673
        %7675 = vrot.lane.b32.xlu0 %v6552, 16
        %v7676 = vpop.permute.xlu0 %7675
        %7677 = vrot.lane.b32.xlu0 %v6557, 16
        %v7678 = vpop.permute.xlu0 %7677
        %7679 = vrot.lane.b32.xlu0 %v6562, 16
        %v7680 = vpop.permute.xlu0 %7679
        %7681 = vrot.lane.b32.xlu0 %v6567, 16
        %v7682 = vpop.permute.xlu0 %7681
        %7683 = vrot.lane.b32.xlu0 %v6572, 16
        %v7684 = vpop.permute.xlu0 %7683
        %7685 = vrot.lane.b32.xlu0 %v6690, 16
        %v7686 = vpop.permute.xlu0 %7685
        %7687 = vrot.lane.b32.xlu0 %v6695, 16
        %v7688 = vpop.permute.xlu0 %7687
        %7689 = vrot.lane.b32.xlu0 %v6700, 16
        %v7690 = vpop.permute.xlu0 %7689
        %7691 = vrot.lane.b32.xlu0 %v6705, 16
        %v7692 = vpop.permute.xlu0 %7691
        %7693 = vrot.lane.b32.xlu0 %v6710, 16
        %v7694 = vpop.permute.xlu0 %7693
        %7695 = vrot.lane.b32.xlu0 %v6715, 16
        %v7696 = vpop.permute.xlu0 %7695
        %7697 = vrot.lane.b32.xlu0 %v6720, 16
        %v7698 = vpop.permute.xlu0 %7697
        %7699 = vrot.lane.b32.xlu0 %v6725, 16
        %v7700 = vpop.permute.xlu0 %7699
        %7701 = vrot.lane.b32.xlu0 %v6843, 16
        %v7702 = vpop.permute.xlu0 %7701
        %7703 = vrot.lane.b32.xlu0 %v6848, 16
        %v7704 = vpop.permute.xlu0 %7703
        %7705 = vrot.lane.b32.xlu0 %v6853, 16
        %v7706 = vpop.permute.xlu0 %7705
        %7707 = vrot.lane.b32.xlu0 %v6858, 16
        %v7708 = vpop.permute.xlu0 %7707
        %7709 = vrot.lane.b32.xlu0 %v6863, 16
        %v7710 = vpop.permute.xlu0 %7709
        %7711 = vrot.lane.b32.xlu0 %v6868, 16
        %v7712 = vpop.permute.xlu0 %7711
        %7713 = vrot.lane.b32.xlu0 %v6873, 16
        %v7714 = vpop.permute.xlu0 %7713
        %7715 = vrot.lane.b32.xlu0 %v6878, 16
        %v7716 = vpop.permute.xlu0 %7715
        %7781 = vrot.lane.b32.xlu0 %v6996, 24
        %v7782 = vpop.permute.xlu0 %7781
        %7783 = vrot.lane.b32.xlu0 %v7001, 24
        %v7784 = vpop.permute.xlu0 %7783
        %7785 = vrot.lane.b32.xlu0 %v7006, 24
        %v7786 = vpop.permute.xlu0 %7785
        %7787 = vrot.lane.b32.xlu0 %v7011, 24
        %v7788 = vpop.permute.xlu0 %7787
        %7789 = vrot.lane.b32.xlu0 %v7016, 24
        %v7790 = vpop.permute.xlu0 %7789
        %7791 = vrot.lane.b32.xlu0 %v7021, 24
        %v7792 = vpop.permute.xlu0 %7791
        %7793 = vrot.lane.b32.xlu0 %v7026, 24
        %v7794 = vpop.permute.xlu0 %7793
        %7795 = vrot.lane.b32.xlu0 %v7031, 24
        %v7796 = vpop.permute.xlu0 %7795
        %7797 = vrot.lane.b32.xlu0 %v7149, 24
        %v7798 = vpop.permute.xlu0 %7797
        %7799 = vrot.lane.b32.xlu0 %v7154, 24
        %v7800 = vpop.permute.xlu0 %7799
        %7801 = vrot.lane.b32.xlu0 %v7159, 24
        %v7802 = vpop.permute.xlu0 %7801
        %7803 = vrot.lane.b32.xlu0 %v7164, 24
        %v7804 = vpop.permute.xlu0 %7803
        %7805 = vrot.lane.b32.xlu0 %v7169, 24
        %v7806 = vpop.permute.xlu0 %7805
        %7807 = vrot.lane.b32.xlu0 %v7174, 24
        %v7808 = vpop.permute.xlu0 %7807
        %7809 = vrot.lane.b32.xlu0 %v7179, 24
        %v7810 = vpop.permute.xlu0 %7809
        %7811 = vrot.lane.b32.xlu0 %v7184, 24
        %v7812 = vpop.permute.xlu0 %7811
        %7813 = vrot.lane.b32.xlu0 %v7302, 24
        %v7814 = vpop.permute.xlu0 %7813
        %7815 = vrot.lane.b32.xlu0 %v7307, 24
        %v7816 = vpop.permute.xlu0 %7815
        %7817 = vrot.lane.b32.xlu0 %v7312, 24
        %v7818 = vpop.permute.xlu0 %7817
        %7819 = vrot.lane.b32.xlu0 %v7317, 24
        %v7820 = vpop.permute.xlu0 %7819
        %7821 = vrot.lane.b32.xlu0 %v7322, 24
        %v7822 = vpop.permute.xlu0 %7821
        %7823 = vrot.lane.b32.xlu0 %v7327, 24
        %v7824 = vpop.permute.xlu0 %7823
        %7825 = vrot.lane.b32.xlu0 %v7332, 24
        %v7826 = vpop.permute.xlu0 %7825
        %7827 = vrot.lane.b32.xlu0 %v7337, 24
        %v7828 = vpop.permute.xlu0 %7827
        %7829 = vrot.lane.b32.xlu0 %v7455, 24
        %v7830 = vpop.permute.xlu0 %7829
        %7831 = vrot.lane.b32.xlu0 %v7460, 24
        %v7832 = vpop.permute.xlu0 %7831
        %7833 = vrot.lane.b32.xlu0 %v7465, 24
        %v7834 = vpop.permute.xlu0 %7833
        %7835 = vrot.lane.b32.xlu0 %v7470, 24
        %v7836 = vpop.permute.xlu0 %7835
        %7837 = vrot.lane.b32.xlu0 %v7475, 24
        %v7838 = vpop.permute.xlu0 %7837
        %7839 = vrot.lane.b32.xlu0 %v7480, 24
        %v7840 = vpop.permute.xlu0 %7839
        %7841 = vrot.lane.b32.xlu0 %v7485, 24
        %v7842 = vpop.permute.xlu0 %7841
        %7843 = vrot.lane.b32.xlu0 %v7490, 24
        %v7844 = vpop.permute.xlu0 %7843
        %v7877 = vsel %vm947, %v5160, %v7526
        %v7878 = vsel %vm947, %v5165, %v7528
        %v7879 = vsel %vm947, %v5170, %v7530
        %v7880 = vsel %vm947, %v5175, %v7532
        %v7881 = vsel %vm947, %v5180, %v7534
        %v7882 = vsel %vm947, %v5185, %v7536
        %v7883 = vsel %vm947, %v5190, %v7538
        %v7884 = vsel %vm947, %v5195, %v7540
        %v7885 = vsel %vm947, %v5313, %v7542
        %v7886 = vsel %vm947, %v5318, %v7544
        %v7887 = vsel %vm947, %v5323, %v7546
        %v7888 = vsel %vm947, %v5328, %v7548
        %v7889 = vsel %vm947, %v5333, %v7550
        %v7890 = vsel %vm947, %v5338, %v7552
        %v7891 = vsel %vm947, %v5343, %v7554
        %v7892 = vsel %vm947, %v5348, %v7556
        %v7893 = vsel %vm947, %v5466, %v7558
        %v7894 = vsel %vm947, %v5471, %v7560
        %v7895 = vsel %vm947, %v5476, %v7562
        %v7896 = vsel %vm947, %v5481, %v7564
        %v7897 = vsel %vm947, %v5486, %v7566
        %v7898 = vsel %vm947, %v5491, %v7568
        %v7899 = vsel %vm947, %v5496, %v7570
        %v7900 = vsel %vm947, %v5501, %v7572
        %v7901 = vsel %vm947, %v5619, %v7574
        %v7902 = vsel %vm947, %v5624, %v7576
        %v7903 = vsel %vm947, %v5629, %v7578
        %v7904 = vsel %vm947, %v5634, %v7580
        %v7905 = vsel %vm947, %v5639, %v7582
        %v7906 = vsel %vm947, %v5644, %v7584
        %v7907 = vsel %vm947, %v5649, %v7586
        %v7908 = vsel %vm947, %v5654, %v7588
        %vm7909 = vcmask 130048
        %v7910 = vsel %vm7909, %v7877, %v7654
        %v7911 = vsel %vm7909, %v7878, %v7656
        %v7912 = vsel %vm7909, %v7879, %v7658
        %v7913 = vsel %vm7909, %v7880, %v7660
        %v7914 = vsel %vm7909, %v7881, %v7662
        %v7915 = vsel %vm7909, %v7882, %v7664
        %v7916 = vsel %vm7909, %v7883, %v7666
        %v7917 = vsel %vm7909, %v7884, %v7668
        %v7918 = vsel %vm7909, %v7885, %v7670
        %v7919 = vsel %vm7909, %v7886, %v7672
        %v7920 = vsel %vm7909, %v7887, %v7674
        %v7921 = vsel %vm7909, %v7888, %v7676
        %v7922 = vsel %vm7909, %v7889, %v7678
        %v7923 = vsel %vm7909, %v7890, %v7680
        %v7924 = vsel %vm7909, %v7891, %v7682
        %v7925 = vsel %vm7909, %v7892, %v7684
        %v7926 = vsel %vm7909, %v7893, %v7686
        %v7927 = vsel %vm7909, %v7894, %v7688
        %v7928 = vsel %vm7909, %v7895, %v7690
        %v7929 = vsel %vm7909, %v7896, %v7692
        %v7930 = vsel %vm7909, %v7897, %v7694
        %v7931 = vsel %vm7909, %v7898, %v7696
        %v7932 = vsel %vm7909, %v7899, %v7698
        %v7933 = vsel %vm7909, %v7900, %v7700
        %v7934 = vsel %vm7909, %v7901, %v7702
        %v7935 = vsel %vm7909, %v7902, %v7704
        %v7936 = vsel %vm7909, %v7903, %v7706
        %v7937 = vsel %vm7909, %v7904, %v7708
        %v7938 = vsel %vm7909, %v7905, %v7710
        %v7939 = vsel %vm7909, %v7906, %v7712
        %v7940 = vsel %vm7909, %v7907, %v7714
        %v7941 = vsel %vm7909, %v7908, %v7716
        %vm7942 = vcmask 195584
        %v7943 = vsel %vm7942, %v7910, %v7782
        %v7944 = vsel %vm7942, %v7911, %v7784
        %v7945 = vsel %vm7942, %v7912, %v7786
        %v7946 = vsel %vm7942, %v7913, %v7788
        %v7947 = vsel %vm7942, %v7914, %v7790
        %v7948 = vsel %vm7942, %v7915, %v7792
        %v7949 = vsel %vm7942, %v7916, %v7794
        %v7950 = vsel %vm7942, %v7917, %v7796
        %v7951 = vsel %vm7942, %v7918, %v7798
        %v7952 = vsel %vm7942, %v7919, %v7800
        %v7953 = vsel %vm7942, %v7920, %v7802
        %v7954 = vsel %vm7942, %v7921, %v7804
        %v7955 = vsel %vm7942, %v7922, %v7806
        %v7956 = vsel %vm7942, %v7923, %v7808
        %v7957 = vsel %vm7942, %v7924, %v7810
        %v7958 = vsel %vm7942, %v7925, %v7812
        %v7959 = vsel %vm7942, %v7926, %v7814
        %v7960 = vsel %vm7942, %v7927, %v7816
        %v7961 = vsel %vm7942, %v7928, %v7818
        %v7962 = vsel %vm7942, %v7929, %v7820
        %v7963 = vsel %vm7942, %v7930, %v7822
        %v7964 = vsel %vm7942, %v7931, %v7824
        %v7965 = vsel %vm7942, %v7932, %v7826
        %v7966 = vsel %vm7942, %v7933, %v7828
        %v7967 = vsel %vm7942, %v7934, %v7830
        %v7968 = vsel %vm7942, %v7935, %v7832
        %v7969 = vsel %vm7942, %v7936, %v7834
        %v7970 = vsel %vm7942, %v7937, %v7836
        %v7971 = vsel %vm7942, %v7938, %v7838
        %v7972 = vsel %vm7942, %v7939, %v7840
        %v7973 = vsel %vm7942, %v7940, %v7842
        %v7974 = vsel %vm7942, %v7941, %v7844
        %v7975 = vld [vmem:[#allocation8] sm:$0xff]
        %v7976 = vld [vmem:[#allocation8 + $0x8] sm:$0xff]
        %v7977 = vld [vmem:[#allocation8 + $0x10] sm:$0xff]
        %v7978 = vld [vmem:[#allocation8 + $0x18] sm:$0xff]
        %v7979 = vld [vmem:[#allocation10] sm:$0x1]
        %v7981 = vlaneseq
        %v7982 = vshrl.u32 %v7981, 7
        %v7983 = vsub.s32 0, %v7982
        %v7984 = vrot.slane %v7979, %v7983
        %v7987 = vsel %vm385, %v7943, 0
        %v7990 = vsel %vm385, %v7944, 0
        %v7993 = vsel %vm385, %v7945, 0
        %v7996 = vsel %vm385, %v7946, 0
        %v7999 = vsel %vm385, %v7947, 0
        %v8002 = vsel %vm385, %v7948, 0
        %v8005 = vsel %vm385, %v7949, 0
        %v8008 = vsel %vm385, %v7950, 0
        %v8011 = vsel %vm385, %v7951, 0
        %v8014 = vsel %vm385, %v7952, 0
        %v8017 = vsel %vm385, %v7953, 0
        %v8020 = vsel %vm385, %v7954, 0
        %v8023 = vsel %vm385, %v7955, 0
        %v8026 = vsel %vm385, %v7956, 0
        %v8029 = vsel %vm385, %v7957, 0
        %v8032 = vsel %vm385, %v7958, 0
        %v8035 = vsel %vm385, %v7959, 0
        %v8038 = vsel %vm385, %v7960, 0
        %v8041 = vsel %vm385, %v7961, 0
        %v8044 = vsel %vm385, %v7962, 0
        %v8047 = vsel %vm385, %v7963, 0
        %v8050 = vsel %vm385, %v7964, 0
        %v8053 = vsel %vm385, %v7965, 0
        %v8056 = vsel %vm385, %v7966, 0
        %v8059 = vsel %vm385, %v7967, 0
        %v8062 = vsel %vm385, %v7968, 0
        %v8065 = vsel %vm385, %v7969, 0
        %v8068 = vsel %vm385, %v7970, 0
        %v8071 = vsel %vm385, %v7971, 0
        %v8074 = vsel %vm385, %v7972, 0
        %v8077 = vsel %vm385, %v7973, 0
        %v8080 = vsel %vm385, %v7974, 0
        %8082 = vmatprep.subr.mxu0 0.0
        %8083 = vmatpush1.msra.mxu0 %v7975
        %8084 = vmatprep.subr.mxu0 0.0
        %8085 = vmatpush1.msra.mxu0 %v7976
        %8086 = vmatprep.subr.mxu0 0.0
        %8087 = vmatpush1.msra.mxu0 %v7977
        %8088 = vmatprep.subr.mxu0 0.0
        %8089 = vmatpush1.msra.mxu0 %v7978
        %8090 = vmatprep.subr.mxu0 0.0
        %8091 = vmatpush1.msra.mxu0 0.0
        %8092 = vmatprep.subr.mxu0 0.0
        %8093 = vmatpush1.msra.mxu0 0.0
        %8094 = vmatprep.subr.mxu0 0.0
        %8095 = vmatpush1.msra.mxu0 0.0
        %8096 = vmatprep.subr.mxu0 0.0
        %8097 = vmatpush1.msra.mxu0 0.0
        %8098 = vmatprep.subr.mxu0 0.0
        %8099 = vmatpush1.msra.mxu0 0.0
        %8100 = vmatprep.subr.mxu0 0.0
        %8101 = vmatpush1.msra.mxu0 0.0
        %8102 = vmatprep.subr.mxu0 0.0
        %8103 = vmatpush1.msra.mxu0 0.0
        %8104 = vmatprep.subr.mxu0 0.0
        %8105 = vmatpush1.msra.mxu0 0.0
        %8106 = vmatprep.subr.mxu0 0.0
        %8107 = vmatpush1.msra.mxu0 0.0
        %8108 = vmatprep.subr.mxu0 0.0
        %8109 = vmatpush1.msra.mxu0 0.0
        %8110 = vmatprep.subr.mxu0 0.0
        %8111 = vmatpush1.msra.mxu0 0.0
        %8112 = vmatprep.subr.mxu0 0.0
        %8113 = vmatpush1.msra.mxu0 0.0
        %8114 = vmatprep.subr.mxu0 0.0
        %8115 = vmatpush1.msra.mxu0 0.0
        %8116 = vmatprep.subr.mxu0 0.0
        %8117 = vmatpush1.msra.mxu0 0.0
        %8118 = vmatprep.subr.mxu0 0.0
        %8119 = vmatpush1.msra.mxu0 0.0
        %8120 = vmatprep.subr.mxu0 0.0
        %8121 = vmatpush1.msra.mxu0 0.0
        %8122 = vmatprep.subr.mxu0 0.0
        %8123 = vmatpush1.msra.mxu0 0.0
        %8124 = vmatprep.subr.mxu0 0.0
        %8125 = vmatpush1.msra.mxu0 0.0
        %8126 = vmatprep.subr.mxu0 0.0
        %8127 = vmatpush1.msra.mxu0 0.0
        %8128 = vmatprep.subr.mxu0 0.0
        %8129 = vmatpush1.msra.mxu0 0.0
        %8130 = vmatprep.subr.mxu0 0.0
        %8131 = vmatpush1.msra.mxu0 0.0
        %8132 = vmatprep.subr.mxu0 0.0
        %8133 = vmatpush1.msra.mxu0 0.0
        %8134 = vmatprep.subr.mxu0 0.0
        %8135 = vmatpush1.msra.mxu0 0.0
        %8136 = vmatprep.subr.mxu0 0.0
        %8137 = vmatpush1.msra.mxu0 0.0
        %8138 = vmatprep.subr.mxu0 0.0
        %8139 = vmatpush1.msra.mxu0 0.0
        %8140 = vmatprep.subr.mxu0 0.0
        %8141 = vmatpush1.msra.mxu0 0.0
        %8142 = vmatprep.subr.mxu0 0.0
        %8143 = vmatpush1.msra.mxu0 0.0
        %8144 = vmatprep.subr.mxu0 0.0
        %8145 = vmatpush1.msra.mxu0 0.0
        %8146 = vmatprep.mubr.f32.mxu0 0.0
        %8147 = vmatmul.mubr.f32.gmra.mrb[0].mxu0 %v7987
        %v8148 = vpop.f32.mrb[0].mxu0
        %v8149 = vadd.f32 %v7984, %v8148
        %v8150 = vpop.f32.mrb[0].mxu0
        %8151 = vmatprep.mubr.f32.mxu0 0.0
        %8152 = vmatmul.mubr.f32.gmra.mrb[0].mxu0 %v7990
        %v8153 = vpop.f32.mrb[0].mxu0
        %v8154 = vadd.f32 %v7984, %v8153
        %v8155 = vpop.f32.mrb[0].mxu0
        %8156 = vmatprep.mubr.f32.mxu0 0.0
        %8157 = vmatmul.mubr.f32.gmra.mrb[0].mxu0 %v7993
        %v8158 = vpop.f32.mrb[0].mxu0
        %v8159 = vadd.f32 %v7984, %v8158
        %v8160 = vpop.f32.mrb[0].mxu0
        %8161 = vmatprep.mubr.f32.mxu0 0.0
        %8162 = vmatmul.mubr.f32.gmra.mrb[0].mxu0 %v7996
        %v8163 = vpop.f32.mrb[0].mxu0
        %v8164 = vadd.f32 %v7984, %v8163
        %v8165 = vpop.f32.mrb[0].mxu0
        %8166 = vmatprep.mubr.f32.mxu0 0.0
        %8167 = vmatmul.mubr.f32.gmra.mrb[0].mxu0 %v7999
        %v8168 = vpop.f32.mrb[0].mxu0
        %v8169 = vadd.f32 %v7984, %v8168
        %v8170 = vpop.f32.mrb[0].mxu0
        %8171 = vmatprep.mubr.f32.mxu0 0.0
        %8172 = vmatmul.mubr.f32.gmra.mrb[0].mxu0 %v8002
        %v8173 = vpop.f32.mrb[0].mxu0
        %v8174 = vadd.f32 %v7984, %v8173
        %v8175 = vpop.f32.mrb[0].mxu0
        %8176 = vmatprep.mubr.f32.mxu0 0.0
        %8177 = vmatmul.mubr.f32.gmra.mrb[0].mxu0 %v8005
        %v8178 = vpop.f32.mrb[0].mxu0
        %v8179 = vadd.f32 %v7984, %v8178
        %v8180 = vpop.f32.mrb[0].mxu0
        %8181 = vmatprep.mubr.f32.mxu0 0.0
        %8182 = vmatmul.mubr.f32.gmra.mrb[0].mxu0 %v8008
        %v8183 = vpop.f32.mrb[0].mxu0
        %v8184 = vadd.f32 %v7984, %v8183
        %v8185 = vpop.f32.mrb[0].mxu0
        %8186 = vmatprep.mubr.f32.mxu0 0.0
        %8187 = vmatmul.mubr.f32.gmra.mrb[0].mxu0 %v8011
        %v8188 = vpop.f32.mrb[0].mxu0
        %v8189 = vadd.f32 %v7984, %v8188
        %v8190 = vpop.f32.mrb[0].mxu0
        %8191 = vmatprep.mubr.f32.mxu0 0.0
        %8192 = vmatmul.mubr.f32.gmra.mrb[0].mxu0 %v8014
        %v8193 = vpop.f32.mrb[0].mxu0
        %v8194 = vadd.f32 %v7984, %v8193
        %v8195 = vpop.f32.mrb[0].mxu0
        %8196 = vmatprep.mubr.f32.mxu0 0.0
        %8197 = vmatmul.mubr.f32.gmra.mrb[0].mxu0 %v8017
        %v8198 = vpop.f32.mrb[0].mxu0
        %v8199 = vadd.f32 %v7984, %v8198
        %v8200 = vpop.f32.mrb[0].mxu0
        %8201 = vmatprep.mubr.f32.mxu0 0.0
        %8202 = vmatmul.mubr.f32.gmra.mrb[0].mxu0 %v8020
        %v8203 = vpop.f32.mrb[0].mxu0
        %v8204 = vadd.f32 %v7984, %v8203
        %v8205 = vpop.f32.mrb[0].mxu0
        %8206 = vmatprep.mubr.f32.mxu0 0.0
        %8207 = vmatmul.mubr.f32.gmra.mrb[0].mxu0 %v8023
        %v8208 = vpop.f32.mrb[0].mxu0
        %v8209 = vadd.f32 %v7984, %v8208
        %v8210 = vpop.f32.mrb[0].mxu0
        %8211 = vmatprep.mubr.f32.mxu0 0.0
        %8212 = vmatmul.mubr.f32.gmra.mrb[0].mxu0 %v8026
        %v8213 = vpop.f32.mrb[0].mxu0
        %v8214 = vadd.f32 %v7984, %v8213
        %v8215 = vpop.f32.mrb[0].mxu0
        %8216 = vmatprep.mubr.f32.mxu0 0.0
        %8217 = vmatmul.mubr.f32.gmra.mrb[0].mxu0 %v8029
        %v8218 = vpop.f32.mrb[0].mxu0
        %v8219 = vadd.f32 %v7984, %v8218
        %v8220 = vpop.f32.mrb[0].mxu0
        %8221 = vmatprep.mubr.f32.mxu0 0.0
        %8222 = vmatmul.mubr.f32.gmra.mrb[0].mxu0 %v8032
        %v8223 = vpop.f32.mrb[0].mxu0
        %v8224 = vadd.f32 %v7984, %v8223
        %v8225 = vpop.f32.mrb[0].mxu0
        %8226 = vmatprep.mubr.f32.mxu0 0.0
        %8227 = vmatmul.mubr.f32.gmra.mrb[0].mxu0 %v8035
        %v8228 = vpop.f32.mrb[0].mxu0
        %v8229 = vadd.f32 %v7984, %v8228
        %v8230 = vpop.f32.mrb[0].mxu0
        %8231 = vmatprep.mubr.f32.mxu0 0.0
        %8232 = vmatmul.mubr.f32.gmra.mrb[0].mxu0 %v8038
        %v8233 = vpop.f32.mrb[0].mxu0
        %v8234 = vadd.f32 %v7984, %v8233
        %v8235 = vpop.f32.mrb[0].mxu0
        %8236 = vmatprep.mubr.f32.mxu0 0.0
        %8237 = vmatmul.mubr.f32.gmra.mrb[0].mxu0 %v8041
        %v8238 = vpop.f32.mrb[0].mxu0
        %v8239 = vadd.f32 %v7984, %v8238
        %v8240 = vpop.f32.mrb[0].mxu0
        %8241 = vmatprep.mubr.f32.mxu0 0.0
        %8242 = vmatmul.mubr.f32.gmra.mrb[0].mxu0 %v8044
        %v8243 = vpop.f32.mrb[0].mxu0
        %v8244 = vadd.f32 %v7984, %v8243
        %v8245 = vpop.f32.mrb[0].mxu0
        %8246 = vmatprep.mubr.f32.mxu0 0.0
        %8247 = vmatmul.mubr.f32.gmra.mrb[0].mxu0 %v8047
        %v8248 = vpop.f32.mrb[0].mxu0
        %v8249 = vadd.f32 %v7984, %v8248
        %v8250 = vpop.f32.mrb[0].mxu0
        %8251 = vmatprep.mubr.f32.mxu0 0.0
        %8252 = vmatmul.mubr.f32.gmra.mrb[0].mxu0 %v8050
        %v8253 = vpop.f32.mrb[0].mxu0
        %v8254 = vadd.f32 %v7984, %v8253
        %v8255 = vpop.f32.mrb[0].mxu0
        %8256 = vmatprep.mubr.f32.mxu0 0.0
        %8257 = vmatmul.mubr.f32.gmra.mrb[0].mxu0 %v8053
        %v8258 = vpop.f32.mrb[0].mxu0
        %v8259 = vadd.f32 %v7984, %v8258
        %v8260 = vpop.f32.mrb[0].mxu0
        %8261 = vmatprep.mubr.f32.mxu0 0.0
        %8262 = vmatmul.mubr.f32.gmra.mrb[0].mxu0 %v8056
        %v8263 = vpop.f32.mrb[0].mxu0
        %v8264 = vadd.f32 %v7984, %v8263
        %v8265 = vpop.f32.mrb[0].mxu0
        %8266 = vmatprep.mubr.f32.mxu0 0.0
        %8267 = vmatmul.mubr.f32.gmra.mrb[0].mxu0 %v8059
        %v8268 = vpop.f32.mrb[0].mxu0
        %v8269 = vadd.f32 %v7984, %v8268
        %v8270 = vpop.f32.mrb[0].mxu0
        %8271 = vmatprep.mubr.f32.mxu0 0.0
        %8272 = vmatmul.mubr.f32.gmra.mrb[0].mxu0 %v8062
        %v8273 = vpop.f32.mrb[0].mxu0
        %v8274 = vadd.f32 %v7984, %v8273
        %v8275 = vpop.f32.mrb[0].mxu0
        %8276 = vmatprep.mubr.f32.mxu0 0.0
        %8277 = vmatmul.mubr.f32.gmra.mrb[0].mxu0 %v8065
        %v8278 = vpop.f32.mrb[0].mxu0
        %v8279 = vadd.f32 %v7984, %v8278
        %v8280 = vpop.f32.mrb[0].mxu0
        %8281 = vmatprep.mubr.f32.mxu0 0.0
        %8282 = vmatmul.mubr.f32.gmra.mrb[0].mxu0 %v8068
        %v8283 = vpop.f32.mrb[0].mxu0
        %v8284 = vadd.f32 %v7984, %v8283
        %v8285 = vpop.f32.mrb[0].mxu0
        %8286 = vmatprep.mubr.f32.mxu0 0.0
        %8287 = vmatmul.mubr.f32.gmra.mrb[0].mxu0 %v8071
        %v8288 = vpop.f32.mrb[0].mxu0
        %v8289 = vadd.f32 %v7984, %v8288
        %v8290 = vpop.f32.mrb[0].mxu0
        %8291 = vmatprep.mubr.f32.mxu0 0.0
        %8292 = vmatmul.mubr.f32.gmra.mrb[0].mxu0 %v8074
        %v8293 = vpop.f32.mrb[0].mxu0
        %v8294 = vadd.f32 %v7984, %v8293
        %v8295 = vpop.f32.mrb[0].mxu0
        %8296 = vmatprep.mubr.f32.mxu0 0.0
        %8297 = vmatmul.mubr.f32.gmra.mrb[0].mxu0 %v8077
        %v8298 = vpop.f32.mrb[0].mxu0
        %v8299 = vadd.f32 %v7984, %v8298
        %v8300 = vpop.f32.mrb[0].mxu0
        %8301 = vmatprep.mubr.f32.mxu0 0.0
        %8302 = vmatmul.mubr.f32.gmra.mrb[0].mxu0 %v8080
        %v8303 = vpop.f32.mrb[0].mxu0
        %v8304 = vadd.f32 %v7984, %v8303
        %v8305 = vpop.f32.mrb[0].mxu0
        %8306 = vdwg.mxu0
        %8307 = vst.msk [vmem:[%s339] sm:$0xff] %vm385, %v8149
        %8308 = vst.msk [vmem:[%s339 + $0x8] sm:$0xff] %vm385, %v8154
        %8309 = vst.msk [vmem:[%s339 + $0x10] sm:$0xff] %vm385, %v8159
        %8310 = vst.msk [vmem:[%s339 + $0x18] sm:$0xff] %vm385, %v8164
        %8311 = vst.msk [vmem:[%s339 + $0x20] sm:$0xff] %vm385, %v8169
        %8312 = vst.msk [vmem:[%s339 + $0x28] sm:$0xff] %vm385, %v8174
        %8313 = vst.msk [vmem:[%s339 + $0x30] sm:$0xff] %vm385, %v8179
        %8314 = vst.msk [vmem:[%s339 + $0x38] sm:$0xff] %vm385, %v8184
        %8315 = vst.msk [vmem:[%s339 + $0x40] sm:$0xff] %vm385, %v8189
        %8316 = vst.msk [vmem:[%s339 + $0x48] sm:$0xff] %vm385, %v8194
        %8317 = vst.msk [vmem:[%s339 + $0x50] sm:$0xff] %vm385, %v8199
        %8318 = vst.msk [vmem:[%s339 + $0x58] sm:$0xff] %vm385, %v8204
        %8319 = vst.msk [vmem:[%s339 + $0x60] sm:$0xff] %vm385, %v8209
        %8320 = vst.msk [vmem:[%s339 + $0x68] sm:$0xff] %vm385, %v8214
        %8321 = vst.msk [vmem:[%s339 + $0x70] sm:$0xff] %vm385, %v8219
        %8322 = vst.msk [vmem:[%s339 + $0x78] sm:$0xff] %vm385, %v8224
        %8323 = vst.msk [vmem:[%s339 + $0x80] sm:$0xff] %vm385, %v8229
        %8324 = vst.msk [vmem:[%s339 + $0x88] sm:$0xff] %vm385, %v8234
        %8325 = vst.msk [vmem:[%s339 + $0x90] sm:$0xff] %vm385, %v8239
        %8326 = vst.msk [vmem:[%s339 + $0x98] sm:$0xff] %vm385, %v8244
        %8327 = vst.msk [vmem:[%s339 + $0xa0] sm:$0xff] %vm385, %v8249
        %8328 = vst.msk [vmem:[%s339 + $0xa8] sm:$0xff] %vm385, %v8254
        %8329 = vst.msk [vmem:[%s339 + $0xb0] sm:$0xff] %vm385, %v8259
        %8330 = vst.msk [vmem:[%s339 + $0xb8] sm:$0xff] %vm385, %v8264
        %8331 = vst.msk [vmem:[%s339 + $0xc0] sm:$0xff] %vm385, %v8269
        %8332 = vst.msk [vmem:[%s339 + $0xc8] sm:$0xff] %vm385, %v8274
        %8333 = vst.msk [vmem:[%s339 + $0xd0] sm:$0xff] %vm385, %v8279
        %8334 = vst.msk [vmem:[%s339 + $0xd8] sm:$0xff] %vm385, %v8284
        %8335 = vst.msk [vmem:[%s339 + $0xe0] sm:$0xff] %vm385, %v8289
        %8336 = vst.msk [vmem:[%s339 + $0xe8] sm:$0xff] %vm385, %v8294
        %8337 = vst.msk [vmem:[%s339 + $0xf0] sm:$0xff] %vm385, %v8299
        %8338 = vst.msk [vmem:[%s339 + $0xf8] sm:$0xff] %vm385, %v8304
        %s8339 = sand.u32 %s165, 1
        %s8340 = scalar_lea.sflag [#allocation4], %s8339
        %s8341 = sand.u32 %s165, 1
        %s8342 = smul.addr %s8341, 256
        %s8343 = scalar_lea.vmem [#allocation13], %s8342
        // Predicated region
        $region69: #{tpu_custom_call.1} parent=43 // pred_check
          %p8344 = pneg %p175
        $region70: #{tpu_custom_call.1} parent=43 // pred_check_branch
          %8346 = sbr.rel (%p8344) target = $region72
        $region71: #{tpu_custom_call.1} parent=43 // pred_region
          %s8347 = smul.u32 4, %s26
          %s8349 = ssub.s32 4096, 4096
          %8350 = vsyncadd %s8340, %s8349
          %s8351 = smul.addr %s8347, 8
          %s8352 = smul.addr %s8351, 128
          %s8353 = scalar_lea.hbm %s6, %s8352
          %s8354 = sshll.u32 %s8343, 4
          %s8355 = int_to_ptr.vmem [resolvable:$true] %s8354
          %8360 = dma.vmem_to_hbm [thread:$0]  %s8355, 4096, %s8353, %s8340, 128, 128, 8
        $region72: #{tpu_custom_call.1} parent=43 // pred_fallthru
          _
      $region44: #{tpu_custom_call.1} parent=5 // pred_fallthru
        _
      %p8361 = scmp.le.s32.totalorder 2, %s21
      // Predicated region
      $region73: #{tpu_custom_call.1} parent=5 // pred_check
        %p8362 = pneg %p8361
      $region74: #{tpu_custom_call.1} parent=5 // pred_check_branch
        %8364 = sbr.rel (%p8362) target = $region76
      $region75: #{tpu_custom_call.1} parent=5 // pred_region
        %s8365 = ssub.s32 %s21, 2
        // Predicated region
        $region77: #{tpu_custom_call.1} parent=75 // pred_check
          %p8366 = pneg %p181
        $region78: #{tpu_custom_call.1} parent=75 // pred_check_branch
          %8368 = sbr.rel (%p8366) target = $region80
        $region79: #{tpu_custom_call.1} parent=75 // pred_region
          %s8369 = sand.u32 %s166, 1
          %s8370 = scalar_lea.sflag [#allocation4], %s8369
          %s8371 = sand.u32 %s166, 1
          %s8372 = smul.addr %s8371, 256
          %s8373 = scalar_lea.vmem [#allocation13], %s8372
          %8374 = dma.done %s8370, 4096
        $region80: #{tpu_custom_call.1} parent=75 // pred_fallthru
          _
      $region76: #{tpu_custom_call.1} parent=5 // pred_fallthru
        _
    $region6: #{tpu_custom_call.1} parent=1 // loop_footer
      %s25 = sadd.s32 1, %s21
    $region7: #{tpu_custom_call.1} parent=1 // loop_footer_branch
      %20 = sbr.rel target = $region3
    $region8: #{tpu_custom_call.1} parent=1 // loop_exit
      _
    %8375 = vsyncpa [#allocation3], 1
    %s8376 = scalar_lea.sflag [#allocation3], 1
    %8377 = vsyncpa %s8376, 1
    %8378 = vsyncpa [#allocation6], 1
    %8379 = vsyncpa [#allocation9], 1
    %8380 = vsyncpa [#allocation12], 1
    %8381 = vsyncpa [#allocation4], 1
    %s8382 = scalar_lea.sflag [#allocation4], 1
    %8383 = vsyncpa %s8382, 1

</llo_original>
